<compile_context>
chip_gen: v6e
topology: v6e:2x2x1
jax: 0.10.0
libtpu: 0.0.40
codegen_flags: <defaults>
</compile_context>

<pallas_src>
import functools
import math

import jax
import jax.numpy as jnp
from jax import lax
from jax.experimental import pallas as pl
from jax.experimental.pallas import tpu as pltpu


def _layernorm(v, g, b, eps=1e-6):
    mean = jnp.mean(v, axis=-1, keepdims=True)
    var = jnp.mean((v - mean) ** 2, axis=-1, keepdims=True)
    return (v - mean) * lax.rsqrt(var + eps) * g + b


def _gelu_exact(v):
    # PyTorch nn.GELU() default = exact erf-based GELU.
    return 0.5 * v * (1.0 + lax.erf(v * (1.0 / math.sqrt(2.0))))


def _round_up(n, m):
    return ((n + m - 1) // m) * m


def cross_attn_block_kernel(num_heads, head_dim, nc_valid,
                            x_ref, k_ref, v_ref,
                            g1x_ref, b1x_ref,
                            wq_ref, bq_ref, wo_ref, bo_ref,
                            g2_ref, b2_ref,
                            w1_ref, bm1_ref, w2_ref, bm2_ref,
                            out_ref):
    tn, H = x_ref.shape
    nc_pad = k_ref.shape[1]

    # --- norm1_x + Q projection ---------------------------------------------
    x = x_ref[...]                                            # (Tn, H) f32
    xn = _layernorm(x, g1x_ref[...], b1x_ref[...])
    q = jnp.dot(xn.astype(jnp.bfloat16), wq_ref[...],
                preferred_element_type=jnp.float32) + bq_ref[...]   # (Tn, H)
    # One head split per tile (scale already folded into K in the wrapper).
    q3 = q.astype(jnp.bfloat16).reshape(tn, num_heads, head_dim)    # (Tn, nh, d)

    # --- batched-over-heads attention (single MXU op stream) ----------------
    k = k_ref[...]                                            # (nh, Ncp, d) bf16
    v = v_ref[...]                                            # (nh, Ncp, d) bf16
    s = jnp.einsum("thd,hcd->htc", q3, k,
                   preferred_element_type=jnp.float32)        # (nh, Tn, Ncp) f32
    if nc_pad > nc_valid:
        col = lax.broadcasted_iota(jnp.int32, (1, 1, nc_pad), 2)
        s = jnp.where(col < nc_valid, s, -1e30)
    s = s - jnp.max(s, axis=-1, keepdims=True)
    e = jnp.exp(s)
    p = e * pl.reciprocal(jnp.sum(e, axis=-1, keepdims=True), approx=True)
    o = jnp.einsum("htc,hcd->thd", p.astype(jnp.bfloat16), v,
                   preferred_element_type=jnp.float32)        # (Tn, nh, d)
    o16 = o.reshape(tn, H).astype(jnp.bfloat16)               # one merge relayout

    attn = jnp.dot(o16, wo_ref[...],
                   preferred_element_type=jnp.float32) + bo_ref[...]

    # --- residual 1 ----------------------------------------------------------
    x1 = x + attn

    # --- norm2 + MLP (Linear -> GELU -> Linear) ------------------------------
    xn2 = _layernorm(x1, g2_ref[...], b2_ref[...])
    h1 = jnp.dot(xn2.astype(jnp.bfloat16), w1_ref[...],
                 preferred_element_type=jnp.float32) + bm1_ref[...]
    h1 = _gelu_exact(h1)
    mlp = jnp.dot(h1.astype(jnp.bfloat16), w2_ref[...],
                  preferred_element_type=jnp.float32) + bm2_ref[...]

    # --- residual 2 ----------------------------------------------------------
    out_ref[...] = (x1 + mlp).astype(out_ref.dtype)


def cross_attention_block(x, cond, params, num_heads, *, block_nx=256):
    """x: (B, Nx, H) f32; cond: (B, Nc, H) or (B, H) f32."""
    if cond.ndim == 2:
        cond = cond[:, None, :]
    x = x.astype(jnp.float32)
    cond = cond.astype(jnp.float32)
    B, Nx, H = x.shape
    Nc = cond.shape[1]
    d = H // num_heads
    M = params["w1"].shape[1]

    # --- K/V precompute (per batch item, grid-invariant) in the wrapper ------
    # cond LayerNorm + K/V projections; fold 1/sqrt(d) into K; head-major;
    # pad Nc to a lane-dense multiple of 128; cast to bf16 for the MXU.
    cn = _layernorm(cond, params["g1c"], params["b1c"])
    k = (cn @ params["wk"] + params["bk"]) * (1.0 / math.sqrt(d))
    v = cn @ params["wv"] + params["bv"]
    k = k.reshape(B, Nc, num_heads, d).transpose(0, 2, 1, 3)   # (B, nh, Nc, d)
    v = v.reshape(B, Nc, num_heads, d).transpose(0, 2, 1, 3)
    Nc_pad = _round_up(Nc, 128)
    if Nc_pad != Nc:
        pad = ((0, 0), (0, 0), (0, Nc_pad - Nc), (0, 0))
        k = jnp.pad(k, pad)
        v = jnp.pad(v, pad)
    k = k.astype(jnp.bfloat16)
    v = v.astype(jnp.bfloat16)

    # --- token-axis tiling: pad Nx to a multiple of the tile (no fallback
    #     to bn == Nx that could blow the VMEM budget) -------------------------
    bn = max(8, min(_round_up(block_nx, 8), _round_up(Nx, 8)))
    Nx_pad = _round_up(Nx, bn)
    x_in = jnp.pad(x, ((0, 0), (0, Nx_pad - Nx), (0, 0))) if Nx_pad != Nx else x

    matmul_weight_names = {"wq", "wo", "w1", "w2"}
    weight_order = ["g1x", "b1x", "wq", "bq", "wo", "bo",
                    "g2", "b2", "w1", "bm1", "w2", "bm2"]
    weights = [
        params[n].astype(jnp.bfloat16) if n in matmul_weight_names
        else params[n].astype(jnp.float32)
        for n in weight_order
    ]

    grid = (B, Nx_pad // bn)

    x_spec = pl.BlockSpec((pl.Squeezed(), bn, H), lambda b, t: (b, t, 0))
    kv_spec = pl.BlockSpec((pl.Squeezed(), num_heads, Nc_pad, d),
                           lambda b, t: (b, 0, 0, 0))
    out_spec = pl.BlockSpec((pl.Squeezed(), bn, H), lambda b, t: (b, t, 0))
    # Weights are grid-invariant: one resident VMEM copy, no pipelining.
    w_spec = pl.BlockSpec(memory_space=pltpu.MemorySpace.VMEM)
    in_specs = [x_spec, kv_spec, kv_spec] + [w_spec] * len(weights)

    # --- VMEM budget: derived from actual footprint, clamped per chip --------
    w_bytes = sum(w.size * w.dtype.itemsize for w in weights)
    kv_block = num_heads * Nc_pad * d * 2                     # bf16
    io_block = bn * H * 4                                      # f32
    pipe_bytes = 2 * 2 * kv_block + 2 * 2 * io_block           # double buffers
    interm = (3 * num_heads * bn * Nc_pad * 4                  # scores/exp/p
              + 2 * bn * M * 4                                 # MLP hidden
              + 6 * bn * H * 4)                                # misc f32 temps
    est = int(1.3 * (w_bytes + pipe_bytes + interm)) + (4 << 20)
    try:
        vmem_cap = pltpu.get_tpu_info().vmem_capacity_bytes
    except Exception:
        vmem_cap = 64 << 20   # v7x-safe fallback (v5e/v6e have 128 MiB)
    vmem_limit = max(32 << 20, min(est, int(0.85 * vmem_cap)))

    flops = 2 * B * (Nx_pad * H * H                            # q projection
                     + 2 * num_heads * Nx_pad * Nc_pad * d     # scores + p@v
                     + Nx_pad * H * H                          # out projection
                     + 2 * Nx_pad * H * M)                     # MLP
    transcendentals = B * (num_heads * Nx_pad * Nc_pad + Nx_pad * M)
    bytes_accessed = (4 * 2 * B * Nx_pad * H
                      + 2 * 2 * B * num_heads * Nc_pad * d
                      + w_bytes)

    kernel = functools.partial(cross_attn_block_kernel, num_heads, d, Nc)

    out = pl.pallas_call(
        kernel,
        out_shape=jax.ShapeDtypeStruct((B, Nx_pad, H), jnp.float32),
        grid=grid,
        in_specs=in_specs,
        out_specs=out_spec,
        compiler_params=pltpu.CompilerParams(
            # No cross-iteration scratch anymore -> both axes parallel
            # (megacore can shard the token-tile axis on v7x).
            dimension_semantics=("parallel", "parallel"),
            vmem_limit_bytes=vmem_limit,
        ),
        cost_estimate=pl.CostEstimate(
            flops=flops,
            transcendentals=transcendentals,
            bytes_accessed=bytes_accessed),
    )(x_in, k, v, *weights)

    if Nx_pad != Nx:
        out = out[:, :Nx, :]
    return out


def reference_block(x, cond, params, num_heads):
    """Pure-JAX f32 reference mirroring the PyTorch forward (verification)."""
    if cond.ndim == 2:
        cond = cond[:, None, :]
    B, Nx, H = x.shape
    Nc = cond.shape[1]
    d = H // num_heads

    xn = _layernorm(x, params["g1x"], params["b1x"])
    cn = _layernorm(cond, params["g1c"], params["b1c"])
    q = xn @ params["wq"] + params["bq"]
    k = cn @ params["wk"] + params["bk"]
    v = cn @ params["wv"] + params["bv"]
    q = q.reshape(B, Nx, num_heads, d).transpose(0, 2, 1, 3)
    k = k.reshape(B, Nc, num_heads, d).transpose(0, 2, 1, 3)
    v = v.reshape(B, Nc, num_heads, d).transpose(0, 2, 1, 3)
    s = jnp.einsum("bhqd,bhkd->bhqk", q, k) / math.sqrt(d)
    w = jax.nn.softmax(s, axis=-1)
    o = jnp.einsum("bhqk,bhkd->bhqd", w, v).transpose(0, 2, 1, 3).reshape(B, Nx, H)
    attn = o @ params["wo"] + params["bo"]
    x1 = x + attn
    xn2 = _layernorm(x1, params["g2"], params["b2"])
    hmid = _gelu_exact(xn2 @ params["w1"] + params["bm1"])
    mlp = hmid @ params["w2"] + params["bm2"]
    return x1 + mlp


def init_params(key, hidden_size, mlp_hidden):
    ks = jax.random.split(key, 12)
    H, M = hidden_size, mlp_hidden

    def w(k, shape, scale=0.05):
        return (scale * jax.random.normal(k, shape)).astype(jnp.float32)

    return {
        # LayerNorm affine params (stored as (1, dim) for broadcast)
        "g1x": jnp.ones((1, H), jnp.float32), "b1x": jnp.zeros((1, H), jnp.float32),
        "g1c": jnp.ones((1, H), jnp.float32), "b1c": jnp.zeros((1, H), jnp.float32),
        "g2":  jnp.ones((1, H), jnp.float32), "b2":  jnp.zeros((1, H), jnp.float32),
        # Projections stored as (in, out) so y = x @ W + b
        "wq": w(ks[0], (H, H)), "bq": w(ks[1], (1, H)),
        "wk": w(ks[2], (H, H)), "bk": w(ks[3], (1, H)),
        "wv": w(ks[4], (H, H)), "bv": w(ks[5], (1, H)),
        "wo": w(ks[6], (H, H)), "bo": w(ks[7], (1, H)),
        # MLP
        "w1": w(ks[8], (H, M)), "bm1": w(ks[9], (1, M)),
        "w2": w(ks[10], (M, H)), "bm2": w(ks[11], (1, H)),
    }


if __name__ == "__main__":
    # Lane-aligned shapes (H multiple of 128); block_nx=128 with Nx=256
    # exercises the token-tile grid axis; Nc=8 exercises the Nc->128 padding
    # + masking path.
    B, Nx, Nc, H = 2, 256, 8, 128
    num_heads = 4
    mlp_ratio = 4.0
    mlp_hidden = int(H * mlp_ratio)

    key = jax.random.PRNGKey(0)
    kx, kc, kp = jax.random.split(key, 3)
    x = jax.random.normal(kx, (B, Nx, H), dtype=jnp.float32)
    cond = jax.random.normal(kc, (B, Nc, H), dtype=jnp.float32)
    params = init_params(kp, H, mlp_hidden)

    out = cross_attention_block(x, cond, params, num_heads, block_nx=128)
    out = jax.block_until_ready(out)

    ref = reference_block(x, cond, params, num_heads)
    assert out.shape == (B, Nx, H)
    max_err = float(jnp.max(jnp.abs(out - ref)))
    # bf16 MXU inputs (intentional, per perf guidance) => loose tolerance vs
    # the pure-f32 reference.
    assert jnp.allclose(out, ref, atol=5e-2, rtol=5e-2), max_err

    print("KERNEL_OK")
</pallas_src>

<mosaic_0001>
module attributes {stable_mosaic.version = 11 : i64} {
  func.func @cross_attn_block_kernel(%arg0: i32, %arg1: i32, %arg2: memref<1x128x128xf32, #tpu.memory_space<vmem>>, %arg3: memref<1x4x128x32xbf16, #tpu.memory_space<vmem>>, %arg4: memref<1x4x128x32xbf16, #tpu.memory_space<vmem>>, %arg5: memref<1x128xf32, #tpu.memory_space<vmem>>, %arg6: memref<1x128xf32, #tpu.memory_space<vmem>>, %arg7: memref<128x128xbf16, #tpu.memory_space<vmem>>, %arg8: memref<1x128xf32, #tpu.memory_space<vmem>>, %arg9: memref<128x128xbf16, #tpu.memory_space<vmem>>, %arg10: memref<1x128xf32, #tpu.memory_space<vmem>>, %arg11: memref<1x128xf32, #tpu.memory_space<vmem>>, %arg12: memref<1x128xf32, #tpu.memory_space<vmem>>, %arg13: memref<128x512xbf16, #tpu.memory_space<vmem>>, %arg14: memref<1x512xf32, #tpu.memory_space<vmem>>, %arg15: memref<512x128xbf16, #tpu.memory_space<vmem>>, %arg16: memref<1x128xf32, #tpu.memory_space<vmem>>, %arg17: memref<1x128x128xf32, #tpu.memory_space<vmem>>) attributes {dimension_semantics = [#tpu.dimension_semantics<parallel>, #tpu.dimension_semantics<parallel>], iteration_bounds = array<i64: 2, 2>, scalar_prefetch = 0 : i64, scratch_operands = 0 : i64, tpu.core_type = #tpu.core_type<tc>, window_params = [{transform_indices = @transform_0, window_bounds = array<i64: 1, 128, 128>}, {transform_indices = @transform_1, window_bounds = array<i64: 1, 4, 128, 32>}, {transform_indices = @transform_2, window_bounds = array<i64: 1, 4, 128, 32>}, {pipeline_mode = #tpu.pipeline_mode<synchronous>, transform_indices = @transform_3, window_bounds = array<i64: 1, 128>}, {pipeline_mode = #tpu.pipeline_mode<synchronous>, transform_indices = @transform_4, window_bounds = array<i64: 1, 128>}, {pipeline_mode = #tpu.pipeline_mode<synchronous>, transform_indices = @transform_5, window_bounds = array<i64: 128, 128>}, {pipeline_mode = #tpu.pipeline_mode<synchronous>, transform_indices = @transform_6, window_bounds = array<i64: 1, 128>}, {pipeline_mode = #tpu.pipeline_mode<synchronous>, transform_indices = @transform_7, window_bounds = array<i64: 128, 128>}, {pipeline_mode = #tpu.pipeline_mode<synchronous>, transform_indices = @transform_8, window_bounds = array<i64: 1, 128>}, {pipeline_mode = #tpu.pipeline_mode<synchronous>, transform_indices = @transform_9, window_bounds = array<i64: 1, 128>}, {pipeline_mode = #tpu.pipeline_mode<synchronous>, transform_indices = @transform_10, window_bounds = array<i64: 1, 128>}, {pipeline_mode = #tpu.pipeline_mode<synchronous>, transform_indices = @transform_11, window_bounds = array<i64: 128, 512>}, {pipeline_mode = #tpu.pipeline_mode<synchronous>, transform_indices = @transform_12, window_bounds = array<i64: 1, 512>}, {pipeline_mode = #tpu.pipeline_mode<synchronous>, transform_indices = @transform_13, window_bounds = array<i64: 512, 128>}, {pipeline_mode = #tpu.pipeline_mode<synchronous>, transform_indices = @transform_14, window_bounds = array<i64: 1, 128>}, {transform_indices = @transform_15, window_bounds = array<i64: 1, 128, 128>}]} {
    %c0 = arith.constant 0 : index
    %c0_0 = arith.constant 0 : index
    %c0_1 = arith.constant 0 : index
    %0 = vector.load %arg2[%c0, %c0_0, %c0_1] : memref<1x128x128xf32, #tpu.memory_space<vmem>>, vector<1x128x128xf32>
    %1 = vector.shape_cast %0 : vector<1x128x128xf32> to vector<128x128xf32>
    %c0_2 = arith.constant 0 : index
    %c0_3 = arith.constant 0 : index
    %2 = vector.load %arg5[%c0_2, %c0_3] : memref<1x128xf32, #tpu.memory_space<vmem>>, vector<1x128xf32>
    %c0_4 = arith.constant 0 : index
    %c0_5 = arith.constant 0 : index
    %3 = vector.load %arg6[%c0_4, %c0_5] : memref<1x128xf32, #tpu.memory_space<vmem>>, vector<1x128xf32>
    %cst = arith.constant dense<0.000000e+00> : vector<128xf32>
    %4 = vector.multi_reduction <add>, %1, %cst [1] : vector<128x128xf32> to vector<128xf32>
    %5 = vector.shape_cast %4 : vector<128xf32> to vector<128x1xf32>
    %cst_6 = arith.constant 1.280000e+02 : f32
    %6 = vector.broadcast %cst_6 : f32 to vector<128x1xf32>
    %7 = arith.divf %5, %6 : vector<128x1xf32>
    %8 = vector.broadcast %7 : vector<128x1xf32> to vector<128x128xf32>
    %9 = arith.subf %1, %8 : vector<128x128xf32>
    %10 = arith.mulf %9, %9 : vector<128x128xf32>
    %cst_7 = arith.constant dense<0.000000e+00> : vector<128xf32>
    %11 = vector.multi_reduction <add>, %10, %cst_7 [1] : vector<128x128xf32> to vector<128xf32>
    %12 = vector.shape_cast %11 : vector<128xf32> to vector<128x1xf32>
    %cst_8 = arith.constant 1.280000e+02 : f32
    %13 = vector.broadcast %cst_8 : f32 to vector<128x1xf32>
    %14 = arith.divf %12, %13 : vector<128x1xf32>
    %15 = vector.broadcast %7 : vector<128x1xf32> to vector<128x128xf32>
    %16 = arith.subf %1, %15 : vector<128x128xf32>
    %cst_9 = arith.constant 9.99999997E-7 : f32
    %17 = vector.broadcast %cst_9 : f32 to vector<128x1xf32>
    %18 = arith.addf %14, %17 : vector<128x1xf32>
    %19 = math.rsqrt %18 : vector<128x1xf32>
    %20 = vector.broadcast %19 : vector<128x1xf32> to vector<128x128xf32>
    %21 = arith.mulf %16, %20 : vector<128x128xf32>
    %22 = vector.broadcast %2 : vector<1x128xf32> to vector<128x128xf32>
    %23 = arith.mulf %21, %22 : vector<128x128xf32>
    %24 = vector.broadcast %3 : vector<1x128xf32> to vector<128x128xf32>
    %25 = arith.addf %23, %24 : vector<128x128xf32>
    %26 = arith.truncf %25 : vector<128x128xf32> to vector<128x128xbf16>
    %c0_10 = arith.constant 0 : index
    %c0_11 = arith.constant 0 : index
    %27 = vector.load %arg7[%c0_10, %c0_11] : memref<128x128xbf16, #tpu.memory_space<vmem>>, vector<128x128xbf16>
    %cst_12 = arith.constant dense<0.000000e+00> : vector<128x128xf32>
    %28 = tpu.matmul %26, %27, %cst_12 {dimension_numbers = #tpu.dot_dimension_numbers<[1], [0], [0], [1], [0, 0, 1, 1], [], []>} : vector<128x128xbf16>, vector<128x128xbf16>, vector<128x128xf32> -> vector<128x128xf32>
    %c0_13 = arith.constant 0 : index
    %c0_14 = arith.constant 0 : index
    %29 = vector.load %arg8[%c0_13, %c0_14] : memref<1x128xf32, #tpu.memory_space<vmem>>, vector<1x128xf32>
    %30 = vector.broadcast %29 : vector<1x128xf32> to vector<128x128xf32>
    %31 = arith.addf %28, %30 : vector<128x128xf32>
    %32 = arith.truncf %31 : vector<128x128xf32> to vector<128x128xbf16>
    %33 = vector.shape_cast %32 : vector<128x128xbf16> to vector<128x4x32xbf16>
    %c0_15 = arith.constant 0 : index
    %c0_16 = arith.constant 0 : index
    %c0_17 = arith.constant 0 : index
    %c0_18 = arith.constant 0 : index
    %34 = vector.load %arg3[%c0_15, %c0_16, %c0_17, %c0_18] : memref<1x4x128x32xbf16, #tpu.memory_space<vmem>>, vector<1x4x128x32xbf16>
    %35 = vector.shape_cast %34 : vector<1x4x128x32xbf16> to vector<4x128x32xbf16>
    %c0_19 = arith.constant 0 : index
    %c0_20 = arith.constant 0 : index
    %c0_21 = arith.constant 0 : index
    %c0_22 = arith.constant 0 : index
    %36 = vector.load %arg4[%c0_19, %c0_20, %c0_21, %c0_22] : memref<1x4x128x32xbf16, #tpu.memory_space<vmem>>, vector<1x4x128x32xbf16>
    %37 = vector.shape_cast %36 : vector<1x4x128x32xbf16> to vector<4x128x32xbf16>
    "tpu.trace_start"() <{level = 10 : i32, message = "thd,hcd->htc"}> : () -> ()
    %cst_23 = arith.constant dense<0.000000e+00> : vector<4x128x128xf32>
    %38 = tpu.matmul %33, %35, %cst_23 {dimension_numbers = #tpu.dot_dimension_numbers<[2], [2], [0], [1], [0, 1, 0, 0, 1, 1], [1], [0]>} : vector<128x4x32xbf16>, vector<4x128x32xbf16>, vector<4x128x128xf32> -> vector<4x128x128xf32>
    "tpu.trace_stop"() : () -> ()
    %39 = tpu.iota {dimensions = array<i32: 2>} : vector<1x1x128xi32>
    %c8_i32 = arith.constant 8 : i32
    %40 = vector.broadcast %c8_i32 : i32 to vector<1x1x128xi32>
    %41 = arith.cmpi slt, %39, %40 : vector<1x1x128xi32>
    %cst_24 = arith.constant -1.000000e+30 : f32
    %42 = vector.shape_cast %41 : vector<1x1x128xi1> to vector<1x1x128xi1>
    %43 = vector.broadcast %42 : vector<1x1x128xi1> to vector<4x128x128xi1>
    %44 = vector.broadcast %cst_24 : f32 to vector<4x128x128xf32>
    %45 = arith.select %43, %38, %44 : vector<4x128x128xi1>, vector<4x128x128xf32>
    %cst_25 = arith.constant dense<0xFF800000> : vector<4x128xf32>
    %46 = vector.multi_reduction <maximumf>, %45, %cst_25 [2] : vector<4x128x128xf32> to vector<4x128xf32>
    %47 = vector.shape_cast %46 : vector<4x128xf32> to vector<4x128x1xf32>
    %48 = vector.broadcast %47 : vector<4x128x1xf32> to vector<4x128x128xf32>
    %49 = arith.subf %45, %48 : vector<4x128x128xf32>
    %50 = math.exp %49 : vector<4x128x128xf32>
    %cst_26 = arith.constant dense<0.000000e+00> : vector<4x128xf32>
    %51 = vector.multi_reduction <add>, %50, %cst_26 [2] : vector<4x128x128xf32> to vector<4x128xf32>
    %52 = vector.shape_cast %51 : vector<4x128xf32> to vector<4x128x1xf32>
    %53 = tpu.reciprocal %52 {approx = true} : vector<4x128x1xf32> -> vector<4x128x1xf32>
    %54 = vector.broadcast %53 : vector<4x128x1xf32> to vector<4x128x128xf32>
    %55 = arith.mulf %50, %54 : vector<4x128x128xf32>
    %56 = arith.truncf %55 : vector<4x128x128xf32> to vector<4x128x128xbf16>
    "tpu.trace_start"() <{level = 10 : i32, message = "htc,hcd->thd"}> : () -> ()
    %cst_27 = arith.constant dense<0.000000e+00> : vector<4x32x128xf32>
    %57 = tpu.matmul %37, %56, %cst_27 {dimension_numbers = #tpu.dot_dimension_numbers<[1], [2], [2], [1], [0, 0, 0, 2, 1, 1], [0], [0]>} : vector<4x128x32xbf16>, vector<4x128x128xbf16>, vector<4x32x128xf32> -> vector<4x32x128xf32>
    %58 = tpu.transpose %57, [2, 0, 1] : vector<4x32x128xf32> -> vector<128x4x32xf32>
    "tpu.trace_stop"() : () -> ()
    %59 = vector.shape_cast %58 : vector<128x4x32xf32> to vector<128x128xf32>
    %60 = arith.truncf %59 : vector<128x128xf32> to vector<128x128xbf16>
    %c0_28 = arith.constant 0 : index
    %c0_29 = arith.constant 0 : index
    %61 = vector.load %arg9[%c0_28, %c0_29] : memref<128x128xbf16, #tpu.memory_space<vmem>>, vector<128x128xbf16>
    %cst_30 = arith.constant dense<0.000000e+00> : vector<128x128xf32>
    %62 = tpu.matmul %60, %61, %cst_30 {dimension_numbers = #tpu.dot_dimension_numbers<[1], [0], [0], [1], [0, 0, 1, 1], [], []>} : vector<128x128xbf16>, vector<128x128xbf16>, vector<128x128xf32> -> vector<128x128xf32>
    %c0_31 = arith.constant 0 : index
    %c0_32 = arith.constant 0 : index
    %63 = vector.load %arg10[%c0_31, %c0_32] : memref<1x128xf32, #tpu.memory_space<vmem>>, vector<1x128xf32>
    %64 = vector.broadcast %63 : vector<1x128xf32> to vector<128x128xf32>
    %65 = arith.addf %62, %64 : vector<128x128xf32>
    %66 = arith.addf %1, %65 : vector<128x128xf32>
    %c0_33 = arith.constant 0 : index
    %c0_34 = arith.constant 0 : index
    %67 = vector.load %arg11[%c0_33, %c0_34] : memref<1x128xf32, #tpu.memory_space<vmem>>, vector<1x128xf32>
    %c0_35 = arith.constant 0 : index
    %c0_36 = arith.constant 0 : index
    %68 = vector.load %arg12[%c0_35, %c0_36] : memref<1x128xf32, #tpu.memory_space<vmem>>, vector<1x128xf32>
    %cst_37 = arith.constant dense<0.000000e+00> : vector<128xf32>
    %69 = vector.multi_reduction <add>, %66, %cst_37 [1] : vector<128x128xf32> to vector<128xf32>
    %70 = vector.shape_cast %69 : vector<128xf32> to vector<128x1xf32>
    %cst_38 = arith.constant 1.280000e+02 : f32
    %71 = vector.broadcast %cst_38 : f32 to vector<128x1xf32>
    %72 = arith.divf %70, %71 : vector<128x1xf32>
    %73 = vector.broadcast %72 : vector<128x1xf32> to vector<128x128xf32>
    %74 = arith.subf %66, %73 : vector<128x128xf32>
    %75 = arith.mulf %74, %74 : vector<128x128xf32>
    %cst_39 = arith.constant dense<0.000000e+00> : vector<128xf32>
    %76 = vector.multi_reduction <add>, %75, %cst_39 [1] : vector<128x128xf32> to vector<128xf32>
    %77 = vector.shape_cast %76 : vector<128xf32> to vector<128x1xf32>
    %cst_40 = arith.constant 1.280000e+02 : f32
    %78 = vector.broadcast %cst_40 : f32 to vector<128x1xf32>
    %79 = arith.divf %77, %78 : vector<128x1xf32>
    %80 = vector.broadcast %72 : vector<128x1xf32> to vector<128x128xf32>
    %81 = arith.subf %66, %80 : vector<128x128xf32>
    %cst_41 = arith.constant 9.99999997E-7 : f32
    %82 = vector.broadcast %cst_41 : f32 to vector<128x1xf32>
    %83 = arith.addf %79, %82 : vector<128x1xf32>
    %84 = math.rsqrt %83 : vector<128x1xf32>
    %85 = vector.broadcast %84 : vector<128x1xf32> to vector<128x128xf32>
    %86 = arith.mulf %81, %85 : vector<128x128xf32>
    %87 = vector.broadcast %67 : vector<1x128xf32> to vector<128x128xf32>
    %88 = arith.mulf %86, %87 : vector<128x128xf32>
    %89 = vector.broadcast %68 : vector<1x128xf32> to vector<128x128xf32>
    %90 = arith.addf %88, %89 : vector<128x128xf32>
    %91 = arith.truncf %90 : vector<128x128xf32> to vector<128x128xbf16>
    %c0_42 = arith.constant 0 : index
    %c0_43 = arith.constant 0 : index
    %92 = vector.load %arg13[%c0_42, %c0_43] : memref<128x512xbf16, #tpu.memory_space<vmem>>, vector<128x512xbf16>
    %cst_44 = arith.constant dense<0.000000e+00> : vector<128x512xf32>
    %93 = tpu.matmul %91, %92, %cst_44 {dimension_numbers = #tpu.dot_dimension_numbers<[1], [0], [0], [1], [0, 0, 1, 1], [], []>} : vector<128x128xbf16>, vector<128x512xbf16>, vector<128x512xf32> -> vector<128x512xf32>
    %c0_45 = arith.constant 0 : index
    %c0_46 = arith.constant 0 : index
    %94 = vector.load %arg14[%c0_45, %c0_46] : memref<1x512xf32, #tpu.memory_space<vmem>>, vector<1x512xf32>
    %95 = vector.broadcast %94 : vector<1x512xf32> to vector<128x512xf32>
    %96 = arith.addf %93, %95 : vector<128x512xf32>
    %cst_47 = arith.constant 5.000000e-01 : f32
    %97 = vector.broadcast %cst_47 : f32 to vector<128x512xf32>
    %98 = arith.mulf %97, %96 : vector<128x512xf32>
    %cst_48 = arith.constant 0.707106769 : f32
    %99 = vector.broadcast %cst_48 : f32 to vector<128x512xf32>
    %100 = arith.mulf %96, %99 : vector<128x512xf32>
    %101 = math.erf %100 : vector<128x512xf32>
    %cst_49 = arith.constant 1.000000e+00 : f32
    %102 = vector.broadcast %cst_49 : f32 to vector<128x512xf32>
    %103 = arith.addf %102, %101 : vector<128x512xf32>
    %104 = arith.mulf %98, %103 : vector<128x512xf32>
    %105 = arith.truncf %104 : vector<128x512xf32> to vector<128x512xbf16>
    %c0_50 = arith.constant 0 : index
    %c0_51 = arith.constant 0 : index
    %106 = vector.load %arg15[%c0_50, %c0_51] : memref<512x128xbf16, #tpu.memory_space<vmem>>, vector<512x128xbf16>
    %cst_52 = arith.constant dense<0.000000e+00> : vector<128x128xf32>
    %107 = tpu.matmul %105, %106, %cst_52 {dimension_numbers = #tpu.dot_dimension_numbers<[1], [0], [0], [1], [0, 0, 1, 1], [], []>} : vector<128x512xbf16>, vector<512x128xbf16>, vector<128x128xf32> -> vector<128x128xf32>
    %c0_53 = arith.constant 0 : index
    %c0_54 = arith.constant 0 : index
    %108 = vector.load %arg16[%c0_53, %c0_54] : memref<1x128xf32, #tpu.memory_space<vmem>>, vector<1x128xf32>
    %109 = vector.broadcast %108 : vector<1x128xf32> to vector<128x128xf32>
    %110 = arith.addf %107, %109 : vector<128x128xf32>
    %111 = arith.addf %66, %110 : vector<128x128xf32>
    %c0_55 = arith.constant 0 : index
    %c0_56 = arith.constant 0 : index
    %c0_57 = arith.constant 0 : index
    %112 = vector.load %arg17[%c0_55, %c0_56, %c0_57] : memref<1x128x128xf32, #tpu.memory_space<vmem>>, vector<1x128x128xf32>
    %113 = vector.shape_cast %112 : vector<1x128x128xf32> to vector<128x128xf32>
    %114 = vector.shape_cast %111 : vector<128x128xf32> to vector<1x128x128xf32>
    tpu.vector_store %arg17[%c0_55, %c0_56, %c0_57], %114 {strides = array<i32>} : memref<1x128x128xf32, #tpu.memory_space<vmem>>, vector<1x128x128xf32>,
    return
  }
  func.func @transform_0(%arg0: i32, %arg1: i32) -> (i32, i32, i32) {
    %c0_i32 = arith.constant 0 : i32
    %c0_i32_0 = arith.constant 0 : i32
    return %arg0, %arg1, %c0_i32 : i32, i32, i32
  }
  func.func @transform_1(%arg0: i32, %arg1: i32) -> (i32, i32, i32, i32) {
    %c0_i32 = arith.constant 0 : i32
    %c0_i32_0 = arith.constant 0 : i32
    %c0_i32_1 = arith.constant 0 : i32
    %c0_i32_2 = arith.constant 0 : i32
    return %arg0, %c0_i32, %c0_i32_0, %c0_i32_1 : i32, i32, i32, i32
  }
  func.func @transform_2(%arg0: i32, %arg1: i32) -> (i32, i32, i32, i32) {
    %c0_i32 = arith.constant 0 : i32
    %c0_i32_0 = arith.constant 0 : i32
    %c0_i32_1 = arith.constant 0 : i32
    %c0_i32_2 = arith.constant 0 : i32
    return %arg0, %c0_i32, %c0_i32_0, %c0_i32_1 : i32, i32, i32, i32
  }
  func.func @transform_3(%arg0: i32, %arg1: i32) -> (i32, i32) {
    %c0_i32 = arith.constant 0 : i32
    %c0_i32_0 = arith.constant 0 : i32
    %c0_i32_1 = arith.constant 0 : i32
    return %c0_i32, %c0_i32_0 : i32, i32
  }
  func.func @transform_4(%arg0: i32, %arg1: i32) -> (i32, i32) {
    %c0_i32 = arith.constant 0 : i32
    %c0_i32_0 = arith.constant 0 : i32
    %c0_i32_1 = arith.constant 0 : i32
    return %c0_i32, %c0_i32_0 : i32, i32
  }
  func.func @transform_5(%arg0: i32, %arg1: i32) -> (i32, i32) {
    %c0_i32 = arith.constant 0 : i32
    %c0_i32_0 = arith.constant 0 : i32
    %c0_i32_1 = arith.constant 0 : i32
    return %c0_i32, %c0_i32_0 : i32, i32
  }
  func.func @transform_6(%arg0: i32, %arg1: i32) -> (i32, i32) {
    %c0_i32 = arith.constant 0 : i32
    %c0_i32_0 = arith.constant 0 : i32
    %c0_i32_1 = arith.constant 0 : i32
    return %c0_i32, %c0_i32_0 : i32, i32
  }
  func.func @transform_7(%arg0: i32, %arg1: i32) -> (i32, i32) {
    %c0_i32 = arith.constant 0 : i32
    %c0_i32_0 = arith.constant 0 : i32
    %c0_i32_1 = arith.constant 0 : i32
    return %c0_i32, %c0_i32_0 : i32, i32
  }
  func.func @transform_8(%arg0: i32, %arg1: i32) -> (i32, i32) {
    %c0_i32 = arith.constant 0 : i32
    %c0_i32_0 = arith.constant 0 : i32
    %c0_i32_1 = arith.constant 0 : i32
    return %c0_i32, %c0_i32_0 : i32, i32
  }
  func.func @transform_9(%arg0: i32, %arg1: i32) -> (i32, i32) {
    %c0_i32 = arith.constant 0 : i32
    %c0_i32_0 = arith.constant 0 : i32
    %c0_i32_1 = arith.constant 0 : i32
    return %c0_i32, %c0_i32_0 : i32, i32
  }
  func.func @transform_10(%arg0: i32, %arg1: i32) -> (i32, i32) {
    %c0_i32 = arith.constant 0 : i32
    %c0_i32_0 = arith.constant 0 : i32
    %c0_i32_1 = arith.constant 0 : i32
    return %c0_i32, %c0_i32_0 : i32, i32
  }
  func.func @transform_11(%arg0: i32, %arg1: i32) -> (i32, i32) {
    %c0_i32 = arith.constant 0 : i32
    %c0_i32_0 = arith.constant 0 : i32
    %c0_i32_1 = arith.constant 0 : i32
    return %c0_i32, %c0_i32_0 : i32, i32
  }
  func.func @transform_12(%arg0: i32, %arg1: i32) -> (i32, i32) {
    %c0_i32 = arith.constant 0 : i32
    %c0_i32_0 = arith.constant 0 : i32
    %c0_i32_1 = arith.constant 0 : i32
    return %c0_i32, %c0_i32_0 : i32, i32
  }
  func.func @transform_13(%arg0: i32, %arg1: i32) -> (i32, i32) {
    %c0_i32 = arith.constant 0 : i32
    %c0_i32_0 = arith.constant 0 : i32
    %c0_i32_1 = arith.constant 0 : i32
    return %c0_i32, %c0_i32_0 : i32, i32
  }
  func.func @transform_14(%arg0: i32, %arg1: i32) -> (i32, i32) {
    %c0_i32 = arith.constant 0 : i32
    %c0_i32_0 = arith.constant 0 : i32
    %c0_i32_1 = arith.constant 0 : i32
    return %c0_i32, %c0_i32_0 : i32, i32
  }
  func.func @transform_15(%arg0: i32, %arg1: i32) -> (i32, i32, i32) {
    %c0_i32 = arith.constant 0 : i32
    %c0_i32_0 = arith.constant 0 : i32
    return %arg0, %arg1, %c0_i32 : i32, i32, i32
  }
}

</mosaic_0001>

<llo_original>
// kernel: tpu_custom_call.1
$region0: #{tpu_custom_call.1}
  #allocation0 [shape = 'u32[]', space=smem, size = 0x4, offset = 0x4, fixed_abs, tag = 'smem constant byte address 0x4 - core index']
  #allocation1 [shape = 'u32[144,128]{1,0:T(1,128)}', space=vmem, size = 0x12000, scoped, tag = 'internal scratch']
  %s0 = inlined_call_operand.vmem [shape: f32[2,256,128], index: 0, kind: input, shape index: {}]
  %s1 = inlined_call_operand.vmem [shape: bf16[2,4,128,32], index: 1, kind: input, shape index: {}]
  %s2 = inlined_call_operand.vmem [shape: bf16[2,4,128,32], index: 2, kind: input, shape index: {}]
  %s3 = inlined_call_operand.hbm [shape: f32[1,128], index: 3, kind: input, shape index: {}]
  %s4 = inlined_call_operand.hbm [shape: f32[1,128], index: 4, kind: input, shape index: {}]
  %s5 = inlined_call_operand.vmem [shape: bf16[128,128], index: 5, kind: input, shape index: {}]
  %s6 = inlined_call_operand.hbm [shape: f32[1,128], index: 6, kind: input, shape index: {}]
  %s7 = inlined_call_operand.vmem [shape: bf16[128,128], index: 7, kind: input, shape index: {}]
  %s8 = inlined_call_operand.vmem [shape: f32[1,128], index: 8, kind: input, shape index: {}]
  %s9 = inlined_call_operand.vmem [shape: f32[1,128], index: 9, kind: input, shape index: {}]
  %s10 = inlined_call_operand.vmem [shape: f32[1,128], index: 10, kind: input, shape index: {}]
  %s11 = inlined_call_operand.vmem [shape: bf16[128,512], index: 11, kind: input, shape index: {}]
  %s12 = inlined_call_operand.vmem [shape: f32[1,512], index: 12, kind: input, shape index: {}]
  %s13 = inlined_call_operand.vmem [shape: bf16[512,128], index: 13, kind: input, shape index: {}]
  %s14 = inlined_call_operand.vmem [shape: f32[1,128], index: 14, kind: input, shape index: {}]
  %s15 = inlined_call_operand.hbm [shape: f32[2,256,128], index: 15, kind: output, shape index: {}]
  %s16 = sld [smem:[#allocation0]]
  $region105: #{tpu_custom_call.1} parent=0
    _
  %s18 = ssub.s32 1, %s16
  %s19 = scalar_select 0, %s18, %s16
  $region1: #{tpu_custom_call.1} parent=0
    #allocation2 [shape = 'u8[512]{0}', space=vmem, size = 0x400, scoped, tag = 'input window, operand 3, single buffered']
    #allocation3 [shape = 's32[2]{0}', space=sflag, size = 0x8, scoped, tag = 'scoped memory for tpu_custom_call.1']
    #allocation4 [shape = 's32[2]{0}', space=sflag, size = 0x8, scoped, tag = 'scoped memory for tpu_custom_call.1']
    #allocation5 [shape = 'u8[512]{0}', space=vmem, size = 0x400, scoped, tag = 'input window, operand 4, single buffered']
    #allocation6 [shape = 's32[1]{0}', space=sflag, size = 0x4, scoped, tag = 'scoped memory for tpu_custom_call.1']
    #allocation7 [shape = 'u8[512]{0}', space=vmem, size = 0x400, scoped, tag = 'input window, operand 6, single buffered']
    #allocation8 [shape = 'u8[131072]{0}', space=vmem, size = 0x20000, scoped, tag = 'output window, operand 0']
    %20 = vsyncpa [#allocation3], 0
    %21 = vsyncpa [#allocation6], 0
    %22 = vsyncpa [#allocation4], 0
    %s23 = scalar_lea.sflag [#allocation4], 1
    %24 = vsyncpa %s23, 0
    loop: start=0, step=1, limit=6
    $region2: #{tpu_custom_call.1} parent=1 // loop_pre_header
      _
    $region3: #{tpu_custom_call.1} parent=1 // loop_header
      %s26 = sphi 0, %s30
      %p27 = scmp.ge.s32.totalorder %s26, 6
      %s33 = sphi 0, %s45
      %s34 = sphi 0, %s41
      %s35 = sphi 0, %s33
      %s36 = sphi 0, %s34
      %s37 = sphi 0, %s35
      %s38 = sphi 0, %s36
      %s50 = sphi 0, %s52
      %s53 = sphi 0, %s50
      %s54 = sphi 0, %s53
      %s70 = sphi 0, %s54
      %s76 = sphi 0, %s78
      %s79 = sphi 0, %s76
      %s80 = sphi 0, %s79
      %s96 = sphi 0, %s80
      %s102 = sphi 0, %s104
      %s105 = sphi 0, %s102
      %s106 = sphi 0, %s105
      %s122 = sphi 0, %s106
      %s126 = sphi 0, %s126
      %s128 = sphi 0, %s126
      %s129 = sphi 0, %s128
      %s143 = sphi 0, %s129
      %s147 = sphi 0, %s147
      %s149 = sphi 0, %s147
      %s150 = sphi 0, %s149
      %s164 = sphi 0, %s150
      %s168 = sphi 0, %s168
      %s170 = sphi 0, %s168
      %s171 = sphi 0, %s170
      %s185 = sphi 0, %s171
      %s189 = sphi 0, %s189
      %s191 = sphi 0, %s189
      %s192 = sphi 0, %s191
      %s206 = sphi 0, %s192
      %s210 = sphi 0, %s210
      %s212 = sphi 0, %s210
      %s213 = sphi 0, %s212
      %s227 = sphi 0, %s213
      %s231 = sphi 0, %s231
      %s233 = sphi 0, %s231
      %s234 = sphi 0, %s233
      %s248 = sphi 0, %s234
      %s252 = sphi 0, %s252
      %s254 = sphi 0, %s252
      %s255 = sphi 0, %s254
      %s269 = sphi 0, %s255
      %s273 = sphi 0, %s273
      %s275 = sphi 0, %s273
      %s276 = sphi 0, %s275
      %s290 = sphi 0, %s276
      %s294 = sphi 0, %s294
      %s296 = sphi 0, %s294
      %s297 = sphi 0, %s296
      %s311 = sphi 0, %s297
      %s315 = sphi 0, %s315
      %s317 = sphi 0, %s315
      %s318 = sphi 0, %s317
      %s332 = sphi 0, %s318
      %s336 = sphi 0, %s336
      %s338 = sphi 0, %s336
      %s339 = sphi 0, %s338
      %s353 = sphi 0, %s339
      %s357 = sphi 0, %s357
      %s359 = sphi 0, %s357
      %s360 = sphi 0, %s359
      %s374 = sphi 0, %s360
      %s382 = sphi 0, %s384
      %s385 = sphi 0, %s382
      %s386 = sphi 0, %s385
      %s402 = sphi 0, %s386
    $region4: #{tpu_custom_call.1} parent=1 // loop_header_branch
      %29 = sbr.rel (%p27) target = $region8
    $region5: #{tpu_custom_call.1} parent=1 // loop_body
      %s31 = ssub.s32 %s26, 1
      %s32 = ssub.s32 %s26, 2
      %s39 = sadd.s32 1, %s34
      %p40 = scmp.ge.s32.totalorder %s39, 2
      %s41 = scalar_select %p40, 0, %s39
      %s42 = sadd.s32 1, %s33
      %s43 = scalar_select %p40, %s42, %s33
      %p44 = scmp.ge.s32.totalorder %s43, 2
      %s45 = scalar_select %p44, 0, %s43
      %s46 = ssub.s32 %s33, %s45
      %s47 = ssub.s32 %s34, %s41
      %s48 = sor.u32 %s46, %s47
      %p49 = scmp.eq.s32.totalorder %s48, 0
      %s51 = sadd.s32 %s50, 1
      %s52 = scalar_select %p49, %s50, %s51
      %p55 = pneg %p49
      %p56 = scmp.eq.s32.totalorder %s26, 3
      %p57 = por %p55, %p56
      %p58 = scmp.ne.s32.totalorder %s50, %s53
      %p59 = scmp.eq.s32.totalorder %s26, 0
      %p60 = por %p58, %p59
      %p61 = scmp.ne.s32.totalorder %s50, %s53
      %p62 = scmp.eq.s32.totalorder %s31, 3
      %p63 = por %p61, %p62
      %p64 = scmp.ne.s32.totalorder %s53, %s54
      %p65 = scmp.eq.s32.totalorder %s31, 0
      %p66 = por %p64, %p65
      %p67 = scmp.ne.s32.totalorder %s53, %s54
      %p68 = scmp.eq.s32.totalorder %s32, 3
      %p69 = por %p67, %p68
      %p71 = scmp.ne.s32.totalorder %s54, %s70
      %p72 = scmp.eq.s32.totalorder %s32, 0
      %p73 = por %p71, %p72
      %s74 = ssub.s32 %s33, %s45
      %p75 = scmp.eq.s32.totalorder %s74, 0
      %s77 = sadd.s32 %s76, 1
      %s78 = scalar_select %p75, %s76, %s77
      %p81 = pneg %p75
      %p82 = scmp.eq.s32.totalorder %s26, 3
      %p83 = por %p81, %p82
      %p84 = scmp.ne.s32.totalorder %s76, %s79
      %p85 = scmp.eq.s32.totalorder %s26, 0
      %p86 = por %p84, %p85
      %p87 = scmp.ne.s32.totalorder %s76, %s79
      %p88 = scmp.eq.s32.totalorder %s31, 3
      %p89 = por %p87, %p88
      %p90 = scmp.ne.s32.totalorder %s79, %s80
      %p91 = scmp.eq.s32.totalorder %s31, 0
      %p92 = por %p90, %p91
      %p93 = scmp.ne.s32.totalorder %s79, %s80
      %p94 = scmp.eq.s32.totalorder %s32, 3
      %p95 = por %p93, %p94
      %p97 = scmp.ne.s32.totalorder %s80, %s96
      %p98 = scmp.eq.s32.totalorder %s32, 0
      %p99 = por %p97, %p98
      %s100 = ssub.s32 %s33, %s45
      %p101 = scmp.eq.s32.totalorder %s100, 0
      %s103 = sadd.s32 %s102, 1
      %s104 = scalar_select %p101, %s102, %s103
      %p107 = pneg %p101
      %p108 = scmp.eq.s32.totalorder %s26, 3
      %p109 = por %p107, %p108
      %p110 = scmp.ne.s32.totalorder %s102, %s105
      %p111 = scmp.eq.s32.totalorder %s26, 0
      %p112 = por %p110, %p111
      %p113 = scmp.ne.s32.totalorder %s102, %s105
      %p114 = scmp.eq.s32.totalorder %s31, 3
      %p115 = por %p113, %p114
      %p116 = scmp.ne.s32.totalorder %s105, %s106
      %p117 = scmp.eq.s32.totalorder %s31, 0
      %p118 = por %p116, %p117
      %p119 = scmp.ne.s32.totalorder %s105, %s106
      %p120 = scmp.eq.s32.totalorder %s32, 3
      %p121 = por %p119, %p120
      %p123 = scmp.ne.s32.totalorder %s106, %s122
      %p124 = scmp.eq.s32.totalorder %s32, 0
      %p125 = por %p123, %p124
      %s127 = sadd.s32 %s126, 1
      %p130 = scmp.eq.s32.totalorder %s26, 3
      %p131 = scmp.ne.s32.totalorder %s126, %s128
      %p132 = scmp.eq.s32.totalorder %s26, 0
      %p133 = por %p131, %p132
      %p134 = scmp.ne.s32.totalorder %s126, %s128
      %p135 = scmp.eq.s32.totalorder %s31, 3
      %p136 = por %p134, %p135
      %p137 = scmp.ne.s32.totalorder %s128, %s129
      %p138 = scmp.eq.s32.totalorder %s31, 0
      %p139 = por %p137, %p138
      %p140 = scmp.ne.s32.totalorder %s128, %s129
      %p141 = scmp.eq.s32.totalorder %s32, 3
      %p142 = por %p140, %p141
      %p144 = scmp.ne.s32.totalorder %s129, %s143
      %p145 = scmp.eq.s32.totalorder %s32, 0
      %p146 = por %p144, %p145
      %s148 = sadd.s32 %s147, 1
      %p151 = scmp.eq.s32.totalorder %s26, 3
      %p152 = scmp.ne.s32.totalorder %s147, %s149
      %p153 = scmp.eq.s32.totalorder %s26, 0
      %p154 = por %p152, %p153
      %p155 = scmp.ne.s32.totalorder %s147, %s149
      %p156 = scmp.eq.s32.totalorder %s31, 3
      %p157 = por %p155, %p156
      %p158 = scmp.ne.s32.totalorder %s149, %s150
      %p159 = scmp.eq.s32.totalorder %s31, 0
      %p160 = por %p158, %p159
      %p161 = scmp.ne.s32.totalorder %s149, %s150
      %p162 = scmp.eq.s32.totalorder %s32, 3
      %p163 = por %p161, %p162
      %p165 = scmp.ne.s32.totalorder %s150, %s164
      %p166 = scmp.eq.s32.totalorder %s32, 0
      %p167 = por %p165, %p166
      %s169 = sadd.s32 %s168, 1
      %p172 = scmp.eq.s32.totalorder %s26, 3
      %p173 = scmp.ne.s32.totalorder %s168, %s170
      %p174 = scmp.eq.s32.totalorder %s26, 0
      %p175 = por %p173, %p174
      %p176 = scmp.ne.s32.totalorder %s168, %s170
      %p177 = scmp.eq.s32.totalorder %s31, 3
      %p178 = por %p176, %p177
      %p179 = scmp.ne.s32.totalorder %s170, %s171
      %p180 = scmp.eq.s32.totalorder %s31, 0
      %p181 = por %p179, %p180
      %p182 = scmp.ne.s32.totalorder %s170, %s171
      %p183 = scmp.eq.s32.totalorder %s32, 3
      %p184 = por %p182, %p183
      %p186 = scmp.ne.s32.totalorder %s171, %s185
      %p187 = scmp.eq.s32.totalorder %s32, 0
      %p188 = por %p186, %p187
      %s190 = sadd.s32 %s189, 1
      %p193 = scmp.eq.s32.totalorder %s26, 3
      %p194 = scmp.ne.s32.totalorder %s189, %s191
      %p195 = scmp.eq.s32.totalorder %s26, 0
      %p196 = por %p194, %p195
      %p197 = scmp.ne.s32.totalorder %s189, %s191
      %p198 = scmp.eq.s32.totalorder %s31, 3
      %p199 = por %p197, %p198
      %p200 = scmp.ne.s32.totalorder %s191, %s192
      %p201 = scmp.eq.s32.totalorder %s31, 0
      %p202 = por %p200, %p201
      %p203 = scmp.ne.s32.totalorder %s191, %s192
      %p204 = scmp.eq.s32.totalorder %s32, 3
      %p205 = por %p203, %p204
      %p207 = scmp.ne.s32.totalorder %s192, %s206
      %p208 = scmp.eq.s32.totalorder %s32, 0
      %p209 = por %p207, %p208
      %s211 = sadd.s32 %s210, 1
      %p214 = scmp.eq.s32.totalorder %s26, 3
      %p215 = scmp.ne.s32.totalorder %s210, %s212
      %p216 = scmp.eq.s32.totalorder %s26, 0
      %p217 = por %p215, %p216
      %p218 = scmp.ne.s32.totalorder %s210, %s212
      %p219 = scmp.eq.s32.totalorder %s31, 3
      %p220 = por %p218, %p219
      %p221 = scmp.ne.s32.totalorder %s212, %s213
      %p222 = scmp.eq.s32.totalorder %s31, 0
      %p223 = por %p221, %p222
      %p224 = scmp.ne.s32.totalorder %s212, %s213
      %p225 = scmp.eq.s32.totalorder %s32, 3
      %p226 = por %p224, %p225
      %p228 = scmp.ne.s32.totalorder %s213, %s227
      %p229 = scmp.eq.s32.totalorder %s32, 0
      %p230 = por %p228, %p229
      %s232 = sadd.s32 %s231, 1
      %p235 = scmp.eq.s32.totalorder %s26, 3
      %p236 = scmp.ne.s32.totalorder %s231, %s233
      %p237 = scmp.eq.s32.totalorder %s26, 0
      %p238 = por %p236, %p237
      %p239 = scmp.ne.s32.totalorder %s231, %s233
      %p240 = scmp.eq.s32.totalorder %s31, 3
      %p241 = por %p239, %p240
      %p242 = scmp.ne.s32.totalorder %s233, %s234
      %p243 = scmp.eq.s32.totalorder %s31, 0
      %p244 = por %p242, %p243
      %p245 = scmp.ne.s32.totalorder %s233, %s234
      %p246 = scmp.eq.s32.totalorder %s32, 3
      %p247 = por %p245, %p246
      %p249 = scmp.ne.s32.totalorder %s234, %s248
      %p250 = scmp.eq.s32.totalorder %s32, 0
      %p251 = por %p249, %p250
      %s253 = sadd.s32 %s252, 1
      %p256 = scmp.eq.s32.totalorder %s26, 3
      %p257 = scmp.ne.s32.totalorder %s252, %s254
      %p258 = scmp.eq.s32.totalorder %s26, 0
      %p259 = por %p257, %p258
      %p260 = scmp.ne.s32.totalorder %s252, %s254
      %p261 = scmp.eq.s32.totalorder %s31, 3
      %p262 = por %p260, %p261
      %p263 = scmp.ne.s32.totalorder %s254, %s255
      %p264 = scmp.eq.s32.totalorder %s31, 0
      %p265 = por %p263, %p264
      %p266 = scmp.ne.s32.totalorder %s254, %s255
      %p267 = scmp.eq.s32.totalorder %s32, 3
      %p268 = por %p266, %p267
      %p270 = scmp.ne.s32.totalorder %s255, %s269
      %p271 = scmp.eq.s32.totalorder %s32, 0
      %p272 = por %p270, %p271
      %s274 = sadd.s32 %s273, 1
      %p277 = scmp.eq.s32.totalorder %s26, 3
      %p278 = scmp.ne.s32.totalorder %s273, %s275
      %p279 = scmp.eq.s32.totalorder %s26, 0
      %p280 = por %p278, %p279
      %p281 = scmp.ne.s32.totalorder %s273, %s275
      %p282 = scmp.eq.s32.totalorder %s31, 3
      %p283 = por %p281, %p282
      %p284 = scmp.ne.s32.totalorder %s275, %s276
      %p285 = scmp.eq.s32.totalorder %s31, 0
      %p286 = por %p284, %p285
      %p287 = scmp.ne.s32.totalorder %s275, %s276
      %p288 = scmp.eq.s32.totalorder %s32, 3
      %p289 = por %p287, %p288
      %p291 = scmp.ne.s32.totalorder %s276, %s290
      %p292 = scmp.eq.s32.totalorder %s32, 0
      %p293 = por %p291, %p292
      %s295 = sadd.s32 %s294, 1
      %p298 = scmp.eq.s32.totalorder %s26, 3
      %p299 = scmp.ne.s32.totalorder %s294, %s296
      %p300 = scmp.eq.s32.totalorder %s26, 0
      %p301 = por %p299, %p300
      %p302 = scmp.ne.s32.totalorder %s294, %s296
      %p303 = scmp.eq.s32.totalorder %s31, 3
      %p304 = por %p302, %p303
      %p305 = scmp.ne.s32.totalorder %s296, %s297
      %p306 = scmp.eq.s32.totalorder %s31, 0
      %p307 = por %p305, %p306
      %p308 = scmp.ne.s32.totalorder %s296, %s297
      %p309 = scmp.eq.s32.totalorder %s32, 3
      %p310 = por %p308, %p309
      %p312 = scmp.ne.s32.totalorder %s297, %s311
      %p313 = scmp.eq.s32.totalorder %s32, 0
      %p314 = por %p312, %p313
      %s316 = sadd.s32 %s315, 1
      %p319 = scmp.eq.s32.totalorder %s26, 3
      %p320 = scmp.ne.s32.totalorder %s315, %s317
      %p321 = scmp.eq.s32.totalorder %s26, 0
      %p322 = por %p320, %p321
      %p323 = scmp.ne.s32.totalorder %s315, %s317
      %p324 = scmp.eq.s32.totalorder %s31, 3
      %p325 = por %p323, %p324
      %p326 = scmp.ne.s32.totalorder %s317, %s318
      %p327 = scmp.eq.s32.totalorder %s31, 0
      %p328 = por %p326, %p327
      %p329 = scmp.ne.s32.totalorder %s317, %s318
      %p330 = scmp.eq.s32.totalorder %s32, 3
      %p331 = por %p329, %p330
      %p333 = scmp.ne.s32.totalorder %s318, %s332
      %p334 = scmp.eq.s32.totalorder %s32, 0
      %p335 = por %p333, %p334
      %s337 = sadd.s32 %s336, 1
      %p340 = scmp.eq.s32.totalorder %s26, 3
      %p341 = scmp.ne.s32.totalorder %s336, %s338
      %p342 = scmp.eq.s32.totalorder %s26, 0
      %p343 = por %p341, %p342
      %p344 = scmp.ne.s32.totalorder %s336, %s338
      %p345 = scmp.eq.s32.totalorder %s31, 3
      %p346 = por %p344, %p345
      %p347 = scmp.ne.s32.totalorder %s338, %s339
      %p348 = scmp.eq.s32.totalorder %s31, 0
      %p349 = por %p347, %p348
      %p350 = scmp.ne.s32.totalorder %s338, %s339
      %p351 = scmp.eq.s32.totalorder %s32, 3
      %p352 = por %p350, %p351
      %p354 = scmp.ne.s32.totalorder %s339, %s353
      %p355 = scmp.eq.s32.totalorder %s32, 0
      %p356 = por %p354, %p355
      %s358 = sadd.s32 %s357, 1
      %p361 = scmp.eq.s32.totalorder %s26, 3
      %p362 = scmp.ne.s32.totalorder %s357, %s359
      %p363 = scmp.eq.s32.totalorder %s26, 0
      %p364 = por %p362, %p363
      %p365 = scmp.ne.s32.totalorder %s357, %s359
      %p366 = scmp.eq.s32.totalorder %s31, 3
      %p367 = por %p365, %p366
      %p368 = scmp.ne.s32.totalorder %s359, %s360
      %p369 = scmp.eq.s32.totalorder %s31, 0
      %p370 = por %p368, %p369
      %p371 = scmp.ne.s32.totalorder %s359, %s360
      %p372 = scmp.eq.s32.totalorder %s32, 3
      %p373 = por %p371, %p372
      %p375 = scmp.ne.s32.totalorder %s360, %s374
      %p376 = scmp.eq.s32.totalorder %s32, 0
      %p377 = por %p375, %p376
      %s378 = ssub.s32 %s33, %s45
      %s379 = ssub.s32 %s34, %s41
      %s380 = sor.u32 %s378, %s379
      %p381 = scmp.eq.s32.totalorder %s380, 0
      %s383 = sadd.s32 %s382, 1
      %s384 = scalar_select %p381, %s382, %s383
      %p387 = pneg %p381
      %p388 = scmp.eq.s32.totalorder %s26, 3
      %p389 = por %p387, %p388
      %p390 = scmp.ne.s32.totalorder %s382, %s385
      %p391 = scmp.eq.s32.totalorder %s26, 0
      %p392 = por %p390, %p391
      %p393 = scmp.ne.s32.totalorder %s382, %s385
      %p394 = scmp.eq.s32.totalorder %s31, 3
      %p395 = por %p393, %p394
      %p396 = scmp.ne.s32.totalorder %s385, %s386
      %p397 = scmp.eq.s32.totalorder %s31, 0
      %p398 = por %p396, %p397
      %p399 = scmp.ne.s32.totalorder %s385, %s386
      %p400 = scmp.eq.s32.totalorder %s32, 3
      %p401 = por %p399, %p400
      %p403 = scmp.ne.s32.totalorder %s386, %s402
      %p404 = scmp.eq.s32.totalorder %s32, 0
      %p405 = por %p403, %p404
      %p406 = scmp.le.s32.totalorder 1, %s26
      %p407 = scmp.lt.s32.totalorder %s26, 5
      %p408 = pnand %p406, %p407
      %p409 = pneg %p408
      // Predicated region
      $region9: #{tpu_custom_call.1} parent=5 // pred_check
        _
      $region10: #{tpu_custom_call.1} parent=5 // pred_check_branch
        %411 = sbr.rel (%p408) target = $region12
      $region11: #{tpu_custom_call.1} parent=5 // pred_region
        %s412 = ssub.s32 %s26, 1
        // Predicated region
        $region13: #{tpu_custom_call.1} parent=11 // pred_check
          %p413 = pneg %p139
        $region14: #{tpu_custom_call.1} parent=11 // pred_check_branch
          %415 = sbr.rel (%p413) target = $region16
        $region15: #{tpu_custom_call.1} parent=11 // pred_region
          %s417 = ssub.s32 16, 16
          %418 = vsyncadd [#allocation3], %s417
          %s420 = sshll.u32 [#allocation2], 4
          %s421 = int_to_ptr.vmem [resolvable:$true] %s420
          %423 = dma.hbm_to_vmem [thread:$0]  %s3, 16, %s421, [#allocation3]
        $region16: #{tpu_custom_call.1} parent=11 // pred_fallthru
          _
        // Predicated region
        $region17: #{tpu_custom_call.1} parent=11 // pred_check
          %p424 = pneg %p160
        $region18: #{tpu_custom_call.1} parent=11 // pred_check_branch
          %426 = sbr.rel (%p424) target = $region20
        $region19: #{tpu_custom_call.1} parent=11 // pred_region
          %s428 = ssub.s32 16, 16
          %429 = vsyncadd [#allocation6], %s428
          %s431 = sshll.u32 [#allocation5], 4
          %s432 = int_to_ptr.vmem [resolvable:$true] %s431
          %434 = dma.hbm_to_vmem [thread:$0]  %s4, 16, %s432, [#allocation6]
        $region20: #{tpu_custom_call.1} parent=11 // pred_fallthru
          _
        // Predicated region
        $region21: #{tpu_custom_call.1} parent=11 // pred_check
          %p435 = pneg %p181
        $region22: #{tpu_custom_call.1} parent=11 // pred_check_branch
          %437 = sbr.rel (%p435) target = $region24
        $region23: #{tpu_custom_call.1} parent=11 // pred_region
          _
        $region24: #{tpu_custom_call.1} parent=11 // pred_fallthru
          _
        // Predicated region
        $region25: #{tpu_custom_call.1} parent=11 // pred_check
          %p438 = pneg %p202
        $region26: #{tpu_custom_call.1} parent=11 // pred_check_branch
          %440 = sbr.rel (%p438) target = $region28
        $region27: #{tpu_custom_call.1} parent=11 // pred_region
          %s442 = ssub.s32 16, 16
          %443 = vsyncadd [#allocation6], %s442
          %s445 = sshll.u32 [#allocation7], 4
          %s446 = int_to_ptr.vmem [resolvable:$true] %s445
          %448 = dma.hbm_to_vmem [thread:$0]  %s6, 16, %s446, [#allocation6]
        $region28: #{tpu_custom_call.1} parent=11 // pred_fallthru
          _
        // Predicated region
        $region29: #{tpu_custom_call.1} parent=11 // pred_check
          %p449 = pneg %p223
        $region30: #{tpu_custom_call.1} parent=11 // pred_check_branch
          %451 = sbr.rel (%p449) target = $region32
        $region31: #{tpu_custom_call.1} parent=11 // pred_region
          _
        $region32: #{tpu_custom_call.1} parent=11 // pred_fallthru
          _
        // Predicated region
        $region33: #{tpu_custom_call.1} parent=11 // pred_check
          %p452 = pneg %p244
        $region34: #{tpu_custom_call.1} parent=11 // pred_check_branch
          %454 = sbr.rel (%p452) target = $region36
        $region35: #{tpu_custom_call.1} parent=11 // pred_region
          _
        $region36: #{tpu_custom_call.1} parent=11 // pred_fallthru
          _
        // Predicated region
        $region37: #{tpu_custom_call.1} parent=11 // pred_check
          %p455 = pneg %p265
        $region38: #{tpu_custom_call.1} parent=11 // pred_check_branch
          %457 = sbr.rel (%p455) target = $region40
        $region39: #{tpu_custom_call.1} parent=11 // pred_region
          _
        $region40: #{tpu_custom_call.1} parent=11 // pred_fallthru
          _
        // Predicated region
        $region41: #{tpu_custom_call.1} parent=11 // pred_check
          %p458 = pneg %p286
        $region42: #{tpu_custom_call.1} parent=11 // pred_check_branch
          %460 = sbr.rel (%p458) target = $region44
        $region43: #{tpu_custom_call.1} parent=11 // pred_region
          _
        $region44: #{tpu_custom_call.1} parent=11 // pred_fallthru
          _
        // Predicated region
        $region45: #{tpu_custom_call.1} parent=11 // pred_check
          %p461 = pneg %p307
        $region46: #{tpu_custom_call.1} parent=11 // pred_check_branch
          %463 = sbr.rel (%p461) target = $region48
        $region47: #{tpu_custom_call.1} parent=11 // pred_region
          _
        $region48: #{tpu_custom_call.1} parent=11 // pred_fallthru
          _
        // Predicated region
        $region49: #{tpu_custom_call.1} parent=11 // pred_check
          %p464 = pneg %p328
        $region50: #{tpu_custom_call.1} parent=11 // pred_check_branch
          %466 = sbr.rel (%p464) target = $region52
        $region51: #{tpu_custom_call.1} parent=11 // pred_region
          _
        $region52: #{tpu_custom_call.1} parent=11 // pred_fallthru
          _
        // Predicated region
        $region53: #{tpu_custom_call.1} parent=11 // pred_check
          %p467 = pneg %p349
        $region54: #{tpu_custom_call.1} parent=11 // pred_check_branch
          %469 = sbr.rel (%p467) target = $region56
        $region55: #{tpu_custom_call.1} parent=11 // pred_region
          _
        $region56: #{tpu_custom_call.1} parent=11 // pred_fallthru
          _
        // Predicated region
        $region57: #{tpu_custom_call.1} parent=11 // pred_check
          %p470 = pneg %p370
        $region58: #{tpu_custom_call.1} parent=11 // pred_check_branch
          %472 = sbr.rel (%p470) target = $region60
        $region59: #{tpu_custom_call.1} parent=11 // pred_region
          _
        $region60: #{tpu_custom_call.1} parent=11 // pred_fallthru
          _
      $region12: #{tpu_custom_call.1} parent=5 // pred_fallthru
        _
      %p473 = scmp.lt.s32.totalorder %s26, 4
      // Predicated region
      $region61: #{tpu_custom_call.1} parent=5 // pred_check
        %p474 = pneg %p473
      $region62: #{tpu_custom_call.1} parent=5 // pred_check_branch
        %476 = sbr.rel (%p474) target = $region64
      $region63: #{tpu_custom_call.1} parent=5 // pred_region
        // Predicated region
        $region65: #{tpu_custom_call.1} parent=63 // pred_check
          %p477 = pneg %p60
        $region66: #{tpu_custom_call.1} parent=63 // pred_check_branch
          %479 = sbr.rel (%p477) target = $region68
        $region67: #{tpu_custom_call.1} parent=63 // pred_region
          %s480 = smul.u32 16, %s34
          %p481 = scmp.lt.s32.totalorder %s33, 1
          %s482 = scalar_select %p481, %s33, 1
          %p483 = scmp.lt.s32.totalorder %s480, 31
          %s484 = scalar_select %p483, %s480, 31
          %s485 = smul.addr %s482, 32
          %s486 = sadd.s32 %s484, %s485
          %s487 = smul.addr %s486, 8
          %s488 = scalar_lea.vmem %s0, %s487
          %s489 = smul.u32 16, %s34
        $region68: #{tpu_custom_call.1} parent=63 // pred_fallthru
          _
        // Predicated region
        $region69: #{tpu_custom_call.1} parent=63 // pred_check
          %p490 = pneg %p86
        $region70: #{tpu_custom_call.1} parent=63 // pred_check_branch
          %492 = sbr.rel (%p490) target = $region72
        $region71: #{tpu_custom_call.1} parent=63 // pred_region
          %p493 = scmp.lt.s32.totalorder %s33, 1
          %s494 = scalar_select %p493, %s33, 1
          %s495 = smul.addr %s494, 64
          %s496 = smul.addr %s495, 4
          %s497 = scalar_lea.vmem %s1, %s496
        $region72: #{tpu_custom_call.1} parent=63 // pred_fallthru
          _
        // Predicated region
        $region73: #{tpu_custom_call.1} parent=63 // pred_check
          %p498 = pneg %p112
        $region74: #{tpu_custom_call.1} parent=63 // pred_check_branch
          %500 = sbr.rel (%p498) target = $region76
        $region75: #{tpu_custom_call.1} parent=63 // pred_region
          %p501 = scmp.lt.s32.totalorder %s33, 1
          %s502 = scalar_select %p501, %s33, 1
          %s503 = smul.addr %s502, 64
          %s504 = smul.addr %s503, 4
          %s505 = scalar_lea.vmem %s2, %s504
        $region76: #{tpu_custom_call.1} parent=63 // pred_fallthru
          _
      $region64: #{tpu_custom_call.1} parent=5 // pred_fallthru
        _
      %p506 = scmp.le.s32.totalorder 1, %s26
      %p507 = scmp.lt.s32.totalorder %s26, 5
      %p508 = pnand %p506, %p507
      %p509 = pneg %p508
      // Predicated region
      $region77: #{tpu_custom_call.1} parent=5 // pred_check
        _
      $region78: #{tpu_custom_call.1} parent=5 // pred_check_branch
        %511 = sbr.rel (%p508) target = $region80
      $region79: #{tpu_custom_call.1} parent=5 // pred_region
        %s512 = ssub.s32 %s26, 1
        // Predicated region
        $region81: #{tpu_custom_call.1} parent=79 // pred_check
          %p513 = pneg %p139
        $region82: #{tpu_custom_call.1} parent=79 // pred_check_branch
          %515 = sbr.rel (%p513) target = $region84
        $region83: #{tpu_custom_call.1} parent=79 // pred_region
          %516 = dma.done [#allocation3], 16
        $region84: #{tpu_custom_call.1} parent=79 // pred_fallthru
          _
        // Predicated region
        $region85: #{tpu_custom_call.1} parent=79 // pred_check
          %p517 = pneg %p160
        $region86: #{tpu_custom_call.1} parent=79 // pred_check_branch
          %519 = sbr.rel (%p517) target = $region88
        $region87: #{tpu_custom_call.1} parent=79 // pred_region
          %520 = dma.done [#allocation6], 16
        $region88: #{tpu_custom_call.1} parent=79 // pred_fallthru
          _
        // Predicated region
        $region89: #{tpu_custom_call.1} parent=79 // pred_check
          %p521 = pneg %p202
        $region90: #{tpu_custom_call.1} parent=79 // pred_check_branch
          %523 = sbr.rel (%p521) target = $region92
        $region91: #{tpu_custom_call.1} parent=79 // pred_region
          %524 = dma.done [#allocation6], 16
        $region92: #{tpu_custom_call.1} parent=79 // pred_fallthru
          _
        %s525 = smul.u32 16, %s36
        %p526 = scmp.lt.s32.totalorder %s35, 1
        %s527 = scalar_select %p526, %s35, 1
        %p528 = scmp.lt.s32.totalorder %s525, 31
        %s529 = scalar_select %p528, %s525, 31
        %s530 = smul.addr %s527, 32
        %s531 = sadd.s32 %s529, %s530
        %s532 = smul.addr %s531, 8
        %s533 = scalar_lea.vmem %s0, %s532
        %p534 = pneg %p66
        %p535 = pneg %p63
        %p536 = scmp.lt.s32.totalorder %s35, 1
        %s537 = scalar_select %p536, %s35, 1
        %s538 = smul.addr %s537, 64
        %s539 = smul.addr %s538, 4
        %s540 = scalar_lea.vmem %s1, %s539
        %p541 = pneg %p92
        %p542 = pneg %p89
        %p543 = scmp.lt.s32.totalorder %s35, 1
        %s544 = scalar_select %p543, %s35, 1
        %s545 = smul.addr %s544, 64
        %s546 = smul.addr %s545, 4
        %s547 = scalar_lea.vmem %s2, %s546
        %p548 = pneg %p118
        %p549 = pneg %p115
        %p550 = pneg %p139
        %p551 = pneg %p136
        %p552 = pneg %p160
        %p553 = pneg %p157
        %p554 = pneg %p181
        %p555 = pneg %p178
        %p556 = pneg %p202
        %p557 = pneg %p199
        %p558 = pneg %p223
        %p559 = pneg %p220
        %p560 = pneg %p244
        %p561 = pneg %p241
        %p562 = pneg %p265
        %p563 = pneg %p262
        %p564 = pneg %p286
        %p565 = pneg %p283
        %p566 = pneg %p307
        %p567 = pneg %p304
        %p568 = pneg %p328
        %p569 = pneg %p325
        %p570 = pneg %p349
        %p571 = pneg %p346
        %p572 = pneg %p370
        %p573 = pneg %p367
        %p574 = pneg %p398
        %p575 = pneg %p395
        %s576 = sand.u32 %s385, 1
        %s577 = scalar_lea.sflag [#allocation4], %s576
        %s578 = sand.u32 %s385, 1
        %s579 = smul.addr %s578, 128
        %s580 = scalar_lea.vmem [#allocation8], %s579
        %s581 = smul.u32 16, %s36
        %p582 = scmp.lt.s32.totalorder %s35, 1
        %s583 = scalar_select %p582, %s35, 1
        %p584 = scmp.lt.s32.totalorder %s581, 31
        %s585 = scalar_select %p584, %s581, 31
        %s586 = smul.addr %s583, 32
        %s587 = sadd.s32 %s585, %s586
        %s588 = smul.addr %s587, 8
        %s589 = scalar_lea.vmem %s0, %s588
        %s590 = smul.u32 16, %s36
        %p591 = scmp.lt.s32.totalorder %s35, 1
        %s592 = scalar_select %p591, %s35, 1
        %s593 = smul.addr %s592, 64
        %s594 = smul.addr %s593, 4
        %s595 = scalar_lea.vmem %s1, %s594
        %p596 = scmp.lt.s32.totalorder %s35, 1
        %s597 = scalar_select %p596, %s35, 1
        %s598 = smul.addr %s597, 64
        %s599 = smul.addr %s598, 4
        %s600 = scalar_lea.vmem %s2, %s599
        %s601 = smul.u32 16, %s36
        %v603 = vld [vmem:[%s589] sm:$0xff]
        %v604 = vld [vmem:[%s589 + $0x8] sm:$0xff]
        %v605 = vld [vmem:[%s589 + $0x10] sm:$0xff]
        %v606 = vld [vmem:[%s589 + $0x18] sm:$0xff]
        %v607 = vld [vmem:[%s589 + $0x20] sm:$0xff]
        %v608 = vld [vmem:[%s589 + $0x28] sm:$0xff]
        %v609 = vld [vmem:[%s589 + $0x30] sm:$0xff]
        %v610 = vld [vmem:[%s589 + $0x38] sm:$0xff]
        %v611 = vld [vmem:[%s589 + $0x40] sm:$0xff]
        %v612 = vld [vmem:[%s589 + $0x48] sm:$0xff]
        %v613 = vld [vmem:[%s589 + $0x50] sm:$0xff]
        %v614 = vld [vmem:[%s589 + $0x58] sm:$0xff]
        %v615 = vld [vmem:[%s589 + $0x60] sm:$0xff]
        %v616 = vld [vmem:[%s589 + $0x68] sm:$0xff]
        %v617 = vld [vmem:[%s589 + $0x70] sm:$0xff]
        %v618 = vld [vmem:[%s589 + $0x78] sm:$0xff]
        %v619 = vld [vmem:[#allocation2] sm:$0x1]
        %v620 = vld [vmem:[#allocation5] sm:$0x1]
        %621 = vadd.xlane.f32.xlu0 %v603
        %v622 = vpop.xlane.xlu0 %621
        %623 = vadd.xlane.f32.xlu0 %v604
        %v624 = vpop.xlane.xlu0 %623
        %625 = vadd.xlane.f32.xlu0 %v605
        %v626 = vpop.xlane.xlu0 %625
        %627 = vadd.xlane.f32.xlu0 %v606
        %v628 = vpop.xlane.xlu0 %627
        %629 = vadd.xlane.f32.xlu0 %v607
        %v630 = vpop.xlane.xlu0 %629
        %631 = vadd.xlane.f32.xlu0 %v608
        %v632 = vpop.xlane.xlu0 %631
        %633 = vadd.xlane.f32.xlu0 %v609
        %v634 = vpop.xlane.xlu0 %633
        %635 = vadd.xlane.f32.xlu0 %v610
        %v636 = vpop.xlane.xlu0 %635
        %637 = vadd.xlane.f32.xlu0 %v611
        %v638 = vpop.xlane.xlu0 %637
        %639 = vadd.xlane.f32.xlu0 %v612
        %v640 = vpop.xlane.xlu0 %639
        %641 = vadd.xlane.f32.xlu0 %v613
        %v642 = vpop.xlane.xlu0 %641
        %643 = vadd.xlane.f32.xlu0 %v614
        %v644 = vpop.xlane.xlu0 %643
        %645 = vadd.xlane.f32.xlu0 %v615
        %v646 = vpop.xlane.xlu0 %645
        %647 = vadd.xlane.f32.xlu0 %v616
        %v648 = vpop.xlane.xlu0 %647
        %649 = vadd.xlane.f32.xlu0 %v617
        %v650 = vpop.xlane.xlu0 %649
        %651 = vadd.xlane.f32.xlu0 %v618
        %v652 = vpop.xlane.xlu0 %651
        %v653 = vrcp.pop 128.0
        %v654 = vmul.f32 %v622, %v653
        %v655 = vmul.f32 %v624, %v653
        %v656 = vmul.f32 %v626, %v653
        %v657 = vmul.f32 %v628, %v653
        %v658 = vmul.f32 %v630, %v653
        %v659 = vmul.f32 %v632, %v653
        %v660 = vmul.f32 %v634, %v653
        %v661 = vmul.f32 %v636, %v653
        %v662 = vmul.f32 %v638, %v653
        %v663 = vmul.f32 %v640, %v653
        %v664 = vmul.f32 %v642, %v653
        %v665 = vmul.f32 %v644, %v653
        %v666 = vmul.f32 %v646, %v653
        %v667 = vmul.f32 %v648, %v653
        %v668 = vmul.f32 %v650, %v653
        %v669 = vmul.f32 %v652, %v653
        %v670 = vsub.f32 %v603, %v654
        %v671 = vsub.f32 %v604, %v655
        %v672 = vsub.f32 %v605, %v656
        %v673 = vsub.f32 %v606, %v657
        %v674 = vsub.f32 %v607, %v658
        %v675 = vsub.f32 %v608, %v659
        %v676 = vsub.f32 %v609, %v660
        %v677 = vsub.f32 %v610, %v661
        %v678 = vsub.f32 %v611, %v662
        %v679 = vsub.f32 %v612, %v663
        %v680 = vsub.f32 %v613, %v664
        %v681 = vsub.f32 %v614, %v665
        %v682 = vsub.f32 %v615, %v666
        %v683 = vsub.f32 %v616, %v667
        %v684 = vsub.f32 %v617, %v668
        %v685 = vsub.f32 %v618, %v669
        %v686 = vmul.f32 %v670, %v670
        %v687 = vmul.f32 %v671, %v671
        %v688 = vmul.f32 %v672, %v672
        %v689 = vmul.f32 %v673, %v673
        %v690 = vmul.f32 %v674, %v674
        %v691 = vmul.f32 %v675, %v675
        %v692 = vmul.f32 %v676, %v676
        %v693 = vmul.f32 %v677, %v677
        %v694 = vmul.f32 %v678, %v678
        %v695 = vmul.f32 %v679, %v679
        %v696 = vmul.f32 %v680, %v680
        %v697 = vmul.f32 %v681, %v681
        %v698 = vmul.f32 %v682, %v682
        %v699 = vmul.f32 %v683, %v683
        %v700 = vmul.f32 %v684, %v684
        %v701 = vmul.f32 %v685, %v685
        %702 = vadd.xlane.f32.xlu0 %v686
        %v703 = vpop.xlane.xlu0 %702
        %704 = vadd.xlane.f32.xlu0 %v687
        %v705 = vpop.xlane.xlu0 %704
        %706 = vadd.xlane.f32.xlu0 %v688
        %v707 = vpop.xlane.xlu0 %706
        %708 = vadd.xlane.f32.xlu0 %v689
        %v709 = vpop.xlane.xlu0 %708
        %710 = vadd.xlane.f32.xlu0 %v690
        %v711 = vpop.xlane.xlu0 %710
        %712 = vadd.xlane.f32.xlu0 %v691
        %v713 = vpop.xlane.xlu0 %712
        %714 = vadd.xlane.f32.xlu0 %v692
        %v715 = vpop.xlane.xlu0 %714
        %716 = vadd.xlane.f32.xlu0 %v693
        %v717 = vpop.xlane.xlu0 %716
        %718 = vadd.xlane.f32.xlu0 %v694
        %v719 = vpop.xlane.xlu0 %718
        %720 = vadd.xlane.f32.xlu0 %v695
        %v721 = vpop.xlane.xlu0 %720
        %722 = vadd.xlane.f32.xlu0 %v696
        %v723 = vpop.xlane.xlu0 %722
        %724 = vadd.xlane.f32.xlu0 %v697
        %v725 = vpop.xlane.xlu0 %724
        %726 = vadd.xlane.f32.xlu0 %v698
        %v727 = vpop.xlane.xlu0 %726
        %728 = vadd.xlane.f32.xlu0 %v699
        %v729 = vpop.xlane.xlu0 %728
        %730 = vadd.xlane.f32.xlu0 %v700
        %v731 = vpop.xlane.xlu0 %730
        %732 = vadd.xlane.f32.xlu0 %v701
        %v733 = vpop.xlane.xlu0 %732
        %v734 = vmul.f32 %v703, %v653
        %v735 = vmul.f32 %v705, %v653
        %v736 = vmul.f32 %v707, %v653
        %v737 = vmul.f32 %v709, %v653
        %v738 = vmul.f32 %v711, %v653
        %v739 = vmul.f32 %v713, %v653
        %v740 = vmul.f32 %v715, %v653
        %v741 = vmul.f32 %v717, %v653
        %v742 = vmul.f32 %v719, %v653
        %v743 = vmul.f32 %v721, %v653
        %v744 = vmul.f32 %v723, %v653
        %v745 = vmul.f32 %v725, %v653
        %v746 = vmul.f32 %v727, %v653
        %v747 = vmul.f32 %v729, %v653
        %v748 = vmul.f32 %v731, %v653
        %v749 = vmul.f32 %v733, %v653
        %v750 = vadd.f32 %v734, 1e-06
        %v751 = vadd.f32 %v735, 1e-06
        %v752 = vadd.f32 %v736, 1e-06
        %v753 = vadd.f32 %v737, 1e-06
        %v754 = vadd.f32 %v738, 1e-06
        %v755 = vadd.f32 %v739, 1e-06
        %v756 = vadd.f32 %v740, 1e-06
        %v757 = vadd.f32 %v741, 1e-06
        %v758 = vadd.f32 %v742, 1e-06
        %v759 = vadd.f32 %v743, 1e-06
        %v760 = vadd.f32 %v744, 1e-06
        %v761 = vadd.f32 %v745, 1e-06
        %v762 = vadd.f32 %v746, 1e-06
        %v763 = vadd.f32 %v747, 1e-06
        %v764 = vadd.f32 %v748, 1e-06
        %v765 = vadd.f32 %v749, 1e-06
        %v766 = vrsqrt.pop %v750
        %v767 = vrsqrt.pop %v751
        %v768 = vrsqrt.pop %v752
        %v769 = vrsqrt.pop %v753
        %v770 = vrsqrt.pop %v754
        %v771 = vrsqrt.pop %v755
        %v772 = vrsqrt.pop %v756
        %v773 = vrsqrt.pop %v757
        %v774 = vrsqrt.pop %v758
        %v775 = vrsqrt.pop %v759
        %v776 = vrsqrt.pop %v760
        %v777 = vrsqrt.pop %v761
        %v778 = vrsqrt.pop %v762
        %v779 = vrsqrt.pop %v763
        %v780 = vrsqrt.pop %v764
        %v781 = vrsqrt.pop %v765
        %v782 = vmul.f32 %v670, %v766
        %v783 = vmul.f32 %v671, %v767
        %v784 = vmul.f32 %v672, %v768
        %v785 = vmul.f32 %v673, %v769
        %v786 = vmul.f32 %v674, %v770
        %v787 = vmul.f32 %v675, %v771
        %v788 = vmul.f32 %v676, %v772
        %v789 = vmul.f32 %v677, %v773
        %v790 = vmul.f32 %v678, %v774
        %v791 = vmul.f32 %v679, %v775
        %v792 = vmul.f32 %v680, %v776
        %v793 = vmul.f32 %v681, %v777
        %v794 = vmul.f32 %v682, %v778
        %v795 = vmul.f32 %v683, %v779
        %v796 = vmul.f32 %v684, %v780
        %v797 = vmul.f32 %v685, %v781
        %v799 = vlaneseq
        %v800 = vshrl.u32 %v799, 7
        %v801 = vsub.s32 0, %v800
        %v802 = vrot.slane %v619, %v801
        %v804 = vmul.f32 %v782, %v802
        %v805 = vmul.f32 %v783, %v802
        %v806 = vmul.f32 %v784, %v802
        %v807 = vmul.f32 %v785, %v802
        %v808 = vmul.f32 %v786, %v802
        %v809 = vmul.f32 %v787, %v802
        %v810 = vmul.f32 %v788, %v802
        %v811 = vmul.f32 %v789, %v802
        %v812 = vmul.f32 %v790, %v802
        %v813 = vmul.f32 %v791, %v802
        %v814 = vmul.f32 %v792, %v802
        %v815 = vmul.f32 %v793, %v802
        %v816 = vmul.f32 %v794, %v802
        %v817 = vmul.f32 %v795, %v802
        %v818 = vmul.f32 %v796, %v802
        %v819 = vmul.f32 %v797, %v802
        %v821 = vlaneseq
        %v822 = vshrl.u32 %v821, 7
        %v823 = vsub.s32 0, %v822
        %v824 = vrot.slane %v620, %v823
        %v826 = vadd.f32 %v804, %v824
        %v827 = vadd.f32 %v805, %v824
        %v828 = vadd.f32 %v806, %v824
        %v829 = vadd.f32 %v807, %v824
        %v830 = vadd.f32 %v808, %v824
        %v831 = vadd.f32 %v809, %v824
        %v832 = vadd.f32 %v810, %v824
        %v833 = vadd.f32 %v811, %v824
        %v834 = vadd.f32 %v812, %v824
        %v835 = vadd.f32 %v813, %v824
        %v836 = vadd.f32 %v814, %v824
        %v837 = vadd.f32 %v815, %v824
        %v838 = vadd.f32 %v816, %v824
        %v839 = vadd.f32 %v817, %v824
        %v840 = vadd.f32 %v818, %v824
        %v841 = vadd.f32 %v819, %v824
        %v842 = vpack.c.bf16 %v827, %v826
        %v843 = vpack.c.bf16 %v829, %v828
        %v844 = vpack.c.bf16 %v831, %v830
        %v845 = vpack.c.bf16 %v833, %v832
        %v846 = vpack.c.bf16 %v835, %v834
        %v847 = vpack.c.bf16 %v837, %v836
        %v848 = vpack.c.bf16 %v839, %v838
        %v849 = vpack.c.bf16 %v841, %v840
        %v850 = vld [vmem:[%s5] sm:$0xf]
        %v851 = vld [vmem:[%s5 + $0x4] sm:$0xf]
        %v852 = vld [vmem:[%s5 + $0x8] sm:$0xf]
        %v853 = vld [vmem:[%s5 + $0xc] sm:$0xf]
        %v854 = vld [vmem:[%s5 + $0x10] sm:$0xf]
        %v855 = vld [vmem:[%s5 + $0x14] sm:$0xf]
        %v856 = vld [vmem:[%s5 + $0x18] sm:$0xf]
        %v857 = vld [vmem:[%s5 + $0x1c] sm:$0xf]
        %v858 = vld [vmem:[%s5 + $0x20] sm:$0xf]
        %v859 = vld [vmem:[%s5 + $0x24] sm:$0xf]
        %v860 = vld [vmem:[%s5 + $0x28] sm:$0xf]
        %v861 = vld [vmem:[%s5 + $0x2c] sm:$0xf]
        %v862 = vld [vmem:[%s5 + $0x30] sm:$0xf]
        %v863 = vld [vmem:[%s5 + $0x34] sm:$0xf]
        %v864 = vld [vmem:[%s5 + $0x38] sm:$0xf]
        %v865 = vld [vmem:[%s5 + $0x3c] sm:$0xf]
        %v866 = vld [vmem:[#allocation7] sm:$0x1]
        %v868 = vlaneseq
        %v869 = vshrl.u32 %v868, 7
        %v870 = vsub.s32 0, %v869
        %v871 = vrot.slane %v866, %v870
        %v889 = vunpack.c.l.b16 %v850
        %v890 = vunpack.c.l.b16 %v851
        %v891 = vunpack.c.l.b16 %v852
        %v892 = vunpack.c.l.b16 %v853
        %v893 = vunpack.c.l.b16 %v854
        %v894 = vunpack.c.l.b16 %v855
        %v895 = vunpack.c.l.b16 %v856
        %v896 = vunpack.c.l.b16 %v857
        %v897 = vunpack.c.l.b16 %v858
        %v898 = vunpack.c.l.b16 %v859
        %v899 = vunpack.c.l.b16 %v860
        %v900 = vunpack.c.l.b16 %v861
        %v901 = vunpack.c.l.b16 %v862
        %v902 = vunpack.c.l.b16 %v863
        %v903 = vunpack.c.l.b16 %v864
        %v904 = vunpack.c.l.b16 %v865
        %v905 = vpack.c.b16 %v890, %v889
        %v906 = vpack.c.b16 %v892, %v891
        %v907 = vpack.c.b16 %v894, %v893
        %v908 = vpack.c.b16 %v896, %v895
        %v909 = vpack.c.b16 %v898, %v897
        %v910 = vpack.c.b16 %v900, %v899
        %v911 = vpack.c.b16 %v902, %v901
        %v912 = vpack.c.b16 %v904, %v903
        %921 = vmatprep.subr.bf16.mxu0 0
        %922 = vmatpush1.bf16.msra.mxu0 %v912
        %923 = vmatprep.subr.bf16.mxu0 0
        %924 = vmatpush1.bf16.msra.mxu0 %v911
        %925 = vmatprep.subr.bf16.mxu0 0
        %926 = vmatpush1.bf16.msra.mxu0 %v910
        %927 = vmatprep.subr.bf16.mxu0 0
        %928 = vmatpush1.bf16.msra.mxu0 %v909
        %929 = vmatprep.subr.bf16.mxu0 0
        %930 = vmatpush1.bf16.msra.mxu0 %v908
        %931 = vmatprep.subr.bf16.mxu0 0
        %932 = vmatpush1.bf16.msra.mxu0 %v907
        %933 = vmatprep.subr.bf16.mxu0 0
        %934 = vmatpush1.bf16.msra.mxu0 %v906
        %935 = vmatprep.subr.bf16.mxu0 0
        %936 = vmatpush1.bf16.msra.mxu0 %v905
        %937 = vmatprep.subr.bf16.mxu0 0
        %938 = vmatpush2.bf16.msra.mxu0 0
        %939 = vmatprep.subr.bf16.mxu0 0
        %940 = vmatpush2.bf16.msra.mxu0 0
        %941 = vmatprep.subr.bf16.mxu0 0
        %942 = vmatpush2.bf16.msra.mxu0 0
        %943 = vmatprep.subr.bf16.mxu0 0
        %944 = vmatpush2.bf16.msra.mxu0 0
        %945 = vmatprep.subr.bf16.mxu0 0
        %946 = vmatpush2.bf16.msra.mxu0 0
        %947 = vmatprep.subr.bf16.mxu0 0
        %948 = vmatpush2.bf16.msra.mxu0 0
        %949 = vmatprep.subr.bf16.mxu0 0
        %950 = vmatpush2.bf16.msra.mxu0 0
        %951 = vmatprep.subr.bf16.mxu0 0
        %952 = vmatpush2.bf16.msra.mxu0 0
        %953 = vmatprep.mubr.bf16.mxu0 0
        %954 = vmatmul.mubr.bf16.gmra.mxu0 %v842
        %v955 = vpop.f32.mrf.mxu0
        %v956 = vadd.f32 %v871, %v955
        %v957 = vpop.f32.mrf.mxu0
        %v958 = vpop.f32.mrf.mxu0
        %v959 = vadd.f32 %v871, %v958
        %v960 = vpop.f32.mrf.mxu0
        %961 = vmatprep.mubr.bf16.mxu0 0
        %962 = vmatmul.mubr.bf16.gmra.mxu0 %v843
        %v963 = vpop.f32.mrf.mxu0
        %v964 = vadd.f32 %v871, %v963
        %v965 = vpop.f32.mrf.mxu0
        %v966 = vpop.f32.mrf.mxu0
        %v967 = vadd.f32 %v871, %v966
        %v968 = vpop.f32.mrf.mxu0
        %969 = vmatprep.mubr.bf16.mxu0 0
        %970 = vmatmul.mubr.bf16.gmra.mxu0 %v844
        %v971 = vpop.f32.mrf.mxu0
        %v972 = vadd.f32 %v871, %v971
        %v973 = vpop.f32.mrf.mxu0
        %v974 = vpop.f32.mrf.mxu0
        %v975 = vadd.f32 %v871, %v974
        %v976 = vpop.f32.mrf.mxu0
        %977 = vmatprep.mubr.bf16.mxu0 0
        %978 = vmatmul.mubr.bf16.gmra.mxu0 %v845
        %v979 = vpop.f32.mrf.mxu0
        %v980 = vadd.f32 %v871, %v979
        %v981 = vpop.f32.mrf.mxu0
        %v982 = vpop.f32.mrf.mxu0
        %v983 = vadd.f32 %v871, %v982
        %v984 = vpop.f32.mrf.mxu0
        %985 = vmatprep.mubr.bf16.mxu0 0
        %986 = vmatmul.mubr.bf16.gmra.mxu0 %v846
        %v987 = vpop.f32.mrf.mxu0
        %v988 = vadd.f32 %v871, %v987
        %v989 = vpop.f32.mrf.mxu0
        %v990 = vpop.f32.mrf.mxu0
        %v991 = vadd.f32 %v871, %v990
        %v992 = vpop.f32.mrf.mxu0
        %993 = vmatprep.mubr.bf16.mxu0 0
        %994 = vmatmul.mubr.bf16.gmra.mxu0 %v847
        %v995 = vpop.f32.mrf.mxu0
        %v996 = vadd.f32 %v871, %v995
        %v997 = vpop.f32.mrf.mxu0
        %v998 = vpop.f32.mrf.mxu0
        %v999 = vadd.f32 %v871, %v998
        %v1000 = vpop.f32.mrf.mxu0
        %1001 = vmatprep.mubr.bf16.mxu0 0
        %1002 = vmatmul.mubr.bf16.gmra.mxu0 %v848
        %v1003 = vpop.f32.mrf.mxu0
        %v1004 = vadd.f32 %v871, %v1003
        %v1005 = vpop.f32.mrf.mxu0
        %v1006 = vpop.f32.mrf.mxu0
        %v1007 = vadd.f32 %v871, %v1006
        %v1008 = vpop.f32.mrf.mxu0
        %1009 = vmatprep.mubr.bf16.mxu0 0
        %1010 = vmatmul.mubr.bf16.gmra.mxu0 %v849
        %v1011 = vpop.f32.mrf.mxu0
        %v1012 = vadd.f32 %v871, %v1011
        %v1013 = vpop.f32.mrf.mxu0
        %v1014 = vpop.f32.mrf.mxu0
        %v1015 = vadd.f32 %v871, %v1014
        %v1016 = vpop.f32.mrf.mxu0
        %1017 = vdwg.mxu0
        %v1018 = vpack.c.bf16 %v959, %v956
        %v1019 = vpack.c.bf16 %v967, %v964
        %v1020 = vpack.c.bf16 %v975, %v972
        %v1021 = vpack.c.bf16 %v983, %v980
        %v1022 = vpack.c.bf16 %v991, %v988
        %v1023 = vpack.c.bf16 %v999, %v996
        %v1024 = vpack.c.bf16 %v1007, %v1004
        %v1025 = vpack.c.bf16 %v1015, %v1012
        %1034 = vrot.lane.b32.xlu0 %v1018, 96
        %v1035 = vpop.permute.xlu0 %1034
        %1036 = vrot.lane.b32.xlu0 %v1019, 96
        %v1037 = vpop.permute.xlu0 %1036
        %1038 = vrot.lane.b32.xlu0 %v1020, 96
        %v1039 = vpop.permute.xlu0 %1038
        %1040 = vrot.lane.b32.xlu0 %v1021, 96
        %v1041 = vpop.permute.xlu0 %1040
        %1042 = vrot.lane.b32.xlu0 %v1022, 96
        %v1043 = vpop.permute.xlu0 %1042
        %1044 = vrot.lane.b32.xlu0 %v1023, 96
        %v1045 = vpop.permute.xlu0 %1044
        %1046 = vrot.lane.b32.xlu0 %v1024, 96
        %v1047 = vpop.permute.xlu0 %1046
        %1048 = vrot.lane.b32.xlu0 %v1025, 96
        %v1049 = vpop.permute.xlu0 %1048
        %1050 = vrot.lane.b32.xlu0 %v1018, 64
        %v1051 = vpop.permute.xlu0 %1050
        %1052 = vrot.lane.b32.xlu0 %v1019, 64
        %v1053 = vpop.permute.xlu0 %1052
        %1054 = vrot.lane.b32.xlu0 %v1020, 64
        %v1055 = vpop.permute.xlu0 %1054
        %1056 = vrot.lane.b32.xlu0 %v1021, 64
        %v1057 = vpop.permute.xlu0 %1056
        %1058 = vrot.lane.b32.xlu0 %v1022, 64
        %v1059 = vpop.permute.xlu0 %1058
        %1060 = vrot.lane.b32.xlu0 %v1023, 64
        %v1061 = vpop.permute.xlu0 %1060
        %1062 = vrot.lane.b32.xlu0 %v1024, 64
        %v1063 = vpop.permute.xlu0 %1062
        %1064 = vrot.lane.b32.xlu0 %v1025, 64
        %v1065 = vpop.permute.xlu0 %1064
        %1066 = vrot.lane.b32.xlu0 %v1018, 32
        %v1067 = vpop.permute.xlu0 %1066
        %1068 = vrot.lane.b32.xlu0 %v1019, 32
        %v1069 = vpop.permute.xlu0 %1068
        %1070 = vrot.lane.b32.xlu0 %v1020, 32
        %v1071 = vpop.permute.xlu0 %1070
        %1072 = vrot.lane.b32.xlu0 %v1021, 32
        %v1073 = vpop.permute.xlu0 %1072
        %1074 = vrot.lane.b32.xlu0 %v1022, 32
        %v1075 = vpop.permute.xlu0 %1074
        %1076 = vrot.lane.b32.xlu0 %v1023, 32
        %v1077 = vpop.permute.xlu0 %1076
        %1078 = vrot.lane.b32.xlu0 %v1024, 32
        %v1079 = vpop.permute.xlu0 %1078
        %1080 = vrot.lane.b32.xlu0 %v1025, 32
        %v1081 = vpop.permute.xlu0 %1080
        %v1082 = vld [vmem:[%s595] sm:$0xf]
        %v1083 = vld [vmem:[%s595 + $0x4] sm:$0xf]
        %v1084 = vld [vmem:[%s595 + $0x8] sm:$0xf]
        %v1085 = vld [vmem:[%s595 + $0xc] sm:$0xf]
        %v1086 = vld [vmem:[%s595 + $0x10] sm:$0xf]
        %v1087 = vld [vmem:[%s595 + $0x14] sm:$0xf]
        %v1088 = vld [vmem:[%s595 + $0x18] sm:$0xf]
        %v1089 = vld [vmem:[%s595 + $0x1c] sm:$0xf]
        %v1090 = vld [vmem:[%s595 + $0x20] sm:$0xf]
        %v1091 = vld [vmem:[%s595 + $0x24] sm:$0xf]
        %v1092 = vld [vmem:[%s595 + $0x28] sm:$0xf]
        %v1093 = vld [vmem:[%s595 + $0x2c] sm:$0xf]
        %v1094 = vld [vmem:[%s595 + $0x30] sm:$0xf]
        %v1095 = vld [vmem:[%s595 + $0x34] sm:$0xf]
        %v1096 = vld [vmem:[%s595 + $0x38] sm:$0xf]
        %v1097 = vld [vmem:[%s595 + $0x3c] sm:$0xf]
        %v1098 = vld [vmem:[%s595 + $0x40] sm:$0xf]
        %v1099 = vld [vmem:[%s595 + $0x44] sm:$0xf]
        %v1100 = vld [vmem:[%s595 + $0x48] sm:$0xf]
        %v1101 = vld [vmem:[%s595 + $0x4c] sm:$0xf]
        %v1102 = vld [vmem:[%s595 + $0x50] sm:$0xf]
        %v1103 = vld [vmem:[%s595 + $0x54] sm:$0xf]
        %v1104 = vld [vmem:[%s595 + $0x58] sm:$0xf]
        %v1105 = vld [vmem:[%s595 + $0x5c] sm:$0xf]
        %v1106 = vld [vmem:[%s595 + $0x60] sm:$0xf]
        %v1107 = vld [vmem:[%s595 + $0x64] sm:$0xf]
        %v1108 = vld [vmem:[%s595 + $0x68] sm:$0xf]
        %v1109 = vld [vmem:[%s595 + $0x6c] sm:$0xf]
        %v1110 = vld [vmem:[%s595 + $0x70] sm:$0xf]
        %v1111 = vld [vmem:[%s595 + $0x74] sm:$0xf]
        %v1112 = vld [vmem:[%s595 + $0x78] sm:$0xf]
        %v1113 = vld [vmem:[%s595 + $0x7c] sm:$0xf]
        %v1114 = vld [vmem:[%s595 + $0x80] sm:$0xf]
        %v1115 = vld [vmem:[%s595 + $0x84] sm:$0xf]
        %v1116 = vld [vmem:[%s595 + $0x88] sm:$0xf]
        %v1117 = vld [vmem:[%s595 + $0x8c] sm:$0xf]
        %v1118 = vld [vmem:[%s595 + $0x90] sm:$0xf]
        %v1119 = vld [vmem:[%s595 + $0x94] sm:$0xf]
        %v1120 = vld [vmem:[%s595 + $0x98] sm:$0xf]
        %v1121 = vld [vmem:[%s595 + $0x9c] sm:$0xf]
        %v1122 = vld [vmem:[%s595 + $0xa0] sm:$0xf]
        %v1123 = vld [vmem:[%s595 + $0xa4] sm:$0xf]
        %v1124 = vld [vmem:[%s595 + $0xa8] sm:$0xf]
        %v1125 = vld [vmem:[%s595 + $0xac] sm:$0xf]
        %v1126 = vld [vmem:[%s595 + $0xb0] sm:$0xf]
        %v1127 = vld [vmem:[%s595 + $0xb4] sm:$0xf]
        %v1128 = vld [vmem:[%s595 + $0xb8] sm:$0xf]
        %v1129 = vld [vmem:[%s595 + $0xbc] sm:$0xf]
        %v1130 = vld [vmem:[%s595 + $0xc0] sm:$0xf]
        %v1131 = vld [vmem:[%s595 + $0xc4] sm:$0xf]
        %v1132 = vld [vmem:[%s595 + $0xc8] sm:$0xf]
        %v1133 = vld [vmem:[%s595 + $0xcc] sm:$0xf]
        %v1134 = vld [vmem:[%s595 + $0xd0] sm:$0xf]
        %v1135 = vld [vmem:[%s595 + $0xd4] sm:$0xf]
        %v1136 = vld [vmem:[%s595 + $0xd8] sm:$0xf]
        %v1137 = vld [vmem:[%s595 + $0xdc] sm:$0xf]
        %v1138 = vld [vmem:[%s595 + $0xe0] sm:$0xf]
        %v1139 = vld [vmem:[%s595 + $0xe4] sm:$0xf]
        %v1140 = vld [vmem:[%s595 + $0xe8] sm:$0xf]
        %v1141 = vld [vmem:[%s595 + $0xec] sm:$0xf]
        %v1142 = vld [vmem:[%s595 + $0xf0] sm:$0xf]
        %v1143 = vld [vmem:[%s595 + $0xf4] sm:$0xf]
        %v1144 = vld [vmem:[%s595 + $0xf8] sm:$0xf]
        %v1145 = vld [vmem:[%s595 + $0xfc] sm:$0xf]
        %v1146 = vld [vmem:[%s600] sm:$0xf]
        %v1147 = vld [vmem:[%s600 + $0x4] sm:$0xf]
        %v1148 = vld [vmem:[%s600 + $0x8] sm:$0xf]
        %v1149 = vld [vmem:[%s600 + $0xc] sm:$0xf]
        %v1150 = vld [vmem:[%s600 + $0x10] sm:$0xf]
        %v1151 = vld [vmem:[%s600 + $0x14] sm:$0xf]
        %v1152 = vld [vmem:[%s600 + $0x18] sm:$0xf]
        %v1153 = vld [vmem:[%s600 + $0x1c] sm:$0xf]
        %v1154 = vld [vmem:[%s600 + $0x20] sm:$0xf]
        %v1155 = vld [vmem:[%s600 + $0x24] sm:$0xf]
        %v1156 = vld [vmem:[%s600 + $0x28] sm:$0xf]
        %v1157 = vld [vmem:[%s600 + $0x2c] sm:$0xf]
        %v1158 = vld [vmem:[%s600 + $0x30] sm:$0xf]
        %v1159 = vld [vmem:[%s600 + $0x34] sm:$0xf]
        %v1160 = vld [vmem:[%s600 + $0x38] sm:$0xf]
        %v1161 = vld [vmem:[%s600 + $0x3c] sm:$0xf]
        %v1162 = vld [vmem:[%s600 + $0x40] sm:$0xf]
        %v1163 = vld [vmem:[%s600 + $0x44] sm:$0xf]
        %v1164 = vld [vmem:[%s600 + $0x48] sm:$0xf]
        %v1165 = vld [vmem:[%s600 + $0x4c] sm:$0xf]
        %v1166 = vld [vmem:[%s600 + $0x50] sm:$0xf]
        %v1167 = vld [vmem:[%s600 + $0x54] sm:$0xf]
        %v1168 = vld [vmem:[%s600 + $0x58] sm:$0xf]
        %v1169 = vld [vmem:[%s600 + $0x5c] sm:$0xf]
        %v1170 = vld [vmem:[%s600 + $0x60] sm:$0xf]
        %v1171 = vld [vmem:[%s600 + $0x64] sm:$0xf]
        %v1172 = vld [vmem:[%s600 + $0x68] sm:$0xf]
        %v1173 = vld [vmem:[%s600 + $0x6c] sm:$0xf]
        %v1174 = vld [vmem:[%s600 + $0x70] sm:$0xf]
        %v1175 = vld [vmem:[%s600 + $0x74] sm:$0xf]
        %v1176 = vld [vmem:[%s600 + $0x78] sm:$0xf]
        %v1177 = vld [vmem:[%s600 + $0x7c] sm:$0xf]
        %v1178 = vld [vmem:[%s600 + $0x80] sm:$0xf]
        %v1179 = vld [vmem:[%s600 + $0x84] sm:$0xf]
        %v1180 = vld [vmem:[%s600 + $0x88] sm:$0xf]
        %v1181 = vld [vmem:[%s600 + $0x8c] sm:$0xf]
        %v1182 = vld [vmem:[%s600 + $0x90] sm:$0xf]
        %v1183 = vld [vmem:[%s600 + $0x94] sm:$0xf]
        %v1184 = vld [vmem:[%s600 + $0x98] sm:$0xf]
        %v1185 = vld [vmem:[%s600 + $0x9c] sm:$0xf]
        %v1186 = vld [vmem:[%s600 + $0xa0] sm:$0xf]
        %v1187 = vld [vmem:[%s600 + $0xa4] sm:$0xf]
        %v1188 = vld [vmem:[%s600 + $0xa8] sm:$0xf]
        %v1189 = vld [vmem:[%s600 + $0xac] sm:$0xf]
        %v1190 = vld [vmem:[%s600 + $0xb0] sm:$0xf]
        %v1191 = vld [vmem:[%s600 + $0xb4] sm:$0xf]
        %v1192 = vld [vmem:[%s600 + $0xb8] sm:$0xf]
        %v1193 = vld [vmem:[%s600 + $0xbc] sm:$0xf]
        %v1194 = vld [vmem:[%s600 + $0xc0] sm:$0xf]
        %v1195 = vld [vmem:[%s600 + $0xc4] sm:$0xf]
        %v1196 = vld [vmem:[%s600 + $0xc8] sm:$0xf]
        %v1197 = vld [vmem:[%s600 + $0xcc] sm:$0xf]
        %v1198 = vld [vmem:[%s600 + $0xd0] sm:$0xf]
        %v1199 = vld [vmem:[%s600 + $0xd4] sm:$0xf]
        %v1200 = vld [vmem:[%s600 + $0xd8] sm:$0xf]
        %v1201 = vld [vmem:[%s600 + $0xdc] sm:$0xf]
        %v1202 = vld [vmem:[%s600 + $0xe0] sm:$0xf]
        %v1203 = vld [vmem:[%s600 + $0xe4] sm:$0xf]
        %v1204 = vld [vmem:[%s600 + $0xe8] sm:$0xf]
        %v1205 = vld [vmem:[%s600 + $0xec] sm:$0xf]
        %v1206 = vld [vmem:[%s600 + $0xf0] sm:$0xf]
        %v1207 = vld [vmem:[%s600 + $0xf4] sm:$0xf]
        %v1208 = vld [vmem:[%s600 + $0xf8] sm:$0xf]
        %v1209 = vld [vmem:[%s600 + $0xfc] sm:$0xf]
        %v1226 = vunpack.c.l.b16 %v1082
        %v1227 = vunpack.c.l.b16 %v1083
        %v1228 = vunpack.c.l.b16 %v1084
        %v1229 = vunpack.c.l.b16 %v1085
        %v1230 = vunpack.c.l.b16 %v1086
        %v1231 = vunpack.c.l.b16 %v1087
        %v1232 = vunpack.c.l.b16 %v1088
        %v1233 = vunpack.c.l.b16 %v1089
        %v1234 = vunpack.c.l.b16 %v1090
        %v1235 = vunpack.c.l.b16 %v1091
        %v1236 = vunpack.c.l.b16 %v1092
        %v1237 = vunpack.c.l.b16 %v1093
        %v1238 = vunpack.c.l.b16 %v1094
        %v1239 = vunpack.c.l.b16 %v1095
        %v1240 = vunpack.c.l.b16 %v1096
        %v1241 = vunpack.c.l.b16 %v1097
        %v1242 = vpack.c.b16 %v1227, %v1226
        %v1243 = vpack.c.b16 %v1229, %v1228
        %v1244 = vpack.c.b16 %v1231, %v1230
        %v1245 = vpack.c.b16 %v1233, %v1232
        %v1246 = vpack.c.b16 %v1235, %v1234
        %v1247 = vpack.c.b16 %v1237, %v1236
        %v1248 = vpack.c.b16 %v1239, %v1238
        %v1249 = vpack.c.b16 %v1241, %v1240
        %vm1250 = vcmask 261120
        %v1252 = vsel %vm1250, %v1018, 0
        %v1255 = vsel %vm1250, %v1019, 0
        %v1258 = vsel %vm1250, %v1020, 0
        %v1261 = vsel %vm1250, %v1021, 0
        %v1264 = vsel %vm1250, %v1022, 0
        %v1267 = vsel %vm1250, %v1023, 0
        %v1270 = vsel %vm1250, %v1024, 0
        %v1273 = vsel %vm1250, %v1025, 0
        %v1276 = vsel %vm1250, %v1242, 0
        %v1279 = vsel %vm1250, %v1243, 0
        %v1282 = vsel %vm1250, %v1244, 0
        %v1285 = vsel %vm1250, %v1245, 0
        %v1288 = vsel %vm1250, %v1246, 0
        %v1291 = vsel %vm1250, %v1247, 0
        %v1294 = vsel %vm1250, %v1248, 0
        %v1297 = vsel %vm1250, %v1249, 0
        %1299 = vmatprep.subr.bf16.mxu0 0
        %1300 = vmatpush1.bf16.xpose.msra.mxu0 %v1297
        %1301 = vmatprep.subr.bf16.mxu0 0
        %1302 = vmatpush1.bf16.xpose.msra.mxu0 %v1294
        %1303 = vmatprep.subr.bf16.mxu0 0
        %1304 = vmatpush1.bf16.xpose.msra.mxu0 %v1291
        %1305 = vmatprep.subr.bf16.mxu0 0
        %1306 = vmatpush1.bf16.xpose.msra.mxu0 %v1288
        %1307 = vmatprep.subr.bf16.mxu0 0
        %1308 = vmatpush1.bf16.xpose.msra.mxu0 %v1285
        %1309 = vmatprep.subr.bf16.mxu0 0
        %1310 = vmatpush1.bf16.xpose.msra.mxu0 %v1282
        %1311 = vmatprep.subr.bf16.mxu0 0
        %1312 = vmatpush1.bf16.xpose.msra.mxu0 %v1279
        %1313 = vmatprep.subr.bf16.mxu0 0
        %1314 = vmatpush1.bf16.xpose.msra.mxu0 %v1276
        %1315 = vmatprep.subr.bf16.mxu0 0
        %1316 = vmatpush2.bf16.xpose.msra.mxu0 0
        %1317 = vmatprep.subr.bf16.mxu0 0
        %1318 = vmatpush2.bf16.xpose.msra.mxu0 0
        %1319 = vmatprep.subr.bf16.mxu0 0
        %1320 = vmatpush2.bf16.xpose.msra.mxu0 0
        %1321 = vmatprep.subr.bf16.mxu0 0
        %1322 = vmatpush2.bf16.xpose.msra.mxu0 0
        %1323 = vmatprep.subr.bf16.mxu0 0
        %1324 = vmatpush2.bf16.xpose.msra.mxu0 0
        %1325 = vmatprep.subr.bf16.mxu0 0
        %1326 = vmatpush2.bf16.xpose.msra.mxu0 0
        %1327 = vmatprep.subr.bf16.mxu0 0
        %1328 = vmatpush2.bf16.xpose.msra.mxu0 0
        %1329 = vmatprep.subr.bf16.mxu0 0
        %1330 = vmatpush2.bf16.xpose.msra.mxu0 0
        %1331 = vmatprep.mubr.bf16.mxu0 0
        %1332 = vmatmul.mubr.bf16.gmra.mxu0 %v1252
        %v1333 = vpop.f32.mrf.mxu0
        %v1334 = vadd.f32 0.0, %v1333
        %v1335 = vpop.f32.mrf.mxu0
        %v1336 = vpop.f32.mrf.mxu0
        %v1337 = vadd.f32 0.0, %v1336
        %v1338 = vpop.f32.mrf.mxu0
        %1339 = vmatprep.mubr.bf16.mxu0 0
        %1340 = vmatmul.mubr.bf16.gmra.mxu0 %v1255
        %v1341 = vpop.f32.mrf.mxu0
        %v1342 = vadd.f32 0.0, %v1341
        %v1343 = vpop.f32.mrf.mxu0
        %v1344 = vpop.f32.mrf.mxu0
        %v1345 = vadd.f32 0.0, %v1344
        %v1346 = vpop.f32.mrf.mxu0
        %1347 = vmatprep.mubr.bf16.mxu0 0
        %1348 = vmatmul.mubr.bf16.gmra.mxu0 %v1258
        %v1349 = vpop.f32.mrf.mxu0
        %v1350 = vadd.f32 0.0, %v1349
        %v1351 = vpop.f32.mrf.mxu0
        %v1352 = vpop.f32.mrf.mxu0
        %v1353 = vadd.f32 0.0, %v1352
        %v1354 = vpop.f32.mrf.mxu0
        %1355 = vmatprep.mubr.bf16.mxu0 0
        %1356 = vmatmul.mubr.bf16.gmra.mxu0 %v1261
        %v1357 = vpop.f32.mrf.mxu0
        %v1358 = vadd.f32 0.0, %v1357
        %v1359 = vpop.f32.mrf.mxu0
        %v1360 = vpop.f32.mrf.mxu0
        %v1361 = vadd.f32 0.0, %v1360
        %v1362 = vpop.f32.mrf.mxu0
        %1363 = vmatprep.mubr.bf16.mxu0 0
        %1364 = vmatmul.mubr.bf16.gmra.mxu0 %v1264
        %v1365 = vpop.f32.mrf.mxu0
        %v1366 = vadd.f32 0.0, %v1365
        %v1367 = vpop.f32.mrf.mxu0
        %v1368 = vpop.f32.mrf.mxu0
        %v1369 = vadd.f32 0.0, %v1368
        %v1370 = vpop.f32.mrf.mxu0
        %1371 = vmatprep.mubr.bf16.mxu0 0
        %1372 = vmatmul.mubr.bf16.gmra.mxu0 %v1267
        %v1373 = vpop.f32.mrf.mxu0
        %v1374 = vadd.f32 0.0, %v1373
        %v1375 = vpop.f32.mrf.mxu0
        %v1376 = vpop.f32.mrf.mxu0
        %v1377 = vadd.f32 0.0, %v1376
        %v1378 = vpop.f32.mrf.mxu0
        %1379 = vmatprep.mubr.bf16.mxu0 0
        %1380 = vmatmul.mubr.bf16.gmra.mxu0 %v1270
        %v1381 = vpop.f32.mrf.mxu0
        %v1382 = vadd.f32 0.0, %v1381
        %v1383 = vpop.f32.mrf.mxu0
        %v1384 = vpop.f32.mrf.mxu0
        %v1385 = vadd.f32 0.0, %v1384
        %v1386 = vpop.f32.mrf.mxu0
        %1387 = vmatprep.mubr.bf16.mxu0 0
        %1388 = vmatmul.mubr.bf16.gmra.mxu0 %v1273
        %v1389 = vpop.f32.mrf.mxu0
        %v1390 = vadd.f32 0.0, %v1389
        %v1391 = vpop.f32.mrf.mxu0
        %v1392 = vpop.f32.mrf.mxu0
        %v1393 = vadd.f32 0.0, %v1392
        %v1394 = vpop.f32.mrf.mxu0
        %1395 = vdwg.mxu0
        %v1412 = vunpack.c.l.b16 %v1098
        %v1413 = vunpack.c.l.b16 %v1099
        %v1414 = vunpack.c.l.b16 %v1100
        %v1415 = vunpack.c.l.b16 %v1101
        %v1416 = vunpack.c.l.b16 %v1102
        %v1417 = vunpack.c.l.b16 %v1103
        %v1418 = vunpack.c.l.b16 %v1104
        %v1419 = vunpack.c.l.b16 %v1105
        %v1420 = vunpack.c.l.b16 %v1106
        %v1421 = vunpack.c.l.b16 %v1107
        %v1422 = vunpack.c.l.b16 %v1108
        %v1423 = vunpack.c.l.b16 %v1109
        %v1424 = vunpack.c.l.b16 %v1110
        %v1425 = vunpack.c.l.b16 %v1111
        %v1426 = vunpack.c.l.b16 %v1112
        %v1427 = vunpack.c.l.b16 %v1113
        %v1428 = vpack.c.b16 %v1413, %v1412
        %v1429 = vpack.c.b16 %v1415, %v1414
        %v1430 = vpack.c.b16 %v1417, %v1416
        %v1431 = vpack.c.b16 %v1419, %v1418
        %v1432 = vpack.c.b16 %v1421, %v1420
        %v1433 = vpack.c.b16 %v1423, %v1422
        %v1434 = vpack.c.b16 %v1425, %v1424
        %v1435 = vpack.c.b16 %v1427, %v1426
        %v1437 = vsel %vm1250, %v1035, 0
        %v1440 = vsel %vm1250, %v1037, 0
        %v1443 = vsel %vm1250, %v1039, 0
        %v1446 = vsel %vm1250, %v1041, 0
        %v1449 = vsel %vm1250, %v1043, 0
        %v1452 = vsel %vm1250, %v1045, 0
        %v1455 = vsel %vm1250, %v1047, 0
        %v1458 = vsel %vm1250, %v1049, 0
        %v1461 = vsel %vm1250, %v1428, 0
        %v1464 = vsel %vm1250, %v1429, 0
        %v1467 = vsel %vm1250, %v1430, 0
        %v1470 = vsel %vm1250, %v1431, 0
        %v1473 = vsel %vm1250, %v1432, 0
        %v1476 = vsel %vm1250, %v1433, 0
        %v1479 = vsel %vm1250, %v1434, 0
        %v1482 = vsel %vm1250, %v1435, 0
        %1484 = vmatprep.subr.bf16.mxu0 0
        %1485 = vmatpush1.bf16.xpose.msra.mxu0 %v1482
        %1486 = vmatprep.subr.bf16.mxu0 0
        %1487 = vmatpush1.bf16.xpose.msra.mxu0 %v1479
        %1488 = vmatprep.subr.bf16.mxu0 0
        %1489 = vmatpush1.bf16.xpose.msra.mxu0 %v1476
        %1490 = vmatprep.subr.bf16.mxu0 0
        %1491 = vmatpush1.bf16.xpose.msra.mxu0 %v1473
        %1492 = vmatprep.subr.bf16.mxu0 0
        %1493 = vmatpush1.bf16.xpose.msra.mxu0 %v1470
        %1494 = vmatprep.subr.bf16.mxu0 0
        %1495 = vmatpush1.bf16.xpose.msra.mxu0 %v1467
        %1496 = vmatprep.subr.bf16.mxu0 0
        %1497 = vmatpush1.bf16.xpose.msra.mxu0 %v1464
        %1498 = vmatprep.subr.bf16.mxu0 0
        %1499 = vmatpush1.bf16.xpose.msra.mxu0 %v1461
        %1500 = vmatprep.subr.bf16.mxu0 0
        %1501 = vmatpush2.bf16.xpose.msra.mxu0 0
        %1502 = vmatprep.subr.bf16.mxu0 0
        %1503 = vmatpush2.bf16.xpose.msra.mxu0 0
        %1504 = vmatprep.subr.bf16.mxu0 0
        %1505 = vmatpush2.bf16.xpose.msra.mxu0 0
        %1506 = vmatprep.subr.bf16.mxu0 0
        %1507 = vmatpush2.bf16.xpose.msra.mxu0 0
        %1508 = vmatprep.subr.bf16.mxu0 0
        %1509 = vmatpush2.bf16.xpose.msra.mxu0 0
        %1510 = vmatprep.subr.bf16.mxu0 0
        %1511 = vmatpush2.bf16.xpose.msra.mxu0 0
        %1512 = vmatprep.subr.bf16.mxu0 0
        %1513 = vmatpush2.bf16.xpose.msra.mxu0 0
        %1514 = vmatprep.subr.bf16.mxu0 0
        %1515 = vmatpush2.bf16.xpose.msra.mxu0 0
        %1516 = vmatprep.mubr.bf16.mxu0 0
        %1517 = vmatmul.mubr.bf16.gmra.mxu0 %v1437
        %v1518 = vpop.f32.mrf.mxu0
        %v1519 = vadd.f32 0.0, %v1518
        %v1520 = vpop.f32.mrf.mxu0
        %v1521 = vpop.f32.mrf.mxu0
        %v1522 = vadd.f32 0.0, %v1521
        %v1523 = vpop.f32.mrf.mxu0
        %1524 = vmatprep.mubr.bf16.mxu0 0
        %1525 = vmatmul.mubr.bf16.gmra.mxu0 %v1440
        %v1526 = vpop.f32.mrf.mxu0
        %v1527 = vadd.f32 0.0, %v1526
        %v1528 = vpop.f32.mrf.mxu0
        %v1529 = vpop.f32.mrf.mxu0
        %v1530 = vadd.f32 0.0, %v1529
        %v1531 = vpop.f32.mrf.mxu0
        %1532 = vmatprep.mubr.bf16.mxu0 0
        %1533 = vmatmul.mubr.bf16.gmra.mxu0 %v1443
        %v1534 = vpop.f32.mrf.mxu0
        %v1535 = vadd.f32 0.0, %v1534
        %v1536 = vpop.f32.mrf.mxu0
        %v1537 = vpop.f32.mrf.mxu0
        %v1538 = vadd.f32 0.0, %v1537
        %v1539 = vpop.f32.mrf.mxu0
        %1540 = vmatprep.mubr.bf16.mxu0 0
        %1541 = vmatmul.mubr.bf16.gmra.mxu0 %v1446
        %v1542 = vpop.f32.mrf.mxu0
        %v1543 = vadd.f32 0.0, %v1542
        %v1544 = vpop.f32.mrf.mxu0
        %v1545 = vpop.f32.mrf.mxu0
        %v1546 = vadd.f32 0.0, %v1545
        %v1547 = vpop.f32.mrf.mxu0
        %1548 = vmatprep.mubr.bf16.mxu0 0
        %1549 = vmatmul.mubr.bf16.gmra.mxu0 %v1449
        %v1550 = vpop.f32.mrf.mxu0
        %v1551 = vadd.f32 0.0, %v1550
        %v1552 = vpop.f32.mrf.mxu0
        %v1553 = vpop.f32.mrf.mxu0
        %v1554 = vadd.f32 0.0, %v1553
        %v1555 = vpop.f32.mrf.mxu0
        %1556 = vmatprep.mubr.bf16.mxu0 0
        %1557 = vmatmul.mubr.bf16.gmra.mxu0 %v1452
        %v1558 = vpop.f32.mrf.mxu0
        %v1559 = vadd.f32 0.0, %v1558
        %v1560 = vpop.f32.mrf.mxu0
        %v1561 = vpop.f32.mrf.mxu0
        %v1562 = vadd.f32 0.0, %v1561
        %v1563 = vpop.f32.mrf.mxu0
        %1564 = vmatprep.mubr.bf16.mxu0 0
        %1565 = vmatmul.mubr.bf16.gmra.mxu0 %v1455
        %v1566 = vpop.f32.mrf.mxu0
        %v1567 = vadd.f32 0.0, %v1566
        %v1568 = vpop.f32.mrf.mxu0
        %v1569 = vpop.f32.mrf.mxu0
        %v1570 = vadd.f32 0.0, %v1569
        %v1571 = vpop.f32.mrf.mxu0
        %1572 = vmatprep.mubr.bf16.mxu0 0
        %1573 = vmatmul.mubr.bf16.gmra.mxu0 %v1458
        %v1574 = vpop.f32.mrf.mxu0
        %v1575 = vadd.f32 0.0, %v1574
        %v1576 = vpop.f32.mrf.mxu0
        %v1577 = vpop.f32.mrf.mxu0
        %v1578 = vadd.f32 0.0, %v1577
        %v1579 = vpop.f32.mrf.mxu0
        %1580 = vdwg.mxu0
        %v1597 = vunpack.c.l.b16 %v1114
        %v1598 = vunpack.c.l.b16 %v1115
        %v1599 = vunpack.c.l.b16 %v1116
        %v1600 = vunpack.c.l.b16 %v1117
        %v1601 = vunpack.c.l.b16 %v1118
        %v1602 = vunpack.c.l.b16 %v1119
        %v1603 = vunpack.c.l.b16 %v1120
        %v1604 = vunpack.c.l.b16 %v1121
        %v1605 = vunpack.c.l.b16 %v1122
        %v1606 = vunpack.c.l.b16 %v1123
        %v1607 = vunpack.c.l.b16 %v1124
        %v1608 = vunpack.c.l.b16 %v1125
        %v1609 = vunpack.c.l.b16 %v1126
        %v1610 = vunpack.c.l.b16 %v1127
        %v1611 = vunpack.c.l.b16 %v1128
        %v1612 = vunpack.c.l.b16 %v1129
        %v1613 = vpack.c.b16 %v1598, %v1597
        %v1614 = vpack.c.b16 %v1600, %v1599
        %v1615 = vpack.c.b16 %v1602, %v1601
        %v1616 = vpack.c.b16 %v1604, %v1603
        %v1617 = vpack.c.b16 %v1606, %v1605
        %v1618 = vpack.c.b16 %v1608, %v1607
        %v1619 = vpack.c.b16 %v1610, %v1609
        %v1620 = vpack.c.b16 %v1612, %v1611
        %v1622 = vsel %vm1250, %v1051, 0
        %v1625 = vsel %vm1250, %v1053, 0
        %v1628 = vsel %vm1250, %v1055, 0
        %v1631 = vsel %vm1250, %v1057, 0
        %v1634 = vsel %vm1250, %v1059, 0
        %v1637 = vsel %vm1250, %v1061, 0
        %v1640 = vsel %vm1250, %v1063, 0
        %v1643 = vsel %vm1250, %v1065, 0
        %v1646 = vsel %vm1250, %v1613, 0
        %v1649 = vsel %vm1250, %v1614, 0
        %v1652 = vsel %vm1250, %v1615, 0
        %v1655 = vsel %vm1250, %v1616, 0
        %v1658 = vsel %vm1250, %v1617, 0
        %v1661 = vsel %vm1250, %v1618, 0
        %v1664 = vsel %vm1250, %v1619, 0
        %v1667 = vsel %vm1250, %v1620, 0
        %1669 = vmatprep.subr.bf16.mxu0 0
        %1670 = vmatpush1.bf16.xpose.msra.mxu0 %v1667
        %1671 = vmatprep.subr.bf16.mxu0 0
        %1672 = vmatpush1.bf16.xpose.msra.mxu0 %v1664
        %1673 = vmatprep.subr.bf16.mxu0 0
        %1674 = vmatpush1.bf16.xpose.msra.mxu0 %v1661
        %1675 = vmatprep.subr.bf16.mxu0 0
        %1676 = vmatpush1.bf16.xpose.msra.mxu0 %v1658
        %1677 = vmatprep.subr.bf16.mxu0 0
        %1678 = vmatpush1.bf16.xpose.msra.mxu0 %v1655
        %1679 = vmatprep.subr.bf16.mxu0 0
        %1680 = vmatpush1.bf16.xpose.msra.mxu0 %v1652
        %1681 = vmatprep.subr.bf16.mxu0 0
        %1682 = vmatpush1.bf16.xpose.msra.mxu0 %v1649
        %1683 = vmatprep.subr.bf16.mxu0 0
        %1684 = vmatpush1.bf16.xpose.msra.mxu0 %v1646
        %1685 = vmatprep.subr.bf16.mxu0 0
        %1686 = vmatpush2.bf16.xpose.msra.mxu0 0
        %1687 = vmatprep.subr.bf16.mxu0 0
        %1688 = vmatpush2.bf16.xpose.msra.mxu0 0
        %1689 = vmatprep.subr.bf16.mxu0 0
        %1690 = vmatpush2.bf16.xpose.msra.mxu0 0
        %1691 = vmatprep.subr.bf16.mxu0 0
        %1692 = vmatpush2.bf16.xpose.msra.mxu0 0
        %1693 = vmatprep.subr.bf16.mxu0 0
        %1694 = vmatpush2.bf16.xpose.msra.mxu0 0
        %1695 = vmatprep.subr.bf16.mxu0 0
        %1696 = vmatpush2.bf16.xpose.msra.mxu0 0
        %1697 = vmatprep.subr.bf16.mxu0 0
        %1698 = vmatpush2.bf16.xpose.msra.mxu0 0
        %1699 = vmatprep.subr.bf16.mxu0 0
        %1700 = vmatpush2.bf16.xpose.msra.mxu0 0
        %1701 = vmatprep.mubr.bf16.mxu0 0
        %1702 = vmatmul.mubr.bf16.gmra.mxu0 %v1622
        %v1703 = vpop.f32.mrf.mxu0
        %v1704 = vadd.f32 0.0, %v1703
        %v1705 = vpop.f32.mrf.mxu0
        %v1706 = vpop.f32.mrf.mxu0
        %v1707 = vadd.f32 0.0, %v1706
        %v1708 = vpop.f32.mrf.mxu0
        %1709 = vmatprep.mubr.bf16.mxu0 0
        %1710 = vmatmul.mubr.bf16.gmra.mxu0 %v1625
        %v1711 = vpop.f32.mrf.mxu0
        %v1712 = vadd.f32 0.0, %v1711
        %v1713 = vpop.f32.mrf.mxu0
        %v1714 = vpop.f32.mrf.mxu0
        %v1715 = vadd.f32 0.0, %v1714
        %v1716 = vpop.f32.mrf.mxu0
        %1717 = vmatprep.mubr.bf16.mxu0 0
        %1718 = vmatmul.mubr.bf16.gmra.mxu0 %v1628
        %v1719 = vpop.f32.mrf.mxu0
        %v1720 = vadd.f32 0.0, %v1719
        %v1721 = vpop.f32.mrf.mxu0
        %v1722 = vpop.f32.mrf.mxu0
        %v1723 = vadd.f32 0.0, %v1722
        %v1724 = vpop.f32.mrf.mxu0
        %1725 = vmatprep.mubr.bf16.mxu0 0
        %1726 = vmatmul.mubr.bf16.gmra.mxu0 %v1631
        %v1727 = vpop.f32.mrf.mxu0
        %v1728 = vadd.f32 0.0, %v1727
        %v1729 = vpop.f32.mrf.mxu0
        %v1730 = vpop.f32.mrf.mxu0
        %v1731 = vadd.f32 0.0, %v1730
        %v1732 = vpop.f32.mrf.mxu0
        %1733 = vmatprep.mubr.bf16.mxu0 0
        %1734 = vmatmul.mubr.bf16.gmra.mxu0 %v1634
        %v1735 = vpop.f32.mrf.mxu0
        %v1736 = vadd.f32 0.0, %v1735
        %v1737 = vpop.f32.mrf.mxu0
        %v1738 = vpop.f32.mrf.mxu0
        %v1739 = vadd.f32 0.0, %v1738
        %v1740 = vpop.f32.mrf.mxu0
        %1741 = vmatprep.mubr.bf16.mxu0 0
        %1742 = vmatmul.mubr.bf16.gmra.mxu0 %v1637
        %v1743 = vpop.f32.mrf.mxu0
        %v1744 = vadd.f32 0.0, %v1743
        %v1745 = vpop.f32.mrf.mxu0
        %v1746 = vpop.f32.mrf.mxu0
        %v1747 = vadd.f32 0.0, %v1746
        %v1748 = vpop.f32.mrf.mxu0
        %1749 = vmatprep.mubr.bf16.mxu0 0
        %1750 = vmatmul.mubr.bf16.gmra.mxu0 %v1640
        %v1751 = vpop.f32.mrf.mxu0
        %v1752 = vadd.f32 0.0, %v1751
        %v1753 = vpop.f32.mrf.mxu0
        %v1754 = vpop.f32.mrf.mxu0
        %v1755 = vadd.f32 0.0, %v1754
        %v1756 = vpop.f32.mrf.mxu0
        %1757 = vmatprep.mubr.bf16.mxu0 0
        %1758 = vmatmul.mubr.bf16.gmra.mxu0 %v1643
        %v1759 = vpop.f32.mrf.mxu0
        %v1760 = vadd.f32 0.0, %v1759
        %v1761 = vpop.f32.mrf.mxu0
        %v1762 = vpop.f32.mrf.mxu0
        %v1763 = vadd.f32 0.0, %v1762
        %v1764 = vpop.f32.mrf.mxu0
        %1765 = vdwg.mxu0
        %v1782 = vunpack.c.l.b16 %v1130
        %v1783 = vunpack.c.l.b16 %v1131
        %v1784 = vunpack.c.l.b16 %v1132
        %v1785 = vunpack.c.l.b16 %v1133
        %v1786 = vunpack.c.l.b16 %v1134
        %v1787 = vunpack.c.l.b16 %v1135
        %v1788 = vunpack.c.l.b16 %v1136
        %v1789 = vunpack.c.l.b16 %v1137
        %v1790 = vunpack.c.l.b16 %v1138
        %v1791 = vunpack.c.l.b16 %v1139
        %v1792 = vunpack.c.l.b16 %v1140
        %v1793 = vunpack.c.l.b16 %v1141
        %v1794 = vunpack.c.l.b16 %v1142
        %v1795 = vunpack.c.l.b16 %v1143
        %v1796 = vunpack.c.l.b16 %v1144
        %v1797 = vunpack.c.l.b16 %v1145
        %v1798 = vpack.c.b16 %v1783, %v1782
        %v1799 = vpack.c.b16 %v1785, %v1784
        %v1800 = vpack.c.b16 %v1787, %v1786
        %v1801 = vpack.c.b16 %v1789, %v1788
        %v1802 = vpack.c.b16 %v1791, %v1790
        %v1803 = vpack.c.b16 %v1793, %v1792
        %v1804 = vpack.c.b16 %v1795, %v1794
        %v1805 = vpack.c.b16 %v1797, %v1796
        %v1807 = vsel %vm1250, %v1067, 0
        %v1810 = vsel %vm1250, %v1069, 0
        %v1813 = vsel %vm1250, %v1071, 0
        %v1816 = vsel %vm1250, %v1073, 0
        %v1819 = vsel %vm1250, %v1075, 0
        %v1822 = vsel %vm1250, %v1077, 0
        %v1825 = vsel %vm1250, %v1079, 0
        %v1828 = vsel %vm1250, %v1081, 0
        %v1831 = vsel %vm1250, %v1798, 0
        %v1834 = vsel %vm1250, %v1799, 0
        %v1837 = vsel %vm1250, %v1800, 0
        %v1840 = vsel %vm1250, %v1801, 0
        %v1843 = vsel %vm1250, %v1802, 0
        %v1846 = vsel %vm1250, %v1803, 0
        %v1849 = vsel %vm1250, %v1804, 0
        %v1852 = vsel %vm1250, %v1805, 0
        %1854 = vmatprep.subr.bf16.mxu0 0
        %1855 = vmatpush1.bf16.xpose.msra.mxu0 %v1852
        %1856 = vmatprep.subr.bf16.mxu0 0
        %1857 = vmatpush1.bf16.xpose.msra.mxu0 %v1849
        %1858 = vmatprep.subr.bf16.mxu0 0
        %1859 = vmatpush1.bf16.xpose.msra.mxu0 %v1846
        %1860 = vmatprep.subr.bf16.mxu0 0
        %1861 = vmatpush1.bf16.xpose.msra.mxu0 %v1843
        %1862 = vmatprep.subr.bf16.mxu0 0
        %1863 = vmatpush1.bf16.xpose.msra.mxu0 %v1840
        %1864 = vmatprep.subr.bf16.mxu0 0
        %1865 = vmatpush1.bf16.xpose.msra.mxu0 %v1837
        %1866 = vmatprep.subr.bf16.mxu0 0
        %1867 = vmatpush1.bf16.xpose.msra.mxu0 %v1834
        %1868 = vmatprep.subr.bf16.mxu0 0
        %1869 = vmatpush1.bf16.xpose.msra.mxu0 %v1831
        %1870 = vmatprep.subr.bf16.mxu0 0
        %1871 = vmatpush2.bf16.xpose.msra.mxu0 0
        %1872 = vmatprep.subr.bf16.mxu0 0
        %1873 = vmatpush2.bf16.xpose.msra.mxu0 0
        %1874 = vmatprep.subr.bf16.mxu0 0
        %1875 = vmatpush2.bf16.xpose.msra.mxu0 0
        %1876 = vmatprep.subr.bf16.mxu0 0
        %1877 = vmatpush2.bf16.xpose.msra.mxu0 0
        %1878 = vmatprep.subr.bf16.mxu0 0
        %1879 = vmatpush2.bf16.xpose.msra.mxu0 0
        %1880 = vmatprep.subr.bf16.mxu0 0
        %1881 = vmatpush2.bf16.xpose.msra.mxu0 0
        %1882 = vmatprep.subr.bf16.mxu0 0
        %1883 = vmatpush2.bf16.xpose.msra.mxu0 0
        %1884 = vmatprep.subr.bf16.mxu0 0
        %1885 = vmatpush2.bf16.xpose.msra.mxu0 0
        %1886 = vmatprep.mubr.bf16.mxu0 0
        %1887 = vmatmul.mubr.bf16.gmra.mxu0 %v1807
        %v1888 = vpop.f32.mrf.mxu0
        %v1889 = vadd.f32 0.0, %v1888
        %v1890 = vpop.f32.mrf.mxu0
        %v1891 = vpop.f32.mrf.mxu0
        %v1892 = vadd.f32 0.0, %v1891
        %v1893 = vpop.f32.mrf.mxu0
        %1894 = vmatprep.mubr.bf16.mxu0 0
        %1895 = vmatmul.mubr.bf16.gmra.mxu0 %v1810
        %v1896 = vpop.f32.mrf.mxu0
        %v1897 = vadd.f32 0.0, %v1896
        %v1898 = vpop.f32.mrf.mxu0
        %v1899 = vpop.f32.mrf.mxu0
        %v1900 = vadd.f32 0.0, %v1899
        %v1901 = vpop.f32.mrf.mxu0
        %1902 = vmatprep.mubr.bf16.mxu0 0
        %1903 = vmatmul.mubr.bf16.gmra.mxu0 %v1813
        %v1904 = vpop.f32.mrf.mxu0
        %v1905 = vadd.f32 0.0, %v1904
        %v1906 = vpop.f32.mrf.mxu0
        %v1907 = vpop.f32.mrf.mxu0
        %v1908 = vadd.f32 0.0, %v1907
        %v1909 = vpop.f32.mrf.mxu0
        %1910 = vmatprep.mubr.bf16.mxu0 0
        %1911 = vmatmul.mubr.bf16.gmra.mxu0 %v1816
        %v1912 = vpop.f32.mrf.mxu0
        %v1913 = vadd.f32 0.0, %v1912
        %v1914 = vpop.f32.mrf.mxu0
        %v1915 = vpop.f32.mrf.mxu0
        %v1916 = vadd.f32 0.0, %v1915
        %v1917 = vpop.f32.mrf.mxu0
        %1918 = vmatprep.mubr.bf16.mxu0 0
        %1919 = vmatmul.mubr.bf16.gmra.mxu0 %v1819
        %v1920 = vpop.f32.mrf.mxu0
        %v1921 = vadd.f32 0.0, %v1920
        %v1922 = vpop.f32.mrf.mxu0
        %v1923 = vpop.f32.mrf.mxu0
        %v1924 = vadd.f32 0.0, %v1923
        %v1925 = vpop.f32.mrf.mxu0
        %1926 = vmatprep.mubr.bf16.mxu0 0
        %1927 = vmatmul.mubr.bf16.gmra.mxu0 %v1822
        %v1928 = vpop.f32.mrf.mxu0
        %v1929 = vadd.f32 0.0, %v1928
        %v1930 = vpop.f32.mrf.mxu0
        %v1931 = vpop.f32.mrf.mxu0
        %v1932 = vadd.f32 0.0, %v1931
        %v1933 = vpop.f32.mrf.mxu0
        %1934 = vmatprep.mubr.bf16.mxu0 0
        %1935 = vmatmul.mubr.bf16.gmra.mxu0 %v1825
        %v1936 = vpop.f32.mrf.mxu0
        %v1937 = vadd.f32 0.0, %v1936
        %v1938 = vpop.f32.mrf.mxu0
        %v1939 = vpop.f32.mrf.mxu0
        %v1940 = vadd.f32 0.0, %v1939
        %v1941 = vpop.f32.mrf.mxu0
        %1942 = vmatprep.mubr.bf16.mxu0 0
        %1943 = vmatmul.mubr.bf16.gmra.mxu0 %v1828
        %v1944 = vpop.f32.mrf.mxu0
        %v1945 = vadd.f32 0.0, %v1944
        %v1946 = vpop.f32.mrf.mxu0
        %v1947 = vpop.f32.mrf.mxu0
        %v1948 = vadd.f32 0.0, %v1947
        %v1949 = vpop.f32.mrf.mxu0
        %1950 = vdwg.mxu0
        %v1951 = vlaneseq
        %v1952 = vand.u32 %v1951, 127
        %vm1953 = vcmp.lt.s32.totalorder %v1952, 8
        %v1954 = vsel %vm1953, 1, 0
        %vm1955 = vcmp.eq.s32.totalorder %v1954, 1
        %v1956 = vsel %vm1955, %v1334, -1e+30
        %v1957 = vsel %vm1955, %v1337, -1e+30
        %v1958 = vsel %vm1955, %v1342, -1e+30
        %v1959 = vsel %vm1955, %v1345, -1e+30
        %v1960 = vsel %vm1955, %v1350, -1e+30
        %v1961 = vsel %vm1955, %v1353, -1e+30
        %v1962 = vsel %vm1955, %v1358, -1e+30
        %v1963 = vsel %vm1955, %v1361, -1e+30
        %v1964 = vsel %vm1955, %v1366, -1e+30
        %v1965 = vsel %vm1955, %v1369, -1e+30
        %v1966 = vsel %vm1955, %v1374, -1e+30
        %v1967 = vsel %vm1955, %v1377, -1e+30
        %v1968 = vsel %vm1955, %v1382, -1e+30
        %v1969 = vsel %vm1955, %v1385, -1e+30
        %v1970 = vsel %vm1955, %v1390, -1e+30
        %v1971 = vsel %vm1955, %v1393, -1e+30
        %v1972 = vsel %vm1955, %v1519, -1e+30
        %v1973 = vsel %vm1955, %v1522, -1e+30
        %v1974 = vsel %vm1955, %v1527, -1e+30
        %v1975 = vsel %vm1955, %v1530, -1e+30
        %v1976 = vsel %vm1955, %v1535, -1e+30
        %v1977 = vsel %vm1955, %v1538, -1e+30
        %v1978 = vsel %vm1955, %v1543, -1e+30
        %v1979 = vsel %vm1955, %v1546, -1e+30
        %v1980 = vsel %vm1955, %v1551, -1e+30
        %v1981 = vsel %vm1955, %v1554, -1e+30
        %v1982 = vsel %vm1955, %v1559, -1e+30
        %v1983 = vsel %vm1955, %v1562, -1e+30
        %v1984 = vsel %vm1955, %v1567, -1e+30
        %v1985 = vsel %vm1955, %v1570, -1e+30
        %v1986 = vsel %vm1955, %v1575, -1e+30
        %v1987 = vsel %vm1955, %v1578, -1e+30
        %v1988 = vsel %vm1955, %v1704, -1e+30
        %v1989 = vsel %vm1955, %v1707, -1e+30
        %v1990 = vsel %vm1955, %v1712, -1e+30
        %v1991 = vsel %vm1955, %v1715, -1e+30
        %v1992 = vsel %vm1955, %v1720, -1e+30
        %v1993 = vsel %vm1955, %v1723, -1e+30
        %v1994 = vsel %vm1955, %v1728, -1e+30
        %v1995 = vsel %vm1955, %v1731, -1e+30
        %v1996 = vsel %vm1955, %v1736, -1e+30
        %v1997 = vsel %vm1955, %v1739, -1e+30
        %v1998 = vsel %vm1955, %v1744, -1e+30
        %v1999 = vsel %vm1955, %v1747, -1e+30
        %v2000 = vsel %vm1955, %v1752, -1e+30
        %v2001 = vsel %vm1955, %v1755, -1e+30
        %v2002 = vsel %vm1955, %v1760, -1e+30
        %v2003 = vsel %vm1955, %v1763, -1e+30
        %v2004 = vsel %vm1955, %v1889, -1e+30
        %v2005 = vsel %vm1955, %v1892, -1e+30
        %v2006 = vsel %vm1955, %v1897, -1e+30
        %v2007 = vsel %vm1955, %v1900, -1e+30
        %v2008 = vsel %vm1955, %v1905, -1e+30
        %v2009 = vsel %vm1955, %v1908, -1e+30
        %v2010 = vsel %vm1955, %v1913, -1e+30
        %v2011 = vsel %vm1955, %v1916, -1e+30
        %v2012 = vsel %vm1955, %v1921, -1e+30
        %v2013 = vsel %vm1955, %v1924, -1e+30
        %v2014 = vsel %vm1955, %v1929, -1e+30
        %v2015 = vsel %vm1955, %v1932, -1e+30
        %v2016 = vsel %vm1955, %v1937, -1e+30
        %v2017 = vsel %vm1955, %v1940, -1e+30
        %v2018 = vsel %vm1955, %v1945, -1e+30
        %v2019 = vsel %vm1955, %v1948, -1e+30
        %2020 = vmax.xlane.f32.xlu0 %v1956
        %v2021 = vpop.xlane.xlu0 %2020
        %2022 = vmax.xlane.f32.xlu0 %v1957
        %v2023 = vpop.xlane.xlu0 %2022
        %2024 = vmax.xlane.f32.xlu0 %v1958
        %v2025 = vpop.xlane.xlu0 %2024
        %2026 = vmax.xlane.f32.xlu0 %v1959
        %v2027 = vpop.xlane.xlu0 %2026
        %2028 = vmax.xlane.f32.xlu0 %v1960
        %v2029 = vpop.xlane.xlu0 %2028
        %2030 = vmax.xlane.f32.xlu0 %v1961
        %v2031 = vpop.xlane.xlu0 %2030
        %2032 = vmax.xlane.f32.xlu0 %v1962
        %v2033 = vpop.xlane.xlu0 %2032
        %2034 = vmax.xlane.f32.xlu0 %v1963
        %v2035 = vpop.xlane.xlu0 %2034
        %2036 = vmax.xlane.f32.xlu0 %v1964
        %v2037 = vpop.xlane.xlu0 %2036
        %2038 = vmax.xlane.f32.xlu0 %v1965
        %v2039 = vpop.xlane.xlu0 %2038
        %2040 = vmax.xlane.f32.xlu0 %v1966
        %v2041 = vpop.xlane.xlu0 %2040
        %2042 = vmax.xlane.f32.xlu0 %v1967
        %v2043 = vpop.xlane.xlu0 %2042
        %2044 = vmax.xlane.f32.xlu0 %v1968
        %v2045 = vpop.xlane.xlu0 %2044
        %2046 = vmax.xlane.f32.xlu0 %v1969
        %v2047 = vpop.xlane.xlu0 %2046
        %2048 = vmax.xlane.f32.xlu0 %v1970
        %v2049 = vpop.xlane.xlu0 %2048
        %2050 = vmax.xlane.f32.xlu0 %v1971
        %v2051 = vpop.xlane.xlu0 %2050
        %2052 = vmax.xlane.f32.xlu0 %v1972
        %v2053 = vpop.xlane.xlu0 %2052
        %2054 = vmax.xlane.f32.xlu0 %v1973
        %v2055 = vpop.xlane.xlu0 %2054
        %2056 = vmax.xlane.f32.xlu0 %v1974
        %v2057 = vpop.xlane.xlu0 %2056
        %2058 = vmax.xlane.f32.xlu0 %v1975
        %v2059 = vpop.xlane.xlu0 %2058
        %2060 = vmax.xlane.f32.xlu0 %v1976
        %v2061 = vpop.xlane.xlu0 %2060
        %2062 = vmax.xlane.f32.xlu0 %v1977
        %v2063 = vpop.xlane.xlu0 %2062
        %2064 = vmax.xlane.f32.xlu0 %v1978
        %v2065 = vpop.xlane.xlu0 %2064
        %2066 = vmax.xlane.f32.xlu0 %v1979
        %v2067 = vpop.xlane.xlu0 %2066
        %2068 = vmax.xlane.f32.xlu0 %v1980
        %v2069 = vpop.xlane.xlu0 %2068
        %2070 = vmax.xlane.f32.xlu0 %v1981
        %v2071 = vpop.xlane.xlu0 %2070
        %2072 = vmax.xlane.f32.xlu0 %v1982
        %v2073 = vpop.xlane.xlu0 %2072
        %2074 = vmax.xlane.f32.xlu0 %v1983
        %v2075 = vpop.xlane.xlu0 %2074
        %2076 = vmax.xlane.f32.xlu0 %v1984
        %v2077 = vpop.xlane.xlu0 %2076
        %2078 = vmax.xlane.f32.xlu0 %v1985
        %v2079 = vpop.xlane.xlu0 %2078
        %2080 = vmax.xlane.f32.xlu0 %v1986
        %v2081 = vpop.xlane.xlu0 %2080
        %2082 = vmax.xlane.f32.xlu0 %v1987
        %v2083 = vpop.xlane.xlu0 %2082
        %2084 = vmax.xlane.f32.xlu0 %v1988
        %v2085 = vpop.xlane.xlu0 %2084
        %2086 = vmax.xlane.f32.xlu0 %v1989
        %v2087 = vpop.xlane.xlu0 %2086
        %2088 = vmax.xlane.f32.xlu0 %v1990
        %v2089 = vpop.xlane.xlu0 %2088
        %2090 = vmax.xlane.f32.xlu0 %v1991
        %v2091 = vpop.xlane.xlu0 %2090
        %2092 = vmax.xlane.f32.xlu0 %v1992
        %v2093 = vpop.xlane.xlu0 %2092
        %2094 = vmax.xlane.f32.xlu0 %v1993
        %v2095 = vpop.xlane.xlu0 %2094
        %2096 = vmax.xlane.f32.xlu0 %v1994
        %v2097 = vpop.xlane.xlu0 %2096
        %2098 = vmax.xlane.f32.xlu0 %v1995
        %v2099 = vpop.xlane.xlu0 %2098
        %2100 = vmax.xlane.f32.xlu0 %v1996
        %v2101 = vpop.xlane.xlu0 %2100
        %2102 = vmax.xlane.f32.xlu0 %v1997
        %v2103 = vpop.xlane.xlu0 %2102
        %2104 = vmax.xlane.f32.xlu0 %v1998
        %v2105 = vpop.xlane.xlu0 %2104
        %2106 = vmax.xlane.f32.xlu0 %v1999
        %v2107 = vpop.xlane.xlu0 %2106
        %2108 = vmax.xlane.f32.xlu0 %v2000
        %v2109 = vpop.xlane.xlu0 %2108
        %2110 = vmax.xlane.f32.xlu0 %v2001
        %v2111 = vpop.xlane.xlu0 %2110
        %2112 = vmax.xlane.f32.xlu0 %v2002
        %v2113 = vpop.xlane.xlu0 %2112
        %2114 = vmax.xlane.f32.xlu0 %v2003
        %v2115 = vpop.xlane.xlu0 %2114
        %2116 = vmax.xlane.f32.xlu0 %v2004
        %v2117 = vpop.xlane.xlu0 %2116
        %2118 = vmax.xlane.f32.xlu0 %v2005
        %v2119 = vpop.xlane.xlu0 %2118
        %2120 = vmax.xlane.f32.xlu0 %v2006
        %v2121 = vpop.xlane.xlu0 %2120
        %2122 = vmax.xlane.f32.xlu0 %v2007
        %v2123 = vpop.xlane.xlu0 %2122
        %2124 = vmax.xlane.f32.xlu0 %v2008
        %v2125 = vpop.xlane.xlu0 %2124
        %2126 = vmax.xlane.f32.xlu0 %v2009
        %v2127 = vpop.xlane.xlu0 %2126
        %2128 = vmax.xlane.f32.xlu0 %v2010
        %v2129 = vpop.xlane.xlu0 %2128
        %2130 = vmax.xlane.f32.xlu0 %v2011
        %v2131 = vpop.xlane.xlu0 %2130
        %2132 = vmax.xlane.f32.xlu0 %v2012
        %v2133 = vpop.xlane.xlu0 %2132
        %2134 = vmax.xlane.f32.xlu0 %v2013
        %v2135 = vpop.xlane.xlu0 %2134
        %2136 = vmax.xlane.f32.xlu0 %v2014
        %v2137 = vpop.xlane.xlu0 %2136
        %2138 = vmax.xlane.f32.xlu0 %v2015
        %v2139 = vpop.xlane.xlu0 %2138
        %2140 = vmax.xlane.f32.xlu0 %v2016
        %v2141 = vpop.xlane.xlu0 %2140
        %2142 = vmax.xlane.f32.xlu0 %v2017
        %v2143 = vpop.xlane.xlu0 %2142
        %2144 = vmax.xlane.f32.xlu0 %v2018
        %v2145 = vpop.xlane.xlu0 %2144
        %2146 = vmax.xlane.f32.xlu0 %v2019
        %v2147 = vpop.xlane.xlu0 %2146
        %v2148 = vsub.f32 %v1956, %v2021
        %v2149 = vsub.f32 %v1957, %v2023
        %v2150 = vsub.f32 %v1958, %v2025
        %v2151 = vsub.f32 %v1959, %v2027
        %v2152 = vsub.f32 %v1960, %v2029
        %v2153 = vsub.f32 %v1961, %v2031
        %v2154 = vsub.f32 %v1962, %v2033
        %v2155 = vsub.f32 %v1963, %v2035
        %v2156 = vsub.f32 %v1964, %v2037
        %v2157 = vsub.f32 %v1965, %v2039
        %v2158 = vsub.f32 %v1966, %v2041
        %v2159 = vsub.f32 %v1967, %v2043
        %v2160 = vsub.f32 %v1968, %v2045
        %v2161 = vsub.f32 %v1969, %v2047
        %v2162 = vsub.f32 %v1970, %v2049
        %v2163 = vsub.f32 %v1971, %v2051
        %v2164 = vsub.f32 %v1972, %v2053
        %v2165 = vsub.f32 %v1973, %v2055
        %v2166 = vsub.f32 %v1974, %v2057
        %v2167 = vsub.f32 %v1975, %v2059
        %v2168 = vsub.f32 %v1976, %v2061
        %v2169 = vsub.f32 %v1977, %v2063
        %v2170 = vsub.f32 %v1978, %v2065
        %v2171 = vsub.f32 %v1979, %v2067
        %v2172 = vsub.f32 %v1980, %v2069
        %v2173 = vsub.f32 %v1981, %v2071
        %v2174 = vsub.f32 %v1982, %v2073
        %v2175 = vsub.f32 %v1983, %v2075
        %v2176 = vsub.f32 %v1984, %v2077
        %v2177 = vsub.f32 %v1985, %v2079
        %v2178 = vsub.f32 %v1986, %v2081
        %v2179 = vsub.f32 %v1987, %v2083
        %v2180 = vsub.f32 %v1988, %v2085
        %v2181 = vsub.f32 %v1989, %v2087
        %v2182 = vsub.f32 %v1990, %v2089
        %v2183 = vsub.f32 %v1991, %v2091
        %v2184 = vsub.f32 %v1992, %v2093
        %v2185 = vsub.f32 %v1993, %v2095
        %v2186 = vsub.f32 %v1994, %v2097
        %v2187 = vsub.f32 %v1995, %v2099
        %v2188 = vsub.f32 %v1996, %v2101
        %v2189 = vsub.f32 %v1997, %v2103
        %v2190 = vsub.f32 %v1998, %v2105
        %v2191 = vsub.f32 %v1999, %v2107
        %v2192 = vsub.f32 %v2000, %v2109
        %v2193 = vsub.f32 %v2001, %v2111
        %v2194 = vsub.f32 %v2002, %v2113
        %v2195 = vsub.f32 %v2003, %v2115
        %v2196 = vsub.f32 %v2004, %v2117
        %v2197 = vsub.f32 %v2005, %v2119
        %v2198 = vsub.f32 %v2006, %v2121
        %v2199 = vsub.f32 %v2007, %v2123
        %v2200 = vsub.f32 %v2008, %v2125
        %v2201 = vsub.f32 %v2009, %v2127
        %v2202 = vsub.f32 %v2010, %v2129
        %v2203 = vsub.f32 %v2011, %v2131
        %v2204 = vsub.f32 %v2012, %v2133
        %v2205 = vsub.f32 %v2013, %v2135
        %v2206 = vsub.f32 %v2014, %v2137
        %v2207 = vsub.f32 %v2015, %v2139
        %v2208 = vsub.f32 %v2016, %v2141
        %v2209 = vsub.f32 %v2017, %v2143
        %v2210 = vsub.f32 %v2018, %v2145
        %v2211 = vsub.f32 %v2019, %v2147
        %v2212 = vmul.f32 %v2148, 1.442695
        %v2213 = vpow.pop %v2212
        %v2214 = vmul.f32 %v2149, 1.442695
        %v2215 = vpow.pop %v2214
        %v2216 = vmul.f32 %v2150, 1.442695
        %v2217 = vpow.pop %v2216
        %v2218 = vmul.f32 %v2151, 1.442695
        %v2219 = vpow.pop %v2218
        %v2220 = vmul.f32 %v2152, 1.442695
        %v2221 = vpow.pop %v2220
        %v2222 = vmul.f32 %v2153, 1.442695
        %v2223 = vpow.pop %v2222
        %v2224 = vmul.f32 %v2154, 1.442695
        %v2225 = vpow.pop %v2224
        %v2226 = vmul.f32 %v2155, 1.442695
        %v2227 = vpow.pop %v2226
        %v2228 = vmul.f32 %v2156, 1.442695
        %v2229 = vpow.pop %v2228
        %v2230 = vmul.f32 %v2157, 1.442695
        %v2231 = vpow.pop %v2230
        %v2232 = vmul.f32 %v2158, 1.442695
        %v2233 = vpow.pop %v2232
        %v2234 = vmul.f32 %v2159, 1.442695
        %v2235 = vpow.pop %v2234
        %v2236 = vmul.f32 %v2160, 1.442695
        %v2237 = vpow.pop %v2236
        %v2238 = vmul.f32 %v2161, 1.442695
        %v2239 = vpow.pop %v2238
        %v2240 = vmul.f32 %v2162, 1.442695
        %v2241 = vpow.pop %v2240
        %v2242 = vmul.f32 %v2163, 1.442695
        %v2243 = vpow.pop %v2242
        %v2244 = vmul.f32 %v2164, 1.442695
        %v2245 = vpow.pop %v2244
        %v2246 = vmul.f32 %v2165, 1.442695
        %v2247 = vpow.pop %v2246
        %v2248 = vmul.f32 %v2166, 1.442695
        %v2249 = vpow.pop %v2248
        %v2250 = vmul.f32 %v2167, 1.442695
        %v2251 = vpow.pop %v2250
        %v2252 = vmul.f32 %v2168, 1.442695
        %v2253 = vpow.pop %v2252
        %v2254 = vmul.f32 %v2169, 1.442695
        %v2255 = vpow.pop %v2254
        %v2256 = vmul.f32 %v2170, 1.442695
        %v2257 = vpow.pop %v2256
        %v2258 = vmul.f32 %v2171, 1.442695
        %v2259 = vpow.pop %v2258
        %v2260 = vmul.f32 %v2172, 1.442695
        %v2261 = vpow.pop %v2260
        %v2262 = vmul.f32 %v2173, 1.442695
        %v2263 = vpow.pop %v2262
        %v2264 = vmul.f32 %v2174, 1.442695
        %v2265 = vpow.pop %v2264
        %v2266 = vmul.f32 %v2175, 1.442695
        %v2267 = vpow.pop %v2266
        %v2268 = vmul.f32 %v2176, 1.442695
        %v2269 = vpow.pop %v2268
        %v2270 = vmul.f32 %v2177, 1.442695
        %v2271 = vpow.pop %v2270
        %v2272 = vmul.f32 %v2178, 1.442695
        %v2273 = vpow.pop %v2272
        %v2274 = vmul.f32 %v2179, 1.442695
        %v2275 = vpow.pop %v2274
        %v2276 = vmul.f32 %v2180, 1.442695
        %v2277 = vpow.pop %v2276
        %v2278 = vmul.f32 %v2181, 1.442695
        %v2279 = vpow.pop %v2278
        %v2280 = vmul.f32 %v2182, 1.442695
        %v2281 = vpow.pop %v2280
        %v2282 = vmul.f32 %v2183, 1.442695
        %v2283 = vpow.pop %v2282
        %v2284 = vmul.f32 %v2184, 1.442695
        %v2285 = vpow.pop %v2284
        %v2286 = vmul.f32 %v2185, 1.442695
        %v2287 = vpow.pop %v2286
        %v2288 = vmul.f32 %v2186, 1.442695
        %v2289 = vpow.pop %v2288
        %v2290 = vmul.f32 %v2187, 1.442695
        %v2291 = vpow.pop %v2290
        %v2292 = vmul.f32 %v2188, 1.442695
        %v2293 = vpow.pop %v2292
        %v2294 = vmul.f32 %v2189, 1.442695
        %v2295 = vpow.pop %v2294
        %v2296 = vmul.f32 %v2190, 1.442695
        %v2297 = vpow.pop %v2296
        %v2298 = vmul.f32 %v2191, 1.442695
        %v2299 = vpow.pop %v2298
        %v2300 = vmul.f32 %v2192, 1.442695
        %v2301 = vpow.pop %v2300
        %v2302 = vmul.f32 %v2193, 1.442695
        %v2303 = vpow.pop %v2302
        %v2304 = vmul.f32 %v2194, 1.442695
        %v2305 = vpow.pop %v2304
        %v2306 = vmul.f32 %v2195, 1.442695
        %v2307 = vpow.pop %v2306
        %v2308 = vmul.f32 %v2196, 1.442695
        %v2309 = vpow.pop %v2308
        %v2310 = vmul.f32 %v2197, 1.442695
        %v2311 = vpow.pop %v2310
        %v2312 = vmul.f32 %v2198, 1.442695
        %v2313 = vpow.pop %v2312
        %v2314 = vmul.f32 %v2199, 1.442695
        %v2315 = vpow.pop %v2314
        %v2316 = vmul.f32 %v2200, 1.442695
        %v2317 = vpow.pop %v2316
        %v2318 = vmul.f32 %v2201, 1.442695
        %v2319 = vpow.pop %v2318
        %v2320 = vmul.f32 %v2202, 1.442695
        %v2321 = vpow.pop %v2320
        %v2322 = vmul.f32 %v2203, 1.442695
        %v2323 = vpow.pop %v2322
        %v2324 = vmul.f32 %v2204, 1.442695
        %v2325 = vpow.pop %v2324
        %v2326 = vmul.f32 %v2205, 1.442695
        %v2327 = vpow.pop %v2326
        %v2328 = vmul.f32 %v2206, 1.442695
        %v2329 = vpow.pop %v2328
        %v2330 = vmul.f32 %v2207, 1.442695
        %v2331 = vpow.pop %v2330
        %v2332 = vmul.f32 %v2208, 1.442695
        %v2333 = vpow.pop %v2332
        %v2334 = vmul.f32 %v2209, 1.442695
        %v2335 = vpow.pop %v2334
        %v2336 = vmul.f32 %v2210, 1.442695
        %v2337 = vpow.pop %v2336
        %v2338 = vmul.f32 %v2211, 1.442695
        %v2339 = vpow.pop %v2338
        %2340 = vadd.xlane.f32.xlu0 %v2213
        %v2341 = vpop.xlane.xlu0 %2340
        %2342 = vadd.xlane.f32.xlu0 %v2215
        %v2343 = vpop.xlane.xlu0 %2342
        %2344 = vadd.xlane.f32.xlu0 %v2217
        %v2345 = vpop.xlane.xlu0 %2344
        %2346 = vadd.xlane.f32.xlu0 %v2219
        %v2347 = vpop.xlane.xlu0 %2346
        %2348 = vadd.xlane.f32.xlu0 %v2221
        %v2349 = vpop.xlane.xlu0 %2348
        %2350 = vadd.xlane.f32.xlu0 %v2223
        %v2351 = vpop.xlane.xlu0 %2350
        %2352 = vadd.xlane.f32.xlu0 %v2225
        %v2353 = vpop.xlane.xlu0 %2352
        %2354 = vadd.xlane.f32.xlu0 %v2227
        %v2355 = vpop.xlane.xlu0 %2354
        %2356 = vadd.xlane.f32.xlu0 %v2229
        %v2357 = vpop.xlane.xlu0 %2356
        %2358 = vadd.xlane.f32.xlu0 %v2231
        %v2359 = vpop.xlane.xlu0 %2358
        %2360 = vadd.xlane.f32.xlu0 %v2233
        %v2361 = vpop.xlane.xlu0 %2360
        %2362 = vadd.xlane.f32.xlu0 %v2235
        %v2363 = vpop.xlane.xlu0 %2362
        %2364 = vadd.xlane.f32.xlu0 %v2237
        %v2365 = vpop.xlane.xlu0 %2364
        %2366 = vadd.xlane.f32.xlu0 %v2239
        %v2367 = vpop.xlane.xlu0 %2366
        %2368 = vadd.xlane.f32.xlu0 %v2241
        %v2369 = vpop.xlane.xlu0 %2368
        %2370 = vadd.xlane.f32.xlu0 %v2243
        %v2371 = vpop.xlane.xlu0 %2370
        %2372 = vadd.xlane.f32.xlu0 %v2245
        %v2373 = vpop.xlane.xlu0 %2372
        %2374 = vadd.xlane.f32.xlu0 %v2247
        %v2375 = vpop.xlane.xlu0 %2374
        %2376 = vadd.xlane.f32.xlu0 %v2249
        %v2377 = vpop.xlane.xlu0 %2376
        %2378 = vadd.xlane.f32.xlu0 %v2251
        %v2379 = vpop.xlane.xlu0 %2378
        %2380 = vadd.xlane.f32.xlu0 %v2253
        %v2381 = vpop.xlane.xlu0 %2380
        %2382 = vadd.xlane.f32.xlu0 %v2255
        %v2383 = vpop.xlane.xlu0 %2382
        %2384 = vadd.xlane.f32.xlu0 %v2257
        %v2385 = vpop.xlane.xlu0 %2384
        %2386 = vadd.xlane.f32.xlu0 %v2259
        %v2387 = vpop.xlane.xlu0 %2386
        %2388 = vadd.xlane.f32.xlu0 %v2261
        %v2389 = vpop.xlane.xlu0 %2388
        %2390 = vadd.xlane.f32.xlu0 %v2263
        %v2391 = vpop.xlane.xlu0 %2390
        %2392 = vadd.xlane.f32.xlu0 %v2265
        %v2393 = vpop.xlane.xlu0 %2392
        %2394 = vadd.xlane.f32.xlu0 %v2267
        %v2395 = vpop.xlane.xlu0 %2394
        %2396 = vadd.xlane.f32.xlu0 %v2269
        %v2397 = vpop.xlane.xlu0 %2396
        %2398 = vadd.xlane.f32.xlu0 %v2271
        %v2399 = vpop.xlane.xlu0 %2398
        %2400 = vadd.xlane.f32.xlu0 %v2273
        %v2401 = vpop.xlane.xlu0 %2400
        %2402 = vadd.xlane.f32.xlu0 %v2275
        %v2403 = vpop.xlane.xlu0 %2402
        %2404 = vadd.xlane.f32.xlu0 %v2277
        %v2405 = vpop.xlane.xlu0 %2404
        %2406 = vadd.xlane.f32.xlu0 %v2279
        %v2407 = vpop.xlane.xlu0 %2406
        %2408 = vadd.xlane.f32.xlu0 %v2281
        %v2409 = vpop.xlane.xlu0 %2408
        %2410 = vadd.xlane.f32.xlu0 %v2283
        %v2411 = vpop.xlane.xlu0 %2410
        %2412 = vadd.xlane.f32.xlu0 %v2285
        %v2413 = vpop.xlane.xlu0 %2412
        %2414 = vadd.xlane.f32.xlu0 %v2287
        %v2415 = vpop.xlane.xlu0 %2414
        %2416 = vadd.xlane.f32.xlu0 %v2289
        %v2417 = vpop.xlane.xlu0 %2416
        %2418 = vadd.xlane.f32.xlu0 %v2291
        %v2419 = vpop.xlane.xlu0 %2418
        %2420 = vadd.xlane.f32.xlu0 %v2293
        %v2421 = vpop.xlane.xlu0 %2420
        %2422 = vadd.xlane.f32.xlu0 %v2295
        %v2423 = vpop.xlane.xlu0 %2422
        %2424 = vadd.xlane.f32.xlu0 %v2297
        %v2425 = vpop.xlane.xlu0 %2424
        %2426 = vadd.xlane.f32.xlu0 %v2299
        %v2427 = vpop.xlane.xlu0 %2426
        %2428 = vadd.xlane.f32.xlu0 %v2301
        %v2429 = vpop.xlane.xlu0 %2428
        %2430 = vadd.xlane.f32.xlu0 %v2303
        %v2431 = vpop.xlane.xlu0 %2430
        %2432 = vadd.xlane.f32.xlu0 %v2305
        %v2433 = vpop.xlane.xlu0 %2432
        %2434 = vadd.xlane.f32.xlu0 %v2307
        %v2435 = vpop.xlane.xlu0 %2434
        %2436 = vadd.xlane.f32.xlu0 %v2309
        %v2437 = vpop.xlane.xlu0 %2436
        %2438 = vadd.xlane.f32.xlu0 %v2311
        %v2439 = vpop.xlane.xlu0 %2438
        %2440 = vadd.xlane.f32.xlu0 %v2313
        %v2441 = vpop.xlane.xlu0 %2440
        %2442 = vadd.xlane.f32.xlu0 %v2315
        %v2443 = vpop.xlane.xlu0 %2442
        %2444 = vadd.xlane.f32.xlu0 %v2317
        %v2445 = vpop.xlane.xlu0 %2444
        %2446 = vadd.xlane.f32.xlu0 %v2319
        %v2447 = vpop.xlane.xlu0 %2446
        %2448 = vadd.xlane.f32.xlu0 %v2321
        %v2449 = vpop.xlane.xlu0 %2448
        %2450 = vadd.xlane.f32.xlu0 %v2323
        %v2451 = vpop.xlane.xlu0 %2450
        %2452 = vadd.xlane.f32.xlu0 %v2325
        %v2453 = vpop.xlane.xlu0 %2452
        %2454 = vadd.xlane.f32.xlu0 %v2327
        %v2455 = vpop.xlane.xlu0 %2454
        %2456 = vadd.xlane.f32.xlu0 %v2329
        %v2457 = vpop.xlane.xlu0 %2456
        %2458 = vadd.xlane.f32.xlu0 %v2331
        %v2459 = vpop.xlane.xlu0 %2458
        %2460 = vadd.xlane.f32.xlu0 %v2333
        %v2461 = vpop.xlane.xlu0 %2460
        %2462 = vadd.xlane.f32.xlu0 %v2335
        %v2463 = vpop.xlane.xlu0 %2462
        %2464 = vadd.xlane.f32.xlu0 %v2337
        %v2465 = vpop.xlane.xlu0 %2464
        %2466 = vadd.xlane.f32.xlu0 %v2339
        %v2467 = vpop.xlane.xlu0 %2466
        %v2468 = vrcp.pop %v2341
        %v2469 = vrcp.pop %v2343
        %v2470 = vrcp.pop %v2345
        %v2471 = vrcp.pop %v2347
        %v2472 = vrcp.pop %v2349
        %v2473 = vrcp.pop %v2351
        %v2474 = vrcp.pop %v2353
        %v2475 = vrcp.pop %v2355
        %v2476 = vrcp.pop %v2357
        %v2477 = vrcp.pop %v2359
        %v2478 = vrcp.pop %v2361
        %v2479 = vrcp.pop %v2363
        %v2480 = vrcp.pop %v2365
        %v2481 = vrcp.pop %v2367
        %v2482 = vrcp.pop %v2369
        %v2483 = vrcp.pop %v2371
        %v2484 = vrcp.pop %v2373
        %v2485 = vrcp.pop %v2375
        %v2486 = vrcp.pop %v2377
        %v2487 = vrcp.pop %v2379
        %v2488 = vrcp.pop %v2381
        %v2489 = vrcp.pop %v2383
        %v2490 = vrcp.pop %v2385
        %v2491 = vrcp.pop %v2387
        %v2492 = vrcp.pop %v2389
        %v2493 = vrcp.pop %v2391
        %v2494 = vrcp.pop %v2393
        %v2495 = vrcp.pop %v2395
        %v2496 = vrcp.pop %v2397
        %v2497 = vrcp.pop %v2399
        %v2498 = vrcp.pop %v2401
        %v2499 = vrcp.pop %v2403
        %v2500 = vrcp.pop %v2405
        %v2501 = vrcp.pop %v2407
        %v2502 = vrcp.pop %v2409
        %v2503 = vrcp.pop %v2411
        %v2504 = vrcp.pop %v2413
        %v2505 = vrcp.pop %v2415
        %v2506 = vrcp.pop %v2417
        %v2507 = vrcp.pop %v2419
        %v2508 = vrcp.pop %v2421
        %v2509 = vrcp.pop %v2423
        %v2510 = vrcp.pop %v2425
        %v2511 = vrcp.pop %v2427
        %v2512 = vrcp.pop %v2429
        %v2513 = vrcp.pop %v2431
        %v2514 = vrcp.pop %v2433
        %v2515 = vrcp.pop %v2435
        %v2516 = vrcp.pop %v2437
        %v2517 = vrcp.pop %v2439
        %v2518 = vrcp.pop %v2441
        %v2519 = vrcp.pop %v2443
        %v2520 = vrcp.pop %v2445
        %v2521 = vrcp.pop %v2447
        %v2522 = vrcp.pop %v2449
        %v2523 = vrcp.pop %v2451
        %v2524 = vrcp.pop %v2453
        %v2525 = vrcp.pop %v2455
        %v2526 = vrcp.pop %v2457
        %v2527 = vrcp.pop %v2459
        %v2528 = vrcp.pop %v2461
        %v2529 = vrcp.pop %v2463
        %v2530 = vrcp.pop %v2465
        %v2531 = vrcp.pop %v2467
        %v2532 = vmul.f32 %v2213, %v2468
        %v2533 = vmul.f32 %v2215, %v2469
        %v2534 = vmul.f32 %v2217, %v2470
        %v2535 = vmul.f32 %v2219, %v2471
        %v2536 = vmul.f32 %v2221, %v2472
        %v2537 = vmul.f32 %v2223, %v2473
        %v2538 = vmul.f32 %v2225, %v2474
        %v2539 = vmul.f32 %v2227, %v2475
        %v2540 = vmul.f32 %v2229, %v2476
        %v2541 = vmul.f32 %v2231, %v2477
        %v2542 = vmul.f32 %v2233, %v2478
        %v2543 = vmul.f32 %v2235, %v2479
        %v2544 = vmul.f32 %v2237, %v2480
        %v2545 = vmul.f32 %v2239, %v2481
        %v2546 = vmul.f32 %v2241, %v2482
        %v2547 = vmul.f32 %v2243, %v2483
        %v2548 = vmul.f32 %v2245, %v2484
        %v2549 = vmul.f32 %v2247, %v2485
        %v2550 = vmul.f32 %v2249, %v2486
        %v2551 = vmul.f32 %v2251, %v2487
        %v2552 = vmul.f32 %v2253, %v2488
        %v2553 = vmul.f32 %v2255, %v2489
        %v2554 = vmul.f32 %v2257, %v2490
        %v2555 = vmul.f32 %v2259, %v2491
        %v2556 = vmul.f32 %v2261, %v2492
        %v2557 = vmul.f32 %v2263, %v2493
        %v2558 = vmul.f32 %v2265, %v2494
        %v2559 = vmul.f32 %v2267, %v2495
        %v2560 = vmul.f32 %v2269, %v2496
        %v2561 = vmul.f32 %v2271, %v2497
        %v2562 = vmul.f32 %v2273, %v2498
        %v2563 = vmul.f32 %v2275, %v2499
        %v2564 = vmul.f32 %v2277, %v2500
        %v2565 = vmul.f32 %v2279, %v2501
        %v2566 = vmul.f32 %v2281, %v2502
        %v2567 = vmul.f32 %v2283, %v2503
        %v2568 = vmul.f32 %v2285, %v2504
        %v2569 = vmul.f32 %v2287, %v2505
        %v2570 = vmul.f32 %v2289, %v2506
        %v2571 = vmul.f32 %v2291, %v2507
        %v2572 = vmul.f32 %v2293, %v2508
        %v2573 = vmul.f32 %v2295, %v2509
        %v2574 = vmul.f32 %v2297, %v2510
        %v2575 = vmul.f32 %v2299, %v2511
        %v2576 = vmul.f32 %v2301, %v2512
        %v2577 = vmul.f32 %v2303, %v2513
        %v2578 = vmul.f32 %v2305, %v2514
        %v2579 = vmul.f32 %v2307, %v2515
        %v2580 = vmul.f32 %v2309, %v2516
        %v2581 = vmul.f32 %v2311, %v2517
        %v2582 = vmul.f32 %v2313, %v2518
        %v2583 = vmul.f32 %v2315, %v2519
        %v2584 = vmul.f32 %v2317, %v2520
        %v2585 = vmul.f32 %v2319, %v2521
        %v2586 = vmul.f32 %v2321, %v2522
        %v2587 = vmul.f32 %v2323, %v2523
        %v2588 = vmul.f32 %v2325, %v2524
        %v2589 = vmul.f32 %v2327, %v2525
        %v2590 = vmul.f32 %v2329, %v2526
        %v2591 = vmul.f32 %v2331, %v2527
        %v2592 = vmul.f32 %v2333, %v2528
        %v2593 = vmul.f32 %v2335, %v2529
        %v2594 = vmul.f32 %v2337, %v2530
        %v2595 = vmul.f32 %v2339, %v2531
        %v2596 = vpack.c.bf16 %v2533, %v2532
        %v2597 = vpack.c.bf16 %v2535, %v2534
        %v2598 = vpack.c.bf16 %v2537, %v2536
        %v2599 = vpack.c.bf16 %v2539, %v2538
        %v2600 = vpack.c.bf16 %v2541, %v2540
        %v2601 = vpack.c.bf16 %v2543, %v2542
        %v2602 = vpack.c.bf16 %v2545, %v2544
        %v2603 = vpack.c.bf16 %v2547, %v2546
        %v2604 = vpack.c.bf16 %v2549, %v2548
        %v2605 = vpack.c.bf16 %v2551, %v2550
        %v2606 = vpack.c.bf16 %v2553, %v2552
        %v2607 = vpack.c.bf16 %v2555, %v2554
        %v2608 = vpack.c.bf16 %v2557, %v2556
        %v2609 = vpack.c.bf16 %v2559, %v2558
        %v2610 = vpack.c.bf16 %v2561, %v2560
        %v2611 = vpack.c.bf16 %v2563, %v2562
        %v2612 = vpack.c.bf16 %v2565, %v2564
        %v2613 = vpack.c.bf16 %v2567, %v2566
        %v2614 = vpack.c.bf16 %v2569, %v2568
        %v2615 = vpack.c.bf16 %v2571, %v2570
        %v2616 = vpack.c.bf16 %v2573, %v2572
        %v2617 = vpack.c.bf16 %v2575, %v2574
        %v2618 = vpack.c.bf16 %v2577, %v2576
        %v2619 = vpack.c.bf16 %v2579, %v2578
        %v2620 = vpack.c.bf16 %v2581, %v2580
        %v2621 = vpack.c.bf16 %v2583, %v2582
        %v2622 = vpack.c.bf16 %v2585, %v2584
        %v2623 = vpack.c.bf16 %v2587, %v2586
        %v2624 = vpack.c.bf16 %v2589, %v2588
        %v2625 = vpack.c.bf16 %v2591, %v2590
        %v2626 = vpack.c.bf16 %v2593, %v2592
        %v2627 = vpack.c.bf16 %v2595, %v2594
        %v2644 = vunpack.c.l.b16 %v1146
        %v2645 = vunpack.c.l.b16 %v1147
        %v2646 = vunpack.c.l.b16 %v1148
        %v2647 = vunpack.c.l.b16 %v1149
        %v2648 = vunpack.c.l.b16 %v1150
        %v2649 = vunpack.c.l.b16 %v1151
        %v2650 = vunpack.c.l.b16 %v1152
        %v2651 = vunpack.c.l.b16 %v1153
        %v2652 = vunpack.c.l.b16 %v1154
        %v2653 = vunpack.c.l.b16 %v1155
        %v2654 = vunpack.c.l.b16 %v1156
        %v2655 = vunpack.c.l.b16 %v1157
        %v2656 = vunpack.c.l.b16 %v1158
        %v2657 = vunpack.c.l.b16 %v1159
        %v2658 = vunpack.c.l.b16 %v1160
        %v2659 = vunpack.c.l.b16 %v1161
        %v2660 = vpack.c.b16 %v2645, %v2644
        %v2661 = vpack.c.b16 %v2647, %v2646
        %v2662 = vpack.c.b16 %v2649, %v2648
        %v2663 = vpack.c.b16 %v2651, %v2650
        %v2664 = vpack.c.b16 %v2653, %v2652
        %v2665 = vpack.c.b16 %v2655, %v2654
        %v2666 = vpack.c.b16 %v2657, %v2656
        %v2667 = vpack.c.b16 %v2659, %v2658
        %2676 = vxpose.xlu0.c.b16.start [1/8] %v2660, 128
        %2677 = vxpose.xlu0.c.b16.cont [2/8] %v2661, 128
        %2678 = vxpose.xlu0.c.b16.cont [3/8] %v2662, 128
        %2679 = vxpose.xlu0.c.b16.cont [4/8] %v2663, 128
        %2680 = vxpose.xlu0.c.b16.cont [5/8] %v2664, 128
        %2681 = vxpose.xlu0.c.b16.cont [6/8] %v2665, 128
        %2682 = vxpose.xlu0.c.b16.cont [7/8] %v2666, 128
        %2683 = vxpose.xlu0.c.b16.end [8/8] %v2667, 128
        %v2684 = vpop.trf.xlu0
        %v2685 = vpop.trf.xlu0
        %v2686 = vpop.trf.xlu0
        %v2687 = vpop.trf.xlu0
        %v2688 = vpop.trf.xlu0
        %v2689 = vpop.trf.xlu0
        %v2690 = vpop.trf.xlu0
        %v2691 = vpop.trf.xlu0
        %2692 = vmatprep.subr.bf16.mxu0 0
        %2693 = vmatpush1.bf16.xpose.msra.mxu0 %v2603
        %2694 = vmatprep.subr.bf16.mxu0 0
        %2695 = vmatpush1.bf16.xpose.msra.mxu0 %v2602
        %2696 = vmatprep.subr.bf16.mxu0 0
        %2697 = vmatpush1.bf16.xpose.msra.mxu0 %v2601
        %2698 = vmatprep.subr.bf16.mxu0 0
        %2699 = vmatpush1.bf16.xpose.msra.mxu0 %v2600
        %2700 = vmatprep.subr.bf16.mxu0 0
        %2701 = vmatpush1.bf16.xpose.msra.mxu0 %v2599
        %2702 = vmatprep.subr.bf16.mxu0 0
        %2703 = vmatpush1.bf16.xpose.msra.mxu0 %v2598
        %2704 = vmatprep.subr.bf16.mxu0 0
        %2705 = vmatpush1.bf16.xpose.msra.mxu0 %v2597
        %2706 = vmatprep.subr.bf16.mxu0 0
        %2707 = vmatpush1.bf16.xpose.msra.mxu0 %v2596
        %2708 = vmatprep.subr.bf16.mxu0 0
        %2709 = vmatpush2.bf16.xpose.msra.mxu0 0
        %2710 = vmatprep.subr.bf16.mxu0 0
        %2711 = vmatpush2.bf16.xpose.msra.mxu0 0
        %2712 = vmatprep.subr.bf16.mxu0 0
        %2713 = vmatpush2.bf16.xpose.msra.mxu0 0
        %2714 = vmatprep.subr.bf16.mxu0 0
        %2715 = vmatpush2.bf16.xpose.msra.mxu0 0
        %2716 = vmatprep.subr.bf16.mxu0 0
        %2717 = vmatpush2.bf16.xpose.msra.mxu0 0
        %2718 = vmatprep.subr.bf16.mxu0 0
        %2719 = vmatpush2.bf16.xpose.msra.mxu0 0
        %2720 = vmatprep.subr.bf16.mxu0 0
        %2721 = vmatpush2.bf16.xpose.msra.mxu0 0
        %2722 = vmatprep.subr.bf16.mxu0 0
        %2723 = vmatpush2.bf16.xpose.msra.mxu0 0
        %2724 = vmatprep.mubr.bf16.mxu0 0
        %2725 = vmatmul.mubr.bf16.gmra.mxu0 %v2684
        %v2726 = vpop.f32.mrf.mxu0
        %v2727 = vadd.f32 0.0, %v2726
        %v2728 = vpop.f32.mrf.mxu0
        %v2729 = vpop.f32.mrf.mxu0
        %v2730 = vadd.f32 0.0, %v2729
        %v2731 = vpop.f32.mrf.mxu0
        %2732 = vmatprep.mubr.bf16.mxu0 0
        %2733 = vmatmul.mubr.bf16.gmra.mxu0 %v2685
        %v2734 = vpop.f32.mrf.mxu0
        %v2735 = vadd.f32 0.0, %v2734
        %v2736 = vpop.f32.mrf.mxu0
        %v2737 = vpop.f32.mrf.mxu0
        %v2738 = vadd.f32 0.0, %v2737
        %v2739 = vpop.f32.mrf.mxu0
        %2740 = vdwg.mxu0
        %v2757 = vunpack.c.l.b16 %v1162
        %v2758 = vunpack.c.l.b16 %v1163
        %v2759 = vunpack.c.l.b16 %v1164
        %v2760 = vunpack.c.l.b16 %v1165
        %v2761 = vunpack.c.l.b16 %v1166
        %v2762 = vunpack.c.l.b16 %v1167
        %v2763 = vunpack.c.l.b16 %v1168
        %v2764 = vunpack.c.l.b16 %v1169
        %v2765 = vunpack.c.l.b16 %v1170
        %v2766 = vunpack.c.l.b16 %v1171
        %v2767 = vunpack.c.l.b16 %v1172
        %v2768 = vunpack.c.l.b16 %v1173
        %v2769 = vunpack.c.l.b16 %v1174
        %v2770 = vunpack.c.l.b16 %v1175
        %v2771 = vunpack.c.l.b16 %v1176
        %v2772 = vunpack.c.l.b16 %v1177
        %v2773 = vpack.c.b16 %v2758, %v2757
        %v2774 = vpack.c.b16 %v2760, %v2759
        %v2775 = vpack.c.b16 %v2762, %v2761
        %v2776 = vpack.c.b16 %v2764, %v2763
        %v2777 = vpack.c.b16 %v2766, %v2765
        %v2778 = vpack.c.b16 %v2768, %v2767
        %v2779 = vpack.c.b16 %v2770, %v2769
        %v2780 = vpack.c.b16 %v2772, %v2771
        %2789 = vxpose.xlu0.c.b16.start [1/8] %v2773, 128
        %2790 = vxpose.xlu0.c.b16.cont [2/8] %v2774, 128
        %2791 = vxpose.xlu0.c.b16.cont [3/8] %v2775, 128
        %2792 = vxpose.xlu0.c.b16.cont [4/8] %v2776, 128
        %2793 = vxpose.xlu0.c.b16.cont [5/8] %v2777, 128
        %2794 = vxpose.xlu0.c.b16.cont [6/8] %v2778, 128
        %2795 = vxpose.xlu0.c.b16.cont [7/8] %v2779, 128
        %2796 = vxpose.xlu0.c.b16.end [8/8] %v2780, 128
        %v2797 = vpop.trf.xlu0
        %v2798 = vpop.trf.xlu0
        %v2799 = vpop.trf.xlu0
        %v2800 = vpop.trf.xlu0
        %v2801 = vpop.trf.xlu0
        %v2802 = vpop.trf.xlu0
        %v2803 = vpop.trf.xlu0
        %v2804 = vpop.trf.xlu0
        %2805 = vmatprep.subr.bf16.mxu0 0
        %2806 = vmatpush1.bf16.xpose.msra.mxu0 %v2611
        %2807 = vmatprep.subr.bf16.mxu0 0
        %2808 = vmatpush1.bf16.xpose.msra.mxu0 %v2610
        %2809 = vmatprep.subr.bf16.mxu0 0
        %2810 = vmatpush1.bf16.xpose.msra.mxu0 %v2609
        %2811 = vmatprep.subr.bf16.mxu0 0
        %2812 = vmatpush1.bf16.xpose.msra.mxu0 %v2608
        %2813 = vmatprep.subr.bf16.mxu0 0
        %2814 = vmatpush1.bf16.xpose.msra.mxu0 %v2607
        %2815 = vmatprep.subr.bf16.mxu0 0
        %2816 = vmatpush1.bf16.xpose.msra.mxu0 %v2606
        %2817 = vmatprep.subr.bf16.mxu0 0
        %2818 = vmatpush1.bf16.xpose.msra.mxu0 %v2605
        %2819 = vmatprep.subr.bf16.mxu0 0
        %2820 = vmatpush1.bf16.xpose.msra.mxu0 %v2604
        %2821 = vmatprep.subr.bf16.mxu0 0
        %2822 = vmatpush2.bf16.xpose.msra.mxu0 0
        %2823 = vmatprep.subr.bf16.mxu0 0
        %2824 = vmatpush2.bf16.xpose.msra.mxu0 0
        %2825 = vmatprep.subr.bf16.mxu0 0
        %2826 = vmatpush2.bf16.xpose.msra.mxu0 0
        %2827 = vmatprep.subr.bf16.mxu0 0
        %2828 = vmatpush2.bf16.xpose.msra.mxu0 0
        %2829 = vmatprep.subr.bf16.mxu0 0
        %2830 = vmatpush2.bf16.xpose.msra.mxu0 0
        %2831 = vmatprep.subr.bf16.mxu0 0
        %2832 = vmatpush2.bf16.xpose.msra.mxu0 0
        %2833 = vmatprep.subr.bf16.mxu0 0
        %2834 = vmatpush2.bf16.xpose.msra.mxu0 0
        %2835 = vmatprep.subr.bf16.mxu0 0
        %2836 = vmatpush2.bf16.xpose.msra.mxu0 0
        %2837 = vmatprep.mubr.bf16.mxu0 0
        %2838 = vmatmul.mubr.bf16.gmra.mxu0 %v2797
        %v2839 = vpop.f32.mrf.mxu0
        %v2840 = vadd.f32 0.0, %v2839
        %v2841 = vpop.f32.mrf.mxu0
        %v2842 = vpop.f32.mrf.mxu0
        %v2843 = vadd.f32 0.0, %v2842
        %v2844 = vpop.f32.mrf.mxu0
        %2845 = vmatprep.mubr.bf16.mxu0 0
        %2846 = vmatmul.mubr.bf16.gmra.mxu0 %v2798
        %v2847 = vpop.f32.mrf.mxu0
        %v2848 = vadd.f32 0.0, %v2847
        %v2849 = vpop.f32.mrf.mxu0
        %v2850 = vpop.f32.mrf.mxu0
        %v2851 = vadd.f32 0.0, %v2850
        %v2852 = vpop.f32.mrf.mxu0
        %2853 = vdwg.mxu0
        %v2870 = vunpack.c.l.b16 %v1178
        %v2871 = vunpack.c.l.b16 %v1179
        %v2872 = vunpack.c.l.b16 %v1180
        %v2873 = vunpack.c.l.b16 %v1181
        %v2874 = vunpack.c.l.b16 %v1182
        %v2875 = vunpack.c.l.b16 %v1183
        %v2876 = vunpack.c.l.b16 %v1184
        %v2877 = vunpack.c.l.b16 %v1185
        %v2878 = vunpack.c.l.b16 %v1186
        %v2879 = vunpack.c.l.b16 %v1187
        %v2880 = vunpack.c.l.b16 %v1188
        %v2881 = vunpack.c.l.b16 %v1189
        %v2882 = vunpack.c.l.b16 %v1190
        %v2883 = vunpack.c.l.b16 %v1191
        %v2884 = vunpack.c.l.b16 %v1192
        %v2885 = vunpack.c.l.b16 %v1193
        %v2886 = vpack.c.b16 %v2871, %v2870
        %v2887 = vpack.c.b16 %v2873, %v2872
        %v2888 = vpack.c.b16 %v2875, %v2874
        %v2889 = vpack.c.b16 %v2877, %v2876
        %v2890 = vpack.c.b16 %v2879, %v2878
        %v2891 = vpack.c.b16 %v2881, %v2880
        %v2892 = vpack.c.b16 %v2883, %v2882
        %v2893 = vpack.c.b16 %v2885, %v2884
        %2902 = vxpose.xlu0.c.b16.start [1/8] %v2886, 128
        %2903 = vxpose.xlu0.c.b16.cont [2/8] %v2887, 128
        %2904 = vxpose.xlu0.c.b16.cont [3/8] %v2888, 128
        %2905 = vxpose.xlu0.c.b16.cont [4/8] %v2889, 128
        %2906 = vxpose.xlu0.c.b16.cont [5/8] %v2890, 128
        %2907 = vxpose.xlu0.c.b16.cont [6/8] %v2891, 128
        %2908 = vxpose.xlu0.c.b16.cont [7/8] %v2892, 128
        %2909 = vxpose.xlu0.c.b16.end [8/8] %v2893, 128
        %v2910 = vpop.trf.xlu0
        %v2911 = vpop.trf.xlu0
        %v2912 = vpop.trf.xlu0
        %v2913 = vpop.trf.xlu0
        %v2914 = vpop.trf.xlu0
        %v2915 = vpop.trf.xlu0
        %v2916 = vpop.trf.xlu0
        %v2917 = vpop.trf.xlu0
        %2918 = vmatprep.subr.bf16.mxu0 0
        %2919 = vmatpush1.bf16.xpose.msra.mxu0 %v2619
        %2920 = vmatprep.subr.bf16.mxu0 0
        %2921 = vmatpush1.bf16.xpose.msra.mxu0 %v2618
        %2922 = vmatprep.subr.bf16.mxu0 0
        %2923 = vmatpush1.bf16.xpose.msra.mxu0 %v2617
        %2924 = vmatprep.subr.bf16.mxu0 0
        %2925 = vmatpush1.bf16.xpose.msra.mxu0 %v2616
        %2926 = vmatprep.subr.bf16.mxu0 0
        %2927 = vmatpush1.bf16.xpose.msra.mxu0 %v2615
        %2928 = vmatprep.subr.bf16.mxu0 0
        %2929 = vmatpush1.bf16.xpose.msra.mxu0 %v2614
        %2930 = vmatprep.subr.bf16.mxu0 0
        %2931 = vmatpush1.bf16.xpose.msra.mxu0 %v2613
        %2932 = vmatprep.subr.bf16.mxu0 0
        %2933 = vmatpush1.bf16.xpose.msra.mxu0 %v2612
        %2934 = vmatprep.subr.bf16.mxu0 0
        %2935 = vmatpush2.bf16.xpose.msra.mxu0 0
        %2936 = vmatprep.subr.bf16.mxu0 0
        %2937 = vmatpush2.bf16.xpose.msra.mxu0 0
        %2938 = vmatprep.subr.bf16.mxu0 0
        %2939 = vmatpush2.bf16.xpose.msra.mxu0 0
        %2940 = vmatprep.subr.bf16.mxu0 0
        %2941 = vmatpush2.bf16.xpose.msra.mxu0 0
        %2942 = vmatprep.subr.bf16.mxu0 0
        %2943 = vmatpush2.bf16.xpose.msra.mxu0 0
        %2944 = vmatprep.subr.bf16.mxu0 0
        %2945 = vmatpush2.bf16.xpose.msra.mxu0 0
        %2946 = vmatprep.subr.bf16.mxu0 0
        %2947 = vmatpush2.bf16.xpose.msra.mxu0 0
        %2948 = vmatprep.subr.bf16.mxu0 0
        %2949 = vmatpush2.bf16.xpose.msra.mxu0 0
        %2950 = vmatprep.mubr.bf16.mxu0 0
        %2951 = vmatmul.mubr.bf16.gmra.mxu0 %v2910
        %v2952 = vpop.f32.mrf.mxu0
        %v2953 = vadd.f32 0.0, %v2952
        %v2954 = vpop.f32.mrf.mxu0
        %v2955 = vpop.f32.mrf.mxu0
        %v2956 = vadd.f32 0.0, %v2955
        %v2957 = vpop.f32.mrf.mxu0
        %2958 = vmatprep.mubr.bf16.mxu0 0
        %2959 = vmatmul.mubr.bf16.gmra.mxu0 %v2911
        %v2960 = vpop.f32.mrf.mxu0
        %v2961 = vadd.f32 0.0, %v2960
        %v2962 = vpop.f32.mrf.mxu0
        %v2963 = vpop.f32.mrf.mxu0
        %v2964 = vadd.f32 0.0, %v2963
        %v2965 = vpop.f32.mrf.mxu0
        %2966 = vdwg.mxu0
        %v2983 = vunpack.c.l.b16 %v1194
        %v2984 = vunpack.c.l.b16 %v1195
        %v2985 = vunpack.c.l.b16 %v1196
        %v2986 = vunpack.c.l.b16 %v1197
        %v2987 = vunpack.c.l.b16 %v1198
        %v2988 = vunpack.c.l.b16 %v1199
        %v2989 = vunpack.c.l.b16 %v1200
        %v2990 = vunpack.c.l.b16 %v1201
        %v2991 = vunpack.c.l.b16 %v1202
        %v2992 = vunpack.c.l.b16 %v1203
        %v2993 = vunpack.c.l.b16 %v1204
        %v2994 = vunpack.c.l.b16 %v1205
        %v2995 = vunpack.c.l.b16 %v1206
        %v2996 = vunpack.c.l.b16 %v1207
        %v2997 = vunpack.c.l.b16 %v1208
        %v2998 = vunpack.c.l.b16 %v1209
        %v2999 = vpack.c.b16 %v2984, %v2983
        %v3000 = vpack.c.b16 %v2986, %v2985
        %v3001 = vpack.c.b16 %v2988, %v2987
        %v3002 = vpack.c.b16 %v2990, %v2989
        %v3003 = vpack.c.b16 %v2992, %v2991
        %v3004 = vpack.c.b16 %v2994, %v2993
        %v3005 = vpack.c.b16 %v2996, %v2995
        %v3006 = vpack.c.b16 %v2998, %v2997
        %3015 = vxpose.xlu0.c.b16.start [1/8] %v2999, 128
        %3016 = vxpose.xlu0.c.b16.cont [2/8] %v3000, 128
        %3017 = vxpose.xlu0.c.b16.cont [3/8] %v3001, 128
        %3018 = vxpose.xlu0.c.b16.cont [4/8] %v3002, 128
        %3019 = vxpose.xlu0.c.b16.cont [5/8] %v3003, 128
        %3020 = vxpose.xlu0.c.b16.cont [6/8] %v3004, 128
        %3021 = vxpose.xlu0.c.b16.cont [7/8] %v3005, 128
        %3022 = vxpose.xlu0.c.b16.end [8/8] %v3006, 128
        %v3023 = vpop.trf.xlu0
        %v3024 = vpop.trf.xlu0
        %v3025 = vpop.trf.xlu0
        %v3026 = vpop.trf.xlu0
        %v3027 = vpop.trf.xlu0
        %v3028 = vpop.trf.xlu0
        %v3029 = vpop.trf.xlu0
        %v3030 = vpop.trf.xlu0
        %3031 = vmatprep.subr.bf16.mxu0 0
        %3032 = vmatpush1.bf16.xpose.msra.mxu0 %v2627
        %3033 = vmatprep.subr.bf16.mxu0 0
        %3034 = vmatpush1.bf16.xpose.msra.mxu0 %v2626
        %3035 = vmatprep.subr.bf16.mxu0 0
        %3036 = vmatpush1.bf16.xpose.msra.mxu0 %v2625
        %3037 = vmatprep.subr.bf16.mxu0 0
        %3038 = vmatpush1.bf16.xpose.msra.mxu0 %v2624
        %3039 = vmatprep.subr.bf16.mxu0 0
        %3040 = vmatpush1.bf16.xpose.msra.mxu0 %v2623
        %3041 = vmatprep.subr.bf16.mxu0 0
        %3042 = vmatpush1.bf16.xpose.msra.mxu0 %v2622
        %3043 = vmatprep.subr.bf16.mxu0 0
        %3044 = vmatpush1.bf16.xpose.msra.mxu0 %v2621
        %3045 = vmatprep.subr.bf16.mxu0 0
        %3046 = vmatpush1.bf16.xpose.msra.mxu0 %v2620
        %3047 = vmatprep.subr.bf16.mxu0 0
        %3048 = vmatpush2.bf16.xpose.msra.mxu0 0
        %3049 = vmatprep.subr.bf16.mxu0 0
        %3050 = vmatpush2.bf16.xpose.msra.mxu0 0
        %3051 = vmatprep.subr.bf16.mxu0 0
        %3052 = vmatpush2.bf16.xpose.msra.mxu0 0
        %3053 = vmatprep.subr.bf16.mxu0 0
        %3054 = vmatpush2.bf16.xpose.msra.mxu0 0
        %3055 = vmatprep.subr.bf16.mxu0 0
        %3056 = vmatpush2.bf16.xpose.msra.mxu0 0
        %3057 = vmatprep.subr.bf16.mxu0 0
        %3058 = vmatpush2.bf16.xpose.msra.mxu0 0
        %3059 = vmatprep.subr.bf16.mxu0 0
        %3060 = vmatpush2.bf16.xpose.msra.mxu0 0
        %3061 = vmatprep.subr.bf16.mxu0 0
        %3062 = vmatpush2.bf16.xpose.msra.mxu0 0
        %3063 = vmatprep.mubr.bf16.mxu0 0
        %3064 = vmatmul.mubr.bf16.gmra.mxu0 %v3023
        %v3065 = vpop.f32.mrf.mxu0
        %v3066 = vadd.f32 0.0, %v3065
        %v3067 = vpop.f32.mrf.mxu0
        %v3068 = vpop.f32.mrf.mxu0
        %v3069 = vadd.f32 0.0, %v3068
        %v3070 = vpop.f32.mrf.mxu0
        %3071 = vmatprep.mubr.bf16.mxu0 0
        %3072 = vmatmul.mubr.bf16.gmra.mxu0 %v3024
        %v3073 = vpop.f32.mrf.mxu0
        %v3074 = vadd.f32 0.0, %v3073
        %v3075 = vpop.f32.mrf.mxu0
        %v3076 = vpop.f32.mrf.mxu0
        %v3077 = vadd.f32 0.0, %v3076
        %v3078 = vpop.f32.mrf.mxu0
        %3079 = vdwg.mxu0
        %3080 = vxpose.xlu0.b32.start [1/16] %v2727, 128
        %3081 = vxpose.xlu0.b32.cont [2/16] %v2730, 128
        %3082 = vxpose.xlu0.b32.cont [3/16] %v2735, 128
        %3083 = vxpose.xlu0.b32.cont [4/16] %v2738, 128
        %3084 = vxpose.xlu0.b32.cont [5/16] 0.0, 128
        %3085 = vxpose.xlu0.b32.cont [6/16] 0.0, 128
        %3086 = vxpose.xlu0.b32.cont [7/16] 0.0, 128
        %3087 = vxpose.xlu0.b32.cont [8/16] 0.0, 128
        %3088 = vxpose.xlu0.b32.cont [9/16] 0.0, 128
        %3089 = vxpose.xlu0.b32.cont [10/16] 0.0, 128
        %3090 = vxpose.xlu0.b32.cont [11/16] 0.0, 128
        %3091 = vxpose.xlu0.b32.cont [12/16] 0.0, 128
        %3092 = vxpose.xlu0.b32.cont [13/16] 0.0, 128
        %3093 = vxpose.xlu0.b32.cont [14/16] 0.0, 128
        %3094 = vxpose.xlu0.b32.cont [15/16] 0.0, 128
        %3095 = vxpose.xlu0.b32.end [16/16] 0.0, 128
        %v3096 = vpop.trf.xlu0
        %v3097 = vpop.trf.xlu0
        %v3098 = vpop.trf.xlu0
        %v3099 = vpop.trf.xlu0
        %v3100 = vpop.trf.xlu0
        %v3101 = vpop.trf.xlu0
        %v3102 = vpop.trf.xlu0
        %v3103 = vpop.trf.xlu0
        %v3104 = vpop.trf.xlu0
        %v3105 = vpop.trf.xlu0
        %v3106 = vpop.trf.xlu0
        %v3107 = vpop.trf.xlu0
        %v3108 = vpop.trf.xlu0
        %v3109 = vpop.trf.xlu0
        %v3110 = vpop.trf.xlu0
        %v3111 = vpop.trf.xlu0
        %3112 = vxpose.xlu0.b32.start [1/16] %v2840, 128
        %3113 = vxpose.xlu0.b32.cont [2/16] %v2843, 128
        %3114 = vxpose.xlu0.b32.cont [3/16] %v2848, 128
        %3115 = vxpose.xlu0.b32.cont [4/16] %v2851, 128
        %3116 = vxpose.xlu0.b32.cont [5/16] 0.0, 128
        %3117 = vxpose.xlu0.b32.cont [6/16] 0.0, 128
        %3118 = vxpose.xlu0.b32.cont [7/16] 0.0, 128
        %3119 = vxpose.xlu0.b32.cont [8/16] 0.0, 128
        %3120 = vxpose.xlu0.b32.cont [9/16] 0.0, 128
        %3121 = vxpose.xlu0.b32.cont [10/16] 0.0, 128
        %3122 = vxpose.xlu0.b32.cont [11/16] 0.0, 128
        %3123 = vxpose.xlu0.b32.cont [12/16] 0.0, 128
        %3124 = vxpose.xlu0.b32.cont [13/16] 0.0, 128
        %3125 = vxpose.xlu0.b32.cont [14/16] 0.0, 128
        %3126 = vxpose.xlu0.b32.cont [15/16] 0.0, 128
        %3127 = vxpose.xlu0.b32.end [16/16] 0.0, 128
        %v3128 = vpop.trf.xlu0
        %v3129 = vpop.trf.xlu0
        %v3130 = vpop.trf.xlu0
        %v3131 = vpop.trf.xlu0
        %v3132 = vpop.trf.xlu0
        %v3133 = vpop.trf.xlu0
        %v3134 = vpop.trf.xlu0
        %v3135 = vpop.trf.xlu0
        %v3136 = vpop.trf.xlu0
        %v3137 = vpop.trf.xlu0
        %v3138 = vpop.trf.xlu0
        %v3139 = vpop.trf.xlu0
        %v3140 = vpop.trf.xlu0
        %v3141 = vpop.trf.xlu0
        %v3142 = vpop.trf.xlu0
        %v3143 = vpop.trf.xlu0
        %3144 = vxpose.xlu0.b32.start [1/16] %v2953, 128
        %3145 = vxpose.xlu0.b32.cont [2/16] %v2956, 128
        %3146 = vxpose.xlu0.b32.cont [3/16] %v2961, 128
        %3147 = vxpose.xlu0.b32.cont [4/16] %v2964, 128
        %3148 = vxpose.xlu0.b32.cont [5/16] 0.0, 128
        %3149 = vxpose.xlu0.b32.cont [6/16] 0.0, 128
        %3150 = vxpose.xlu0.b32.cont [7/16] 0.0, 128
        %3151 = vxpose.xlu0.b32.cont [8/16] 0.0, 128
        %3152 = vxpose.xlu0.b32.cont [9/16] 0.0, 128
        %3153 = vxpose.xlu0.b32.cont [10/16] 0.0, 128
        %3154 = vxpose.xlu0.b32.cont [11/16] 0.0, 128
        %3155 = vxpose.xlu0.b32.cont [12/16] 0.0, 128
        %3156 = vxpose.xlu0.b32.cont [13/16] 0.0, 128
        %3157 = vxpose.xlu0.b32.cont [14/16] 0.0, 128
        %3158 = vxpose.xlu0.b32.cont [15/16] 0.0, 128
        %3159 = vxpose.xlu0.b32.end [16/16] 0.0, 128
        %v3160 = vpop.trf.xlu0
        %v3161 = vpop.trf.xlu0
        %v3162 = vpop.trf.xlu0
        %v3163 = vpop.trf.xlu0
        %v3164 = vpop.trf.xlu0
        %v3165 = vpop.trf.xlu0
        %v3166 = vpop.trf.xlu0
        %v3167 = vpop.trf.xlu0
        %v3168 = vpop.trf.xlu0
        %v3169 = vpop.trf.xlu0
        %v3170 = vpop.trf.xlu0
        %v3171 = vpop.trf.xlu0
        %v3172 = vpop.trf.xlu0
        %v3173 = vpop.trf.xlu0
        %v3174 = vpop.trf.xlu0
        %v3175 = vpop.trf.xlu0
        %3176 = vxpose.xlu0.b32.start [1/16] %v3066, 128
        %3177 = vxpose.xlu0.b32.cont [2/16] %v3069, 128
        %3178 = vxpose.xlu0.b32.cont [3/16] %v3074, 128
        %3179 = vxpose.xlu0.b32.cont [4/16] %v3077, 128
        %3180 = vxpose.xlu0.b32.cont [5/16] 0.0, 128
        %3181 = vxpose.xlu0.b32.cont [6/16] 0.0, 128
        %3182 = vxpose.xlu0.b32.cont [7/16] 0.0, 128
        %3183 = vxpose.xlu0.b32.cont [8/16] 0.0, 128
        %3184 = vxpose.xlu0.b32.cont [9/16] 0.0, 128
        %3185 = vxpose.xlu0.b32.cont [10/16] 0.0, 128
        %3186 = vxpose.xlu0.b32.cont [11/16] 0.0, 128
        %3187 = vxpose.xlu0.b32.cont [12/16] 0.0, 128
        %3188 = vxpose.xlu0.b32.cont [13/16] 0.0, 128
        %3189 = vxpose.xlu0.b32.cont [14/16] 0.0, 128
        %3190 = vxpose.xlu0.b32.cont [15/16] 0.0, 128
        %3191 = vxpose.xlu0.b32.end [16/16] 0.0, 128
        %v3192 = vpop.trf.xlu0
        %v3193 = vpop.trf.xlu0
        %v3194 = vpop.trf.xlu0
        %v3195 = vpop.trf.xlu0
        %v3196 = vpop.trf.xlu0
        %v3197 = vpop.trf.xlu0
        %v3198 = vpop.trf.xlu0
        %v3199 = vpop.trf.xlu0
        %v3200 = vpop.trf.xlu0
        %v3201 = vpop.trf.xlu0
        %v3202 = vpop.trf.xlu0
        %v3203 = vpop.trf.xlu0
        %v3204 = vpop.trf.xlu0
        %v3205 = vpop.trf.xlu0
        %v3206 = vpop.trf.xlu0
        %v3207 = vpop.trf.xlu0
        %v3208 = vcombine.low %v3096, %v3160
        %v3209 = vcombine.high %v3096, %v3160
        %v3211 = vunpack.c.l.s4 1983009808
        %v3212 = vunpack.c.0.s8 %v3211
        %v3213 = vlaneseq
        %v3214 = vshrl.u32 %v3213, 7
        %v3215 = vsub.s32 %v3212, %v3214
        %v3216 = vrot.slane %v3208, %v3215
        %v3218 = vunpack.c.l.s4 1983009808
        %v3219 = vunpack.c.0.s8 %v3218
        %v3220 = vlaneseq
        %v3221 = vshrl.u32 %v3220, 7
        %v3222 = vsub.s32 %v3219, %v3221
        %v3223 = vrot.slane %v3209, %v3222
        %v3224 = vcombine.low %v3128, %v3192
        %v3225 = vcombine.high %v3128, %v3192
        %v3227 = vunpack.c.l.s4 1983009808
        %v3228 = vunpack.c.0.s8 %v3227
        %v3229 = vlaneseq
        %v3230 = vshrl.u32 %v3229, 7
        %v3231 = vsub.s32 %v3228, %v3230
        %v3232 = vrot.slane %v3224, %v3231
        %v3234 = vunpack.c.l.s4 1983009808
        %v3235 = vunpack.c.0.s8 %v3234
        %v3236 = vlaneseq
        %v3237 = vshrl.u32 %v3236, 7
        %v3238 = vsub.s32 %v3235, %v3237
        %v3239 = vrot.slane %v3225, %v3238
        %v3240 = vcombine.low %v3216, %v3232
        %v3241 = vcombine.high %v3216, %v3232
        %v3243 = vunpack.c.l.s4 1934713408
        %v3244 = vunpack.c.0.s8 %v3243
        %v3245 = vlaneseq
        %v3246 = vshrl.u32 %v3245, 7
        %v3247 = vsub.s32 %v3244, %v3246
        %v3248 = vrot.slane %v3240, %v3247
        %v3250 = vunpack.c.l.s4 1934713408
        %v3251 = vunpack.c.0.s8 %v3250
        %v3252 = vlaneseq
        %v3253 = vshrl.u32 %v3252, 7
        %v3254 = vsub.s32 %v3251, %v3253
        %v3255 = vrot.slane %v3241, %v3254
        %v3256 = vcombine.low %v3223, %v3239
        %v3257 = vcombine.high %v3223, %v3239
        %v3259 = vunpack.c.l.s4 1934713408
        %v3260 = vunpack.c.0.s8 %v3259
        %v3261 = vlaneseq
        %v3262 = vshrl.u32 %v3261, 7
        %v3263 = vsub.s32 %v3260, %v3262
        %v3264 = vrot.slane %v3256, %v3263
        %v3266 = vunpack.c.l.s4 1934713408
        %v3267 = vunpack.c.0.s8 %v3266
        %v3268 = vlaneseq
        %v3269 = vshrl.u32 %v3268, 7
        %v3270 = vsub.s32 %v3267, %v3269
        %v3271 = vrot.slane %v3257, %v3270
        %v3272 = vcombine.high %v3248, 0.0
        %v3273 = vcombine.high %v3255, 0.0
        %v3274 = vcombine.high %v3264, 0.0
        %v3275 = vcombine.high %v3271, 0.0
        %v3276 = vcombine.low %v3097, %v3161
        %v3277 = vcombine.high %v3097, %v3161
        %v3279 = vunpack.c.l.s4 1983009808
        %v3280 = vunpack.c.0.s8 %v3279
        %v3281 = vlaneseq
        %v3282 = vshrl.u32 %v3281, 7
        %v3283 = vsub.s32 %v3280, %v3282
        %v3284 = vrot.slane %v3276, %v3283
        %v3286 = vunpack.c.l.s4 1983009808
        %v3287 = vunpack.c.0.s8 %v3286
        %v3288 = vlaneseq
        %v3289 = vshrl.u32 %v3288, 7
        %v3290 = vsub.s32 %v3287, %v3289
        %v3291 = vrot.slane %v3277, %v3290
        %v3292 = vcombine.low %v3129, %v3193
        %v3293 = vcombine.high %v3129, %v3193
        %v3295 = vunpack.c.l.s4 1983009808
        %v3296 = vunpack.c.0.s8 %v3295
        %v3297 = vlaneseq
        %v3298 = vshrl.u32 %v3297, 7
        %v3299 = vsub.s32 %v3296, %v3298
        %v3300 = vrot.slane %v3292, %v3299
        %v3302 = vunpack.c.l.s4 1983009808
        %v3303 = vunpack.c.0.s8 %v3302
        %v3304 = vlaneseq
        %v3305 = vshrl.u32 %v3304, 7
        %v3306 = vsub.s32 %v3303, %v3305
        %v3307 = vrot.slane %v3293, %v3306
        %v3308 = vcombine.low %v3284, %v3300
        %v3309 = vcombine.high %v3284, %v3300
        %v3311 = vunpack.c.l.s4 1934713408
        %v3312 = vunpack.c.0.s8 %v3311
        %v3313 = vlaneseq
        %v3314 = vshrl.u32 %v3313, 7
        %v3315 = vsub.s32 %v3312, %v3314
        %v3316 = vrot.slane %v3308, %v3315
        %v3318 = vunpack.c.l.s4 1934713408
        %v3319 = vunpack.c.0.s8 %v3318
        %v3320 = vlaneseq
        %v3321 = vshrl.u32 %v3320, 7
        %v3322 = vsub.s32 %v3319, %v3321
        %v3323 = vrot.slane %v3309, %v3322
        %v3324 = vcombine.low %v3291, %v3307
        %v3325 = vcombine.high %v3291, %v3307
        %v3327 = vunpack.c.l.s4 1934713408
        %v3328 = vunpack.c.0.s8 %v3327
        %v3329 = vlaneseq
        %v3330 = vshrl.u32 %v3329, 7
        %v3331 = vsub.s32 %v3328, %v3330
        %v3332 = vrot.slane %v3324, %v3331
        %v3334 = vunpack.c.l.s4 1934713408
        %v3335 = vunpack.c.0.s8 %v3334
        %v3336 = vlaneseq
        %v3337 = vshrl.u32 %v3336, 7
        %v3338 = vsub.s32 %v3335, %v3337
        %v3339 = vrot.slane %v3325, %v3338
        %v3340 = vcombine.high %v3316, 0.0
        %v3341 = vcombine.high %v3323, 0.0
        %v3342 = vcombine.high %v3332, 0.0
        %v3343 = vcombine.high %v3339, 0.0
        %v3344 = vcombine.low %v3098, %v3162
        %v3345 = vcombine.high %v3098, %v3162
        %v3347 = vunpack.c.l.s4 1983009808
        %v3348 = vunpack.c.0.s8 %v3347
        %v3349 = vlaneseq
        %v3350 = vshrl.u32 %v3349, 7
        %v3351 = vsub.s32 %v3348, %v3350
        %v3352 = vrot.slane %v3344, %v3351
        %v3354 = vunpack.c.l.s4 1983009808
        %v3355 = vunpack.c.0.s8 %v3354
        %v3356 = vlaneseq
        %v3357 = vshrl.u32 %v3356, 7
        %v3358 = vsub.s32 %v3355, %v3357
        %v3359 = vrot.slane %v3345, %v3358
        %v3360 = vcombine.low %v3130, %v3194
        %v3361 = vcombine.high %v3130, %v3194
        %v3363 = vunpack.c.l.s4 1983009808
        %v3364 = vunpack.c.0.s8 %v3363
        %v3365 = vlaneseq
        %v3366 = vshrl.u32 %v3365, 7
        %v3367 = vsub.s32 %v3364, %v3366
        %v3368 = vrot.slane %v3360, %v3367
        %v3370 = vunpack.c.l.s4 1983009808
        %v3371 = vunpack.c.0.s8 %v3370
        %v3372 = vlaneseq
        %v3373 = vshrl.u32 %v3372, 7
        %v3374 = vsub.s32 %v3371, %v3373
        %v3375 = vrot.slane %v3361, %v3374
        %v3376 = vcombine.low %v3352, %v3368
        %v3377 = vcombine.high %v3352, %v3368
        %v3379 = vunpack.c.l.s4 1934713408
        %v3380 = vunpack.c.0.s8 %v3379
        %v3381 = vlaneseq
        %v3382 = vshrl.u32 %v3381, 7
        %v3383 = vsub.s32 %v3380, %v3382
        %v3384 = vrot.slane %v3376, %v3383
        %v3386 = vunpack.c.l.s4 1934713408
        %v3387 = vunpack.c.0.s8 %v3386
        %v3388 = vlaneseq
        %v3389 = vshrl.u32 %v3388, 7
        %v3390 = vsub.s32 %v3387, %v3389
        %v3391 = vrot.slane %v3377, %v3390
        %v3392 = vcombine.low %v3359, %v3375
        %v3393 = vcombine.high %v3359, %v3375
        %v3395 = vunpack.c.l.s4 1934713408
        %v3396 = vunpack.c.0.s8 %v3395
        %v3397 = vlaneseq
        %v3398 = vshrl.u32 %v3397, 7
        %v3399 = vsub.s32 %v3396, %v3398
        %v3400 = vrot.slane %v3392, %v3399
        %v3402 = vunpack.c.l.s4 1934713408
        %v3403 = vunpack.c.0.s8 %v3402
        %v3404 = vlaneseq
        %v3405 = vshrl.u32 %v3404, 7
        %v3406 = vsub.s32 %v3403, %v3405
        %v3407 = vrot.slane %v3393, %v3406
        %v3408 = vcombine.high %v3384, 0.0
        %v3409 = vcombine.high %v3391, 0.0
        %v3410 = vcombine.high %v3400, 0.0
        %v3411 = vcombine.high %v3407, 0.0
        %v3412 = vcombine.low %v3099, %v3163
        %v3413 = vcombine.high %v3099, %v3163
        %v3415 = vunpack.c.l.s4 1983009808
        %v3416 = vunpack.c.0.s8 %v3415
        %v3417 = vlaneseq
        %v3418 = vshrl.u32 %v3417, 7
        %v3419 = vsub.s32 %v3416, %v3418
        %v3420 = vrot.slane %v3412, %v3419
        %v3422 = vunpack.c.l.s4 1983009808
        %v3423 = vunpack.c.0.s8 %v3422
        %v3424 = vlaneseq
        %v3425 = vshrl.u32 %v3424, 7
        %v3426 = vsub.s32 %v3423, %v3425
        %v3427 = vrot.slane %v3413, %v3426
        %v3428 = vcombine.low %v3131, %v3195
        %v3429 = vcombine.high %v3131, %v3195
        %v3431 = vunpack.c.l.s4 1983009808
        %v3432 = vunpack.c.0.s8 %v3431
        %v3433 = vlaneseq
        %v3434 = vshrl.u32 %v3433, 7
        %v3435 = vsub.s32 %v3432, %v3434
        %v3436 = vrot.slane %v3428, %v3435
        %v3438 = vunpack.c.l.s4 1983009808
        %v3439 = vunpack.c.0.s8 %v3438
        %v3440 = vlaneseq
        %v3441 = vshrl.u32 %v3440, 7
        %v3442 = vsub.s32 %v3439, %v3441
        %v3443 = vrot.slane %v3429, %v3442
        %v3444 = vcombine.low %v3420, %v3436
        %v3445 = vcombine.high %v3420, %v3436
        %v3447 = vunpack.c.l.s4 1934713408
        %v3448 = vunpack.c.0.s8 %v3447
        %v3449 = vlaneseq
        %v3450 = vshrl.u32 %v3449, 7
        %v3451 = vsub.s32 %v3448, %v3450
        %v3452 = vrot.slane %v3444, %v3451
        %v3454 = vunpack.c.l.s4 1934713408
        %v3455 = vunpack.c.0.s8 %v3454
        %v3456 = vlaneseq
        %v3457 = vshrl.u32 %v3456, 7
        %v3458 = vsub.s32 %v3455, %v3457
        %v3459 = vrot.slane %v3445, %v3458
        %v3460 = vcombine.low %v3427, %v3443
        %v3461 = vcombine.high %v3427, %v3443
        %v3463 = vunpack.c.l.s4 1934713408
        %v3464 = vunpack.c.0.s8 %v3463
        %v3465 = vlaneseq
        %v3466 = vshrl.u32 %v3465, 7
        %v3467 = vsub.s32 %v3464, %v3466
        %v3468 = vrot.slane %v3460, %v3467
        %v3470 = vunpack.c.l.s4 1934713408
        %v3471 = vunpack.c.0.s8 %v3470
        %v3472 = vlaneseq
        %v3473 = vshrl.u32 %v3472, 7
        %v3474 = vsub.s32 %v3471, %v3473
        %v3475 = vrot.slane %v3461, %v3474
        %v3476 = vcombine.high %v3452, 0.0
        %v3477 = vcombine.high %v3459, 0.0
        %v3478 = vcombine.high %v3468, 0.0
        %v3479 = vcombine.high %v3475, 0.0
        %v3480 = vcombine.low %v3100, %v3164
        %v3481 = vcombine.high %v3100, %v3164
        %v3483 = vunpack.c.l.s4 1983009808
        %v3484 = vunpack.c.0.s8 %v3483
        %v3485 = vlaneseq
        %v3486 = vshrl.u32 %v3485, 7
        %v3487 = vsub.s32 %v3484, %v3486
        %v3488 = vrot.slane %v3480, %v3487
        %v3490 = vunpack.c.l.s4 1983009808
        %v3491 = vunpack.c.0.s8 %v3490
        %v3492 = vlaneseq
        %v3493 = vshrl.u32 %v3492, 7
        %v3494 = vsub.s32 %v3491, %v3493
        %v3495 = vrot.slane %v3481, %v3494
        %v3496 = vcombine.low %v3132, %v3196
        %v3497 = vcombine.high %v3132, %v3196
        %v3499 = vunpack.c.l.s4 1983009808
        %v3500 = vunpack.c.0.s8 %v3499
        %v3501 = vlaneseq
        %v3502 = vshrl.u32 %v3501, 7
        %v3503 = vsub.s32 %v3500, %v3502
        %v3504 = vrot.slane %v3496, %v3503
        %v3506 = vunpack.c.l.s4 1983009808
        %v3507 = vunpack.c.0.s8 %v3506
        %v3508 = vlaneseq
        %v3509 = vshrl.u32 %v3508, 7
        %v3510 = vsub.s32 %v3507, %v3509
        %v3511 = vrot.slane %v3497, %v3510
        %v3512 = vcombine.low %v3488, %v3504
        %v3513 = vcombine.high %v3488, %v3504
        %v3515 = vunpack.c.l.s4 1934713408
        %v3516 = vunpack.c.0.s8 %v3515
        %v3517 = vlaneseq
        %v3518 = vshrl.u32 %v3517, 7
        %v3519 = vsub.s32 %v3516, %v3518
        %v3520 = vrot.slane %v3512, %v3519
        %v3522 = vunpack.c.l.s4 1934713408
        %v3523 = vunpack.c.0.s8 %v3522
        %v3524 = vlaneseq
        %v3525 = vshrl.u32 %v3524, 7
        %v3526 = vsub.s32 %v3523, %v3525
        %v3527 = vrot.slane %v3513, %v3526
        %v3528 = vcombine.low %v3495, %v3511
        %v3529 = vcombine.high %v3495, %v3511
        %v3531 = vunpack.c.l.s4 1934713408
        %v3532 = vunpack.c.0.s8 %v3531
        %v3533 = vlaneseq
        %v3534 = vshrl.u32 %v3533, 7
        %v3535 = vsub.s32 %v3532, %v3534
        %v3536 = vrot.slane %v3528, %v3535
        %v3538 = vunpack.c.l.s4 1934713408
        %v3539 = vunpack.c.0.s8 %v3538
        %v3540 = vlaneseq
        %v3541 = vshrl.u32 %v3540, 7
        %v3542 = vsub.s32 %v3539, %v3541
        %v3543 = vrot.slane %v3529, %v3542
        %v3544 = vcombine.high %v3520, 0.0
        %v3545 = vcombine.high %v3527, 0.0
        %v3546 = vcombine.high %v3536, 0.0
        %v3547 = vcombine.high %v3543, 0.0
        %v3548 = vcombine.low %v3101, %v3165
        %v3549 = vcombine.high %v3101, %v3165
        %v3551 = vunpack.c.l.s4 1983009808
        %v3552 = vunpack.c.0.s8 %v3551
        %v3553 = vlaneseq
        %v3554 = vshrl.u32 %v3553, 7
        %v3555 = vsub.s32 %v3552, %v3554
        %v3556 = vrot.slane %v3548, %v3555
        %v3558 = vunpack.c.l.s4 1983009808
        %v3559 = vunpack.c.0.s8 %v3558
        %v3560 = vlaneseq
        %v3561 = vshrl.u32 %v3560, 7
        %v3562 = vsub.s32 %v3559, %v3561
        %v3563 = vrot.slane %v3549, %v3562
        %v3564 = vcombine.low %v3133, %v3197
        %v3565 = vcombine.high %v3133, %v3197
        %v3567 = vunpack.c.l.s4 1983009808
        %v3568 = vunpack.c.0.s8 %v3567
        %v3569 = vlaneseq
        %v3570 = vshrl.u32 %v3569, 7
        %v3571 = vsub.s32 %v3568, %v3570
        %v3572 = vrot.slane %v3564, %v3571
        %v3574 = vunpack.c.l.s4 1983009808
        %v3575 = vunpack.c.0.s8 %v3574
        %v3576 = vlaneseq
        %v3577 = vshrl.u32 %v3576, 7
        %v3578 = vsub.s32 %v3575, %v3577
        %v3579 = vrot.slane %v3565, %v3578
        %v3580 = vcombine.low %v3556, %v3572
        %v3581 = vcombine.high %v3556, %v3572
        %v3583 = vunpack.c.l.s4 1934713408
        %v3584 = vunpack.c.0.s8 %v3583
        %v3585 = vlaneseq
        %v3586 = vshrl.u32 %v3585, 7
        %v3587 = vsub.s32 %v3584, %v3586
        %v3588 = vrot.slane %v3580, %v3587
        %v3590 = vunpack.c.l.s4 1934713408
        %v3591 = vunpack.c.0.s8 %v3590
        %v3592 = vlaneseq
        %v3593 = vshrl.u32 %v3592, 7
        %v3594 = vsub.s32 %v3591, %v3593
        %v3595 = vrot.slane %v3581, %v3594
        %v3596 = vcombine.low %v3563, %v3579
        %v3597 = vcombine.high %v3563, %v3579
        %v3599 = vunpack.c.l.s4 1934713408
        %v3600 = vunpack.c.0.s8 %v3599
        %v3601 = vlaneseq
        %v3602 = vshrl.u32 %v3601, 7
        %v3603 = vsub.s32 %v3600, %v3602
        %v3604 = vrot.slane %v3596, %v3603
        %v3606 = vunpack.c.l.s4 1934713408
        %v3607 = vunpack.c.0.s8 %v3606
        %v3608 = vlaneseq
        %v3609 = vshrl.u32 %v3608, 7
        %v3610 = vsub.s32 %v3607, %v3609
        %v3611 = vrot.slane %v3597, %v3610
        %v3612 = vcombine.high %v3588, 0.0
        %v3613 = vcombine.high %v3595, 0.0
        %v3614 = vcombine.high %v3604, 0.0
        %v3615 = vcombine.high %v3611, 0.0
        %v3616 = vcombine.low %v3102, %v3166
        %v3617 = vcombine.high %v3102, %v3166
        %v3619 = vunpack.c.l.s4 1983009808
        %v3620 = vunpack.c.0.s8 %v3619
        %v3621 = vlaneseq
        %v3622 = vshrl.u32 %v3621, 7
        %v3623 = vsub.s32 %v3620, %v3622
        %v3624 = vrot.slane %v3616, %v3623
        %v3626 = vunpack.c.l.s4 1983009808
        %v3627 = vunpack.c.0.s8 %v3626
        %v3628 = vlaneseq
        %v3629 = vshrl.u32 %v3628, 7
        %v3630 = vsub.s32 %v3627, %v3629
        %v3631 = vrot.slane %v3617, %v3630
        %v3632 = vcombine.low %v3134, %v3198
        %v3633 = vcombine.high %v3134, %v3198
        %v3635 = vunpack.c.l.s4 1983009808
        %v3636 = vunpack.c.0.s8 %v3635
        %v3637 = vlaneseq
        %v3638 = vshrl.u32 %v3637, 7
        %v3639 = vsub.s32 %v3636, %v3638
        %v3640 = vrot.slane %v3632, %v3639
        %v3642 = vunpack.c.l.s4 1983009808
        %v3643 = vunpack.c.0.s8 %v3642
        %v3644 = vlaneseq
        %v3645 = vshrl.u32 %v3644, 7
        %v3646 = vsub.s32 %v3643, %v3645
        %v3647 = vrot.slane %v3633, %v3646
        %v3648 = vcombine.low %v3624, %v3640
        %v3649 = vcombine.high %v3624, %v3640
        %v3651 = vunpack.c.l.s4 1934713408
        %v3652 = vunpack.c.0.s8 %v3651
        %v3653 = vlaneseq
        %v3654 = vshrl.u32 %v3653, 7
        %v3655 = vsub.s32 %v3652, %v3654
        %v3656 = vrot.slane %v3648, %v3655
        %v3658 = vunpack.c.l.s4 1934713408
        %v3659 = vunpack.c.0.s8 %v3658
        %v3660 = vlaneseq
        %v3661 = vshrl.u32 %v3660, 7
        %v3662 = vsub.s32 %v3659, %v3661
        %v3663 = vrot.slane %v3649, %v3662
        %v3664 = vcombine.low %v3631, %v3647
        %v3665 = vcombine.high %v3631, %v3647
        %v3667 = vunpack.c.l.s4 1934713408
        %v3668 = vunpack.c.0.s8 %v3667
        %v3669 = vlaneseq
        %v3670 = vshrl.u32 %v3669, 7
        %v3671 = vsub.s32 %v3668, %v3670
        %v3672 = vrot.slane %v3664, %v3671
        %v3674 = vunpack.c.l.s4 1934713408
        %v3675 = vunpack.c.0.s8 %v3674
        %v3676 = vlaneseq
        %v3677 = vshrl.u32 %v3676, 7
        %v3678 = vsub.s32 %v3675, %v3677
        %v3679 = vrot.slane %v3665, %v3678
        %v3680 = vcombine.high %v3656, 0.0
        %v3681 = vcombine.high %v3663, 0.0
        %v3682 = vcombine.high %v3672, 0.0
        %v3683 = vcombine.high %v3679, 0.0
        %v3684 = vcombine.low %v3103, %v3167
        %v3685 = vcombine.high %v3103, %v3167
        %v3687 = vunpack.c.l.s4 1983009808
        %v3688 = vunpack.c.0.s8 %v3687
        %v3689 = vlaneseq
        %v3690 = vshrl.u32 %v3689, 7
        %v3691 = vsub.s32 %v3688, %v3690
        %v3692 = vrot.slane %v3684, %v3691
        %v3694 = vunpack.c.l.s4 1983009808
        %v3695 = vunpack.c.0.s8 %v3694
        %v3696 = vlaneseq
        %v3697 = vshrl.u32 %v3696, 7
        %v3698 = vsub.s32 %v3695, %v3697
        %v3699 = vrot.slane %v3685, %v3698
        %v3700 = vcombine.low %v3135, %v3199
        %v3701 = vcombine.high %v3135, %v3199
        %v3703 = vunpack.c.l.s4 1983009808
        %v3704 = vunpack.c.0.s8 %v3703
        %v3705 = vlaneseq
        %v3706 = vshrl.u32 %v3705, 7
        %v3707 = vsub.s32 %v3704, %v3706
        %v3708 = vrot.slane %v3700, %v3707
        %v3710 = vunpack.c.l.s4 1983009808
        %v3711 = vunpack.c.0.s8 %v3710
        %v3712 = vlaneseq
        %v3713 = vshrl.u32 %v3712, 7
        %v3714 = vsub.s32 %v3711, %v3713
        %v3715 = vrot.slane %v3701, %v3714
        %v3716 = vcombine.low %v3692, %v3708
        %v3717 = vcombine.high %v3692, %v3708
        %v3719 = vunpack.c.l.s4 1934713408
        %v3720 = vunpack.c.0.s8 %v3719
        %v3721 = vlaneseq
        %v3722 = vshrl.u32 %v3721, 7
        %v3723 = vsub.s32 %v3720, %v3722
        %v3724 = vrot.slane %v3716, %v3723
        %v3726 = vunpack.c.l.s4 1934713408
        %v3727 = vunpack.c.0.s8 %v3726
        %v3728 = vlaneseq
        %v3729 = vshrl.u32 %v3728, 7
        %v3730 = vsub.s32 %v3727, %v3729
        %v3731 = vrot.slane %v3717, %v3730
        %v3732 = vcombine.low %v3699, %v3715
        %v3733 = vcombine.high %v3699, %v3715
        %v3735 = vunpack.c.l.s4 1934713408
        %v3736 = vunpack.c.0.s8 %v3735
        %v3737 = vlaneseq
        %v3738 = vshrl.u32 %v3737, 7
        %v3739 = vsub.s32 %v3736, %v3738
        %v3740 = vrot.slane %v3732, %v3739
        %v3742 = vunpack.c.l.s4 1934713408
        %v3743 = vunpack.c.0.s8 %v3742
        %v3744 = vlaneseq
        %v3745 = vshrl.u32 %v3744, 7
        %v3746 = vsub.s32 %v3743, %v3745
        %v3747 = vrot.slane %v3733, %v3746
        %v3748 = vcombine.high %v3724, 0.0
        %v3749 = vcombine.high %v3731, 0.0
        %v3750 = vcombine.high %v3740, 0.0
        %v3751 = vcombine.high %v3747, 0.0
        %v3752 = vcombine.low %v3104, %v3168
        %v3753 = vcombine.high %v3104, %v3168
        %v3755 = vunpack.c.l.s4 1983009808
        %v3756 = vunpack.c.0.s8 %v3755
        %v3757 = vlaneseq
        %v3758 = vshrl.u32 %v3757, 7
        %v3759 = vsub.s32 %v3756, %v3758
        %v3760 = vrot.slane %v3752, %v3759
        %v3762 = vunpack.c.l.s4 1983009808
        %v3763 = vunpack.c.0.s8 %v3762
        %v3764 = vlaneseq
        %v3765 = vshrl.u32 %v3764, 7
        %v3766 = vsub.s32 %v3763, %v3765
        %v3767 = vrot.slane %v3753, %v3766
        %v3768 = vcombine.low %v3136, %v3200
        %v3769 = vcombine.high %v3136, %v3200
        %v3771 = vunpack.c.l.s4 1983009808
        %v3772 = vunpack.c.0.s8 %v3771
        %v3773 = vlaneseq
        %v3774 = vshrl.u32 %v3773, 7
        %v3775 = vsub.s32 %v3772, %v3774
        %v3776 = vrot.slane %v3768, %v3775
        %v3778 = vunpack.c.l.s4 1983009808
        %v3779 = vunpack.c.0.s8 %v3778
        %v3780 = vlaneseq
        %v3781 = vshrl.u32 %v3780, 7
        %v3782 = vsub.s32 %v3779, %v3781
        %v3783 = vrot.slane %v3769, %v3782
        %v3784 = vcombine.low %v3760, %v3776
        %v3785 = vcombine.high %v3760, %v3776
        %v3787 = vunpack.c.l.s4 1934713408
        %v3788 = vunpack.c.0.s8 %v3787
        %v3789 = vlaneseq
        %v3790 = vshrl.u32 %v3789, 7
        %v3791 = vsub.s32 %v3788, %v3790
        %v3792 = vrot.slane %v3784, %v3791
        %v3794 = vunpack.c.l.s4 1934713408
        %v3795 = vunpack.c.0.s8 %v3794
        %v3796 = vlaneseq
        %v3797 = vshrl.u32 %v3796, 7
        %v3798 = vsub.s32 %v3795, %v3797
        %v3799 = vrot.slane %v3785, %v3798
        %v3800 = vcombine.low %v3767, %v3783
        %v3801 = vcombine.high %v3767, %v3783
        %v3803 = vunpack.c.l.s4 1934713408
        %v3804 = vunpack.c.0.s8 %v3803
        %v3805 = vlaneseq
        %v3806 = vshrl.u32 %v3805, 7
        %v3807 = vsub.s32 %v3804, %v3806
        %v3808 = vrot.slane %v3800, %v3807
        %v3810 = vunpack.c.l.s4 1934713408
        %v3811 = vunpack.c.0.s8 %v3810
        %v3812 = vlaneseq
        %v3813 = vshrl.u32 %v3812, 7
        %v3814 = vsub.s32 %v3811, %v3813
        %v3815 = vrot.slane %v3801, %v3814
        %v3816 = vcombine.high %v3792, 0.0
        %v3817 = vcombine.high %v3799, 0.0
        %v3818 = vcombine.high %v3808, 0.0
        %v3819 = vcombine.high %v3815, 0.0
        %v3820 = vcombine.low %v3105, %v3169
        %v3821 = vcombine.high %v3105, %v3169
        %v3823 = vunpack.c.l.s4 1983009808
        %v3824 = vunpack.c.0.s8 %v3823
        %v3825 = vlaneseq
        %v3826 = vshrl.u32 %v3825, 7
        %v3827 = vsub.s32 %v3824, %v3826
        %v3828 = vrot.slane %v3820, %v3827
        %v3830 = vunpack.c.l.s4 1983009808
        %v3831 = vunpack.c.0.s8 %v3830
        %v3832 = vlaneseq
        %v3833 = vshrl.u32 %v3832, 7
        %v3834 = vsub.s32 %v3831, %v3833
        %v3835 = vrot.slane %v3821, %v3834
        %v3836 = vcombine.low %v3137, %v3201
        %v3837 = vcombine.high %v3137, %v3201
        %v3839 = vunpack.c.l.s4 1983009808
        %v3840 = vunpack.c.0.s8 %v3839
        %v3841 = vlaneseq
        %v3842 = vshrl.u32 %v3841, 7
        %v3843 = vsub.s32 %v3840, %v3842
        %v3844 = vrot.slane %v3836, %v3843
        %v3846 = vunpack.c.l.s4 1983009808
        %v3847 = vunpack.c.0.s8 %v3846
        %v3848 = vlaneseq
        %v3849 = vshrl.u32 %v3848, 7
        %v3850 = vsub.s32 %v3847, %v3849
        %v3851 = vrot.slane %v3837, %v3850
        %v3852 = vcombine.low %v3828, %v3844
        %v3853 = vcombine.high %v3828, %v3844
        %v3855 = vunpack.c.l.s4 1934713408
        %v3856 = vunpack.c.0.s8 %v3855
        %v3857 = vlaneseq
        %v3858 = vshrl.u32 %v3857, 7
        %v3859 = vsub.s32 %v3856, %v3858
        %v3860 = vrot.slane %v3852, %v3859
        %v3862 = vunpack.c.l.s4 1934713408
        %v3863 = vunpack.c.0.s8 %v3862
        %v3864 = vlaneseq
        %v3865 = vshrl.u32 %v3864, 7
        %v3866 = vsub.s32 %v3863, %v3865
        %v3867 = vrot.slane %v3853, %v3866
        %v3868 = vcombine.low %v3835, %v3851
        %v3869 = vcombine.high %v3835, %v3851
        %v3871 = vunpack.c.l.s4 1934713408
        %v3872 = vunpack.c.0.s8 %v3871
        %v3873 = vlaneseq
        %v3874 = vshrl.u32 %v3873, 7
        %v3875 = vsub.s32 %v3872, %v3874
        %v3876 = vrot.slane %v3868, %v3875
        %v3878 = vunpack.c.l.s4 1934713408
        %v3879 = vunpack.c.0.s8 %v3878
        %v3880 = vlaneseq
        %v3881 = vshrl.u32 %v3880, 7
        %v3882 = vsub.s32 %v3879, %v3881
        %v3883 = vrot.slane %v3869, %v3882
        %v3884 = vcombine.high %v3860, 0.0
        %v3885 = vcombine.high %v3867, 0.0
        %v3886 = vcombine.high %v3876, 0.0
        %v3887 = vcombine.high %v3883, 0.0
        %v3888 = vcombine.low %v3106, %v3170
        %v3889 = vcombine.high %v3106, %v3170
        %v3891 = vunpack.c.l.s4 1983009808
        %v3892 = vunpack.c.0.s8 %v3891
        %v3893 = vlaneseq
        %v3894 = vshrl.u32 %v3893, 7
        %v3895 = vsub.s32 %v3892, %v3894
        %v3896 = vrot.slane %v3888, %v3895
        %v3898 = vunpack.c.l.s4 1983009808
        %v3899 = vunpack.c.0.s8 %v3898
        %v3900 = vlaneseq
        %v3901 = vshrl.u32 %v3900, 7
        %v3902 = vsub.s32 %v3899, %v3901
        %v3903 = vrot.slane %v3889, %v3902
        %v3904 = vcombine.low %v3138, %v3202
        %v3905 = vcombine.high %v3138, %v3202
        %v3907 = vunpack.c.l.s4 1983009808
        %v3908 = vunpack.c.0.s8 %v3907
        %v3909 = vlaneseq
        %v3910 = vshrl.u32 %v3909, 7
        %v3911 = vsub.s32 %v3908, %v3910
        %v3912 = vrot.slane %v3904, %v3911
        %v3914 = vunpack.c.l.s4 1983009808
        %v3915 = vunpack.c.0.s8 %v3914
        %v3916 = vlaneseq
        %v3917 = vshrl.u32 %v3916, 7
        %v3918 = vsub.s32 %v3915, %v3917
        %v3919 = vrot.slane %v3905, %v3918
        %v3920 = vcombine.low %v3896, %v3912
        %v3921 = vcombine.high %v3896, %v3912
        %v3923 = vunpack.c.l.s4 1934713408
        %v3924 = vunpack.c.0.s8 %v3923
        %v3925 = vlaneseq
        %v3926 = vshrl.u32 %v3925, 7
        %v3927 = vsub.s32 %v3924, %v3926
        %v3928 = vrot.slane %v3920, %v3927
        %v3930 = vunpack.c.l.s4 1934713408
        %v3931 = vunpack.c.0.s8 %v3930
        %v3932 = vlaneseq
        %v3933 = vshrl.u32 %v3932, 7
        %v3934 = vsub.s32 %v3931, %v3933
        %v3935 = vrot.slane %v3921, %v3934
        %v3936 = vcombine.low %v3903, %v3919
        %v3937 = vcombine.high %v3903, %v3919
        %v3939 = vunpack.c.l.s4 1934713408
        %v3940 = vunpack.c.0.s8 %v3939
        %v3941 = vlaneseq
        %v3942 = vshrl.u32 %v3941, 7
        %v3943 = vsub.s32 %v3940, %v3942
        %v3944 = vrot.slane %v3936, %v3943
        %v3946 = vunpack.c.l.s4 1934713408
        %v3947 = vunpack.c.0.s8 %v3946
        %v3948 = vlaneseq
        %v3949 = vshrl.u32 %v3948, 7
        %v3950 = vsub.s32 %v3947, %v3949
        %v3951 = vrot.slane %v3937, %v3950
        %v3952 = vcombine.high %v3928, 0.0
        %v3953 = vcombine.high %v3935, 0.0
        %v3954 = vcombine.high %v3944, 0.0
        %v3955 = vcombine.high %v3951, 0.0
        %v3956 = vcombine.low %v3107, %v3171
        %v3957 = vcombine.high %v3107, %v3171
        %v3959 = vunpack.c.l.s4 1983009808
        %v3960 = vunpack.c.0.s8 %v3959
        %v3961 = vlaneseq
        %v3962 = vshrl.u32 %v3961, 7
        %v3963 = vsub.s32 %v3960, %v3962
        %v3964 = vrot.slane %v3956, %v3963
        %v3966 = vunpack.c.l.s4 1983009808
        %v3967 = vunpack.c.0.s8 %v3966
        %v3968 = vlaneseq
        %v3969 = vshrl.u32 %v3968, 7
        %v3970 = vsub.s32 %v3967, %v3969
        %v3971 = vrot.slane %v3957, %v3970
        %v3972 = vcombine.low %v3139, %v3203
        %v3973 = vcombine.high %v3139, %v3203
        %v3975 = vunpack.c.l.s4 1983009808
        %v3976 = vunpack.c.0.s8 %v3975
        %v3977 = vlaneseq
        %v3978 = vshrl.u32 %v3977, 7
        %v3979 = vsub.s32 %v3976, %v3978
        %v3980 = vrot.slane %v3972, %v3979
        %v3982 = vunpack.c.l.s4 1983009808
        %v3983 = vunpack.c.0.s8 %v3982
        %v3984 = vlaneseq
        %v3985 = vshrl.u32 %v3984, 7
        %v3986 = vsub.s32 %v3983, %v3985
        %v3987 = vrot.slane %v3973, %v3986
        %v3988 = vcombine.low %v3964, %v3980
        %v3989 = vcombine.high %v3964, %v3980
        %v3991 = vunpack.c.l.s4 1934713408
        %v3992 = vunpack.c.0.s8 %v3991
        %v3993 = vlaneseq
        %v3994 = vshrl.u32 %v3993, 7
        %v3995 = vsub.s32 %v3992, %v3994
        %v3996 = vrot.slane %v3988, %v3995
        %v3998 = vunpack.c.l.s4 1934713408
        %v3999 = vunpack.c.0.s8 %v3998
        %v4000 = vlaneseq
        %v4001 = vshrl.u32 %v4000, 7
        %v4002 = vsub.s32 %v3999, %v4001
        %v4003 = vrot.slane %v3989, %v4002
        %v4004 = vcombine.low %v3971, %v3987
        %v4005 = vcombine.high %v3971, %v3987
        %v4007 = vunpack.c.l.s4 1934713408
        %v4008 = vunpack.c.0.s8 %v4007
        %v4009 = vlaneseq
        %v4010 = vshrl.u32 %v4009, 7
        %v4011 = vsub.s32 %v4008, %v4010
        %v4012 = vrot.slane %v4004, %v4011
        %v4014 = vunpack.c.l.s4 1934713408
        %v4015 = vunpack.c.0.s8 %v4014
        %v4016 = vlaneseq
        %v4017 = vshrl.u32 %v4016, 7
        %v4018 = vsub.s32 %v4015, %v4017
        %v4019 = vrot.slane %v4005, %v4018
        %v4020 = vcombine.high %v3996, 0.0
        %v4021 = vcombine.high %v4003, 0.0
        %v4022 = vcombine.high %v4012, 0.0
        %v4023 = vcombine.high %v4019, 0.0
        %v4024 = vcombine.low %v3108, %v3172
        %v4025 = vcombine.high %v3108, %v3172
        %v4027 = vunpack.c.l.s4 1983009808
        %v4028 = vunpack.c.0.s8 %v4027
        %v4029 = vlaneseq
        %v4030 = vshrl.u32 %v4029, 7
        %v4031 = vsub.s32 %v4028, %v4030
        %v4032 = vrot.slane %v4024, %v4031
        %v4034 = vunpack.c.l.s4 1983009808
        %v4035 = vunpack.c.0.s8 %v4034
        %v4036 = vlaneseq
        %v4037 = vshrl.u32 %v4036, 7
        %v4038 = vsub.s32 %v4035, %v4037
        %v4039 = vrot.slane %v4025, %v4038
        %v4040 = vcombine.low %v3140, %v3204
        %v4041 = vcombine.high %v3140, %v3204
        %v4043 = vunpack.c.l.s4 1983009808
        %v4044 = vunpack.c.0.s8 %v4043
        %v4045 = vlaneseq
        %v4046 = vshrl.u32 %v4045, 7
        %v4047 = vsub.s32 %v4044, %v4046
        %v4048 = vrot.slane %v4040, %v4047
        %v4050 = vunpack.c.l.s4 1983009808
        %v4051 = vunpack.c.0.s8 %v4050
        %v4052 = vlaneseq
        %v4053 = vshrl.u32 %v4052, 7
        %v4054 = vsub.s32 %v4051, %v4053
        %v4055 = vrot.slane %v4041, %v4054
        %v4056 = vcombine.low %v4032, %v4048
        %v4057 = vcombine.high %v4032, %v4048
        %v4059 = vunpack.c.l.s4 1934713408
        %v4060 = vunpack.c.0.s8 %v4059
        %v4061 = vlaneseq
        %v4062 = vshrl.u32 %v4061, 7
        %v4063 = vsub.s32 %v4060, %v4062
        %v4064 = vrot.slane %v4056, %v4063
        %v4066 = vunpack.c.l.s4 1934713408
        %v4067 = vunpack.c.0.s8 %v4066
        %v4068 = vlaneseq
        %v4069 = vshrl.u32 %v4068, 7
        %v4070 = vsub.s32 %v4067, %v4069
        %v4071 = vrot.slane %v4057, %v4070
        %v4072 = vcombine.low %v4039, %v4055
        %v4073 = vcombine.high %v4039, %v4055
        %v4075 = vunpack.c.l.s4 1934713408
        %v4076 = vunpack.c.0.s8 %v4075
        %v4077 = vlaneseq
        %v4078 = vshrl.u32 %v4077, 7
        %v4079 = vsub.s32 %v4076, %v4078
        %v4080 = vrot.slane %v4072, %v4079
        %v4082 = vunpack.c.l.s4 1934713408
        %v4083 = vunpack.c.0.s8 %v4082
        %v4084 = vlaneseq
        %v4085 = vshrl.u32 %v4084, 7
        %v4086 = vsub.s32 %v4083, %v4085
        %v4087 = vrot.slane %v4073, %v4086
        %v4088 = vcombine.high %v4064, 0.0
        %v4089 = vcombine.high %v4071, 0.0
        %v4090 = vcombine.high %v4080, 0.0
        %v4091 = vcombine.high %v4087, 0.0
        %v4092 = vcombine.low %v3109, %v3173
        %v4093 = vcombine.high %v3109, %v3173
        %v4095 = vunpack.c.l.s4 1983009808
        %v4096 = vunpack.c.0.s8 %v4095
        %v4097 = vlaneseq
        %v4098 = vshrl.u32 %v4097, 7
        %v4099 = vsub.s32 %v4096, %v4098
        %v4100 = vrot.slane %v4092, %v4099
        %v4102 = vunpack.c.l.s4 1983009808
        %v4103 = vunpack.c.0.s8 %v4102
        %v4104 = vlaneseq
        %v4105 = vshrl.u32 %v4104, 7
        %v4106 = vsub.s32 %v4103, %v4105
        %v4107 = vrot.slane %v4093, %v4106
        %v4108 = vcombine.low %v3141, %v3205
        %v4109 = vcombine.high %v3141, %v3205
        %v4111 = vunpack.c.l.s4 1983009808
        %v4112 = vunpack.c.0.s8 %v4111
        %v4113 = vlaneseq
        %v4114 = vshrl.u32 %v4113, 7
        %v4115 = vsub.s32 %v4112, %v4114
        %v4116 = vrot.slane %v4108, %v4115
        %v4118 = vunpack.c.l.s4 1983009808
        %v4119 = vunpack.c.0.s8 %v4118
        %v4120 = vlaneseq
        %v4121 = vshrl.u32 %v4120, 7
        %v4122 = vsub.s32 %v4119, %v4121
        %v4123 = vrot.slane %v4109, %v4122
        %v4124 = vcombine.low %v4100, %v4116
        %v4125 = vcombine.high %v4100, %v4116
        %v4127 = vunpack.c.l.s4 1934713408
        %v4128 = vunpack.c.0.s8 %v4127
        %v4129 = vlaneseq
        %v4130 = vshrl.u32 %v4129, 7
        %v4131 = vsub.s32 %v4128, %v4130
        %v4132 = vrot.slane %v4124, %v4131
        %v4134 = vunpack.c.l.s4 1934713408
        %v4135 = vunpack.c.0.s8 %v4134
        %v4136 = vlaneseq
        %v4137 = vshrl.u32 %v4136, 7
        %v4138 = vsub.s32 %v4135, %v4137
        %v4139 = vrot.slane %v4125, %v4138
        %v4140 = vcombine.low %v4107, %v4123
        %v4141 = vcombine.high %v4107, %v4123
        %v4143 = vunpack.c.l.s4 1934713408
        %v4144 = vunpack.c.0.s8 %v4143
        %v4145 = vlaneseq
        %v4146 = vshrl.u32 %v4145, 7
        %v4147 = vsub.s32 %v4144, %v4146
        %v4148 = vrot.slane %v4140, %v4147
        %v4150 = vunpack.c.l.s4 1934713408
        %v4151 = vunpack.c.0.s8 %v4150
        %v4152 = vlaneseq
        %v4153 = vshrl.u32 %v4152, 7
        %v4154 = vsub.s32 %v4151, %v4153
        %v4155 = vrot.slane %v4141, %v4154
        %v4156 = vcombine.high %v4132, 0.0
        %v4157 = vcombine.high %v4139, 0.0
        %v4158 = vcombine.high %v4148, 0.0
        %v4159 = vcombine.high %v4155, 0.0
        %v4160 = vcombine.low %v3110, %v3174
        %v4161 = vcombine.high %v3110, %v3174
        %v4163 = vunpack.c.l.s4 1983009808
        %v4164 = vunpack.c.0.s8 %v4163
        %v4165 = vlaneseq
        %v4166 = vshrl.u32 %v4165, 7
        %v4167 = vsub.s32 %v4164, %v4166
        %v4168 = vrot.slane %v4160, %v4167
        %v4170 = vunpack.c.l.s4 1983009808
        %v4171 = vunpack.c.0.s8 %v4170
        %v4172 = vlaneseq
        %v4173 = vshrl.u32 %v4172, 7
        %v4174 = vsub.s32 %v4171, %v4173
        %v4175 = vrot.slane %v4161, %v4174
        %v4176 = vcombine.low %v3142, %v3206
        %v4177 = vcombine.high %v3142, %v3206
        %v4179 = vunpack.c.l.s4 1983009808
        %v4180 = vunpack.c.0.s8 %v4179
        %v4181 = vlaneseq
        %v4182 = vshrl.u32 %v4181, 7
        %v4183 = vsub.s32 %v4180, %v4182
        %v4184 = vrot.slane %v4176, %v4183
        %v4186 = vunpack.c.l.s4 1983009808
        %v4187 = vunpack.c.0.s8 %v4186
        %v4188 = vlaneseq
        %v4189 = vshrl.u32 %v4188, 7
        %v4190 = vsub.s32 %v4187, %v4189
        %v4191 = vrot.slane %v4177, %v4190
        %v4192 = vcombine.low %v4168, %v4184
        %v4193 = vcombine.high %v4168, %v4184
        %v4195 = vunpack.c.l.s4 1934713408
        %v4196 = vunpack.c.0.s8 %v4195
        %v4197 = vlaneseq
        %v4198 = vshrl.u32 %v4197, 7
        %v4199 = vsub.s32 %v4196, %v4198
        %v4200 = vrot.slane %v4192, %v4199
        %v4202 = vunpack.c.l.s4 1934713408
        %v4203 = vunpack.c.0.s8 %v4202
        %v4204 = vlaneseq
        %v4205 = vshrl.u32 %v4204, 7
        %v4206 = vsub.s32 %v4203, %v4205
        %v4207 = vrot.slane %v4193, %v4206
        %v4208 = vcombine.low %v4175, %v4191
        %v4209 = vcombine.high %v4175, %v4191
        %v4211 = vunpack.c.l.s4 1934713408
        %v4212 = vunpack.c.0.s8 %v4211
        %v4213 = vlaneseq
        %v4214 = vshrl.u32 %v4213, 7
        %v4215 = vsub.s32 %v4212, %v4214
        %v4216 = vrot.slane %v4208, %v4215
        %v4218 = vunpack.c.l.s4 1934713408
        %v4219 = vunpack.c.0.s8 %v4218
        %v4220 = vlaneseq
        %v4221 = vshrl.u32 %v4220, 7
        %v4222 = vsub.s32 %v4219, %v4221
        %v4223 = vrot.slane %v4209, %v4222
        %v4224 = vcombine.high %v4200, 0.0
        %v4225 = vcombine.high %v4207, 0.0
        %v4226 = vcombine.high %v4216, 0.0
        %v4227 = vcombine.high %v4223, 0.0
        %v4228 = vcombine.low %v3111, %v3175
        %v4229 = vcombine.high %v3111, %v3175
        %v4231 = vunpack.c.l.s4 1983009808
        %v4232 = vunpack.c.0.s8 %v4231
        %v4233 = vlaneseq
        %v4234 = vshrl.u32 %v4233, 7
        %v4235 = vsub.s32 %v4232, %v4234
        %v4236 = vrot.slane %v4228, %v4235
        %v4238 = vunpack.c.l.s4 1983009808
        %v4239 = vunpack.c.0.s8 %v4238
        %v4240 = vlaneseq
        %v4241 = vshrl.u32 %v4240, 7
        %v4242 = vsub.s32 %v4239, %v4241
        %v4243 = vrot.slane %v4229, %v4242
        %v4244 = vcombine.low %v3143, %v3207
        %v4245 = vcombine.high %v3143, %v3207
        %v4247 = vunpack.c.l.s4 1983009808
        %v4248 = vunpack.c.0.s8 %v4247
        %v4249 = vlaneseq
        %v4250 = vshrl.u32 %v4249, 7
        %v4251 = vsub.s32 %v4248, %v4250
        %v4252 = vrot.slane %v4244, %v4251
        %v4254 = vunpack.c.l.s4 1983009808
        %v4255 = vunpack.c.0.s8 %v4254
        %v4256 = vlaneseq
        %v4257 = vshrl.u32 %v4256, 7
        %v4258 = vsub.s32 %v4255, %v4257
        %v4259 = vrot.slane %v4245, %v4258
        %v4260 = vcombine.low %v4236, %v4252
        %v4261 = vcombine.high %v4236, %v4252
        %v4263 = vunpack.c.l.s4 1934713408
        %v4264 = vunpack.c.0.s8 %v4263
        %v4265 = vlaneseq
        %v4266 = vshrl.u32 %v4265, 7
        %v4267 = vsub.s32 %v4264, %v4266
        %v4268 = vrot.slane %v4260, %v4267
        %v4270 = vunpack.c.l.s4 1934713408
        %v4271 = vunpack.c.0.s8 %v4270
        %v4272 = vlaneseq
        %v4273 = vshrl.u32 %v4272, 7
        %v4274 = vsub.s32 %v4271, %v4273
        %v4275 = vrot.slane %v4261, %v4274
        %v4276 = vcombine.low %v4243, %v4259
        %v4277 = vcombine.high %v4243, %v4259
        %v4279 = vunpack.c.l.s4 1934713408
        %v4280 = vunpack.c.0.s8 %v4279
        %v4281 = vlaneseq
        %v4282 = vshrl.u32 %v4281, 7
        %v4283 = vsub.s32 %v4280, %v4282
        %v4284 = vrot.slane %v4276, %v4283
        %v4286 = vunpack.c.l.s4 1934713408
        %v4287 = vunpack.c.0.s8 %v4286
        %v4288 = vlaneseq
        %v4289 = vshrl.u32 %v4288, 7
        %v4290 = vsub.s32 %v4287, %v4289
        %v4291 = vrot.slane %v4277, %v4290
        %v4292 = vcombine.high %v4268, 0.0
        %v4293 = vcombine.high %v4275, 0.0
        %v4294 = vcombine.high %v4284, 0.0
        %v4295 = vcombine.high %v4291, 0.0
        %v4296 = vcombine.low %v3248, %v3255
        %v4298 = vunpack.c.l.s4 1983009808
        %v4299 = vunpack.c.0.s8 %v4298
        %v4300 = vlaneseq
        %v4301 = vshrl.u32 %v4300, 7
        %v4302 = vsub.s32 %v4299, %v4301
        %v4303 = vrot.slane %v4296, %v4302
        %v4304 = vcombine.low %v3272, %v3273
        %v4306 = vunpack.c.l.s4 1983009808
        %v4307 = vunpack.c.0.s8 %v4306
        %v4308 = vlaneseq
        %v4309 = vshrl.u32 %v4308, 7
        %v4310 = vsub.s32 %v4307, %v4309
        %v4311 = vrot.slane %v4304, %v4310
        %v4312 = vcombine.low %v3264, %v3271
        %v4314 = vunpack.c.l.s4 1983009808
        %v4315 = vunpack.c.0.s8 %v4314
        %v4316 = vlaneseq
        %v4317 = vshrl.u32 %v4316, 7
        %v4318 = vsub.s32 %v4315, %v4317
        %v4319 = vrot.slane %v4312, %v4318
        %v4320 = vcombine.low %v3274, %v3275
        %v4322 = vunpack.c.l.s4 1983009808
        %v4323 = vunpack.c.0.s8 %v4322
        %v4324 = vlaneseq
        %v4325 = vshrl.u32 %v4324, 7
        %v4326 = vsub.s32 %v4323, %v4325
        %v4327 = vrot.slane %v4320, %v4326
        %v4328 = vcombine.low %v4303, %v4311
        %v4329 = vcombine.high %v4303, %v4311
        %v4331 = vunpack.c.l.s4 1934713408
        %v4332 = vunpack.c.0.s8 %v4331
        %v4333 = vlaneseq
        %v4334 = vshrl.u32 %v4333, 7
        %v4335 = vsub.s32 %v4332, %v4334
        %v4336 = vrot.slane %v4328, %v4335
        %v4338 = vunpack.c.l.s4 1934713408
        %v4339 = vunpack.c.0.s8 %v4338
        %v4340 = vlaneseq
        %v4341 = vshrl.u32 %v4340, 7
        %v4342 = vsub.s32 %v4339, %v4341
        %v4343 = vrot.slane %v4329, %v4342
        %v4344 = vcombine.low %v4319, %v4327
        %v4345 = vcombine.high %v4319, %v4327
        %v4347 = vunpack.c.l.s4 1934713408
        %v4348 = vunpack.c.0.s8 %v4347
        %v4349 = vlaneseq
        %v4350 = vshrl.u32 %v4349, 7
        %v4351 = vsub.s32 %v4348, %v4350
        %v4352 = vrot.slane %v4344, %v4351
        %v4354 = vunpack.c.l.s4 1934713408
        %v4355 = vunpack.c.0.s8 %v4354
        %v4356 = vlaneseq
        %v4357 = vshrl.u32 %v4356, 7
        %v4358 = vsub.s32 %v4355, %v4357
        %v4359 = vrot.slane %v4345, %v4358
        %v4360 = vcombine.low %v4336, %v4352
        %v4361 = vcombine.high %v4336, %v4352
        %v4362 = vcombine.low %v4343, %v4359
        %v4363 = vcombine.high %v4343, %v4359
        %v4364 = vcombine.low %v3316, %v3323
        %v4366 = vunpack.c.l.s4 1983009808
        %v4367 = vunpack.c.0.s8 %v4366
        %v4368 = vlaneseq
        %v4369 = vshrl.u32 %v4368, 7
        %v4370 = vsub.s32 %v4367, %v4369
        %v4371 = vrot.slane %v4364, %v4370
        %v4372 = vcombine.low %v3340, %v3341
        %v4374 = vunpack.c.l.s4 1983009808
        %v4375 = vunpack.c.0.s8 %v4374
        %v4376 = vlaneseq
        %v4377 = vshrl.u32 %v4376, 7
        %v4378 = vsub.s32 %v4375, %v4377
        %v4379 = vrot.slane %v4372, %v4378
        %v4380 = vcombine.low %v3332, %v3339
        %v4382 = vunpack.c.l.s4 1983009808
        %v4383 = vunpack.c.0.s8 %v4382
        %v4384 = vlaneseq
        %v4385 = vshrl.u32 %v4384, 7
        %v4386 = vsub.s32 %v4383, %v4385
        %v4387 = vrot.slane %v4380, %v4386
        %v4388 = vcombine.low %v3342, %v3343
        %v4390 = vunpack.c.l.s4 1983009808
        %v4391 = vunpack.c.0.s8 %v4390
        %v4392 = vlaneseq
        %v4393 = vshrl.u32 %v4392, 7
        %v4394 = vsub.s32 %v4391, %v4393
        %v4395 = vrot.slane %v4388, %v4394
        %v4396 = vcombine.low %v4371, %v4379
        %v4397 = vcombine.high %v4371, %v4379
        %v4399 = vunpack.c.l.s4 1934713408
        %v4400 = vunpack.c.0.s8 %v4399
        %v4401 = vlaneseq
        %v4402 = vshrl.u32 %v4401, 7
        %v4403 = vsub.s32 %v4400, %v4402
        %v4404 = vrot.slane %v4396, %v4403
        %v4406 = vunpack.c.l.s4 1934713408
        %v4407 = vunpack.c.0.s8 %v4406
        %v4408 = vlaneseq
        %v4409 = vshrl.u32 %v4408, 7
        %v4410 = vsub.s32 %v4407, %v4409
        %v4411 = vrot.slane %v4397, %v4410
        %v4412 = vcombine.low %v4387, %v4395
        %v4413 = vcombine.high %v4387, %v4395
        %v4415 = vunpack.c.l.s4 1934713408
        %v4416 = vunpack.c.0.s8 %v4415
        %v4417 = vlaneseq
        %v4418 = vshrl.u32 %v4417, 7
        %v4419 = vsub.s32 %v4416, %v4418
        %v4420 = vrot.slane %v4412, %v4419
        %v4422 = vunpack.c.l.s4 1934713408
        %v4423 = vunpack.c.0.s8 %v4422
        %v4424 = vlaneseq
        %v4425 = vshrl.u32 %v4424, 7
        %v4426 = vsub.s32 %v4423, %v4425
        %v4427 = vrot.slane %v4413, %v4426
        %v4428 = vcombine.low %v4404, %v4420
        %v4429 = vcombine.high %v4404, %v4420
        %v4430 = vcombine.low %v4411, %v4427
        %v4431 = vcombine.high %v4411, %v4427
        %v4432 = vcombine.low %v3384, %v3391
        %v4434 = vunpack.c.l.s4 1983009808
        %v4435 = vunpack.c.0.s8 %v4434
        %v4436 = vlaneseq
        %v4437 = vshrl.u32 %v4436, 7
        %v4438 = vsub.s32 %v4435, %v4437
        %v4439 = vrot.slane %v4432, %v4438
        %v4440 = vcombine.low %v3408, %v3409
        %v4442 = vunpack.c.l.s4 1983009808
        %v4443 = vunpack.c.0.s8 %v4442
        %v4444 = vlaneseq
        %v4445 = vshrl.u32 %v4444, 7
        %v4446 = vsub.s32 %v4443, %v4445
        %v4447 = vrot.slane %v4440, %v4446
        %v4448 = vcombine.low %v3400, %v3407
        %v4450 = vunpack.c.l.s4 1983009808
        %v4451 = vunpack.c.0.s8 %v4450
        %v4452 = vlaneseq
        %v4453 = vshrl.u32 %v4452, 7
        %v4454 = vsub.s32 %v4451, %v4453
        %v4455 = vrot.slane %v4448, %v4454
        %v4456 = vcombine.low %v3410, %v3411
        %v4458 = vunpack.c.l.s4 1983009808
        %v4459 = vunpack.c.0.s8 %v4458
        %v4460 = vlaneseq
        %v4461 = vshrl.u32 %v4460, 7
        %v4462 = vsub.s32 %v4459, %v4461
        %v4463 = vrot.slane %v4456, %v4462
        %v4464 = vcombine.low %v4439, %v4447
        %v4465 = vcombine.high %v4439, %v4447
        %v4467 = vunpack.c.l.s4 1934713408
        %v4468 = vunpack.c.0.s8 %v4467
        %v4469 = vlaneseq
        %v4470 = vshrl.u32 %v4469, 7
        %v4471 = vsub.s32 %v4468, %v4470
        %v4472 = vrot.slane %v4464, %v4471
        %v4474 = vunpack.c.l.s4 1934713408
        %v4475 = vunpack.c.0.s8 %v4474
        %v4476 = vlaneseq
        %v4477 = vshrl.u32 %v4476, 7
        %v4478 = vsub.s32 %v4475, %v4477
        %v4479 = vrot.slane %v4465, %v4478
        %v4480 = vcombine.low %v4455, %v4463
        %v4481 = vcombine.high %v4455, %v4463
        %v4483 = vunpack.c.l.s4 1934713408
        %v4484 = vunpack.c.0.s8 %v4483
        %v4485 = vlaneseq
        %v4486 = vshrl.u32 %v4485, 7
        %v4487 = vsub.s32 %v4484, %v4486
        %v4488 = vrot.slane %v4480, %v4487
        %v4490 = vunpack.c.l.s4 1934713408
        %v4491 = vunpack.c.0.s8 %v4490
        %v4492 = vlaneseq
        %v4493 = vshrl.u32 %v4492, 7
        %v4494 = vsub.s32 %v4491, %v4493
        %v4495 = vrot.slane %v4481, %v4494
        %v4496 = vcombine.low %v4472, %v4488
        %v4497 = vcombine.high %v4472, %v4488
        %v4498 = vcombine.low %v4479, %v4495
        %v4499 = vcombine.high %v4479, %v4495
        %v4500 = vcombine.low %v3452, %v3459
        %v4502 = vunpack.c.l.s4 1983009808
        %v4503 = vunpack.c.0.s8 %v4502
        %v4504 = vlaneseq
        %v4505 = vshrl.u32 %v4504, 7
        %v4506 = vsub.s32 %v4503, %v4505
        %v4507 = vrot.slane %v4500, %v4506
        %v4508 = vcombine.low %v3476, %v3477
        %v4510 = vunpack.c.l.s4 1983009808
        %v4511 = vunpack.c.0.s8 %v4510
        %v4512 = vlaneseq
        %v4513 = vshrl.u32 %v4512, 7
        %v4514 = vsub.s32 %v4511, %v4513
        %v4515 = vrot.slane %v4508, %v4514
        %v4516 = vcombine.low %v3468, %v3475
        %v4518 = vunpack.c.l.s4 1983009808
        %v4519 = vunpack.c.0.s8 %v4518
        %v4520 = vlaneseq
        %v4521 = vshrl.u32 %v4520, 7
        %v4522 = vsub.s32 %v4519, %v4521
        %v4523 = vrot.slane %v4516, %v4522
        %v4524 = vcombine.low %v3478, %v3479
        %v4526 = vunpack.c.l.s4 1983009808
        %v4527 = vunpack.c.0.s8 %v4526
        %v4528 = vlaneseq
        %v4529 = vshrl.u32 %v4528, 7
        %v4530 = vsub.s32 %v4527, %v4529
        %v4531 = vrot.slane %v4524, %v4530
        %v4532 = vcombine.low %v4507, %v4515
        %v4533 = vcombine.high %v4507, %v4515
        %v4535 = vunpack.c.l.s4 1934713408
        %v4536 = vunpack.c.0.s8 %v4535
        %v4537 = vlaneseq
        %v4538 = vshrl.u32 %v4537, 7
        %v4539 = vsub.s32 %v4536, %v4538
        %v4540 = vrot.slane %v4532, %v4539
        %v4542 = vunpack.c.l.s4 1934713408
        %v4543 = vunpack.c.0.s8 %v4542
        %v4544 = vlaneseq
        %v4545 = vshrl.u32 %v4544, 7
        %v4546 = vsub.s32 %v4543, %v4545
        %v4547 = vrot.slane %v4533, %v4546
        %v4548 = vcombine.low %v4523, %v4531
        %v4549 = vcombine.high %v4523, %v4531
        %v4551 = vunpack.c.l.s4 1934713408
        %v4552 = vunpack.c.0.s8 %v4551
        %v4553 = vlaneseq
        %v4554 = vshrl.u32 %v4553, 7
        %v4555 = vsub.s32 %v4552, %v4554
        %v4556 = vrot.slane %v4548, %v4555
        %v4558 = vunpack.c.l.s4 1934713408
        %v4559 = vunpack.c.0.s8 %v4558
        %v4560 = vlaneseq
        %v4561 = vshrl.u32 %v4560, 7
        %v4562 = vsub.s32 %v4559, %v4561
        %v4563 = vrot.slane %v4549, %v4562
        %v4564 = vcombine.low %v4540, %v4556
        %v4565 = vcombine.high %v4540, %v4556
        %v4566 = vcombine.low %v4547, %v4563
        %v4567 = vcombine.high %v4547, %v4563
        %v4568 = vcombine.low %v3520, %v3527
        %v4570 = vunpack.c.l.s4 1983009808
        %v4571 = vunpack.c.0.s8 %v4570
        %v4572 = vlaneseq
        %v4573 = vshrl.u32 %v4572, 7
        %v4574 = vsub.s32 %v4571, %v4573
        %v4575 = vrot.slane %v4568, %v4574
        %v4576 = vcombine.low %v3544, %v3545
        %v4578 = vunpack.c.l.s4 1983009808
        %v4579 = vunpack.c.0.s8 %v4578
        %v4580 = vlaneseq
        %v4581 = vshrl.u32 %v4580, 7
        %v4582 = vsub.s32 %v4579, %v4581
        %v4583 = vrot.slane %v4576, %v4582
        %v4584 = vcombine.low %v3536, %v3543
        %v4586 = vunpack.c.l.s4 1983009808
        %v4587 = vunpack.c.0.s8 %v4586
        %v4588 = vlaneseq
        %v4589 = vshrl.u32 %v4588, 7
        %v4590 = vsub.s32 %v4587, %v4589
        %v4591 = vrot.slane %v4584, %v4590
        %v4592 = vcombine.low %v3546, %v3547
        %v4594 = vunpack.c.l.s4 1983009808
        %v4595 = vunpack.c.0.s8 %v4594
        %v4596 = vlaneseq
        %v4597 = vshrl.u32 %v4596, 7
        %v4598 = vsub.s32 %v4595, %v4597
        %v4599 = vrot.slane %v4592, %v4598
        %v4600 = vcombine.low %v4575, %v4583
        %v4601 = vcombine.high %v4575, %v4583
        %v4603 = vunpack.c.l.s4 1934713408
        %v4604 = vunpack.c.0.s8 %v4603
        %v4605 = vlaneseq
        %v4606 = vshrl.u32 %v4605, 7
        %v4607 = vsub.s32 %v4604, %v4606
        %v4608 = vrot.slane %v4600, %v4607
        %v4610 = vunpack.c.l.s4 1934713408
        %v4611 = vunpack.c.0.s8 %v4610
        %v4612 = vlaneseq
        %v4613 = vshrl.u32 %v4612, 7
        %v4614 = vsub.s32 %v4611, %v4613
        %v4615 = vrot.slane %v4601, %v4614
        %v4616 = vcombine.low %v4591, %v4599
        %v4617 = vcombine.high %v4591, %v4599
        %v4619 = vunpack.c.l.s4 1934713408
        %v4620 = vunpack.c.0.s8 %v4619
        %v4621 = vlaneseq
        %v4622 = vshrl.u32 %v4621, 7
        %v4623 = vsub.s32 %v4620, %v4622
        %v4624 = vrot.slane %v4616, %v4623
        %v4626 = vunpack.c.l.s4 1934713408
        %v4627 = vunpack.c.0.s8 %v4626
        %v4628 = vlaneseq
        %v4629 = vshrl.u32 %v4628, 7
        %v4630 = vsub.s32 %v4627, %v4629
        %v4631 = vrot.slane %v4617, %v4630
        %v4632 = vcombine.low %v4608, %v4624
        %v4633 = vcombine.high %v4608, %v4624
        %v4634 = vcombine.low %v4615, %v4631
        %v4635 = vcombine.high %v4615, %v4631
        %v4636 = vcombine.low %v3588, %v3595
        %v4638 = vunpack.c.l.s4 1983009808
        %v4639 = vunpack.c.0.s8 %v4638
        %v4640 = vlaneseq
        %v4641 = vshrl.u32 %v4640, 7
        %v4642 = vsub.s32 %v4639, %v4641
        %v4643 = vrot.slane %v4636, %v4642
        %v4644 = vcombine.low %v3612, %v3613
        %v4646 = vunpack.c.l.s4 1983009808
        %v4647 = vunpack.c.0.s8 %v4646
        %v4648 = vlaneseq
        %v4649 = vshrl.u32 %v4648, 7
        %v4650 = vsub.s32 %v4647, %v4649
        %v4651 = vrot.slane %v4644, %v4650
        %v4652 = vcombine.low %v3604, %v3611
        %v4654 = vunpack.c.l.s4 1983009808
        %v4655 = vunpack.c.0.s8 %v4654
        %v4656 = vlaneseq
        %v4657 = vshrl.u32 %v4656, 7
        %v4658 = vsub.s32 %v4655, %v4657
        %v4659 = vrot.slane %v4652, %v4658
        %v4660 = vcombine.low %v3614, %v3615
        %v4662 = vunpack.c.l.s4 1983009808
        %v4663 = vunpack.c.0.s8 %v4662
        %v4664 = vlaneseq
        %v4665 = vshrl.u32 %v4664, 7
        %v4666 = vsub.s32 %v4663, %v4665
        %v4667 = vrot.slane %v4660, %v4666
        %v4668 = vcombine.low %v4643, %v4651
        %v4669 = vcombine.high %v4643, %v4651
        %v4671 = vunpack.c.l.s4 1934713408
        %v4672 = vunpack.c.0.s8 %v4671
        %v4673 = vlaneseq
        %v4674 = vshrl.u32 %v4673, 7
        %v4675 = vsub.s32 %v4672, %v4674
        %v4676 = vrot.slane %v4668, %v4675
        %v4678 = vunpack.c.l.s4 1934713408
        %v4679 = vunpack.c.0.s8 %v4678
        %v4680 = vlaneseq
        %v4681 = vshrl.u32 %v4680, 7
        %v4682 = vsub.s32 %v4679, %v4681
        %v4683 = vrot.slane %v4669, %v4682
        %v4684 = vcombine.low %v4659, %v4667
        %v4685 = vcombine.high %v4659, %v4667
        %v4687 = vunpack.c.l.s4 1934713408
        %v4688 = vunpack.c.0.s8 %v4687
        %v4689 = vlaneseq
        %v4690 = vshrl.u32 %v4689, 7
        %v4691 = vsub.s32 %v4688, %v4690
        %v4692 = vrot.slane %v4684, %v4691
        %v4694 = vunpack.c.l.s4 1934713408
        %v4695 = vunpack.c.0.s8 %v4694
        %v4696 = vlaneseq
        %v4697 = vshrl.u32 %v4696, 7
        %v4698 = vsub.s32 %v4695, %v4697
        %v4699 = vrot.slane %v4685, %v4698
        %v4700 = vcombine.low %v4676, %v4692
        %v4701 = vcombine.high %v4676, %v4692
        %v4702 = vcombine.low %v4683, %v4699
        %v4703 = vcombine.high %v4683, %v4699
        %v4704 = vcombine.low %v3656, %v3663
        %v4706 = vunpack.c.l.s4 1983009808
        %v4707 = vunpack.c.0.s8 %v4706
        %v4708 = vlaneseq
        %v4709 = vshrl.u32 %v4708, 7
        %v4710 = vsub.s32 %v4707, %v4709
        %v4711 = vrot.slane %v4704, %v4710
        %v4712 = vcombine.low %v3680, %v3681
        %v4714 = vunpack.c.l.s4 1983009808
        %v4715 = vunpack.c.0.s8 %v4714
        %v4716 = vlaneseq
        %v4717 = vshrl.u32 %v4716, 7
        %v4718 = vsub.s32 %v4715, %v4717
        %v4719 = vrot.slane %v4712, %v4718
        %v4720 = vcombine.low %v3672, %v3679
        %v4722 = vunpack.c.l.s4 1983009808
        %v4723 = vunpack.c.0.s8 %v4722
        %v4724 = vlaneseq
        %v4725 = vshrl.u32 %v4724, 7
        %v4726 = vsub.s32 %v4723, %v4725
        %v4727 = vrot.slane %v4720, %v4726
        %v4728 = vcombine.low %v3682, %v3683
        %v4730 = vunpack.c.l.s4 1983009808
        %v4731 = vunpack.c.0.s8 %v4730
        %v4732 = vlaneseq
        %v4733 = vshrl.u32 %v4732, 7
        %v4734 = vsub.s32 %v4731, %v4733
        %v4735 = vrot.slane %v4728, %v4734
        %v4736 = vcombine.low %v4711, %v4719
        %v4737 = vcombine.high %v4711, %v4719
        %v4739 = vunpack.c.l.s4 1934713408
        %v4740 = vunpack.c.0.s8 %v4739
        %v4741 = vlaneseq
        %v4742 = vshrl.u32 %v4741, 7
        %v4743 = vsub.s32 %v4740, %v4742
        %v4744 = vrot.slane %v4736, %v4743
        %v4746 = vunpack.c.l.s4 1934713408
        %v4747 = vunpack.c.0.s8 %v4746
        %v4748 = vlaneseq
        %v4749 = vshrl.u32 %v4748, 7
        %v4750 = vsub.s32 %v4747, %v4749
        %v4751 = vrot.slane %v4737, %v4750
        %v4752 = vcombine.low %v4727, %v4735
        %v4753 = vcombine.high %v4727, %v4735
        %v4755 = vunpack.c.l.s4 1934713408
        %v4756 = vunpack.c.0.s8 %v4755
        %v4757 = vlaneseq
        %v4758 = vshrl.u32 %v4757, 7
        %v4759 = vsub.s32 %v4756, %v4758
        %v4760 = vrot.slane %v4752, %v4759
        %v4762 = vunpack.c.l.s4 1934713408
        %v4763 = vunpack.c.0.s8 %v4762
        %v4764 = vlaneseq
        %v4765 = vshrl.u32 %v4764, 7
        %v4766 = vsub.s32 %v4763, %v4765
        %v4767 = vrot.slane %v4753, %v4766
        %v4768 = vcombine.low %v4744, %v4760
        %v4769 = vcombine.high %v4744, %v4760
        %v4770 = vcombine.low %v4751, %v4767
        %v4771 = vcombine.high %v4751, %v4767
        %v4772 = vcombine.low %v3724, %v3731
        %v4774 = vunpack.c.l.s4 1983009808
        %v4775 = vunpack.c.0.s8 %v4774
        %v4776 = vlaneseq
        %v4777 = vshrl.u32 %v4776, 7
        %v4778 = vsub.s32 %v4775, %v4777
        %v4779 = vrot.slane %v4772, %v4778
        %v4780 = vcombine.low %v3748, %v3749
        %v4782 = vunpack.c.l.s4 1983009808
        %v4783 = vunpack.c.0.s8 %v4782
        %v4784 = vlaneseq
        %v4785 = vshrl.u32 %v4784, 7
        %v4786 = vsub.s32 %v4783, %v4785
        %v4787 = vrot.slane %v4780, %v4786
        %v4788 = vcombine.low %v3740, %v3747
        %v4790 = vunpack.c.l.s4 1983009808
        %v4791 = vunpack.c.0.s8 %v4790
        %v4792 = vlaneseq
        %v4793 = vshrl.u32 %v4792, 7
        %v4794 = vsub.s32 %v4791, %v4793
        %v4795 = vrot.slane %v4788, %v4794
        %v4796 = vcombine.low %v3750, %v3751
        %v4798 = vunpack.c.l.s4 1983009808
        %v4799 = vunpack.c.0.s8 %v4798
        %v4800 = vlaneseq
        %v4801 = vshrl.u32 %v4800, 7
        %v4802 = vsub.s32 %v4799, %v4801
        %v4803 = vrot.slane %v4796, %v4802
        %v4804 = vcombine.low %v4779, %v4787
        %v4805 = vcombine.high %v4779, %v4787
        %v4807 = vunpack.c.l.s4 1934713408
        %v4808 = vunpack.c.0.s8 %v4807
        %v4809 = vlaneseq
        %v4810 = vshrl.u32 %v4809, 7
        %v4811 = vsub.s32 %v4808, %v4810
        %v4812 = vrot.slane %v4804, %v4811
        %v4814 = vunpack.c.l.s4 1934713408
        %v4815 = vunpack.c.0.s8 %v4814
        %v4816 = vlaneseq
        %v4817 = vshrl.u32 %v4816, 7
        %v4818 = vsub.s32 %v4815, %v4817
        %v4819 = vrot.slane %v4805, %v4818
        %v4820 = vcombine.low %v4795, %v4803
        %v4821 = vcombine.high %v4795, %v4803
        %v4823 = vunpack.c.l.s4 1934713408
        %v4824 = vunpack.c.0.s8 %v4823
        %v4825 = vlaneseq
        %v4826 = vshrl.u32 %v4825, 7
        %v4827 = vsub.s32 %v4824, %v4826
        %v4828 = vrot.slane %v4820, %v4827
        %v4830 = vunpack.c.l.s4 1934713408
        %v4831 = vunpack.c.0.s8 %v4830
        %v4832 = vlaneseq
        %v4833 = vshrl.u32 %v4832, 7
        %v4834 = vsub.s32 %v4831, %v4833
        %v4835 = vrot.slane %v4821, %v4834
        %v4836 = vcombine.low %v4812, %v4828
        %v4837 = vcombine.high %v4812, %v4828
        %v4838 = vcombine.low %v4819, %v4835
        %v4839 = vcombine.high %v4819, %v4835
        %v4840 = vcombine.low %v3792, %v3799
        %v4842 = vunpack.c.l.s4 1983009808
        %v4843 = vunpack.c.0.s8 %v4842
        %v4844 = vlaneseq
        %v4845 = vshrl.u32 %v4844, 7
        %v4846 = vsub.s32 %v4843, %v4845
        %v4847 = vrot.slane %v4840, %v4846
        %v4848 = vcombine.low %v3816, %v3817
        %v4850 = vunpack.c.l.s4 1983009808
        %v4851 = vunpack.c.0.s8 %v4850
        %v4852 = vlaneseq
        %v4853 = vshrl.u32 %v4852, 7
        %v4854 = vsub.s32 %v4851, %v4853
        %v4855 = vrot.slane %v4848, %v4854
        %v4856 = vcombine.low %v3808, %v3815
        %v4858 = vunpack.c.l.s4 1983009808
        %v4859 = vunpack.c.0.s8 %v4858
        %v4860 = vlaneseq
        %v4861 = vshrl.u32 %v4860, 7
        %v4862 = vsub.s32 %v4859, %v4861
        %v4863 = vrot.slane %v4856, %v4862
        %v4864 = vcombine.low %v3818, %v3819
        %v4866 = vunpack.c.l.s4 1983009808
        %v4867 = vunpack.c.0.s8 %v4866
        %v4868 = vlaneseq
        %v4869 = vshrl.u32 %v4868, 7
        %v4870 = vsub.s32 %v4867, %v4869
        %v4871 = vrot.slane %v4864, %v4870
        %v4872 = vcombine.low %v4847, %v4855
        %v4873 = vcombine.high %v4847, %v4855
        %v4875 = vunpack.c.l.s4 1934713408
        %v4876 = vunpack.c.0.s8 %v4875
        %v4877 = vlaneseq
        %v4878 = vshrl.u32 %v4877, 7
        %v4879 = vsub.s32 %v4876, %v4878
        %v4880 = vrot.slane %v4872, %v4879
        %v4882 = vunpack.c.l.s4 1934713408
        %v4883 = vunpack.c.0.s8 %v4882
        %v4884 = vlaneseq
        %v4885 = vshrl.u32 %v4884, 7
        %v4886 = vsub.s32 %v4883, %v4885
        %v4887 = vrot.slane %v4873, %v4886
        %v4888 = vcombine.low %v4863, %v4871
        %v4889 = vcombine.high %v4863, %v4871
        %v4891 = vunpack.c.l.s4 1934713408
        %v4892 = vunpack.c.0.s8 %v4891
        %v4893 = vlaneseq
        %v4894 = vshrl.u32 %v4893, 7
        %v4895 = vsub.s32 %v4892, %v4894
        %v4896 = vrot.slane %v4888, %v4895
        %v4898 = vunpack.c.l.s4 1934713408
        %v4899 = vunpack.c.0.s8 %v4898
        %v4900 = vlaneseq
        %v4901 = vshrl.u32 %v4900, 7
        %v4902 = vsub.s32 %v4899, %v4901
        %v4903 = vrot.slane %v4889, %v4902
        %v4904 = vcombine.low %v4880, %v4896
        %v4905 = vcombine.high %v4880, %v4896
        %v4906 = vcombine.low %v4887, %v4903
        %v4907 = vcombine.high %v4887, %v4903
        %v4908 = vcombine.low %v3860, %v3867
        %v4910 = vunpack.c.l.s4 1983009808
        %v4911 = vunpack.c.0.s8 %v4910
        %v4912 = vlaneseq
        %v4913 = vshrl.u32 %v4912, 7
        %v4914 = vsub.s32 %v4911, %v4913
        %v4915 = vrot.slane %v4908, %v4914
        %v4916 = vcombine.low %v3884, %v3885
        %v4918 = vunpack.c.l.s4 1983009808
        %v4919 = vunpack.c.0.s8 %v4918
        %v4920 = vlaneseq
        %v4921 = vshrl.u32 %v4920, 7
        %v4922 = vsub.s32 %v4919, %v4921
        %v4923 = vrot.slane %v4916, %v4922
        %v4924 = vcombine.low %v3876, %v3883
        %v4926 = vunpack.c.l.s4 1983009808
        %v4927 = vunpack.c.0.s8 %v4926
        %v4928 = vlaneseq
        %v4929 = vshrl.u32 %v4928, 7
        %v4930 = vsub.s32 %v4927, %v4929
        %v4931 = vrot.slane %v4924, %v4930
        %v4932 = vcombine.low %v3886, %v3887
        %v4934 = vunpack.c.l.s4 1983009808
        %v4935 = vunpack.c.0.s8 %v4934
        %v4936 = vlaneseq
        %v4937 = vshrl.u32 %v4936, 7
        %v4938 = vsub.s32 %v4935, %v4937
        %v4939 = vrot.slane %v4932, %v4938
        %v4940 = vcombine.low %v4915, %v4923
        %v4941 = vcombine.high %v4915, %v4923
        %v4943 = vunpack.c.l.s4 1934713408
        %v4944 = vunpack.c.0.s8 %v4943
        %v4945 = vlaneseq
        %v4946 = vshrl.u32 %v4945, 7
        %v4947 = vsub.s32 %v4944, %v4946
        %v4948 = vrot.slane %v4940, %v4947
        %v4950 = vunpack.c.l.s4 1934713408
        %v4951 = vunpack.c.0.s8 %v4950
        %v4952 = vlaneseq
        %v4953 = vshrl.u32 %v4952, 7
        %v4954 = vsub.s32 %v4951, %v4953
        %v4955 = vrot.slane %v4941, %v4954
        %v4956 = vcombine.low %v4931, %v4939
        %v4957 = vcombine.high %v4931, %v4939
        %v4959 = vunpack.c.l.s4 1934713408
        %v4960 = vunpack.c.0.s8 %v4959
        %v4961 = vlaneseq
        %v4962 = vshrl.u32 %v4961, 7
        %v4963 = vsub.s32 %v4960, %v4962
        %v4964 = vrot.slane %v4956, %v4963
        %v4966 = vunpack.c.l.s4 1934713408
        %v4967 = vunpack.c.0.s8 %v4966
        %v4968 = vlaneseq
        %v4969 = vshrl.u32 %v4968, 7
        %v4970 = vsub.s32 %v4967, %v4969
        %v4971 = vrot.slane %v4957, %v4970
        %v4972 = vcombine.low %v4948, %v4964
        %v4973 = vcombine.high %v4948, %v4964
        %v4974 = vcombine.low %v4955, %v4971
        %v4975 = vcombine.high %v4955, %v4971
        %v4976 = vcombine.low %v3928, %v3935
        %v4978 = vunpack.c.l.s4 1983009808
        %v4979 = vunpack.c.0.s8 %v4978
        %v4980 = vlaneseq
        %v4981 = vshrl.u32 %v4980, 7
        %v4982 = vsub.s32 %v4979, %v4981
        %v4983 = vrot.slane %v4976, %v4982
        %v4984 = vcombine.low %v3952, %v3953
        %v4986 = vunpack.c.l.s4 1983009808
        %v4987 = vunpack.c.0.s8 %v4986
        %v4988 = vlaneseq
        %v4989 = vshrl.u32 %v4988, 7
        %v4990 = vsub.s32 %v4987, %v4989
        %v4991 = vrot.slane %v4984, %v4990
        %v4992 = vcombine.low %v3944, %v3951
        %v4994 = vunpack.c.l.s4 1983009808
        %v4995 = vunpack.c.0.s8 %v4994
        %v4996 = vlaneseq
        %v4997 = vshrl.u32 %v4996, 7
        %v4998 = vsub.s32 %v4995, %v4997
        %v4999 = vrot.slane %v4992, %v4998
        %v5000 = vcombine.low %v3954, %v3955
        %v5002 = vunpack.c.l.s4 1983009808
        %v5003 = vunpack.c.0.s8 %v5002
        %v5004 = vlaneseq
        %v5005 = vshrl.u32 %v5004, 7
        %v5006 = vsub.s32 %v5003, %v5005
        %v5007 = vrot.slane %v5000, %v5006
        %v5008 = vcombine.low %v4983, %v4991
        %v5009 = vcombine.high %v4983, %v4991
        %v5011 = vunpack.c.l.s4 1934713408
        %v5012 = vunpack.c.0.s8 %v5011
        %v5013 = vlaneseq
        %v5014 = vshrl.u32 %v5013, 7
        %v5015 = vsub.s32 %v5012, %v5014
        %v5016 = vrot.slane %v5008, %v5015
        %v5018 = vunpack.c.l.s4 1934713408
        %v5019 = vunpack.c.0.s8 %v5018
        %v5020 = vlaneseq
        %v5021 = vshrl.u32 %v5020, 7
        %v5022 = vsub.s32 %v5019, %v5021
        %v5023 = vrot.slane %v5009, %v5022
        %v5024 = vcombine.low %v4999, %v5007
        %v5025 = vcombine.high %v4999, %v5007
        %v5027 = vunpack.c.l.s4 1934713408
        %v5028 = vunpack.c.0.s8 %v5027
        %v5029 = vlaneseq
        %v5030 = vshrl.u32 %v5029, 7
        %v5031 = vsub.s32 %v5028, %v5030
        %v5032 = vrot.slane %v5024, %v5031
        %v5034 = vunpack.c.l.s4 1934713408
        %v5035 = vunpack.c.0.s8 %v5034
        %v5036 = vlaneseq
        %v5037 = vshrl.u32 %v5036, 7
        %v5038 = vsub.s32 %v5035, %v5037
        %v5039 = vrot.slane %v5025, %v5038
        %v5040 = vcombine.low %v5016, %v5032
        %v5041 = vcombine.high %v5016, %v5032
        %v5042 = vcombine.low %v5023, %v5039
        %v5043 = vcombine.high %v5023, %v5039
        %v5044 = vcombine.low %v3996, %v4003
        %v5046 = vunpack.c.l.s4 1983009808
        %v5047 = vunpack.c.0.s8 %v5046
        %v5048 = vlaneseq
        %v5049 = vshrl.u32 %v5048, 7
        %v5050 = vsub.s32 %v5047, %v5049
        %v5051 = vrot.slane %v5044, %v5050
        %v5052 = vcombine.low %v4020, %v4021
        %v5054 = vunpack.c.l.s4 1983009808
        %v5055 = vunpack.c.0.s8 %v5054
        %v5056 = vlaneseq
        %v5057 = vshrl.u32 %v5056, 7
        %v5058 = vsub.s32 %v5055, %v5057
        %v5059 = vrot.slane %v5052, %v5058
        %v5060 = vcombine.low %v4012, %v4019
        %v5062 = vunpack.c.l.s4 1983009808
        %v5063 = vunpack.c.0.s8 %v5062
        %v5064 = vlaneseq
        %v5065 = vshrl.u32 %v5064, 7
        %v5066 = vsub.s32 %v5063, %v5065
        %v5067 = vrot.slane %v5060, %v5066
        %v5068 = vcombine.low %v4022, %v4023
        %v5070 = vunpack.c.l.s4 1983009808
        %v5071 = vunpack.c.0.s8 %v5070
        %v5072 = vlaneseq
        %v5073 = vshrl.u32 %v5072, 7
        %v5074 = vsub.s32 %v5071, %v5073
        %v5075 = vrot.slane %v5068, %v5074
        %v5076 = vcombine.low %v5051, %v5059
        %v5077 = vcombine.high %v5051, %v5059
        %v5079 = vunpack.c.l.s4 1934713408
        %v5080 = vunpack.c.0.s8 %v5079
        %v5081 = vlaneseq
        %v5082 = vshrl.u32 %v5081, 7
        %v5083 = vsub.s32 %v5080, %v5082
        %v5084 = vrot.slane %v5076, %v5083
        %v5086 = vunpack.c.l.s4 1934713408
        %v5087 = vunpack.c.0.s8 %v5086
        %v5088 = vlaneseq
        %v5089 = vshrl.u32 %v5088, 7
        %v5090 = vsub.s32 %v5087, %v5089
        %v5091 = vrot.slane %v5077, %v5090
        %v5092 = vcombine.low %v5067, %v5075
        %v5093 = vcombine.high %v5067, %v5075
        %v5095 = vunpack.c.l.s4 1934713408
        %v5096 = vunpack.c.0.s8 %v5095
        %v5097 = vlaneseq
        %v5098 = vshrl.u32 %v5097, 7
        %v5099 = vsub.s32 %v5096, %v5098
        %v5100 = vrot.slane %v5092, %v5099
        %v5102 = vunpack.c.l.s4 1934713408
        %v5103 = vunpack.c.0.s8 %v5102
        %v5104 = vlaneseq
        %v5105 = vshrl.u32 %v5104, 7
        %v5106 = vsub.s32 %v5103, %v5105
        %v5107 = vrot.slane %v5093, %v5106
        %v5108 = vcombine.low %v5084, %v5100
        %v5109 = vcombine.high %v5084, %v5100
        %v5110 = vcombine.low %v5091, %v5107
        %v5111 = vcombine.high %v5091, %v5107
        %v5112 = vcombine.low %v4064, %v4071
        %v5114 = vunpack.c.l.s4 1983009808
        %v5115 = vunpack.c.0.s8 %v5114
        %v5116 = vlaneseq
        %v5117 = vshrl.u32 %v5116, 7
        %v5118 = vsub.s32 %v5115, %v5117
        %v5119 = vrot.slane %v5112, %v5118
        %v5120 = vcombine.low %v4088, %v4089
        %v5122 = vunpack.c.l.s4 1983009808
        %v5123 = vunpack.c.0.s8 %v5122
        %v5124 = vlaneseq
        %v5125 = vshrl.u32 %v5124, 7
        %v5126 = vsub.s32 %v5123, %v5125
        %v5127 = vrot.slane %v5120, %v5126
        %v5128 = vcombine.low %v4080, %v4087
        %v5130 = vunpack.c.l.s4 1983009808
        %v5131 = vunpack.c.0.s8 %v5130
        %v5132 = vlaneseq
        %v5133 = vshrl.u32 %v5132, 7
        %v5134 = vsub.s32 %v5131, %v5133
        %v5135 = vrot.slane %v5128, %v5134
        %v5136 = vcombine.low %v4090, %v4091
        %v5138 = vunpack.c.l.s4 1983009808
        %v5139 = vunpack.c.0.s8 %v5138
        %v5140 = vlaneseq
        %v5141 = vshrl.u32 %v5140, 7
        %v5142 = vsub.s32 %v5139, %v5141
        %v5143 = vrot.slane %v5136, %v5142
        %v5144 = vcombine.low %v5119, %v5127
        %v5145 = vcombine.high %v5119, %v5127
        %v5147 = vunpack.c.l.s4 1934713408
        %v5148 = vunpack.c.0.s8 %v5147
        %v5149 = vlaneseq
        %v5150 = vshrl.u32 %v5149, 7
        %v5151 = vsub.s32 %v5148, %v5150
        %v5152 = vrot.slane %v5144, %v5151
        %v5154 = vunpack.c.l.s4 1934713408
        %v5155 = vunpack.c.0.s8 %v5154
        %v5156 = vlaneseq
        %v5157 = vshrl.u32 %v5156, 7
        %v5158 = vsub.s32 %v5155, %v5157
        %v5159 = vrot.slane %v5145, %v5158
        %v5160 = vcombine.low %v5135, %v5143
        %v5161 = vcombine.high %v5135, %v5143
        %v5163 = vunpack.c.l.s4 1934713408
        %v5164 = vunpack.c.0.s8 %v5163
        %v5165 = vlaneseq
        %v5166 = vshrl.u32 %v5165, 7
        %v5167 = vsub.s32 %v5164, %v5166
        %v5168 = vrot.slane %v5160, %v5167
        %v5170 = vunpack.c.l.s4 1934713408
        %v5171 = vunpack.c.0.s8 %v5170
        %v5172 = vlaneseq
        %v5173 = vshrl.u32 %v5172, 7
        %v5174 = vsub.s32 %v5171, %v5173
        %v5175 = vrot.slane %v5161, %v5174
        %v5176 = vcombine.low %v5152, %v5168
        %v5177 = vcombine.high %v5152, %v5168
        %v5178 = vcombine.low %v5159, %v5175
        %v5179 = vcombine.high %v5159, %v5175
        %v5180 = vcombine.low %v4132, %v4139
        %v5182 = vunpack.c.l.s4 1983009808
        %v5183 = vunpack.c.0.s8 %v5182
        %v5184 = vlaneseq
        %v5185 = vshrl.u32 %v5184, 7
        %v5186 = vsub.s32 %v5183, %v5185
        %v5187 = vrot.slane %v5180, %v5186
        %v5188 = vcombine.low %v4156, %v4157
        %v5190 = vunpack.c.l.s4 1983009808
        %v5191 = vunpack.c.0.s8 %v5190
        %v5192 = vlaneseq
        %v5193 = vshrl.u32 %v5192, 7
        %v5194 = vsub.s32 %v5191, %v5193
        %v5195 = vrot.slane %v5188, %v5194
        %v5196 = vcombine.low %v4148, %v4155
        %v5198 = vunpack.c.l.s4 1983009808
        %v5199 = vunpack.c.0.s8 %v5198
        %v5200 = vlaneseq
        %v5201 = vshrl.u32 %v5200, 7
        %v5202 = vsub.s32 %v5199, %v5201
        %v5203 = vrot.slane %v5196, %v5202
        %v5204 = vcombine.low %v4158, %v4159
        %v5206 = vunpack.c.l.s4 1983009808
        %v5207 = vunpack.c.0.s8 %v5206
        %v5208 = vlaneseq
        %v5209 = vshrl.u32 %v5208, 7
        %v5210 = vsub.s32 %v5207, %v5209
        %v5211 = vrot.slane %v5204, %v5210
        %v5212 = vcombine.low %v5187, %v5195
        %v5213 = vcombine.high %v5187, %v5195
        %v5215 = vunpack.c.l.s4 1934713408
        %v5216 = vunpack.c.0.s8 %v5215
        %v5217 = vlaneseq
        %v5218 = vshrl.u32 %v5217, 7
        %v5219 = vsub.s32 %v5216, %v5218
        %v5220 = vrot.slane %v5212, %v5219
        %v5222 = vunpack.c.l.s4 1934713408
        %v5223 = vunpack.c.0.s8 %v5222
        %v5224 = vlaneseq
        %v5225 = vshrl.u32 %v5224, 7
        %v5226 = vsub.s32 %v5223, %v5225
        %v5227 = vrot.slane %v5213, %v5226
        %v5228 = vcombine.low %v5203, %v5211
        %v5229 = vcombine.high %v5203, %v5211
        %v5231 = vunpack.c.l.s4 1934713408
        %v5232 = vunpack.c.0.s8 %v5231
        %v5233 = vlaneseq
        %v5234 = vshrl.u32 %v5233, 7
        %v5235 = vsub.s32 %v5232, %v5234
        %v5236 = vrot.slane %v5228, %v5235
        %v5238 = vunpack.c.l.s4 1934713408
        %v5239 = vunpack.c.0.s8 %v5238
        %v5240 = vlaneseq
        %v5241 = vshrl.u32 %v5240, 7
        %v5242 = vsub.s32 %v5239, %v5241
        %v5243 = vrot.slane %v5229, %v5242
        %v5244 = vcombine.low %v5220, %v5236
        %v5245 = vcombine.high %v5220, %v5236
        %v5246 = vcombine.low %v5227, %v5243
        %v5247 = vcombine.high %v5227, %v5243
        %v5248 = vcombine.low %v4200, %v4207
        %v5250 = vunpack.c.l.s4 1983009808
        %v5251 = vunpack.c.0.s8 %v5250
        %v5252 = vlaneseq
        %v5253 = vshrl.u32 %v5252, 7
        %v5254 = vsub.s32 %v5251, %v5253
        %v5255 = vrot.slane %v5248, %v5254
        %v5256 = vcombine.low %v4224, %v4225
        %v5258 = vunpack.c.l.s4 1983009808
        %v5259 = vunpack.c.0.s8 %v5258
        %v5260 = vlaneseq
        %v5261 = vshrl.u32 %v5260, 7
        %v5262 = vsub.s32 %v5259, %v5261
        %v5263 = vrot.slane %v5256, %v5262
        %v5264 = vcombine.low %v4216, %v4223
        %v5266 = vunpack.c.l.s4 1983009808
        %v5267 = vunpack.c.0.s8 %v5266
        %v5268 = vlaneseq
        %v5269 = vshrl.u32 %v5268, 7
        %v5270 = vsub.s32 %v5267, %v5269
        %v5271 = vrot.slane %v5264, %v5270
        %v5272 = vcombine.low %v4226, %v4227
        %v5274 = vunpack.c.l.s4 1983009808
        %v5275 = vunpack.c.0.s8 %v5274
        %v5276 = vlaneseq
        %v5277 = vshrl.u32 %v5276, 7
        %v5278 = vsub.s32 %v5275, %v5277
        %v5279 = vrot.slane %v5272, %v5278
        %v5280 = vcombine.low %v5255, %v5263
        %v5281 = vcombine.high %v5255, %v5263
        %v5283 = vunpack.c.l.s4 1934713408
        %v5284 = vunpack.c.0.s8 %v5283
        %v5285 = vlaneseq
        %v5286 = vshrl.u32 %v5285, 7
        %v5287 = vsub.s32 %v5284, %v5286
        %v5288 = vrot.slane %v5280, %v5287
        %v5290 = vunpack.c.l.s4 1934713408
        %v5291 = vunpack.c.0.s8 %v5290
        %v5292 = vlaneseq
        %v5293 = vshrl.u32 %v5292, 7
        %v5294 = vsub.s32 %v5291, %v5293
        %v5295 = vrot.slane %v5281, %v5294
        %v5296 = vcombine.low %v5271, %v5279
        %v5297 = vcombine.high %v5271, %v5279
        %v5299 = vunpack.c.l.s4 1934713408
        %v5300 = vunpack.c.0.s8 %v5299
        %v5301 = vlaneseq
        %v5302 = vshrl.u32 %v5301, 7
        %v5303 = vsub.s32 %v5300, %v5302
        %v5304 = vrot.slane %v5296, %v5303
        %v5306 = vunpack.c.l.s4 1934713408
        %v5307 = vunpack.c.0.s8 %v5306
        %v5308 = vlaneseq
        %v5309 = vshrl.u32 %v5308, 7
        %v5310 = vsub.s32 %v5307, %v5309
        %v5311 = vrot.slane %v5297, %v5310
        %v5312 = vcombine.low %v5288, %v5304
        %v5313 = vcombine.high %v5288, %v5304
        %v5314 = vcombine.low %v5295, %v5311
        %v5315 = vcombine.high %v5295, %v5311
        %v5316 = vcombine.low %v4268, %v4275
        %v5318 = vunpack.c.l.s4 1983009808
        %v5319 = vunpack.c.0.s8 %v5318
        %v5320 = vlaneseq
        %v5321 = vshrl.u32 %v5320, 7
        %v5322 = vsub.s32 %v5319, %v5321
        %v5323 = vrot.slane %v5316, %v5322
        %v5324 = vcombine.low %v4292, %v4293
        %v5326 = vunpack.c.l.s4 1983009808
        %v5327 = vunpack.c.0.s8 %v5326
        %v5328 = vlaneseq
        %v5329 = vshrl.u32 %v5328, 7
        %v5330 = vsub.s32 %v5327, %v5329
        %v5331 = vrot.slane %v5324, %v5330
        %v5332 = vcombine.low %v4284, %v4291
        %v5334 = vunpack.c.l.s4 1983009808
        %v5335 = vunpack.c.0.s8 %v5334
        %v5336 = vlaneseq
        %v5337 = vshrl.u32 %v5336, 7
        %v5338 = vsub.s32 %v5335, %v5337
        %v5339 = vrot.slane %v5332, %v5338
        %v5340 = vcombine.low %v4294, %v4295
        %v5342 = vunpack.c.l.s4 1983009808
        %v5343 = vunpack.c.0.s8 %v5342
        %v5344 = vlaneseq
        %v5345 = vshrl.u32 %v5344, 7
        %v5346 = vsub.s32 %v5343, %v5345
        %v5347 = vrot.slane %v5340, %v5346
        %v5348 = vcombine.low %v5323, %v5331
        %v5349 = vcombine.high %v5323, %v5331
        %v5351 = vunpack.c.l.s4 1934713408
        %v5352 = vunpack.c.0.s8 %v5351
        %v5353 = vlaneseq
        %v5354 = vshrl.u32 %v5353, 7
        %v5355 = vsub.s32 %v5352, %v5354
        %v5356 = vrot.slane %v5348, %v5355
        %v5358 = vunpack.c.l.s4 1934713408
        %v5359 = vunpack.c.0.s8 %v5358
        %v5360 = vlaneseq
        %v5361 = vshrl.u32 %v5360, 7
        %v5362 = vsub.s32 %v5359, %v5361
        %v5363 = vrot.slane %v5349, %v5362
        %v5364 = vcombine.low %v5339, %v5347
        %v5365 = vcombine.high %v5339, %v5347
        %v5367 = vunpack.c.l.s4 1934713408
        %v5368 = vunpack.c.0.s8 %v5367
        %v5369 = vlaneseq
        %v5370 = vshrl.u32 %v5369, 7
        %v5371 = vsub.s32 %v5368, %v5370
        %v5372 = vrot.slane %v5364, %v5371
        %v5374 = vunpack.c.l.s4 1934713408
        %v5375 = vunpack.c.0.s8 %v5374
        %v5376 = vlaneseq
        %v5377 = vshrl.u32 %v5376, 7
        %v5378 = vsub.s32 %v5375, %v5377
        %v5379 = vrot.slane %v5365, %v5378
        %v5380 = vcombine.low %v5356, %v5372
        %v5381 = vcombine.high %v5356, %v5372
        %v5382 = vcombine.low %v5363, %v5379
        %v5383 = vcombine.high %v5363, %v5379
        %5400 = vrot.lane.b32.xlu0 %v4361, 32
        %v5401 = vpop.permute.xlu0 %5400
        %5402 = vrot.lane.b32.xlu0 %v4429, 32
        %v5403 = vpop.permute.xlu0 %5402
        %5404 = vrot.lane.b32.xlu0 %v4497, 32
        %v5405 = vpop.permute.xlu0 %5404
        %5406 = vrot.lane.b32.xlu0 %v4565, 32
        %v5407 = vpop.permute.xlu0 %5406
        %5408 = vrot.lane.b32.xlu0 %v4633, 32
        %v5409 = vpop.permute.xlu0 %5408
        %5410 = vrot.lane.b32.xlu0 %v4701, 32
        %v5411 = vpop.permute.xlu0 %5410
        %5412 = vrot.lane.b32.xlu0 %v4769, 32
        %v5413 = vpop.permute.xlu0 %5412
        %5414 = vrot.lane.b32.xlu0 %v4837, 32
        %v5415 = vpop.permute.xlu0 %5414
        %5416 = vrot.lane.b32.xlu0 %v4905, 32
        %v5417 = vpop.permute.xlu0 %5416
        %5418 = vrot.lane.b32.xlu0 %v4973, 32
        %v5419 = vpop.permute.xlu0 %5418
        %5420 = vrot.lane.b32.xlu0 %v5041, 32
        %v5421 = vpop.permute.xlu0 %5420
        %5422 = vrot.lane.b32.xlu0 %v5109, 32
        %v5423 = vpop.permute.xlu0 %5422
        %5424 = vrot.lane.b32.xlu0 %v5177, 32
        %v5425 = vpop.permute.xlu0 %5424
        %5426 = vrot.lane.b32.xlu0 %v5245, 32
        %v5427 = vpop.permute.xlu0 %5426
        %5428 = vrot.lane.b32.xlu0 %v5313, 32
        %v5429 = vpop.permute.xlu0 %5428
        %5430 = vrot.lane.b32.xlu0 %v5381, 32
        %v5431 = vpop.permute.xlu0 %5430
        %5464 = vrot.lane.b32.xlu0 %v4362, 64
        %v5465 = vpop.permute.xlu0 %5464
        %5466 = vrot.lane.b32.xlu0 %v4430, 64
        %v5467 = vpop.permute.xlu0 %5466
        %5468 = vrot.lane.b32.xlu0 %v4498, 64
        %v5469 = vpop.permute.xlu0 %5468
        %5470 = vrot.lane.b32.xlu0 %v4566, 64
        %v5471 = vpop.permute.xlu0 %5470
        %5472 = vrot.lane.b32.xlu0 %v4634, 64
        %v5473 = vpop.permute.xlu0 %5472
        %5474 = vrot.lane.b32.xlu0 %v4702, 64
        %v5475 = vpop.permute.xlu0 %5474
        %5476 = vrot.lane.b32.xlu0 %v4770, 64
        %v5477 = vpop.permute.xlu0 %5476
        %5478 = vrot.lane.b32.xlu0 %v4838, 64
        %v5479 = vpop.permute.xlu0 %5478
        %5480 = vrot.lane.b32.xlu0 %v4906, 64
        %v5481 = vpop.permute.xlu0 %5480
        %5482 = vrot.lane.b32.xlu0 %v4974, 64
        %v5483 = vpop.permute.xlu0 %5482
        %5484 = vrot.lane.b32.xlu0 %v5042, 64
        %v5485 = vpop.permute.xlu0 %5484
        %5486 = vrot.lane.b32.xlu0 %v5110, 64
        %v5487 = vpop.permute.xlu0 %5486
        %5488 = vrot.lane.b32.xlu0 %v5178, 64
        %v5489 = vpop.permute.xlu0 %5488
        %5490 = vrot.lane.b32.xlu0 %v5246, 64
        %v5491 = vpop.permute.xlu0 %5490
        %5492 = vrot.lane.b32.xlu0 %v5314, 64
        %v5493 = vpop.permute.xlu0 %5492
        %5494 = vrot.lane.b32.xlu0 %v5382, 64
        %v5495 = vpop.permute.xlu0 %5494
        %5528 = vrot.lane.b32.xlu0 %v4363, 96
        %v5529 = vpop.permute.xlu0 %5528
        %5530 = vrot.lane.b32.xlu0 %v4431, 96
        %v5531 = vpop.permute.xlu0 %5530
        %5532 = vrot.lane.b32.xlu0 %v4499, 96
        %v5533 = vpop.permute.xlu0 %5532
        %5534 = vrot.lane.b32.xlu0 %v4567, 96
        %v5535 = vpop.permute.xlu0 %5534
        %5536 = vrot.lane.b32.xlu0 %v4635, 96
        %v5537 = vpop.permute.xlu0 %5536
        %5538 = vrot.lane.b32.xlu0 %v4703, 96
        %v5539 = vpop.permute.xlu0 %5538
        %5540 = vrot.lane.b32.xlu0 %v4771, 96
        %v5541 = vpop.permute.xlu0 %5540
        %5542 = vrot.lane.b32.xlu0 %v4839, 96
        %v5543 = vpop.permute.xlu0 %5542
        %5544 = vrot.lane.b32.xlu0 %v4907, 96
        %v5545 = vpop.permute.xlu0 %5544
        %5546 = vrot.lane.b32.xlu0 %v4975, 96
        %v5547 = vpop.permute.xlu0 %5546
        %5548 = vrot.lane.b32.xlu0 %v5043, 96
        %v5549 = vpop.permute.xlu0 %5548
        %5550 = vrot.lane.b32.xlu0 %v5111, 96
        %v5551 = vpop.permute.xlu0 %5550
        %5552 = vrot.lane.b32.xlu0 %v5179, 96
        %v5553 = vpop.permute.xlu0 %5552
        %5554 = vrot.lane.b32.xlu0 %v5247, 96
        %v5555 = vpop.permute.xlu0 %5554
        %5556 = vrot.lane.b32.xlu0 %v5315, 96
        %v5557 = vpop.permute.xlu0 %5556
        %5558 = vrot.lane.b32.xlu0 %v5383, 96
        %v5559 = vpop.permute.xlu0 %5558
        %v5576 = vsel %vm1250, %v4360, %v5401
        %v5577 = vsel %vm1250, %v4428, %v5403
        %v5578 = vsel %vm1250, %v4496, %v5405
        %v5579 = vsel %vm1250, %v4564, %v5407
        %v5580 = vsel %vm1250, %v4632, %v5409
        %v5581 = vsel %vm1250, %v4700, %v5411
        %v5582 = vsel %vm1250, %v4768, %v5413
        %v5583 = vsel %vm1250, %v4836, %v5415
        %v5584 = vsel %vm1250, %v4904, %v5417
        %v5585 = vsel %vm1250, %v4972, %v5419
        %v5586 = vsel %vm1250, %v5040, %v5421
        %v5587 = vsel %vm1250, %v5108, %v5423
        %v5588 = vsel %vm1250, %v5176, %v5425
        %v5589 = vsel %vm1250, %v5244, %v5427
        %v5590 = vsel %vm1250, %v5312, %v5429
        %v5591 = vsel %vm1250, %v5380, %v5431
        %vm5592 = vcmask 523264
        %v5593 = vsel %vm5592, %v5576, %v5465
        %v5594 = vsel %vm5592, %v5577, %v5467
        %v5595 = vsel %vm5592, %v5578, %v5469
        %v5596 = vsel %vm5592, %v5579, %v5471
        %v5597 = vsel %vm5592, %v5580, %v5473
        %v5598 = vsel %vm5592, %v5581, %v5475
        %v5599 = vsel %vm5592, %v5582, %v5477
        %v5600 = vsel %vm5592, %v5583, %v5479
        %v5601 = vsel %vm5592, %v5584, %v5481
        %v5602 = vsel %vm5592, %v5585, %v5483
        %v5603 = vsel %vm5592, %v5586, %v5485
        %v5604 = vsel %vm5592, %v5587, %v5487
        %v5605 = vsel %vm5592, %v5588, %v5489
        %v5606 = vsel %vm5592, %v5589, %v5491
        %v5607 = vsel %vm5592, %v5590, %v5493
        %v5608 = vsel %vm5592, %v5591, %v5495
        %vm5609 = vcmask 785408
        %v5610 = vsel %vm5609, %v5593, %v5529
        %v5611 = vsel %vm5609, %v5594, %v5531
        %v5612 = vsel %vm5609, %v5595, %v5533
        %v5613 = vsel %vm5609, %v5596, %v5535
        %v5614 = vsel %vm5609, %v5597, %v5537
        %v5615 = vsel %vm5609, %v5598, %v5539
        %v5616 = vsel %vm5609, %v5599, %v5541
        %v5617 = vsel %vm5609, %v5600, %v5543
        %v5618 = vsel %vm5609, %v5601, %v5545
        %v5619 = vsel %vm5609, %v5602, %v5547
        %v5620 = vsel %vm5609, %v5603, %v5549
        %v5621 = vsel %vm5609, %v5604, %v5551
        %v5622 = vsel %vm5609, %v5605, %v5553
        %v5623 = vsel %vm5609, %v5606, %v5555
        %v5624 = vsel %vm5609, %v5607, %v5557
        %v5625 = vsel %vm5609, %v5608, %v5559
        %v5626 = vpack.c.bf16 %v5611, %v5610
        %v5627 = vpack.c.bf16 %v5613, %v5612
        %v5628 = vpack.c.bf16 %v5615, %v5614
        %v5629 = vpack.c.bf16 %v5617, %v5616
        %v5630 = vpack.c.bf16 %v5619, %v5618
        %v5631 = vpack.c.bf16 %v5621, %v5620
        %v5632 = vpack.c.bf16 %v5623, %v5622
        %v5633 = vpack.c.bf16 %v5625, %v5624
        %v5634 = vld [vmem:[%s7] sm:$0xf]
        %v5635 = vld [vmem:[%s7 + $0x4] sm:$0xf]
        %v5636 = vld [vmem:[%s7 + $0x8] sm:$0xf]
        %v5637 = vld [vmem:[%s7 + $0xc] sm:$0xf]
        %v5638 = vld [vmem:[%s7 + $0x10] sm:$0xf]
        %v5639 = vld [vmem:[%s7 + $0x14] sm:$0xf]
        %v5640 = vld [vmem:[%s7 + $0x18] sm:$0xf]
        %v5641 = vld [vmem:[%s7 + $0x1c] sm:$0xf]
        %v5642 = vld [vmem:[%s7 + $0x20] sm:$0xf]
        %v5643 = vld [vmem:[%s7 + $0x24] sm:$0xf]
        %v5644 = vld [vmem:[%s7 + $0x28] sm:$0xf]
        %v5645 = vld [vmem:[%s7 + $0x2c] sm:$0xf]
        %v5646 = vld [vmem:[%s7 + $0x30] sm:$0xf]
        %v5647 = vld [vmem:[%s7 + $0x34] sm:$0xf]
        %v5648 = vld [vmem:[%s7 + $0x38] sm:$0xf]
        %v5649 = vld [vmem:[%s7 + $0x3c] sm:$0xf]
        %v5650 = vld [vmem:[%s8] sm:$0x1]
        %v5652 = vlaneseq
        %v5653 = vshrl.u32 %v5652, 7
        %v5654 = vsub.s32 0, %v5653
        %v5655 = vrot.slane %v5650, %v5654
        %v5673 = vunpack.c.l.b16 %v5634
        %v5674 = vunpack.c.l.b16 %v5635
        %v5675 = vunpack.c.l.b16 %v5636
        %v5676 = vunpack.c.l.b16 %v5637
        %v5677 = vunpack.c.l.b16 %v5638
        %v5678 = vunpack.c.l.b16 %v5639
        %v5679 = vunpack.c.l.b16 %v5640
        %v5680 = vunpack.c.l.b16 %v5641
        %v5681 = vunpack.c.l.b16 %v5642
        %v5682 = vunpack.c.l.b16 %v5643
        %v5683 = vunpack.c.l.b16 %v5644
        %v5684 = vunpack.c.l.b16 %v5645
        %v5685 = vunpack.c.l.b16 %v5646
        %v5686 = vunpack.c.l.b16 %v5647
        %v5687 = vunpack.c.l.b16 %v5648
        %v5688 = vunpack.c.l.b16 %v5649
        %v5689 = vpack.c.b16 %v5674, %v5673
        %v5690 = vpack.c.b16 %v5676, %v5675
        %v5691 = vpack.c.b16 %v5678, %v5677
        %v5692 = vpack.c.b16 %v5680, %v5679
        %v5693 = vpack.c.b16 %v5682, %v5681
        %v5694 = vpack.c.b16 %v5684, %v5683
        %v5695 = vpack.c.b16 %v5686, %v5685
        %v5696 = vpack.c.b16 %v5688, %v5687
        %5705 = vmatprep.subr.bf16.mxu0 0
        %5706 = vmatpush1.bf16.msra.mxu0 %v5696
        %5707 = vmatprep.subr.bf16.mxu0 0
        %5708 = vmatpush1.bf16.msra.mxu0 %v5695
        %5709 = vmatprep.subr.bf16.mxu0 0
        %5710 = vmatpush1.bf16.msra.mxu0 %v5694
        %5711 = vmatprep.subr.bf16.mxu0 0
        %5712 = vmatpush1.bf16.msra.mxu0 %v5693
        %5713 = vmatprep.subr.bf16.mxu0 0
        %5714 = vmatpush1.bf16.msra.mxu0 %v5692
        %5715 = vmatprep.subr.bf16.mxu0 0
        %5716 = vmatpush1.bf16.msra.mxu0 %v5691
        %5717 = vmatprep.subr.bf16.mxu0 0
        %5718 = vmatpush1.bf16.msra.mxu0 %v5690
        %5719 = vmatprep.subr.bf16.mxu0 0
        %5720 = vmatpush1.bf16.msra.mxu0 %v5689
        %5721 = vmatprep.subr.bf16.mxu0 0
        %5722 = vmatpush2.bf16.msra.mxu0 0
        %5723 = vmatprep.subr.bf16.mxu0 0
        %5724 = vmatpush2.bf16.msra.mxu0 0
        %5725 = vmatprep.subr.bf16.mxu0 0
        %5726 = vmatpush2.bf16.msra.mxu0 0
        %5727 = vmatprep.subr.bf16.mxu0 0
        %5728 = vmatpush2.bf16.msra.mxu0 0
        %5729 = vmatprep.subr.bf16.mxu0 0
        %5730 = vmatpush2.bf16.msra.mxu0 0
        %5731 = vmatprep.subr.bf16.mxu0 0
        %5732 = vmatpush2.bf16.msra.mxu0 0
        %5733 = vmatprep.subr.bf16.mxu0 0
        %5734 = vmatpush2.bf16.msra.mxu0 0
        %5735 = vmatprep.subr.bf16.mxu0 0
        %5736 = vmatpush2.bf16.msra.mxu0 0
        %5737 = vmatprep.mubr.bf16.mxu0 0
        %5738 = vmatmul.mubr.bf16.gmra.mxu0 %v5626
        %v5739 = vpop.f32.mrf.mxu0
        %v5740 = vadd.f32 %v5655, %v5739
        %v5741 = vpop.f32.mrf.mxu0
        %v5742 = vpop.f32.mrf.mxu0
        %v5743 = vadd.f32 %v5655, %v5742
        %v5744 = vpop.f32.mrf.mxu0
        %5745 = vmatprep.mubr.bf16.mxu0 0
        %5746 = vmatmul.mubr.bf16.gmra.mxu0 %v5627
        %v5747 = vpop.f32.mrf.mxu0
        %v5748 = vadd.f32 %v5655, %v5747
        %v5749 = vpop.f32.mrf.mxu0
        %v5750 = vpop.f32.mrf.mxu0
        %v5751 = vadd.f32 %v5655, %v5750
        %v5752 = vpop.f32.mrf.mxu0
        %5753 = vmatprep.mubr.bf16.mxu0 0
        %5754 = vmatmul.mubr.bf16.gmra.mxu0 %v5628
        %v5755 = vpop.f32.mrf.mxu0
        %v5756 = vadd.f32 %v5655, %v5755
        %v5757 = vpop.f32.mrf.mxu0
        %v5758 = vpop.f32.mrf.mxu0
        %v5759 = vadd.f32 %v5655, %v5758
        %v5760 = vpop.f32.mrf.mxu0
        %5761 = vmatprep.mubr.bf16.mxu0 0
        %5762 = vmatmul.mubr.bf16.gmra.mxu0 %v5629
        %v5763 = vpop.f32.mrf.mxu0
        %v5764 = vadd.f32 %v5655, %v5763
        %v5765 = vpop.f32.mrf.mxu0
        %v5766 = vpop.f32.mrf.mxu0
        %v5767 = vadd.f32 %v5655, %v5766
        %v5768 = vpop.f32.mrf.mxu0
        %5769 = vmatprep.mubr.bf16.mxu0 0
        %5770 = vmatmul.mubr.bf16.gmra.mxu0 %v5630
        %v5771 = vpop.f32.mrf.mxu0
        %v5772 = vadd.f32 %v5655, %v5771
        %v5773 = vpop.f32.mrf.mxu0
        %v5774 = vpop.f32.mrf.mxu0
        %v5775 = vadd.f32 %v5655, %v5774
        %v5776 = vpop.f32.mrf.mxu0
        %5777 = vmatprep.mubr.bf16.mxu0 0
        %5778 = vmatmul.mubr.bf16.gmra.mxu0 %v5631
        %v5779 = vpop.f32.mrf.mxu0
        %v5780 = vadd.f32 %v5655, %v5779
        %v5781 = vpop.f32.mrf.mxu0
        %v5782 = vpop.f32.mrf.mxu0
        %v5783 = vadd.f32 %v5655, %v5782
        %v5784 = vpop.f32.mrf.mxu0
        %5785 = vmatprep.mubr.bf16.mxu0 0
        %5786 = vmatmul.mubr.bf16.gmra.mxu0 %v5632
        %v5787 = vpop.f32.mrf.mxu0
        %v5788 = vadd.f32 %v5655, %v5787
        %v5789 = vpop.f32.mrf.mxu0
        %v5790 = vpop.f32.mrf.mxu0
        %v5791 = vadd.f32 %v5655, %v5790
        %v5792 = vpop.f32.mrf.mxu0
        %5793 = vmatprep.mubr.bf16.mxu0 0
        %5794 = vmatmul.mubr.bf16.gmra.mxu0 %v5633
        %v5795 = vpop.f32.mrf.mxu0
        %v5796 = vadd.f32 %v5655, %v5795
        %v5797 = vpop.f32.mrf.mxu0
        %v5798 = vpop.f32.mrf.mxu0
        %v5799 = vadd.f32 %v5655, %v5798
        %v5800 = vpop.f32.mrf.mxu0
        %5801 = vdwg.mxu0
        %v5802 = vadd.f32 %v603, %v5740
        %v5803 = vadd.f32 %v604, %v5743
        %v5804 = vadd.f32 %v605, %v5748
        %v5805 = vadd.f32 %v606, %v5751
        %v5806 = vadd.f32 %v607, %v5756
        %v5807 = vadd.f32 %v608, %v5759
        %v5808 = vadd.f32 %v609, %v5764
        %v5809 = vadd.f32 %v610, %v5767
        %v5810 = vadd.f32 %v611, %v5772
        %v5811 = vadd.f32 %v612, %v5775
        %v5812 = vadd.f32 %v613, %v5780
        %v5813 = vadd.f32 %v614, %v5783
        %v5814 = vadd.f32 %v615, %v5788
        %v5815 = vadd.f32 %v616, %v5791
        %v5816 = vadd.f32 %v617, %v5796
        %v5817 = vadd.f32 %v618, %v5799
        %v5818 = vld [vmem:[%s9] sm:$0x1]
        %v5819 = vld [vmem:[%s10] sm:$0x1]
        %5820 = vadd.xlane.f32.xlu0 %v5802
        %v5821 = vpop.xlane.xlu0 %5820
        %5822 = vadd.xlane.f32.xlu0 %v5803
        %v5823 = vpop.xlane.xlu0 %5822
        %5824 = vadd.xlane.f32.xlu0 %v5804
        %v5825 = vpop.xlane.xlu0 %5824
        %5826 = vadd.xlane.f32.xlu0 %v5805
        %v5827 = vpop.xlane.xlu0 %5826
        %5828 = vadd.xlane.f32.xlu0 %v5806
        %v5829 = vpop.xlane.xlu0 %5828
        %5830 = vadd.xlane.f32.xlu0 %v5807
        %v5831 = vpop.xlane.xlu0 %5830
        %5832 = vadd.xlane.f32.xlu0 %v5808
        %v5833 = vpop.xlane.xlu0 %5832
        %5834 = vadd.xlane.f32.xlu0 %v5809
        %v5835 = vpop.xlane.xlu0 %5834
        %5836 = vadd.xlane.f32.xlu0 %v5810
        %v5837 = vpop.xlane.xlu0 %5836
        %5838 = vadd.xlane.f32.xlu0 %v5811
        %v5839 = vpop.xlane.xlu0 %5838
        %5840 = vadd.xlane.f32.xlu0 %v5812
        %v5841 = vpop.xlane.xlu0 %5840
        %5842 = vadd.xlane.f32.xlu0 %v5813
        %v5843 = vpop.xlane.xlu0 %5842
        %5844 = vadd.xlane.f32.xlu0 %v5814
        %v5845 = vpop.xlane.xlu0 %5844
        %5846 = vadd.xlane.f32.xlu0 %v5815
        %v5847 = vpop.xlane.xlu0 %5846
        %5848 = vadd.xlane.f32.xlu0 %v5816
        %v5849 = vpop.xlane.xlu0 %5848
        %5850 = vadd.xlane.f32.xlu0 %v5817
        %v5851 = vpop.xlane.xlu0 %5850
        %v5852 = vmul.f32 %v5821, %v653
        %v5853 = vmul.f32 %v5823, %v653
        %v5854 = vmul.f32 %v5825, %v653
        %v5855 = vmul.f32 %v5827, %v653
        %v5856 = vmul.f32 %v5829, %v653
        %v5857 = vmul.f32 %v5831, %v653
        %v5858 = vmul.f32 %v5833, %v653
        %v5859 = vmul.f32 %v5835, %v653
        %v5860 = vmul.f32 %v5837, %v653
        %v5861 = vmul.f32 %v5839, %v653
        %v5862 = vmul.f32 %v5841, %v653
        %v5863 = vmul.f32 %v5843, %v653
        %v5864 = vmul.f32 %v5845, %v653
        %v5865 = vmul.f32 %v5847, %v653
        %v5866 = vmul.f32 %v5849, %v653
        %v5867 = vmul.f32 %v5851, %v653
        %v5868 = vsub.f32 %v5802, %v5852
        %v5869 = vsub.f32 %v5803, %v5853
        %v5870 = vsub.f32 %v5804, %v5854
        %v5871 = vsub.f32 %v5805, %v5855
        %v5872 = vsub.f32 %v5806, %v5856
        %v5873 = vsub.f32 %v5807, %v5857
        %v5874 = vsub.f32 %v5808, %v5858
        %v5875 = vsub.f32 %v5809, %v5859
        %v5876 = vsub.f32 %v5810, %v5860
        %v5877 = vsub.f32 %v5811, %v5861
        %v5878 = vsub.f32 %v5812, %v5862
        %v5879 = vsub.f32 %v5813, %v5863
        %v5880 = vsub.f32 %v5814, %v5864
        %v5881 = vsub.f32 %v5815, %v5865
        %v5882 = vsub.f32 %v5816, %v5866
        %v5883 = vsub.f32 %v5817, %v5867
        %v5884 = vmul.f32 %v5868, %v5868
        %v5885 = vmul.f32 %v5869, %v5869
        %v5886 = vmul.f32 %v5870, %v5870
        %v5887 = vmul.f32 %v5871, %v5871
        %v5888 = vmul.f32 %v5872, %v5872
        %v5889 = vmul.f32 %v5873, %v5873
        %v5890 = vmul.f32 %v5874, %v5874
        %v5891 = vmul.f32 %v5875, %v5875
        %v5892 = vmul.f32 %v5876, %v5876
        %v5893 = vmul.f32 %v5877, %v5877
        %v5894 = vmul.f32 %v5878, %v5878
        %v5895 = vmul.f32 %v5879, %v5879
        %v5896 = vmul.f32 %v5880, %v5880
        %v5897 = vmul.f32 %v5881, %v5881
        %v5898 = vmul.f32 %v5882, %v5882
        %v5899 = vmul.f32 %v5883, %v5883
        %5900 = vadd.xlane.f32.xlu0 %v5884
        %v5901 = vpop.xlane.xlu0 %5900
        %5902 = vadd.xlane.f32.xlu0 %v5885
        %v5903 = vpop.xlane.xlu0 %5902
        %5904 = vadd.xlane.f32.xlu0 %v5886
        %v5905 = vpop.xlane.xlu0 %5904
        %5906 = vadd.xlane.f32.xlu0 %v5887
        %v5907 = vpop.xlane.xlu0 %5906
        %5908 = vadd.xlane.f32.xlu0 %v5888
        %v5909 = vpop.xlane.xlu0 %5908
        %5910 = vadd.xlane.f32.xlu0 %v5889
        %v5911 = vpop.xlane.xlu0 %5910
        %5912 = vadd.xlane.f32.xlu0 %v5890
        %v5913 = vpop.xlane.xlu0 %5912
        %5914 = vadd.xlane.f32.xlu0 %v5891
        %v5915 = vpop.xlane.xlu0 %5914
        %5916 = vadd.xlane.f32.xlu0 %v5892
        %v5917 = vpop.xlane.xlu0 %5916
        %5918 = vadd.xlane.f32.xlu0 %v5893
        %v5919 = vpop.xlane.xlu0 %5918
        %5920 = vadd.xlane.f32.xlu0 %v5894
        %v5921 = vpop.xlane.xlu0 %5920
        %5922 = vadd.xlane.f32.xlu0 %v5895
        %v5923 = vpop.xlane.xlu0 %5922
        %5924 = vadd.xlane.f32.xlu0 %v5896
        %v5925 = vpop.xlane.xlu0 %5924
        %5926 = vadd.xlane.f32.xlu0 %v5897
        %v5927 = vpop.xlane.xlu0 %5926
        %5928 = vadd.xlane.f32.xlu0 %v5898
        %v5929 = vpop.xlane.xlu0 %5928
        %5930 = vadd.xlane.f32.xlu0 %v5899
        %v5931 = vpop.xlane.xlu0 %5930
        %v5932 = vmul.f32 %v5901, %v653
        %v5933 = vmul.f32 %v5903, %v653
        %v5934 = vmul.f32 %v5905, %v653
        %v5935 = vmul.f32 %v5907, %v653
        %v5936 = vmul.f32 %v5909, %v653
        %v5937 = vmul.f32 %v5911, %v653
        %v5938 = vmul.f32 %v5913, %v653
        %v5939 = vmul.f32 %v5915, %v653
        %v5940 = vmul.f32 %v5917, %v653
        %v5941 = vmul.f32 %v5919, %v653
        %v5942 = vmul.f32 %v5921, %v653
        %v5943 = vmul.f32 %v5923, %v653
        %v5944 = vmul.f32 %v5925, %v653
        %v5945 = vmul.f32 %v5927, %v653
        %v5946 = vmul.f32 %v5929, %v653
        %v5947 = vmul.f32 %v5931, %v653
        %v5948 = vadd.f32 %v5932, 1e-06
        %v5949 = vadd.f32 %v5933, 1e-06
        %v5950 = vadd.f32 %v5934, 1e-06
        %v5951 = vadd.f32 %v5935, 1e-06
        %v5952 = vadd.f32 %v5936, 1e-06
        %v5953 = vadd.f32 %v5937, 1e-06
        %v5954 = vadd.f32 %v5938, 1e-06
        %v5955 = vadd.f32 %v5939, 1e-06
        %v5956 = vadd.f32 %v5940, 1e-06
        %v5957 = vadd.f32 %v5941, 1e-06
        %v5958 = vadd.f32 %v5942, 1e-06
        %v5959 = vadd.f32 %v5943, 1e-06
        %v5960 = vadd.f32 %v5944, 1e-06
        %v5961 = vadd.f32 %v5945, 1e-06
        %v5962 = vadd.f32 %v5946, 1e-06
        %v5963 = vadd.f32 %v5947, 1e-06
        %v5964 = vrsqrt.pop %v5948
        %v5965 = vrsqrt.pop %v5949
        %v5966 = vrsqrt.pop %v5950
        %v5967 = vrsqrt.pop %v5951
        %v5968 = vrsqrt.pop %v5952
        %v5969 = vrsqrt.pop %v5953
        %v5970 = vrsqrt.pop %v5954
        %v5971 = vrsqrt.pop %v5955
        %v5972 = vrsqrt.pop %v5956
        %v5973 = vrsqrt.pop %v5957
        %v5974 = vrsqrt.pop %v5958
        %v5975 = vrsqrt.pop %v5959
        %v5976 = vrsqrt.pop %v5960
        %v5977 = vrsqrt.pop %v5961
        %v5978 = vrsqrt.pop %v5962
        %v5979 = vrsqrt.pop %v5963
        %v5980 = vmul.f32 %v5868, %v5964
        %v5981 = vmul.f32 %v5869, %v5965
        %v5982 = vmul.f32 %v5870, %v5966
        %v5983 = vmul.f32 %v5871, %v5967
        %v5984 = vmul.f32 %v5872, %v5968
        %v5985 = vmul.f32 %v5873, %v5969
        %v5986 = vmul.f32 %v5874, %v5970
        %v5987 = vmul.f32 %v5875, %v5971
        %v5988 = vmul.f32 %v5876, %v5972
        %v5989 = vmul.f32 %v5877, %v5973
        %v5990 = vmul.f32 %v5878, %v5974
        %v5991 = vmul.f32 %v5879, %v5975
        %v5992 = vmul.f32 %v5880, %v5976
        %v5993 = vmul.f32 %v5881, %v5977
        %v5994 = vmul.f32 %v5882, %v5978
        %v5995 = vmul.f32 %v5883, %v5979
        %v5997 = vlaneseq
        %v5998 = vshrl.u32 %v5997, 7
        %v5999 = vsub.s32 0, %v5998
        %v6000 = vrot.slane %v5818, %v5999
        %v6002 = vmul.f32 %v5980, %v6000
        %v6003 = vmul.f32 %v5981, %v6000
        %v6004 = vmul.f32 %v5982, %v6000
        %v6005 = vmul.f32 %v5983, %v6000
        %v6006 = vmul.f32 %v5984, %v6000
        %v6007 = vmul.f32 %v5985, %v6000
        %v6008 = vmul.f32 %v5986, %v6000
        %v6009 = vmul.f32 %v5987, %v6000
        %v6010 = vmul.f32 %v5988, %v6000
        %v6011 = vmul.f32 %v5989, %v6000
        %v6012 = vmul.f32 %v5990, %v6000
        %v6013 = vmul.f32 %v5991, %v6000
        %v6014 = vmul.f32 %v5992, %v6000
        %v6015 = vmul.f32 %v5993, %v6000
        %v6016 = vmul.f32 %v5994, %v6000
        %v6017 = vmul.f32 %v5995, %v6000
        %v6019 = vlaneseq
        %v6020 = vshrl.u32 %v6019, 7
        %v6021 = vsub.s32 0, %v6020
        %v6022 = vrot.slane %v5819, %v6021
        %v6024 = vadd.f32 %v6002, %v6022
        %v6025 = vadd.f32 %v6003, %v6022
        %v6026 = vadd.f32 %v6004, %v6022
        %v6027 = vadd.f32 %v6005, %v6022
        %v6028 = vadd.f32 %v6006, %v6022
        %v6029 = vadd.f32 %v6007, %v6022
        %v6030 = vadd.f32 %v6008, %v6022
        %v6031 = vadd.f32 %v6009, %v6022
        %v6032 = vadd.f32 %v6010, %v6022
        %v6033 = vadd.f32 %v6011, %v6022
        %v6034 = vadd.f32 %v6012, %v6022
        %v6035 = vadd.f32 %v6013, %v6022
        %v6036 = vadd.f32 %v6014, %v6022
        %v6037 = vadd.f32 %v6015, %v6022
        %v6038 = vadd.f32 %v6016, %v6022
        %v6039 = vadd.f32 %v6017, %v6022
        %v6040 = vpack.c.bf16 %v6025, %v6024
        %v6041 = vpack.c.bf16 %v6027, %v6026
        %v6042 = vpack.c.bf16 %v6029, %v6028
        %v6043 = vpack.c.bf16 %v6031, %v6030
        %v6044 = vpack.c.bf16 %v6033, %v6032
        %v6045 = vpack.c.bf16 %v6035, %v6034
        %v6046 = vpack.c.bf16 %v6037, %v6036
        %v6047 = vpack.c.bf16 %v6039, %v6038
        %v6048 = vld [vmem:[%s11] sm:$0xff]
        %v6049 = vld [vmem:[%s11 + $0x8] sm:$0xff]
        %v6050 = vld [vmem:[%s11 + $0x10] sm:$0xff]
        %v6051 = vld [vmem:[%s11 + $0x18] sm:$0xff]
        %v6052 = vld [vmem:[%s11 + $0x20] sm:$0xff]
        %v6053 = vld [vmem:[%s11 + $0x28] sm:$0xff]
        %v6054 = vld [vmem:[%s11 + $0x30] sm:$0xff]
        %v6055 = vld [vmem:[%s11 + $0x38] sm:$0xff]
        %v6056 = vld [vmem:[%s11 + $0x40] sm:$0xff]
        %v6057 = vld [vmem:[%s11 + $0x48] sm:$0xff]
        %v6058 = vld [vmem:[%s11 + $0x50] sm:$0xff]
        %v6059 = vld [vmem:[%s11 + $0x58] sm:$0xff]
        %v6060 = vld [vmem:[%s11 + $0x60] sm:$0xff]
        %v6061 = vld [vmem:[%s11 + $0x68] sm:$0xff]
        %v6062 = vld [vmem:[%s11 + $0x70] sm:$0xff]
        %v6063 = vld [vmem:[%s11 + $0x78] sm:$0xff]
        %v6064 = vld [vmem:[%s11 + $0x80] sm:$0xff]
        %v6065 = vld [vmem:[%s11 + $0x88] sm:$0xff]
        %v6066 = vld [vmem:[%s11 + $0x90] sm:$0xff]
        %v6067 = vld [vmem:[%s11 + $0x98] sm:$0xff]
        %v6068 = vld [vmem:[%s11 + $0xa0] sm:$0xff]
        %v6069 = vld [vmem:[%s11 + $0xa8] sm:$0xff]
        %v6070 = vld [vmem:[%s11 + $0xb0] sm:$0xff]
        %v6071 = vld [vmem:[%s11 + $0xb8] sm:$0xff]
        %v6072 = vld [vmem:[%s11 + $0xc0] sm:$0xff]
        %v6073 = vld [vmem:[%s11 + $0xc8] sm:$0xff]
        %v6074 = vld [vmem:[%s11 + $0xd0] sm:$0xff]
        %v6075 = vld [vmem:[%s11 + $0xd8] sm:$0xff]
        %v6076 = vld [vmem:[%s11 + $0xe0] sm:$0xff]
        %v6077 = vld [vmem:[%s11 + $0xe8] sm:$0xff]
        %v6078 = vld [vmem:[%s11 + $0xf0] sm:$0xff]
        %v6079 = vld [vmem:[%s11 + $0xf8] sm:$0xff]
        %v6080 = vld [vmem:[%s12] sm:$0xf]
        %v6082 = vlaneseq
        %v6083 = vshrl.u32 %v6082, 7
        %v6084 = vsub.s32 0, %v6083
        %v6085 = vrot.slane %v6080, %v6084
        %v6086 = vlaneseq
        %v6087 = vshrl.u32 %v6086, 7
        %v6088 = vsub.s32 1, %v6087
        %v6089 = vrot.slane %v6080, %v6088
        %v6090 = vlaneseq
        %v6091 = vshrl.u32 %v6090, 7
        %v6092 = vsub.s32 2, %v6091
        %v6093 = vrot.slane %v6080, %v6092
        %v6094 = vlaneseq
        %v6095 = vshrl.u32 %v6094, 7
        %v6096 = vsub.s32 3, %v6095
        %v6097 = vrot.slane %v6080, %v6096
        %v6134 = vunpack.c.l.b16 %v6048
        %v6135 = vunpack.c.h.b16 %v6048
        %v6136 = vunpack.c.l.b16 %v6049
        %v6137 = vunpack.c.h.b16 %v6049
        %v6138 = vunpack.c.l.b16 %v6050
        %v6139 = vunpack.c.h.b16 %v6050
        %v6140 = vunpack.c.l.b16 %v6051
        %v6141 = vunpack.c.h.b16 %v6051
        %v6142 = vunpack.c.l.b16 %v6052
        %v6143 = vunpack.c.h.b16 %v6052
        %v6144 = vunpack.c.l.b16 %v6053
        %v6145 = vunpack.c.h.b16 %v6053
        %v6146 = vunpack.c.l.b16 %v6054
        %v6147 = vunpack.c.h.b16 %v6054
        %v6148 = vunpack.c.l.b16 %v6055
        %v6149 = vunpack.c.h.b16 %v6055
        %v6150 = vunpack.c.l.b16 %v6056
        %v6151 = vunpack.c.h.b16 %v6056
        %v6152 = vunpack.c.l.b16 %v6057
        %v6153 = vunpack.c.h.b16 %v6057
        %v6154 = vunpack.c.l.b16 %v6058
        %v6155 = vunpack.c.h.b16 %v6058
        %v6156 = vunpack.c.l.b16 %v6059
        %v6157 = vunpack.c.h.b16 %v6059
        %v6158 = vunpack.c.l.b16 %v6060
        %v6159 = vunpack.c.h.b16 %v6060
        %v6160 = vunpack.c.l.b16 %v6061
        %v6161 = vunpack.c.h.b16 %v6061
        %v6162 = vunpack.c.l.b16 %v6062
        %v6163 = vunpack.c.h.b16 %v6062
        %v6164 = vunpack.c.l.b16 %v6063
        %v6165 = vunpack.c.h.b16 %v6063
        %v6166 = vunpack.c.l.b16 %v6064
        %v6167 = vunpack.c.h.b16 %v6064
        %v6168 = vunpack.c.l.b16 %v6065
        %v6169 = vunpack.c.h.b16 %v6065
        %v6170 = vunpack.c.l.b16 %v6066
        %v6171 = vunpack.c.h.b16 %v6066
        %v6172 = vunpack.c.l.b16 %v6067
        %v6173 = vunpack.c.h.b16 %v6067
        %v6174 = vunpack.c.l.b16 %v6068
        %v6175 = vunpack.c.h.b16 %v6068
        %v6176 = vunpack.c.l.b16 %v6069
        %v6177 = vunpack.c.h.b16 %v6069
        %v6178 = vunpack.c.l.b16 %v6070
        %v6179 = vunpack.c.h.b16 %v6070
        %v6180 = vunpack.c.l.b16 %v6071
        %v6181 = vunpack.c.h.b16 %v6071
        %v6182 = vunpack.c.l.b16 %v6072
        %v6183 = vunpack.c.h.b16 %v6072
        %v6184 = vunpack.c.l.b16 %v6073
        %v6185 = vunpack.c.h.b16 %v6073
        %v6186 = vunpack.c.l.b16 %v6074
        %v6187 = vunpack.c.h.b16 %v6074
        %v6188 = vunpack.c.l.b16 %v6075
        %v6189 = vunpack.c.h.b16 %v6075
        %v6190 = vunpack.c.l.b16 %v6076
        %v6191 = vunpack.c.h.b16 %v6076
        %v6192 = vunpack.c.l.b16 %v6077
        %v6193 = vunpack.c.h.b16 %v6077
        %v6194 = vunpack.c.l.b16 %v6078
        %v6195 = vunpack.c.h.b16 %v6078
        %v6196 = vunpack.c.l.b16 %v6079
        %v6197 = vunpack.c.h.b16 %v6079
        %v6198 = vpack.c.b16 %v6138, %v6134
        %v6199 = vpack.c.b16 %v6139, %v6135
        %v6200 = vpack.c.b16 %v6140, %v6136
        %v6201 = vpack.c.b16 %v6141, %v6137
        %v6202 = vpack.c.b16 %v6146, %v6142
        %v6203 = vpack.c.b16 %v6147, %v6143
        %v6204 = vpack.c.b16 %v6148, %v6144
        %v6205 = vpack.c.b16 %v6149, %v6145
        %v6206 = vpack.c.b16 %v6154, %v6150
        %v6207 = vpack.c.b16 %v6155, %v6151
        %v6208 = vpack.c.b16 %v6156, %v6152
        %v6209 = vpack.c.b16 %v6157, %v6153
        %v6210 = vpack.c.b16 %v6162, %v6158
        %v6211 = vpack.c.b16 %v6163, %v6159
        %v6212 = vpack.c.b16 %v6164, %v6160
        %v6213 = vpack.c.b16 %v6165, %v6161
        %v6214 = vpack.c.b16 %v6170, %v6166
        %v6215 = vpack.c.b16 %v6171, %v6167
        %v6216 = vpack.c.b16 %v6172, %v6168
        %v6217 = vpack.c.b16 %v6173, %v6169
        %v6218 = vpack.c.b16 %v6178, %v6174
        %v6219 = vpack.c.b16 %v6179, %v6175
        %v6220 = vpack.c.b16 %v6180, %v6176
        %v6221 = vpack.c.b16 %v6181, %v6177
        %v6222 = vpack.c.b16 %v6186, %v6182
        %v6223 = vpack.c.b16 %v6187, %v6183
        %v6224 = vpack.c.b16 %v6188, %v6184
        %v6225 = vpack.c.b16 %v6189, %v6185
        %v6226 = vpack.c.b16 %v6194, %v6190
        %v6227 = vpack.c.b16 %v6195, %v6191
        %v6228 = vpack.c.b16 %v6196, %v6192
        %v6229 = vpack.c.b16 %v6197, %v6193
        %6262 = vmatprep.subr.bf16.mxu0 %v6227
        %6263 = vmatpush1.bf16.msra.mxu0 %v6226
        %6264 = vmatprep.subr.bf16.mxu0 %v6223
        %6265 = vmatpush1.bf16.msra.mxu0 %v6222
        %6266 = vmatprep.subr.bf16.mxu0 %v6219
        %6267 = vmatpush1.bf16.msra.mxu0 %v6218
        %6268 = vmatprep.subr.bf16.mxu0 %v6215
        %6269 = vmatpush1.bf16.msra.mxu0 %v6214
        %6270 = vmatprep.subr.bf16.mxu0 %v6211
        %6271 = vmatpush1.bf16.msra.mxu0 %v6210
        %6272 = vmatprep.subr.bf16.mxu0 %v6207
        %6273 = vmatpush1.bf16.msra.mxu0 %v6206
        %6274 = vmatprep.subr.bf16.mxu0 %v6203
        %6275 = vmatpush1.bf16.msra.mxu0 %v6202
        %6276 = vmatprep.subr.bf16.mxu0 %v6199
        %6277 = vmatpush1.bf16.msra.mxu0 %v6198
        %6278 = vmatprep.subr.bf16.mxu0 0
        %6279 = vmatpush2.bf16.msra.mxu0 0
        %6280 = vmatprep.subr.bf16.mxu0 0
        %6281 = vmatpush2.bf16.msra.mxu0 0
        %6282 = vmatprep.subr.bf16.mxu0 0
        %6283 = vmatpush2.bf16.msra.mxu0 0
        %6284 = vmatprep.subr.bf16.mxu0 0
        %6285 = vmatpush2.bf16.msra.mxu0 0
        %6286 = vmatprep.subr.bf16.mxu0 0
        %6287 = vmatpush2.bf16.msra.mxu0 0
        %6288 = vmatprep.subr.bf16.mxu0 0
        %6289 = vmatpush2.bf16.msra.mxu0 0
        %6290 = vmatprep.subr.bf16.mxu0 0
        %6291 = vmatpush2.bf16.msra.mxu0 0
        %6292 = vmatprep.subr.bf16.mxu0 0
        %6293 = vmatpush2.bf16.msra.mxu0 0
        %6294 = vmatprep.mubr.bf16.mxu0 0
        %6295 = vmatmul.mubr.bf16.gmra.mxu0 %v6040
        %v6296 = vpop.f32.mrf.mxu0
        %v6297 = vadd.f32 %v6085, %v6296
        %v6298 = vpop.f32.mrf.mxu0
        %v6299 = vadd.f32 %v6089, %v6298
        %v6300 = vpop.f32.mrf.mxu0
        %v6301 = vadd.f32 %v6085, %v6300
        %v6302 = vpop.f32.mrf.mxu0
        %v6303 = vadd.f32 %v6089, %v6302
        %6304 = vmatprep.mubr.bf16.mxu0 0
        %6305 = vmatmul.mubr.bf16.gmra.mxu0 %v6041
        %v6306 = vpop.f32.mrf.mxu0
        %v6307 = vadd.f32 %v6085, %v6306
        %v6308 = vpop.f32.mrf.mxu0
        %v6309 = vadd.f32 %v6089, %v6308
        %v6310 = vpop.f32.mrf.mxu0
        %v6311 = vadd.f32 %v6085, %v6310
        %v6312 = vpop.f32.mrf.mxu0
        %v6313 = vadd.f32 %v6089, %v6312
        %6314 = vmatprep.mubr.bf16.mxu0 0
        %6315 = vmatmul.mubr.bf16.gmra.mxu0 %v6042
        %v6316 = vpop.f32.mrf.mxu0
        %v6317 = vadd.f32 %v6085, %v6316
        %v6318 = vpop.f32.mrf.mxu0
        %v6319 = vadd.f32 %v6089, %v6318
        %v6320 = vpop.f32.mrf.mxu0
        %v6321 = vadd.f32 %v6085, %v6320
        %v6322 = vpop.f32.mrf.mxu0
        %v6323 = vadd.f32 %v6089, %v6322
        %6324 = vmatprep.mubr.bf16.mxu0 0
        %6325 = vmatmul.mubr.bf16.gmra.mxu0 %v6043
        %v6326 = vpop.f32.mrf.mxu0
        %v6327 = vadd.f32 %v6085, %v6326
        %v6328 = vpop.f32.mrf.mxu0
        %v6329 = vadd.f32 %v6089, %v6328
        %v6330 = vpop.f32.mrf.mxu0
        %v6331 = vadd.f32 %v6085, %v6330
        %v6332 = vpop.f32.mrf.mxu0
        %v6333 = vadd.f32 %v6089, %v6332
        %6334 = vmatprep.mubr.bf16.mxu0 0
        %6335 = vmatmul.mubr.bf16.gmra.mxu0 %v6044
        %v6336 = vpop.f32.mrf.mxu0
        %v6337 = vadd.f32 %v6085, %v6336
        %v6338 = vpop.f32.mrf.mxu0
        %v6339 = vadd.f32 %v6089, %v6338
        %v6340 = vpop.f32.mrf.mxu0
        %v6341 = vadd.f32 %v6085, %v6340
        %v6342 = vpop.f32.mrf.mxu0
        %v6343 = vadd.f32 %v6089, %v6342
        %6344 = vmatprep.mubr.bf16.mxu0 0
        %6345 = vmatmul.mubr.bf16.gmra.mxu0 %v6045
        %v6346 = vpop.f32.mrf.mxu0
        %v6347 = vadd.f32 %v6085, %v6346
        %v6348 = vpop.f32.mrf.mxu0
        %v6349 = vadd.f32 %v6089, %v6348
        %v6350 = vpop.f32.mrf.mxu0
        %v6351 = vadd.f32 %v6085, %v6350
        %v6352 = vpop.f32.mrf.mxu0
        %v6353 = vadd.f32 %v6089, %v6352
        %6354 = vmatprep.mubr.bf16.mxu0 0
        %6355 = vmatmul.mubr.bf16.gmra.mxu0 %v6046
        %v6356 = vpop.f32.mrf.mxu0
        %v6357 = vadd.f32 %v6085, %v6356
        %v6358 = vpop.f32.mrf.mxu0
        %v6359 = vadd.f32 %v6089, %v6358
        %v6360 = vpop.f32.mrf.mxu0
        %v6361 = vadd.f32 %v6085, %v6360
        %v6362 = vpop.f32.mrf.mxu0
        %v6363 = vadd.f32 %v6089, %v6362
        %6364 = vmatprep.mubr.bf16.mxu0 0
        %6365 = vmatmul.mubr.bf16.gmra.mxu0 %v6047
        %v6366 = vpop.f32.mrf.mxu0
        %v6367 = vadd.f32 %v6085, %v6366
        %v6368 = vpop.f32.mrf.mxu0
        %v6369 = vadd.f32 %v6089, %v6368
        %v6370 = vpop.f32.mrf.mxu0
        %v6371 = vadd.f32 %v6085, %v6370
        %v6372 = vpop.f32.mrf.mxu0
        %v6373 = vadd.f32 %v6089, %v6372
        %6374 = vdwg.mxu0
        %6375 = vmatprep.subr.bf16.mxu0 %v6229
        %6376 = vmatpush1.bf16.msra.mxu0 %v6228
        %6377 = vmatprep.subr.bf16.mxu0 %v6225
        %6378 = vmatpush1.bf16.msra.mxu0 %v6224
        %6379 = vmatprep.subr.bf16.mxu0 %v6221
        %6380 = vmatpush1.bf16.msra.mxu0 %v6220
        %6381 = vmatprep.subr.bf16.mxu0 %v6217
        %6382 = vmatpush1.bf16.msra.mxu0 %v6216
        %6383 = vmatprep.subr.bf16.mxu0 %v6213
        %6384 = vmatpush1.bf16.msra.mxu0 %v6212
        %6385 = vmatprep.subr.bf16.mxu0 %v6209
        %6386 = vmatpush1.bf16.msra.mxu0 %v6208
        %6387 = vmatprep.subr.bf16.mxu0 %v6205
        %6388 = vmatpush1.bf16.msra.mxu0 %v6204
        %6389 = vmatprep.subr.bf16.mxu0 %v6201
        %6390 = vmatpush1.bf16.msra.mxu0 %v6200
        %6391 = vmatprep.subr.bf16.mxu0 0
        %6392 = vmatpush2.bf16.msra.mxu0 0
        %6393 = vmatprep.subr.bf16.mxu0 0
        %6394 = vmatpush2.bf16.msra.mxu0 0
        %6395 = vmatprep.subr.bf16.mxu0 0
        %6396 = vmatpush2.bf16.msra.mxu0 0
        %6397 = vmatprep.subr.bf16.mxu0 0
        %6398 = vmatpush2.bf16.msra.mxu0 0
        %6399 = vmatprep.subr.bf16.mxu0 0
        %6400 = vmatpush2.bf16.msra.mxu0 0
        %6401 = vmatprep.subr.bf16.mxu0 0
        %6402 = vmatpush2.bf16.msra.mxu0 0
        %6403 = vmatprep.subr.bf16.mxu0 0
        %6404 = vmatpush2.bf16.msra.mxu0 0
        %6405 = vmatprep.subr.bf16.mxu0 0
        %6406 = vmatpush2.bf16.msra.mxu0 0
        %6407 = vmatprep.mubr.bf16.mxu0 0
        %6408 = vmatmul.mubr.bf16.gmra.mxu0 %v6040
        %v6409 = vpop.f32.mrf.mxu0
        %v6410 = vadd.f32 %v6093, %v6409
        %v6411 = vpop.f32.mrf.mxu0
        %v6412 = vadd.f32 %v6097, %v6411
        %v6413 = vpop.f32.mrf.mxu0
        %v6414 = vadd.f32 %v6093, %v6413
        %v6415 = vpop.f32.mrf.mxu0
        %v6416 = vadd.f32 %v6097, %v6415
        %6417 = vmatprep.mubr.bf16.mxu0 0
        %6418 = vmatmul.mubr.bf16.gmra.mxu0 %v6041
        %v6419 = vpop.f32.mrf.mxu0
        %v6420 = vadd.f32 %v6093, %v6419
        %v6421 = vpop.f32.mrf.mxu0
        %v6422 = vadd.f32 %v6097, %v6421
        %v6423 = vpop.f32.mrf.mxu0
        %v6424 = vadd.f32 %v6093, %v6423
        %v6425 = vpop.f32.mrf.mxu0
        %v6426 = vadd.f32 %v6097, %v6425
        %6427 = vmatprep.mubr.bf16.mxu0 0
        %6428 = vmatmul.mubr.bf16.gmra.mxu0 %v6042
        %v6429 = vpop.f32.mrf.mxu0
        %v6430 = vadd.f32 %v6093, %v6429
        %v6431 = vpop.f32.mrf.mxu0
        %v6432 = vadd.f32 %v6097, %v6431
        %v6433 = vpop.f32.mrf.mxu0
        %v6434 = vadd.f32 %v6093, %v6433
        %v6435 = vpop.f32.mrf.mxu0
        %v6436 = vadd.f32 %v6097, %v6435
        %6437 = vmatprep.mubr.bf16.mxu0 0
        %6438 = vmatmul.mubr.bf16.gmra.mxu0 %v6043
        %v6439 = vpop.f32.mrf.mxu0
        %v6440 = vadd.f32 %v6093, %v6439
        %v6441 = vpop.f32.mrf.mxu0
        %v6442 = vadd.f32 %v6097, %v6441
        %v6443 = vpop.f32.mrf.mxu0
        %v6444 = vadd.f32 %v6093, %v6443
        %v6445 = vpop.f32.mrf.mxu0
        %v6446 = vadd.f32 %v6097, %v6445
        %6447 = vmatprep.mubr.bf16.mxu0 0
        %6448 = vmatmul.mubr.bf16.gmra.mxu0 %v6044
        %v6449 = vpop.f32.mrf.mxu0
        %v6450 = vadd.f32 %v6093, %v6449
        %v6451 = vpop.f32.mrf.mxu0
        %v6452 = vadd.f32 %v6097, %v6451
        %v6453 = vpop.f32.mrf.mxu0
        %v6454 = vadd.f32 %v6093, %v6453
        %v6455 = vpop.f32.mrf.mxu0
        %v6456 = vadd.f32 %v6097, %v6455
        %6457 = vmatprep.mubr.bf16.mxu0 0
        %6458 = vmatmul.mubr.bf16.gmra.mxu0 %v6045
        %v6459 = vpop.f32.mrf.mxu0
        %v6460 = vadd.f32 %v6093, %v6459
        %v6461 = vpop.f32.mrf.mxu0
        %v6462 = vadd.f32 %v6097, %v6461
        %v6463 = vpop.f32.mrf.mxu0
        %v6464 = vadd.f32 %v6093, %v6463
        %v6465 = vpop.f32.mrf.mxu0
        %v6466 = vadd.f32 %v6097, %v6465
        %6467 = vmatprep.mubr.bf16.mxu0 0
        %6468 = vmatmul.mubr.bf16.gmra.mxu0 %v6046
        %v6469 = vpop.f32.mrf.mxu0
        %v6470 = vadd.f32 %v6093, %v6469
        %v6471 = vpop.f32.mrf.mxu0
        %v6472 = vadd.f32 %v6097, %v6471
        %v6473 = vpop.f32.mrf.mxu0
        %v6474 = vadd.f32 %v6093, %v6473
        %v6475 = vpop.f32.mrf.mxu0
        %v6476 = vadd.f32 %v6097, %v6475
        %6477 = vmatprep.mubr.bf16.mxu0 0
        %6478 = vmatmul.mubr.bf16.gmra.mxu0 %v6047
        %v6479 = vpop.f32.mrf.mxu0
        %v6480 = vadd.f32 %v6093, %v6479
        %v6481 = vpop.f32.mrf.mxu0
        %v6482 = vadd.f32 %v6097, %v6481
        %v6483 = vpop.f32.mrf.mxu0
        %v6484 = vadd.f32 %v6093, %v6483
        %v6485 = vpop.f32.mrf.mxu0
        %v6486 = vadd.f32 %v6097, %v6485
        %6487 = vdwg.mxu0
        %v6488 = vmul.f32 %v6297, 0.5
        %v6489 = vmul.f32 %v6299, 0.5
        %v6490 = vmul.f32 %v6410, 0.5
        %v6491 = vmul.f32 %v6412, 0.5
        %v6492 = vmul.f32 %v6301, 0.5
        %v6493 = vmul.f32 %v6303, 0.5
        %v6494 = vmul.f32 %v6414, 0.5
        %v6495 = vmul.f32 %v6416, 0.5
        %v6496 = vmul.f32 %v6307, 0.5
        %v6497 = vmul.f32 %v6309, 0.5
        %v6498 = vmul.f32 %v6420, 0.5
        %v6499 = vmul.f32 %v6422, 0.5
        %v6500 = vmul.f32 %v6311, 0.5
        %v6501 = vmul.f32 %v6313, 0.5
        %v6502 = vmul.f32 %v6424, 0.5
        %v6503 = vmul.f32 %v6426, 0.5
        %v6504 = vmul.f32 %v6317, 0.5
        %v6505 = vmul.f32 %v6319, 0.5
        %v6506 = vmul.f32 %v6430, 0.5
        %v6507 = vmul.f32 %v6432, 0.5
        %v6508 = vmul.f32 %v6321, 0.5
        %v6509 = vmul.f32 %v6323, 0.5
        %v6510 = vmul.f32 %v6434, 0.5
        %v6511 = vmul.f32 %v6436, 0.5
        %v6512 = vmul.f32 %v6327, 0.5
        %v6513 = vmul.f32 %v6329, 0.5
        %v6514 = vmul.f32 %v6440, 0.5
        %v6515 = vmul.f32 %v6442, 0.5
        %v6516 = vmul.f32 %v6331, 0.5
        %v6517 = vmul.f32 %v6333, 0.5
        %v6518 = vmul.f32 %v6444, 0.5
        %v6519 = vmul.f32 %v6446, 0.5
        %v6520 = vmul.f32 %v6337, 0.5
        %v6521 = vmul.f32 %v6339, 0.5
        %v6522 = vmul.f32 %v6450, 0.5
        %v6523 = vmul.f32 %v6452, 0.5
        %v6524 = vmul.f32 %v6341, 0.5
        %v6525 = vmul.f32 %v6343, 0.5
        %v6526 = vmul.f32 %v6454, 0.5
        %v6527 = vmul.f32 %v6456, 0.5
        %v6528 = vmul.f32 %v6347, 0.5
        %v6529 = vmul.f32 %v6349, 0.5
        %v6530 = vmul.f32 %v6460, 0.5
        %v6531 = vmul.f32 %v6462, 0.5
        %v6532 = vmul.f32 %v6351, 0.5
        %v6533 = vmul.f32 %v6353, 0.5
        %v6534 = vmul.f32 %v6464, 0.5
        %v6535 = vmul.f32 %v6466, 0.5
        %v6536 = vmul.f32 %v6357, 0.5
        %v6537 = vmul.f32 %v6359, 0.5
        %v6538 = vmul.f32 %v6470, 0.5
        %v6539 = vmul.f32 %v6472, 0.5
        %v6540 = vmul.f32 %v6361, 0.5
        %v6541 = vmul.f32 %v6363, 0.5
        %v6542 = vmul.f32 %v6474, 0.5
        %v6543 = vmul.f32 %v6476, 0.5
        %v6544 = vmul.f32 %v6367, 0.5
        %v6545 = vmul.f32 %v6369, 0.5
        %v6546 = vmul.f32 %v6480, 0.5
        %v6547 = vmul.f32 %v6482, 0.5
        %v6548 = vmul.f32 %v6371, 0.5
        %v6549 = vmul.f32 %v6373, 0.5
        %v6550 = vmul.f32 %v6484, 0.5
        %v6551 = vmul.f32 %v6486, 0.5
        %v6552 = vmul.f32 %v6297, 0.70710677
        %v6553 = vmul.f32 %v6299, 0.70710677
        %v6554 = vmul.f32 %v6410, 0.70710677
        %v6555 = vmul.f32 %v6412, 0.70710677
        %v6556 = vmul.f32 %v6301, 0.70710677
        %v6557 = vmul.f32 %v6303, 0.70710677
        %v6558 = vmul.f32 %v6414, 0.70710677
        %v6559 = vmul.f32 %v6416, 0.70710677
        %v6560 = vmul.f32 %v6307, 0.70710677
        %v6561 = vmul.f32 %v6309, 0.70710677
        %v6562 = vmul.f32 %v6420, 0.70710677
        %v6563 = vmul.f32 %v6422, 0.70710677
        %v6564 = vmul.f32 %v6311, 0.70710677
        %v6565 = vmul.f32 %v6313, 0.70710677
        %v6566 = vmul.f32 %v6424, 0.70710677
        %v6567 = vmul.f32 %v6426, 0.70710677
        %v6568 = vmul.f32 %v6317, 0.70710677
        %v6569 = vmul.f32 %v6319, 0.70710677
        %v6570 = vmul.f32 %v6430, 0.70710677
        %v6571 = vmul.f32 %v6432, 0.70710677
        %v6572 = vmul.f32 %v6321, 0.70710677
        %v6573 = vmul.f32 %v6323, 0.70710677
        %v6574 = vmul.f32 %v6434, 0.70710677
        %v6575 = vmul.f32 %v6436, 0.70710677
        %v6576 = vmul.f32 %v6327, 0.70710677
        %v6577 = vmul.f32 %v6329, 0.70710677
        %v6578 = vmul.f32 %v6440, 0.70710677
        %v6579 = vmul.f32 %v6442, 0.70710677
        %v6580 = vmul.f32 %v6331, 0.70710677
        %v6581 = vmul.f32 %v6333, 0.70710677
        %v6582 = vmul.f32 %v6444, 0.70710677
        %v6583 = vmul.f32 %v6446, 0.70710677
        %v6584 = vmul.f32 %v6337, 0.70710677
        %v6585 = vmul.f32 %v6339, 0.70710677
        %v6586 = vmul.f32 %v6450, 0.70710677
        %v6587 = vmul.f32 %v6452, 0.70710677
        %v6588 = vmul.f32 %v6341, 0.70710677
        %v6589 = vmul.f32 %v6343, 0.70710677
        %v6590 = vmul.f32 %v6454, 0.70710677
        %v6591 = vmul.f32 %v6456, 0.70710677
        %v6592 = vmul.f32 %v6347, 0.70710677
        %v6593 = vmul.f32 %v6349, 0.70710677
        %v6594 = vmul.f32 %v6460, 0.70710677
        %v6595 = vmul.f32 %v6462, 0.70710677
        %v6596 = vmul.f32 %v6351, 0.70710677
        %v6597 = vmul.f32 %v6353, 0.70710677
        %v6598 = vmul.f32 %v6464, 0.70710677
        %v6599 = vmul.f32 %v6466, 0.70710677
        %v6600 = vmul.f32 %v6357, 0.70710677
        %v6601 = vmul.f32 %v6359, 0.70710677
        %v6602 = vmul.f32 %v6470, 0.70710677
        %v6603 = vmul.f32 %v6472, 0.70710677
        %v6604 = vmul.f32 %v6361, 0.70710677
        %v6605 = vmul.f32 %v6363, 0.70710677
        %v6606 = vmul.f32 %v6474, 0.70710677
        %v6607 = vmul.f32 %v6476, 0.70710677
        %v6608 = vmul.f32 %v6367, 0.70710677
        %v6609 = vmul.f32 %v6369, 0.70710677
        %v6610 = vmul.f32 %v6480, 0.70710677
        %v6611 = vmul.f32 %v6482, 0.70710677
        %v6612 = vmul.f32 %v6371, 0.70710677
        %v6613 = vmul.f32 %v6373, 0.70710677
        %v6614 = vmul.f32 %v6484, 0.70710677
        %v6615 = vmul.f32 %v6486, 0.70710677
        %v6616 = verf.f32.pop %v6552
        %v6617 = verf.f32.pop %v6553
        %v6618 = verf.f32.pop %v6554
        %v6619 = verf.f32.pop %v6555
        %v6620 = verf.f32.pop %v6556
        %v6621 = verf.f32.pop %v6557
        %v6622 = verf.f32.pop %v6558
        %v6623 = verf.f32.pop %v6559
        %v6624 = verf.f32.pop %v6560
        %v6625 = verf.f32.pop %v6561
        %v6626 = verf.f32.pop %v6562
        %v6627 = verf.f32.pop %v6563
        %v6628 = verf.f32.pop %v6564
        %v6629 = verf.f32.pop %v6565
        %v6630 = verf.f32.pop %v6566
        %v6631 = verf.f32.pop %v6567
        %v6632 = verf.f32.pop %v6568
        %v6633 = verf.f32.pop %v6569
        %v6634 = verf.f32.pop %v6570
        %v6635 = verf.f32.pop %v6571
        %v6636 = verf.f32.pop %v6572
        %v6637 = verf.f32.pop %v6573
        %v6638 = verf.f32.pop %v6574
        %v6639 = verf.f32.pop %v6575
        %v6640 = verf.f32.pop %v6576
        %v6641 = verf.f32.pop %v6577
        %v6642 = verf.f32.pop %v6578
        %v6643 = verf.f32.pop %v6579
        %v6644 = verf.f32.pop %v6580
        %v6645 = verf.f32.pop %v6581
        %v6646 = verf.f32.pop %v6582
        %v6647 = verf.f32.pop %v6583
        %v6648 = verf.f32.pop %v6584
        %v6649 = verf.f32.pop %v6585
        %v6650 = verf.f32.pop %v6586
        %v6651 = verf.f32.pop %v6587
        %v6652 = verf.f32.pop %v6588
        %v6653 = verf.f32.pop %v6589
        %v6654 = verf.f32.pop %v6590
        %v6655 = verf.f32.pop %v6591
        %v6656 = verf.f32.pop %v6592
        %v6657 = verf.f32.pop %v6593
        %v6658 = verf.f32.pop %v6594
        %v6659 = verf.f32.pop %v6595
        %v6660 = verf.f32.pop %v6596
        %v6661 = verf.f32.pop %v6597
        %v6662 = verf.f32.pop %v6598
        %v6663 = verf.f32.pop %v6599
        %v6664 = verf.f32.pop %v6600
        %v6665 = verf.f32.pop %v6601
        %v6666 = verf.f32.pop %v6602
        %v6667 = verf.f32.pop %v6603
        %v6668 = verf.f32.pop %v6604
        %v6669 = verf.f32.pop %v6605
        %v6670 = verf.f32.pop %v6606
        %v6671 = verf.f32.pop %v6607
        %v6672 = verf.f32.pop %v6608
        %v6673 = verf.f32.pop %v6609
        %v6674 = verf.f32.pop %v6610
        %v6675 = verf.f32.pop %v6611
        %v6676 = verf.f32.pop %v6612
        %v6677 = verf.f32.pop %v6613
        %v6678 = verf.f32.pop %v6614
        %v6679 = verf.f32.pop %v6615
        %v6680 = vadd.f32 %v6616, 1.0
        %v6681 = vadd.f32 %v6617, 1.0
        %v6682 = vadd.f32 %v6618, 1.0
        %v6683 = vadd.f32 %v6619, 1.0
        %v6684 = vadd.f32 %v6620, 1.0
        %v6685 = vadd.f32 %v6621, 1.0
        %v6686 = vadd.f32 %v6622, 1.0
        %v6687 = vadd.f32 %v6623, 1.0
        %v6688 = vadd.f32 %v6624, 1.0
        %v6689 = vadd.f32 %v6625, 1.0
        %v6690 = vadd.f32 %v6626, 1.0
        %v6691 = vadd.f32 %v6627, 1.0
        %v6692 = vadd.f32 %v6628, 1.0
        %v6693 = vadd.f32 %v6629, 1.0
        %v6694 = vadd.f32 %v6630, 1.0
        %v6695 = vadd.f32 %v6631, 1.0
        %v6696 = vadd.f32 %v6632, 1.0
        %v6697 = vadd.f32 %v6633, 1.0
        %v6698 = vadd.f32 %v6634, 1.0
        %v6699 = vadd.f32 %v6635, 1.0
        %v6700 = vadd.f32 %v6636, 1.0
        %v6701 = vadd.f32 %v6637, 1.0
        %v6702 = vadd.f32 %v6638, 1.0
        %v6703 = vadd.f32 %v6639, 1.0
        %v6704 = vadd.f32 %v6640, 1.0
        %v6705 = vadd.f32 %v6641, 1.0
        %v6706 = vadd.f32 %v6642, 1.0
        %v6707 = vadd.f32 %v6643, 1.0
        %v6708 = vadd.f32 %v6644, 1.0
        %v6709 = vadd.f32 %v6645, 1.0
        %v6710 = vadd.f32 %v6646, 1.0
        %v6711 = vadd.f32 %v6647, 1.0
        %v6712 = vadd.f32 %v6648, 1.0
        %v6713 = vadd.f32 %v6649, 1.0
        %v6714 = vadd.f32 %v6650, 1.0
        %v6715 = vadd.f32 %v6651, 1.0
        %v6716 = vadd.f32 %v6652, 1.0
        %v6717 = vadd.f32 %v6653, 1.0
        %v6718 = vadd.f32 %v6654, 1.0
        %v6719 = vadd.f32 %v6655, 1.0
        %v6720 = vadd.f32 %v6656, 1.0
        %v6721 = vadd.f32 %v6657, 1.0
        %v6722 = vadd.f32 %v6658, 1.0
        %v6723 = vadd.f32 %v6659, 1.0
        %v6724 = vadd.f32 %v6660, 1.0
        %v6725 = vadd.f32 %v6661, 1.0
        %v6726 = vadd.f32 %v6662, 1.0
        %v6727 = vadd.f32 %v6663, 1.0
        %v6728 = vadd.f32 %v6664, 1.0
        %v6729 = vadd.f32 %v6665, 1.0
        %v6730 = vadd.f32 %v6666, 1.0
        %v6731 = vadd.f32 %v6667, 1.0
        %v6732 = vadd.f32 %v6668, 1.0
        %v6733 = vadd.f32 %v6669, 1.0
        %v6734 = vadd.f32 %v6670, 1.0
        %v6735 = vadd.f32 %v6671, 1.0
        %v6736 = vadd.f32 %v6672, 1.0
        %v6737 = vadd.f32 %v6673, 1.0
        %v6738 = vadd.f32 %v6674, 1.0
        %v6739 = vadd.f32 %v6675, 1.0
        %v6740 = vadd.f32 %v6676, 1.0
        %v6741 = vadd.f32 %v6677, 1.0
        %v6742 = vadd.f32 %v6678, 1.0
        %v6743 = vadd.f32 %v6679, 1.0
        %v6744 = vmul.f32 %v6488, %v6680
        %v6745 = vmul.f32 %v6489, %v6681
        %v6746 = vmul.f32 %v6490, %v6682
        %v6747 = vmul.f32 %v6491, %v6683
        %v6748 = vmul.f32 %v6492, %v6684
        %v6749 = vmul.f32 %v6493, %v6685
        %v6750 = vmul.f32 %v6494, %v6686
        %v6751 = vmul.f32 %v6495, %v6687
        %v6752 = vmul.f32 %v6496, %v6688
        %v6753 = vmul.f32 %v6497, %v6689
        %v6754 = vmul.f32 %v6498, %v6690
        %v6755 = vmul.f32 %v6499, %v6691
        %v6756 = vmul.f32 %v6500, %v6692
        %v6757 = vmul.f32 %v6501, %v6693
        %v6758 = vmul.f32 %v6502, %v6694
        %v6759 = vmul.f32 %v6503, %v6695
        %v6760 = vmul.f32 %v6504, %v6696
        %v6761 = vmul.f32 %v6505, %v6697
        %v6762 = vmul.f32 %v6506, %v6698
        %v6763 = vmul.f32 %v6507, %v6699
        %v6764 = vmul.f32 %v6508, %v6700
        %v6765 = vmul.f32 %v6509, %v6701
        %v6766 = vmul.f32 %v6510, %v6702
        %v6767 = vmul.f32 %v6511, %v6703
        %v6768 = vmul.f32 %v6512, %v6704
        %v6769 = vmul.f32 %v6513, %v6705
        %v6770 = vmul.f32 %v6514, %v6706
        %v6771 = vmul.f32 %v6515, %v6707
        %v6772 = vmul.f32 %v6516, %v6708
        %v6773 = vmul.f32 %v6517, %v6709
        %v6774 = vmul.f32 %v6518, %v6710
        %v6775 = vmul.f32 %v6519, %v6711
        %v6776 = vmul.f32 %v6520, %v6712
        %v6777 = vmul.f32 %v6521, %v6713
        %v6778 = vmul.f32 %v6522, %v6714
        %v6779 = vmul.f32 %v6523, %v6715
        %v6780 = vmul.f32 %v6524, %v6716
        %v6781 = vmul.f32 %v6525, %v6717
        %v6782 = vmul.f32 %v6526, %v6718
        %v6783 = vmul.f32 %v6527, %v6719
        %v6784 = vmul.f32 %v6528, %v6720
        %v6785 = vmul.f32 %v6529, %v6721
        %v6786 = vmul.f32 %v6530, %v6722
        %v6787 = vmul.f32 %v6531, %v6723
        %v6788 = vmul.f32 %v6532, %v6724
        %v6789 = vmul.f32 %v6533, %v6725
        %v6790 = vmul.f32 %v6534, %v6726
        %v6791 = vmul.f32 %v6535, %v6727
        %v6792 = vmul.f32 %v6536, %v6728
        %v6793 = vmul.f32 %v6537, %v6729
        %v6794 = vmul.f32 %v6538, %v6730
        %v6795 = vmul.f32 %v6539, %v6731
        %v6796 = vmul.f32 %v6540, %v6732
        %v6797 = vmul.f32 %v6541, %v6733
        %v6798 = vmul.f32 %v6542, %v6734
        %v6799 = vmul.f32 %v6543, %v6735
        %v6800 = vmul.f32 %v6544, %v6736
        %v6801 = vmul.f32 %v6545, %v6737
        %v6802 = vmul.f32 %v6546, %v6738
        %v6803 = vmul.f32 %v6547, %v6739
        %v6804 = vmul.f32 %v6548, %v6740
        %v6805 = vmul.f32 %v6549, %v6741
        %v6806 = vmul.f32 %v6550, %v6742
        %v6807 = vmul.f32 %v6551, %v6743
        %v6808 = vpack.c.bf16 %v6748, %v6744
        %v6809 = vpack.c.bf16 %v6749, %v6745
        %v6810 = vpack.c.bf16 %v6750, %v6746
        %v6811 = vpack.c.bf16 %v6751, %v6747
        %v6812 = vpack.c.bf16 %v6756, %v6752
        %v6813 = vpack.c.bf16 %v6757, %v6753
        %v6814 = vpack.c.bf16 %v6758, %v6754
        %v6815 = vpack.c.bf16 %v6759, %v6755
        %v6816 = vpack.c.bf16 %v6764, %v6760
        %v6817 = vpack.c.bf16 %v6765, %v6761
        %v6818 = vpack.c.bf16 %v6766, %v6762
        %v6819 = vpack.c.bf16 %v6767, %v6763
        %v6820 = vpack.c.bf16 %v6772, %v6768
        %v6821 = vpack.c.bf16 %v6773, %v6769
        %v6822 = vpack.c.bf16 %v6774, %v6770
        %v6823 = vpack.c.bf16 %v6775, %v6771
        %v6824 = vpack.c.bf16 %v6780, %v6776
        %v6825 = vpack.c.bf16 %v6781, %v6777
        %v6826 = vpack.c.bf16 %v6782, %v6778
        %v6827 = vpack.c.bf16 %v6783, %v6779
        %v6828 = vpack.c.bf16 %v6788, %v6784
        %v6829 = vpack.c.bf16 %v6789, %v6785
        %v6830 = vpack.c.bf16 %v6790, %v6786
        %v6831 = vpack.c.bf16 %v6791, %v6787
        %v6832 = vpack.c.bf16 %v6796, %v6792
        %v6833 = vpack.c.bf16 %v6797, %v6793
        %v6834 = vpack.c.bf16 %v6798, %v6794
        %v6835 = vpack.c.bf16 %v6799, %v6795
        %v6836 = vpack.c.bf16 %v6804, %v6800
        %v6837 = vpack.c.bf16 %v6805, %v6801
        %v6838 = vpack.c.bf16 %v6806, %v6802
        %v6839 = vpack.c.bf16 %v6807, %v6803
        %v6840 = vld [vmem:[%s13] sm:$0xf]
        %v6841 = vld [vmem:[%s13 + $0x4] sm:$0xf]
        %v6842 = vld [vmem:[%s13 + $0x8] sm:$0xf]
        %v6843 = vld [vmem:[%s13 + $0xc] sm:$0xf]
        %v6844 = vld [vmem:[%s13 + $0x10] sm:$0xf]
        %v6845 = vld [vmem:[%s13 + $0x14] sm:$0xf]
        %v6846 = vld [vmem:[%s13 + $0x18] sm:$0xf]
        %v6847 = vld [vmem:[%s13 + $0x1c] sm:$0xf]
        %v6848 = vld [vmem:[%s13 + $0x20] sm:$0xf]
        %v6849 = vld [vmem:[%s13 + $0x24] sm:$0xf]
        %v6850 = vld [vmem:[%s13 + $0x28] sm:$0xf]
        %v6851 = vld [vmem:[%s13 + $0x2c] sm:$0xf]
        %v6852 = vld [vmem:[%s13 + $0x30] sm:$0xf]
        %v6853 = vld [vmem:[%s13 + $0x34] sm:$0xf]
        %v6854 = vld [vmem:[%s13 + $0x38] sm:$0xf]
        %v6855 = vld [vmem:[%s13 + $0x3c] sm:$0xf]
        %v6856 = vld [vmem:[%s13 + $0x40] sm:$0xf]
        %v6857 = vld [vmem:[%s13 + $0x44] sm:$0xf]
        %v6858 = vld [vmem:[%s13 + $0x48] sm:$0xf]
        %v6859 = vld [vmem:[%s13 + $0x4c] sm:$0xf]
        %v6860 = vld [vmem:[%s13 + $0x50] sm:$0xf]
        %v6861 = vld [vmem:[%s13 + $0x54] sm:$0xf]
        %v6862 = vld [vmem:[%s13 + $0x58] sm:$0xf]
        %v6863 = vld [vmem:[%s13 + $0x5c] sm:$0xf]
        %v6864 = vld [vmem:[%s13 + $0x60] sm:$0xf]
        %v6865 = vld [vmem:[%s13 + $0x64] sm:$0xf]
        %v6866 = vld [vmem:[%s13 + $0x68] sm:$0xf]
        %v6867 = vld [vmem:[%s13 + $0x6c] sm:$0xf]
        %v6868 = vld [vmem:[%s13 + $0x70] sm:$0xf]
        %v6869 = vld [vmem:[%s13 + $0x74] sm:$0xf]
        %v6870 = vld [vmem:[%s13 + $0x78] sm:$0xf]
        %v6871 = vld [vmem:[%s13 + $0x7c] sm:$0xf]
        %v6872 = vld [vmem:[%s13 + $0x80] sm:$0xf]
        %v6873 = vld [vmem:[%s13 + $0x84] sm:$0xf]
        %v6874 = vld [vmem:[%s13 + $0x88] sm:$0xf]
        %v6875 = vld [vmem:[%s13 + $0x8c] sm:$0xf]
        %v6876 = vld [vmem:[%s13 + $0x90] sm:$0xf]
        %v6877 = vld [vmem:[%s13 + $0x94] sm:$0xf]
        %v6878 = vld [vmem:[%s13 + $0x98] sm:$0xf]
        %v6879 = vld [vmem:[%s13 + $0x9c] sm:$0xf]
        %v6880 = vld [vmem:[%s13 + $0xa0] sm:$0xf]
        %v6881 = vld [vmem:[%s13 + $0xa4] sm:$0xf]
        %v6882 = vld [vmem:[%s13 + $0xa8] sm:$0xf]
        %v6883 = vld [vmem:[%s13 + $0xac] sm:$0xf]
        %v6884 = vld [vmem:[%s13 + $0xb0] sm:$0xf]
        %v6885 = vld [vmem:[%s13 + $0xb4] sm:$0xf]
        %v6886 = vld [vmem:[%s13 + $0xb8] sm:$0xf]
        %v6887 = vld [vmem:[%s13 + $0xbc] sm:$0xf]
        %v6888 = vld [vmem:[%s13 + $0xc0] sm:$0xf]
        %v6889 = vld [vmem:[%s13 + $0xc4] sm:$0xf]
        %v6890 = vld [vmem:[%s13 + $0xc8] sm:$0xf]
        %v6891 = vld [vmem:[%s13 + $0xcc] sm:$0xf]
        %v6892 = vld [vmem:[%s13 + $0xd0] sm:$0xf]
        %v6893 = vld [vmem:[%s13 + $0xd4] sm:$0xf]
        %v6894 = vld [vmem:[%s13 + $0xd8] sm:$0xf]
        %v6895 = vld [vmem:[%s13 + $0xdc] sm:$0xf]
        %v6896 = vld [vmem:[%s13 + $0xe0] sm:$0xf]
        %v6897 = vld [vmem:[%s13 + $0xe4] sm:$0xf]
        %v6898 = vld [vmem:[%s13 + $0xe8] sm:$0xf]
        %v6899 = vld [vmem:[%s13 + $0xec] sm:$0xf]
        %v6900 = vld [vmem:[%s13 + $0xf0] sm:$0xf]
        %v6901 = vld [vmem:[%s13 + $0xf4] sm:$0xf]
        %v6902 = vld [vmem:[%s13 + $0xf8] sm:$0xf]
        %v6903 = vld [vmem:[%s13 + $0xfc] sm:$0xf]
        %v6904 = vld [vmem:[%s14] sm:$0x1]
        %v6906 = vlaneseq
        %v6907 = vshrl.u32 %v6906, 7
        %v6908 = vsub.s32 0, %v6907
        %v6909 = vrot.slane %v6904, %v6908
        %v6975 = vunpack.c.l.b16 %v6840
        %v6976 = vunpack.c.l.b16 %v6841
        %v6977 = vunpack.c.l.b16 %v6842
        %v6978 = vunpack.c.l.b16 %v6843
        %v6979 = vunpack.c.l.b16 %v6844
        %v6980 = vunpack.c.l.b16 %v6845
        %v6981 = vunpack.c.l.b16 %v6846
        %v6982 = vunpack.c.l.b16 %v6847
        %v6983 = vunpack.c.l.b16 %v6848
        %v6984 = vunpack.c.l.b16 %v6849
        %v6985 = vunpack.c.l.b16 %v6850
        %v6986 = vunpack.c.l.b16 %v6851
        %v6987 = vunpack.c.l.b16 %v6852
        %v6988 = vunpack.c.l.b16 %v6853
        %v6989 = vunpack.c.l.b16 %v6854
        %v6990 = vunpack.c.l.b16 %v6855
        %v6991 = vunpack.c.l.b16 %v6856
        %v6992 = vunpack.c.l.b16 %v6857
        %v6993 = vunpack.c.l.b16 %v6858
        %v6994 = vunpack.c.l.b16 %v6859
        %v6995 = vunpack.c.l.b16 %v6860
        %v6996 = vunpack.c.l.b16 %v6861
        %v6997 = vunpack.c.l.b16 %v6862
        %v6998 = vunpack.c.l.b16 %v6863
        %v6999 = vunpack.c.l.b16 %v6864
        %v7000 = vunpack.c.l.b16 %v6865
        %v7001 = vunpack.c.l.b16 %v6866
        %v7002 = vunpack.c.l.b16 %v6867
        %v7003 = vunpack.c.l.b16 %v6868
        %v7004 = vunpack.c.l.b16 %v6869
        %v7005 = vunpack.c.l.b16 %v6870
        %v7006 = vunpack.c.l.b16 %v6871
        %v7007 = vunpack.c.l.b16 %v6872
        %v7008 = vunpack.c.l.b16 %v6873
        %v7009 = vunpack.c.l.b16 %v6874
        %v7010 = vunpack.c.l.b16 %v6875
        %v7011 = vunpack.c.l.b16 %v6876
        %v7012 = vunpack.c.l.b16 %v6877
        %v7013 = vunpack.c.l.b16 %v6878
        %v7014 = vunpack.c.l.b16 %v6879
        %v7015 = vunpack.c.l.b16 %v6880
        %v7016 = vunpack.c.l.b16 %v6881
        %v7017 = vunpack.c.l.b16 %v6882
        %v7018 = vunpack.c.l.b16 %v6883
        %v7019 = vunpack.c.l.b16 %v6884
        %v7020 = vunpack.c.l.b16 %v6885
        %v7021 = vunpack.c.l.b16 %v6886
        %v7022 = vunpack.c.l.b16 %v6887
        %v7023 = vunpack.c.l.b16 %v6888
        %v7024 = vunpack.c.l.b16 %v6889
        %v7025 = vunpack.c.l.b16 %v6890
        %v7026 = vunpack.c.l.b16 %v6891
        %v7027 = vunpack.c.l.b16 %v6892
        %v7028 = vunpack.c.l.b16 %v6893
        %v7029 = vunpack.c.l.b16 %v6894
        %v7030 = vunpack.c.l.b16 %v6895
        %v7031 = vunpack.c.l.b16 %v6896
        %v7032 = vunpack.c.l.b16 %v6897
        %v7033 = vunpack.c.l.b16 %v6898
        %v7034 = vunpack.c.l.b16 %v6899
        %v7035 = vunpack.c.l.b16 %v6900
        %v7036 = vunpack.c.l.b16 %v6901
        %v7037 = vunpack.c.l.b16 %v6902
        %v7038 = vunpack.c.l.b16 %v6903
        %v7039 = vpack.c.b16 %v6976, %v6975
        %v7040 = vpack.c.b16 %v6978, %v6977
        %v7041 = vpack.c.b16 %v6980, %v6979
        %v7042 = vpack.c.b16 %v6982, %v6981
        %v7043 = vpack.c.b16 %v6984, %v6983
        %v7044 = vpack.c.b16 %v6986, %v6985
        %v7045 = vpack.c.b16 %v6988, %v6987
        %v7046 = vpack.c.b16 %v6990, %v6989
        %v7047 = vpack.c.b16 %v6992, %v6991
        %v7048 = vpack.c.b16 %v6994, %v6993
        %v7049 = vpack.c.b16 %v6996, %v6995
        %v7050 = vpack.c.b16 %v6998, %v6997
        %v7051 = vpack.c.b16 %v7000, %v6999
        %v7052 = vpack.c.b16 %v7002, %v7001
        %v7053 = vpack.c.b16 %v7004, %v7003
        %v7054 = vpack.c.b16 %v7006, %v7005
        %v7055 = vpack.c.b16 %v7008, %v7007
        %v7056 = vpack.c.b16 %v7010, %v7009
        %v7057 = vpack.c.b16 %v7012, %v7011
        %v7058 = vpack.c.b16 %v7014, %v7013
        %v7059 = vpack.c.b16 %v7016, %v7015
        %v7060 = vpack.c.b16 %v7018, %v7017
        %v7061 = vpack.c.b16 %v7020, %v7019
        %v7062 = vpack.c.b16 %v7022, %v7021
        %v7063 = vpack.c.b16 %v7024, %v7023
        %v7064 = vpack.c.b16 %v7026, %v7025
        %v7065 = vpack.c.b16 %v7028, %v7027
        %v7066 = vpack.c.b16 %v7030, %v7029
        %v7067 = vpack.c.b16 %v7032, %v7031
        %v7068 = vpack.c.b16 %v7034, %v7033
        %v7069 = vpack.c.b16 %v7036, %v7035
        %v7070 = vpack.c.b16 %v7038, %v7037
        %7103 = vmatprep.subr.bf16.mxu0 0
        %7104 = vmatpush1.bf16.msra.mxu0 %v7046
        %7105 = vmatprep.subr.bf16.mxu0 0
        %7106 = vmatpush1.bf16.msra.mxu0 %v7045
        %7107 = vmatprep.subr.bf16.mxu0 0
        %7108 = vmatpush1.bf16.msra.mxu0 %v7044
        %7109 = vmatprep.subr.bf16.mxu0 0
        %7110 = vmatpush1.bf16.msra.mxu0 %v7043
        %7111 = vmatprep.subr.bf16.mxu0 0
        %7112 = vmatpush1.bf16.msra.mxu0 %v7042
        %7113 = vmatprep.subr.bf16.mxu0 0
        %7114 = vmatpush1.bf16.msra.mxu0 %v7041
        %7115 = vmatprep.subr.bf16.mxu0 0
        %7116 = vmatpush1.bf16.msra.mxu0 %v7040
        %7117 = vmatprep.subr.bf16.mxu0 0
        %7118 = vmatpush1.bf16.msra.mxu0 %v7039
        %7119 = vmatprep.subr.bf16.mxu0 0
        %7120 = vmatpush2.bf16.msra.mxu0 %v7054
        %7121 = vmatprep.subr.bf16.mxu0 0
        %7122 = vmatpush2.bf16.msra.mxu0 %v7053
        %7123 = vmatprep.subr.bf16.mxu0 0
        %7124 = vmatpush2.bf16.msra.mxu0 %v7052
        %7125 = vmatprep.subr.bf16.mxu0 0
        %7126 = vmatpush2.bf16.msra.mxu0 %v7051
        %7127 = vmatprep.subr.bf16.mxu0 0
        %7128 = vmatpush2.bf16.msra.mxu0 %v7050
        %7129 = vmatprep.subr.bf16.mxu0 0
        %7130 = vmatpush2.bf16.msra.mxu0 %v7049
        %7131 = vmatprep.subr.bf16.mxu0 0
        %7132 = vmatpush2.bf16.msra.mxu0 %v7048
        %7133 = vmatprep.subr.bf16.mxu0 0
        %7134 = vmatpush2.bf16.msra.mxu0 %v7047
        %7135 = vmatprep.mubr.bf16.mxu0 %v6809
        %7136 = vmatmul.mubr.bf16.gmra.mxu0 %v6808
        %v7137 = vpop.f32.mrf.mxu0
        %v7138 = vadd.f32 %v6909, %v7137
        %v7139 = vpop.f32.mrf.mxu0
        %v7140 = vpop.f32.mrf.mxu0
        %v7141 = vadd.f32 %v6909, %v7140
        %v7142 = vpop.f32.mrf.mxu0
        %7143 = vmatprep.mubr.bf16.mxu0 %v6813
        %7144 = vmatmul.mubr.bf16.gmra.mxu0 %v6812
        %v7145 = vpop.f32.mrf.mxu0
        %v7146 = vadd.f32 %v6909, %v7145
        %v7147 = vpop.f32.mrf.mxu0
        %v7148 = vpop.f32.mrf.mxu0
        %v7149 = vadd.f32 %v6909, %v7148
        %v7150 = vpop.f32.mrf.mxu0
        %7151 = vmatprep.mubr.bf16.mxu0 %v6817
        %7152 = vmatmul.mubr.bf16.gmra.mxu0 %v6816
        %v7153 = vpop.f32.mrf.mxu0
        %v7154 = vadd.f32 %v6909, %v7153
        %v7155 = vpop.f32.mrf.mxu0
        %v7156 = vpop.f32.mrf.mxu0
        %v7157 = vadd.f32 %v6909, %v7156
        %v7158 = vpop.f32.mrf.mxu0
        %7159 = vmatprep.mubr.bf16.mxu0 %v6821
        %7160 = vmatmul.mubr.bf16.gmra.mxu0 %v6820
        %v7161 = vpop.f32.mrf.mxu0
        %v7162 = vadd.f32 %v6909, %v7161
        %v7163 = vpop.f32.mrf.mxu0
        %v7164 = vpop.f32.mrf.mxu0
        %v7165 = vadd.f32 %v6909, %v7164
        %v7166 = vpop.f32.mrf.mxu0
        %7167 = vmatprep.mubr.bf16.mxu0 %v6825
        %7168 = vmatmul.mubr.bf16.gmra.mxu0 %v6824
        %v7169 = vpop.f32.mrf.mxu0
        %v7170 = vadd.f32 %v6909, %v7169
        %v7171 = vpop.f32.mrf.mxu0
        %v7172 = vpop.f32.mrf.mxu0
        %v7173 = vadd.f32 %v6909, %v7172
        %v7174 = vpop.f32.mrf.mxu0
        %7175 = vmatprep.mubr.bf16.mxu0 %v6829
        %7176 = vmatmul.mubr.bf16.gmra.mxu0 %v6828
        %v7177 = vpop.f32.mrf.mxu0
        %v7178 = vadd.f32 %v6909, %v7177
        %v7179 = vpop.f32.mrf.mxu0
        %v7180 = vpop.f32.mrf.mxu0
        %v7181 = vadd.f32 %v6909, %v7180
        %v7182 = vpop.f32.mrf.mxu0
        %7183 = vmatprep.mubr.bf16.mxu0 %v6833
        %7184 = vmatmul.mubr.bf16.gmra.mxu0 %v6832
        %v7185 = vpop.f32.mrf.mxu0
        %v7186 = vadd.f32 %v6909, %v7185
        %v7187 = vpop.f32.mrf.mxu0
        %v7188 = vpop.f32.mrf.mxu0
        %v7189 = vadd.f32 %v6909, %v7188
        %v7190 = vpop.f32.mrf.mxu0
        %7191 = vmatprep.mubr.bf16.mxu0 %v6837
        %7192 = vmatmul.mubr.bf16.gmra.mxu0 %v6836
        %v7193 = vpop.f32.mrf.mxu0
        %v7194 = vadd.f32 %v6909, %v7193
        %v7195 = vpop.f32.mrf.mxu0
        %v7196 = vpop.f32.mrf.mxu0
        %v7197 = vadd.f32 %v6909, %v7196
        %v7198 = vpop.f32.mrf.mxu0
        %7199 = vdwg.mxu0
        %7200 = vmatprep.subr.bf16.mxu0 0
        %7201 = vmatpush1.bf16.msra.mxu0 %v7062
        %7202 = vmatprep.subr.bf16.mxu0 0
        %7203 = vmatpush1.bf16.msra.mxu0 %v7061
        %7204 = vmatprep.subr.bf16.mxu0 0
        %7205 = vmatpush1.bf16.msra.mxu0 %v7060
        %7206 = vmatprep.subr.bf16.mxu0 0
        %7207 = vmatpush1.bf16.msra.mxu0 %v7059
        %7208 = vmatprep.subr.bf16.mxu0 0
        %7209 = vmatpush1.bf16.msra.mxu0 %v7058
        %7210 = vmatprep.subr.bf16.mxu0 0
        %7211 = vmatpush1.bf16.msra.mxu0 %v7057
        %7212 = vmatprep.subr.bf16.mxu0 0
        %7213 = vmatpush1.bf16.msra.mxu0 %v7056
        %7214 = vmatprep.subr.bf16.mxu0 0
        %7215 = vmatpush1.bf16.msra.mxu0 %v7055
        %7216 = vmatprep.subr.bf16.mxu0 0
        %7217 = vmatpush2.bf16.msra.mxu0 %v7070
        %7218 = vmatprep.subr.bf16.mxu0 0
        %7219 = vmatpush2.bf16.msra.mxu0 %v7069
        %7220 = vmatprep.subr.bf16.mxu0 0
        %7221 = vmatpush2.bf16.msra.mxu0 %v7068
        %7222 = vmatprep.subr.bf16.mxu0 0
        %7223 = vmatpush2.bf16.msra.mxu0 %v7067
        %7224 = vmatprep.subr.bf16.mxu0 0
        %7225 = vmatpush2.bf16.msra.mxu0 %v7066
        %7226 = vmatprep.subr.bf16.mxu0 0
        %7227 = vmatpush2.bf16.msra.mxu0 %v7065
        %7228 = vmatprep.subr.bf16.mxu0 0
        %7229 = vmatpush2.bf16.msra.mxu0 %v7064
        %7230 = vmatprep.subr.bf16.mxu0 0
        %7231 = vmatpush2.bf16.msra.mxu0 %v7063
        %7232 = vmatprep.mubr.bf16.mxu0 %v6811
        %7233 = vmatmul.mubr.bf16.gmra.mxu0 %v6810
        %v7234 = vpop.f32.mrf.mxu0
        %v7235 = vadd.f32 %v7138, %v7234
        %v7236 = vpop.f32.mrf.mxu0
        %v7237 = vpop.f32.mrf.mxu0
        %v7238 = vadd.f32 %v7141, %v7237
        %v7239 = vpop.f32.mrf.mxu0
        %7240 = vmatprep.mubr.bf16.mxu0 %v6815
        %7241 = vmatmul.mubr.bf16.gmra.mxu0 %v6814
        %v7242 = vpop.f32.mrf.mxu0
        %v7243 = vadd.f32 %v7146, %v7242
        %v7244 = vpop.f32.mrf.mxu0
        %v7245 = vpop.f32.mrf.mxu0
        %v7246 = vadd.f32 %v7149, %v7245
        %v7247 = vpop.f32.mrf.mxu0
        %7248 = vmatprep.mubr.bf16.mxu0 %v6819
        %7249 = vmatmul.mubr.bf16.gmra.mxu0 %v6818
        %v7250 = vpop.f32.mrf.mxu0
        %v7251 = vadd.f32 %v7154, %v7250
        %v7252 = vpop.f32.mrf.mxu0
        %v7253 = vpop.f32.mrf.mxu0
        %v7254 = vadd.f32 %v7157, %v7253
        %v7255 = vpop.f32.mrf.mxu0
        %7256 = vmatprep.mubr.bf16.mxu0 %v6823
        %7257 = vmatmul.mubr.bf16.gmra.mxu0 %v6822
        %v7258 = vpop.f32.mrf.mxu0
        %v7259 = vadd.f32 %v7162, %v7258
        %v7260 = vpop.f32.mrf.mxu0
        %v7261 = vpop.f32.mrf.mxu0
        %v7262 = vadd.f32 %v7165, %v7261
        %v7263 = vpop.f32.mrf.mxu0
        %7264 = vmatprep.mubr.bf16.mxu0 %v6827
        %7265 = vmatmul.mubr.bf16.gmra.mxu0 %v6826
        %v7266 = vpop.f32.mrf.mxu0
        %v7267 = vadd.f32 %v7170, %v7266
        %v7268 = vpop.f32.mrf.mxu0
        %v7269 = vpop.f32.mrf.mxu0
        %v7270 = vadd.f32 %v7173, %v7269
        %v7271 = vpop.f32.mrf.mxu0
        %7272 = vmatprep.mubr.bf16.mxu0 %v6831
        %7273 = vmatmul.mubr.bf16.gmra.mxu0 %v6830
        %v7274 = vpop.f32.mrf.mxu0
        %v7275 = vadd.f32 %v7178, %v7274
        %v7276 = vpop.f32.mrf.mxu0
        %v7277 = vpop.f32.mrf.mxu0
        %v7278 = vadd.f32 %v7181, %v7277
        %v7279 = vpop.f32.mrf.mxu0
        %7280 = vmatprep.mubr.bf16.mxu0 %v6835
        %7281 = vmatmul.mubr.bf16.gmra.mxu0 %v6834
        %v7282 = vpop.f32.mrf.mxu0
        %v7283 = vadd.f32 %v7186, %v7282
        %v7284 = vpop.f32.mrf.mxu0
        %v7285 = vpop.f32.mrf.mxu0
        %v7286 = vadd.f32 %v7189, %v7285
        %v7287 = vpop.f32.mrf.mxu0
        %7288 = vmatprep.mubr.bf16.mxu0 %v6839
        %7289 = vmatmul.mubr.bf16.gmra.mxu0 %v6838
        %v7290 = vpop.f32.mrf.mxu0
        %v7291 = vadd.f32 %v7194, %v7290
        %v7292 = vpop.f32.mrf.mxu0
        %v7293 = vpop.f32.mrf.mxu0
        %v7294 = vadd.f32 %v7197, %v7293
        %v7295 = vpop.f32.mrf.mxu0
        %7296 = vdwg.mxu0
        %v7297 = vadd.f32 %v5802, %v7235
        %v7298 = vadd.f32 %v5803, %v7238
        %v7299 = vadd.f32 %v5804, %v7243
        %v7300 = vadd.f32 %v5805, %v7246
        %v7301 = vadd.f32 %v5806, %v7251
        %v7302 = vadd.f32 %v5807, %v7254
        %v7303 = vadd.f32 %v5808, %v7259
        %v7304 = vadd.f32 %v5809, %v7262
        %v7305 = vadd.f32 %v5810, %v7267
        %v7306 = vadd.f32 %v5811, %v7270
        %v7307 = vadd.f32 %v5812, %v7275
        %v7308 = vadd.f32 %v5813, %v7278
        %v7309 = vadd.f32 %v5814, %v7283
        %v7310 = vadd.f32 %v5815, %v7286
        %v7311 = vadd.f32 %v5816, %v7291
        %v7312 = vadd.f32 %v5817, %v7294
        %7313 = vst [vmem:[%s580] sm:$0xff] %v7297
        %7314 = vst [vmem:[%s580 + $0x8] sm:$0xff] %v7298
        %7315 = vst [vmem:[%s580 + $0x10] sm:$0xff] %v7299
        %7316 = vst [vmem:[%s580 + $0x18] sm:$0xff] %v7300
        %7317 = vst [vmem:[%s580 + $0x20] sm:$0xff] %v7301
        %7318 = vst [vmem:[%s580 + $0x28] sm:$0xff] %v7302
        %7319 = vst [vmem:[%s580 + $0x30] sm:$0xff] %v7303
        %7320 = vst [vmem:[%s580 + $0x38] sm:$0xff] %v7304
        %7321 = vst [vmem:[%s580 + $0x40] sm:$0xff] %v7305
        %7322 = vst [vmem:[%s580 + $0x48] sm:$0xff] %v7306
        %7323 = vst [vmem:[%s580 + $0x50] sm:$0xff] %v7307
        %7324 = vst [vmem:[%s580 + $0x58] sm:$0xff] %v7308
        %7325 = vst [vmem:[%s580 + $0x60] sm:$0xff] %v7309
        %7326 = vst [vmem:[%s580 + $0x68] sm:$0xff] %v7310
        %7327 = vst [vmem:[%s580 + $0x70] sm:$0xff] %v7311
        %7328 = vst [vmem:[%s580 + $0x78] sm:$0xff] %v7312
        %s7329 = sand.u32 %s385, 1
        %s7330 = scalar_lea.sflag [#allocation4], %s7329
        %s7331 = sand.u32 %s385, 1
        %s7332 = smul.addr %s7331, 128
        %s7333 = scalar_lea.vmem [#allocation8], %s7332
        // Predicated region
        $region93: #{tpu_custom_call.1} parent=79 // pred_check
          %p7334 = pneg %p395
        $region94: #{tpu_custom_call.1} parent=79 // pred_check_branch
          %7336 = sbr.rel (%p7334) target = $region96
        $region95: #{tpu_custom_call.1} parent=79 // pred_region
          %s7337 = smul.u32 16, %s36
          %s7339 = ssub.s32 2048, 2048
          %7340 = vsyncadd %s7330, %s7339
          %s7341 = smul.addr %s35, 32
          %s7342 = sadd.s32 %s7337, %s7341
          %s7343 = smul.addr %s7342, 128
          %s7344 = scalar_lea.hbm %s15, %s7343
          %s7345 = sshll.u32 %s7333, 4
          %s7346 = int_to_ptr.vmem [resolvable:$true] %s7345
          %7351 = dma.vmem_to_hbm [thread:$0]  %s7346, 2048, %s7344, %s7330, 128, 128, 8
        $region96: #{tpu_custom_call.1} parent=79 // pred_fallthru
          _
      $region80: #{tpu_custom_call.1} parent=5 // pred_fallthru
        _
      %p7352 = scmp.le.s32.totalorder 2, %s26
      // Predicated region
      $region97: #{tpu_custom_call.1} parent=5 // pred_check
        %p7353 = pneg %p7352
      $region98: #{tpu_custom_call.1} parent=5 // pred_check_branch
        %7355 = sbr.rel (%p7353) target = $region100
      $region99: #{tpu_custom_call.1} parent=5 // pred_region
        %s7356 = ssub.s32 %s26, 2
        // Predicated region
        $region101: #{tpu_custom_call.1} parent=99 // pred_check
          %p7357 = pneg %p401
        $region102: #{tpu_custom_call.1} parent=99 // pred_check_branch
          %7359 = sbr.rel (%p7357) target = $region104
        $region103: #{tpu_custom_call.1} parent=99 // pred_region
          %s7360 = sand.u32 %s386, 1
          %s7361 = scalar_lea.sflag [#allocation4], %s7360
          %s7362 = sand.u32 %s386, 1
          %s7363 = smul.addr %s7362, 128
          %s7364 = scalar_lea.vmem [#allocation8], %s7363
          %7365 = dma.done %s7361, 2048
        $region104: #{tpu_custom_call.1} parent=99 // pred_fallthru
          _
      $region100: #{tpu_custom_call.1} parent=5 // pred_fallthru
        _
    $region6: #{tpu_custom_call.1} parent=1 // loop_footer
      %s30 = sadd.s32 1, %s26
    $region7: #{tpu_custom_call.1} parent=1 // loop_footer_branch
      %25 = sbr.rel target = $region3
    $region8: #{tpu_custom_call.1} parent=1 // loop_exit
      _
    %7366 = vsyncpa [#allocation3], 1
    %s7367 = scalar_lea.sflag [#allocation3], 1
    %7368 = vsyncpa %s7367, 1
    %7369 = vsyncpa [#allocation6], 1
    %7370 = vsyncpa [#allocation4], 1
    %s7371 = scalar_lea.sflag [#allocation4], 1
    %7372 = vsyncpa %s7371, 1

</llo_original>
